<compile_context>
chip_gen: v5e
topology: v5e:2x2
jax: 0.10.0
libtpu: 0.0.40
codegen_flags: <defaults>
</compile_context>

<pallas_src>
from functools import partial

import jax
import jax.numpy as jnp
from jax.experimental import pallas as pl
from jax.experimental.pallas import tpu as pltpu


# ----------------------------------------------------------------------------
# Kernel A: hierarchical LSTM recurrence (sentence LSTM + context LSTM).
# ----------------------------------------------------------------------------
def lstm_kernel(x_ref, wih_s_ref, whh_s_ref, b_s_ref, w_cat_c_ref, b_c_ref,
                hid_ref, gx_ref, *, S, W, Bp, H):
    """x_ref   : (S*W*Bp, I)  bf16, rows ordered (sentence, word, padded batch)
    hid_ref : (S*W*Bp, H)  bf16 per-word hidden states (same row order)
    gx_ref  : (W*Bp, 4H)   f32 scratch (per-sentence hoisted input projection)
    """
    f32 = jnp.float32
    bf16 = jnp.bfloat16

    def cell(gates, c_prev):
        # PyTorch gate order i, f, g, o; H multiple of 128 -> lane-aligned
        # value slices are free.  All gate math in f32 (v5e-friendly).
        i = jax.nn.sigmoid(gates[:, 0:H])
        f = jax.nn.sigmoid(gates[:, H:2 * H])
        g = jnp.tanh(gates[:, 2 * H:3 * H])
        o = jax.nn.sigmoid(gates[:, 3 * H:4 * H])
        c_new = f * c_prev + i * g
        h_new = o * jnp.tanh(c_new)
        return h_new, c_new

    b_s = b_s_ref[...]          # (1, 4H) f32 (b_ih + b_hh fused at init)
    b_c = b_c_ref[...]          # (1, 4H) f32

    # reset_hidden(): first sentence starts from zero states.
    h_s = jnp.zeros((Bp, H), f32)     # sentence-LSTM hidden (carried)
    h_c = jnp.zeros((Bp, H), f32)     # context-LSTM hidden (carried)
    c_ctx = jnp.zeros((Bp, H), f32)   # context-LSTM cell   (carried)

    # TODO(synk): convert to lax.fori_loop with bounded unroll if S*W grows
    # beyond toy sizes (static Python unrolling does not bound vreg live ranges).
    for s in range(S):
        # Per-sentence hoisted input projection: ONE (W*Bp, I) x (I, 4H) matmul.
        gx_ref[...] = jnp.dot(
            x_ref[s * W * Bp:(s + 1) * W * Bp, :], wih_s_ref[...],
            preferred_element_type=f32) + b_s

        # lstm_sentence(embedded, (hidden_s, context_cells)):
        # initial hidden = carried sentence hidden, initial cell = context cell
        # (matches the PyTorch reference; zeros for the first sentence).
        h = h_s
        c = c_ctx
        for w in range(W):
            t = s * W + w
            # Aligned full-tile (Bp=8 row) load; only h @ W_hh stays serial.
            gates = gx_ref[w * Bp:(w + 1) * Bp, :] + jnp.dot(
                h.astype(bf16), whh_s_ref[...], preferred_element_type=f32)
            h, c = cell(gates, c)
            hid_ref[t * Bp:(t + 1) * Bp, :] = h.astype(bf16)  # aligned store
        h_s = h                         # hidden_s carried to next sentence

        # lstm_context single step: input = cells_s (final sentence cell),
        # state (hidden_c, context_cells).  Fused into ONE MXU matmul with the
        # pre-concatenated (2H, 4H) weight.
        gates_c = jnp.dot(
            jnp.concatenate([c, h_c], axis=-1).astype(bf16),
            w_cat_c_ref[...], preferred_element_type=f32) + b_c
        h_c, c_ctx = cell(gates_c, c_ctx)


# ----------------------------------------------------------------------------
# Kernel B: output Linear, tiled over the vocab dimension (TC-parallel axis).
# ----------------------------------------------------------------------------
def out_linear_kernel(hid_ref, w_out_ref, b_out_ref, out_ref):
    out_ref[...] = jnp.dot(hid_ref[...], w_out_ref[...],
                           preferred_element_type=jnp.float32) + b_out_ref[...]


# ----------------------------------------------------------------------------
# Wrapper
# ----------------------------------------------------------------------------
def design_forward(paragraph, params, *, t_tile=256):
    B, S, W = paragraph.shape
    emb_tbl = params["embedding"]            # (num_token, num_inp) f32
    I = emb_tbl.shape[1]
    H = params["whh_s"].shape[0]
    T = params["w_out"].shape[1]

    Bp = max(8, ((B + 7) // 8) * 8)          # pad batch to a full sublane tile
    tT = t_tile if T % t_tile == 0 else T    # vocab tile (multiple of 128 here)

    # TODO(synk): embedding lookup is a gather; kept in plain JAX glue.
    # Gather in (sentence, word, batch) order, pad batch to Bp, cast to bf16.
    idx = jnp.transpose(paragraph, (1, 2, 0))                       # (S, W, B)
    idx = jnp.pad(idx, ((0, 0), (0, 0), (0, Bp - B)))               # (S, W, Bp)
    x_flat = jnp.take(emb_tbl, idx.reshape(-1), axis=0).astype(jnp.bfloat16)

    # ---- Kernel A: recurrence (no grid; everything resident in VMEM) ----
    hid_pad = pl.pallas_call(
        partial(lstm_kernel, S=S, W=W, Bp=Bp, H=H),
        out_shape=jax.ShapeDtypeStruct((S * W * Bp, H), jnp.bfloat16),
        scratch_shapes=[
            pltpu.VMEM((W * Bp, 4 * H), jnp.float32),   # per-sentence gates_x
        ],
        compiler_params=pltpu.CompilerParams(
            vmem_limit_bytes=32 * 1024 * 1024),
    )(x_flat,
      params["wih_s"], params["whh_s"], params["b_s"],
      params["w_cat_c"], params["b_c"])

    # Tiny layout glue: drop the batch padding and reorder the (small) hidden
    # sequence (s, w, b) -> (b, s, w).  This is S*W*B*H bf16 (~KBs), unlike the
    # (S*W*B, T) logits which are written once, already in final order.
    hid = hid_pad.reshape(S * W, Bp, H)[:, :B]
    hid = jnp.transpose(hid, (1, 0, 2)).reshape(B * S * W, H)

    # ---- Kernel B: output linear, T-tiled, parallel over TensorCores ----
    logits = pl.pallas_call(
        out_linear_kernel,
        out_shape=jax.ShapeDtypeStruct((B * S * W, T), jnp.float32),
        grid=(T // tT,),
        in_specs=[
            pl.BlockSpec((B * S * W, H), lambda j: (0, 0)),   # hid (constant)
            pl.BlockSpec((H, tT), lambda j: (0, j)),          # w_out tile
            pl.BlockSpec((1, tT), lambda j: (0, j)),          # b_out tile
        ],
        out_specs=pl.BlockSpec((B * S * W, tT), lambda j: (0, j)),
        compiler_params=pltpu.CompilerParams(
            dimension_semantics=("parallel",),
            vmem_limit_bytes=32 * 1024 * 1024),
    )(hid, params["w_out"], params["b_out"])

    return logits


def init_params(key, num_token, num_inp, num_hid):
    ks = jax.random.split(key, 12)
    k = 1.0 / jnp.sqrt(jnp.float32(num_hid))

    def u(kk, shape):
        return jax.random.uniform(kk, shape, jnp.float32, -k, k)

    emb = jax.random.normal(ks[0], (num_token, num_inp), jnp.float32)
    # lstm_sentence: W_ih (4H, I), W_hh (4H, H); biases fused (b_ih + b_hh).
    wih_s = u(ks[1], (4 * num_hid, num_inp))
    whh_s = u(ks[2], (4 * num_hid, num_hid))
    b_s = u(ks[3], (4 * num_hid,)) + u(ks[4], (4 * num_hid,))
    # lstm_context: input size = num_hid.
    wih_c = u(ks[5], (4 * num_hid, num_hid))
    whh_c = u(ks[6], (4 * num_hid, num_hid))
    b_c = u(ks[7], (4 * num_hid,)) + u(ks[8], (4 * num_hid,))
    # output linear: (num_token, num_hid).
    w_out = u(ks[9], (num_token, num_hid))
    b_out = u(ks[10], (num_token,))

    bf16 = jnp.bfloat16
    return dict(
        embedding=emb,
        # Matmul weights pre-transposed to (in, 4H) / (H, T) and cast to bf16;
        # biases stay f32 (gate math / accumulation stays f32).
        wih_s=wih_s.T.astype(bf16),                       # (I, 4H)
        whh_s=whh_s.T.astype(bf16),                       # (H, 4H)
        b_s=b_s.reshape(1, -1),
        # Context LSTM: [W_ih_c ; W_hh_c] stacked into ONE (2H, 4H) weight so
        # the serial context step is a single matmul on concat([c, h_c], -1).
        # NOTE: biases are pre-fused (b_ih + b_hh) — raw PyTorch weights must
        # be fused the same way before loading.
        w_cat_c=jnp.concatenate([wih_c.T, whh_c.T], axis=0).astype(bf16),
        b_c=b_c.reshape(1, -1),
        w_out=w_out.T.astype(bf16),                       # (H, T)
        b_out=b_out.reshape(1, -1),
    )


if __name__ == "__main__":
    # Small shapes consistent with the module (num_token / num_inp / num_hid
    # scaled down; H and I multiples of 128 for lane alignment).
    NUM_TOKEN, NUM_INP, NUM_HID = 512, 128, 128
    B, S, W = 2, 3, 8

    key = jax.random.PRNGKey(0)
    kp, kx = jax.random.split(key)
    params = init_params(kp, NUM_TOKEN, NUM_INP, NUM_HID)
    paragraph = jax.random.randint(kx, (B, S, W), 0, NUM_TOKEN, dtype=jnp.int32)

    logits = jax.jit(design_forward)(paragraph, params)
    jax.block_until_ready(logits)
    assert logits.shape == (B * S * W, NUM_TOKEN)
    assert bool(jnp.all(jnp.isfinite(logits)))
    print("KERNEL_OK")
</pallas_src>

<mosaic_0001>
module attributes {stable_mosaic.version = 11 : i64} {
  func.func @out_linear_kernel(%arg0: i32, %arg1: memref<48x128xbf16, #tpu.memory_space<vmem>>, %arg2: memref<128x256xbf16, #tpu.memory_space<vmem>>, %arg3: memref<1x256xf32, #tpu.memory_space<vmem>>, %arg4: memref<48x256xf32, #tpu.memory_space<vmem>>) attributes {dimension_semantics = [#tpu.dimension_semantics<parallel>], iteration_bounds = array<i64: 2>, scalar_prefetch = 0 : i64, scratch_operands = 0 : i64, tpu.core_type = #tpu.core_type<tc>, window_params = [{pipeline_mode = #tpu.pipeline_mode<synchronous>, transform_indices = @transform_0, window_bounds = array<i64: 48, 128>}, {transform_indices = @transform_1, window_bounds = array<i64: 128, 256>}, {transform_indices = @transform_2, window_bounds = array<i64: 1, 256>}, {transform_indices = @transform_3, window_bounds = array<i64: 48, 256>}]} {
    %c0 = arith.constant 0 : index
    %c0_0 = arith.constant 0 : index
    %0 = vector.load %arg1[%c0, %c0_0] : memref<48x128xbf16, #tpu.memory_space<vmem>>, vector<48x128xbf16>
    %c0_1 = arith.constant 0 : index
    %c0_2 = arith.constant 0 : index
    %1 = vector.load %arg2[%c0_1, %c0_2] : memref<128x256xbf16, #tpu.memory_space<vmem>>, vector<128x256xbf16>
    %cst = arith.constant dense<0.000000e+00> : vector<48x256xf32>
    %2 = tpu.matmul %0, %1, %cst {dimension_numbers = #tpu.dot_dimension_numbers<[1], [0], [0], [1], [0, 0, 1, 1], [], []>} : vector<48x128xbf16>, vector<128x256xbf16>, vector<48x256xf32> -> vector<48x256xf32>
    %c0_3 = arith.constant 0 : index
    %c0_4 = arith.constant 0 : index
    %3 = vector.load %arg3[%c0_3, %c0_4] : memref<1x256xf32, #tpu.memory_space<vmem>>, vector<1x256xf32>
    %4 = vector.broadcast %3 : vector<1x256xf32> to vector<48x256xf32>
    %5 = arith.addf %2, %4 : vector<48x256xf32>
    %c0_5 = arith.constant 0 : index
    %c0_6 = arith.constant 0 : index
    %6 = vector.load %arg4[%c0_5, %c0_6] : memref<48x256xf32, #tpu.memory_space<vmem>>, vector<48x256xf32>
    tpu.vector_store %arg4[%c0_5, %c0_6], %5 {strides = array<i32>} : memref<48x256xf32, #tpu.memory_space<vmem>>, vector<48x256xf32>,
    return
  }
  func.func @transform_0(%arg0: i32) -> (i32, i32) {
    %c0_i32 = arith.constant 0 : i32
    %c0_i32_0 = arith.constant 0 : i32
    %c0_i32_1 = arith.constant 0 : i32
    return %c0_i32, %c0_i32_0 : i32, i32
  }
  func.func @transform_1(%arg0: i32) -> (i32, i32) {
    %c0_i32 = arith.constant 0 : i32
    %c0_i32_0 = arith.constant 0 : i32
    return %c0_i32, %arg0 : i32, i32
  }
  func.func @transform_2(%arg0: i32) -> (i32, i32) {
    %c0_i32 = arith.constant 0 : i32
    %c0_i32_0 = arith.constant 0 : i32
    return %c0_i32, %arg0 : i32, i32
  }
  func.func @transform_3(%arg0: i32) -> (i32, i32) {
    %c0_i32 = arith.constant 0 : i32
    %c0_i32_0 = arith.constant 0 : i32
    return %c0_i32, %arg0 : i32, i32
  }
}

module attributes {stable_mosaic.version = 11 : i64} {
  func.func @lstm_kernel(%arg0: memref<192x128xbf16, #tpu.memory_space<vmem>>, %arg1: memref<128x512xbf16, #tpu.memory_space<vmem>>, %arg2: memref<128x512xbf16, #tpu.memory_space<vmem>>, %arg3: memref<1x512xf32, #tpu.memory_space<vmem>>, %arg4: memref<256x512xbf16, #tpu.memory_space<vmem>>, %arg5: memref<1x512xf32, #tpu.memory_space<vmem>>, %arg6: memref<192x128xbf16, #tpu.memory_space<vmem>>, %arg7: memref<64x512xf32, #tpu.memory_space<vmem>>) attributes {dimension_semantics = [], scalar_prefetch = 0 : i64, scratch_operands = 1 : i64, tpu.core_type = #tpu.core_type<tc>} {
    %c0 = arith.constant 0 : index
    %c0_0 = arith.constant 0 : index
    %0 = vector.load %arg3[%c0, %c0_0] : memref<1x512xf32, #tpu.memory_space<vmem>>, vector<1x512xf32>
    %c0_1 = arith.constant 0 : index
    %c0_2 = arith.constant 0 : index
    %1 = vector.load %arg5[%c0_1, %c0_2] : memref<1x512xf32, #tpu.memory_space<vmem>>, vector<1x512xf32>
    %cst = arith.constant 0.000000e+00 : f32
    %2 = vector.broadcast %cst : f32 to vector<8x128xf32>
    %cst_3 = arith.constant 0.000000e+00 : f32
    %3 = vector.broadcast %cst_3 : f32 to vector<8x128xf32>
    %cst_4 = arith.constant 0.000000e+00 : f32
    %4 = vector.broadcast %cst_4 : f32 to vector<8x128xf32>
    %c0_5 = arith.constant 0 : index
    %c0_6 = arith.constant 0 : index
    %5 = vector.load %arg0[%c0_5, %c0_6] : memref<192x128xbf16, #tpu.memory_space<vmem>>, vector<64x128xbf16>
    %c0_7 = arith.constant 0 : index
    %c0_8 = arith.constant 0 : index
    %6 = vector.load %arg1[%c0_7, %c0_8] : memref<128x512xbf16, #tpu.memory_space<vmem>>, vector<128x512xbf16>
    %cst_9 = arith.constant dense<0.000000e+00> : vector<64x512xf32>
    %7 = tpu.matmul %5, %6, %cst_9 {dimension_numbers = #tpu.dot_dimension_numbers<[1], [0], [0], [1], [0, 0, 1, 1], [], []>} : vector<64x128xbf16>, vector<128x512xbf16>, vector<64x512xf32> -> vector<64x512xf32>
    %8 = vector.broadcast %0 : vector<1x512xf32> to vector<64x512xf32>
    %9 = arith.addf %7, %8 : vector<64x512xf32>
    %c0_10 = arith.constant 0 : index
    %c0_11 = arith.constant 0 : index
    %10 = vector.load %arg7[%c0_10, %c0_11] : memref<64x512xf32, #tpu.memory_space<vmem>>, vector<64x512xf32>
    tpu.vector_store %arg7[%c0_10, %c0_11], %9 {strides = array<i32>} : memref<64x512xf32, #tpu.memory_space<vmem>>, vector<64x512xf32>,
    %c0_12 = arith.constant 0 : index
    %c0_13 = arith.constant 0 : index
    %11 = vector.load %arg7[%c0_12, %c0_13] : memref<64x512xf32, #tpu.memory_space<vmem>>, vector<8x512xf32>
    %12 = arith.truncf %2 : vector<8x128xf32> to vector<8x128xbf16>
    %c0_14 = arith.constant 0 : index
    %c0_15 = arith.constant 0 : index
    %13 = vector.load %arg2[%c0_14, %c0_15] : memref<128x512xbf16, #tpu.memory_space<vmem>>, vector<128x512xbf16>
    %cst_16 = arith.constant dense<0.000000e+00> : vector<8x512xf32>
    %14 = tpu.matmul %12, %13, %cst_16 {dimension_numbers = #tpu.dot_dimension_numbers<[1], [0], [0], [1], [0, 0, 1, 1], [], []>} : vector<8x128xbf16>, vector<128x512xbf16>, vector<8x512xf32> -> vector<8x512xf32>
    %15 = arith.addf %11, %14 : vector<8x512xf32>
    %16 = vector.extract_strided_slice %15 {offsets = [0, 0], sizes = [8, 128], strides = [1, 1]} : vector<8x512xf32> to vector<8x128xf32>
    %17 = arith.negf %16 : vector<8x128xf32>
    %18 = math.exp %17 : vector<8x128xf32>
    %cst_17 = arith.constant 1.000000e+00 : f32
    %19 = vector.broadcast %cst_17 : f32 to vector<8x128xf32>
    %20 = arith.addf %19, %18 : vector<8x128xf32>
    %21 = arith.divf %19, %20 : vector<8x128xf32>
    %22 = vector.extract_strided_slice %15 {offsets = [0, 128], sizes = [8, 128], strides = [1, 1]} : vector<8x512xf32> to vector<8x128xf32>
    %23 = arith.negf %22 : vector<8x128xf32>
    %24 = math.exp %23 : vector<8x128xf32>
    %cst_18 = arith.constant 1.000000e+00 : f32
    %25 = vector.broadcast %cst_18 : f32 to vector<8x128xf32>
    %26 = arith.addf %25, %24 : vector<8x128xf32>
    %27 = arith.divf %25, %26 : vector<8x128xf32>
    %28 = vector.extract_strided_slice %15 {offsets = [0, 256], sizes = [8, 128], strides = [1, 1]} : vector<8x512xf32> to vector<8x128xf32>
    %29 = math.tanh %28 : vector<8x128xf32>
    %30 = vector.extract_strided_slice %15 {offsets = [0, 384], sizes = [8, 128], strides = [1, 1]} : vector<8x512xf32> to vector<8x128xf32>
    %31 = arith.negf %30 : vector<8x128xf32>
    %32 = math.exp %31 : vector<8x128xf32>
    %cst_19 = arith.constant 1.000000e+00 : f32
    %33 = vector.broadcast %cst_19 : f32 to vector<8x128xf32>
    %34 = arith.addf %33, %32 : vector<8x128xf32>
    %35 = arith.divf %33, %34 : vector<8x128xf32>
    %36 = arith.mulf %27, %4 : vector<8x128xf32>
    %37 = arith.mulf %21, %29 : vector<8x128xf32>
    %38 = arith.addf %36, %37 : vector<8x128xf32>
    %39 = math.tanh %38 : vector<8x128xf32>
    %40 = arith.mulf %35, %39 : vector<8x128xf32>
    %41 = arith.truncf %40 : vector<8x128xf32> to vector<8x128xbf16>
    %c0_20 = arith.constant 0 : index
    %c0_21 = arith.constant 0 : index
    %42 = vector.load %arg6[%c0_20, %c0_21] : memref<192x128xbf16, #tpu.memory_space<vmem>>, vector<8x128xbf16>
    tpu.vector_store %arg6[%c0_20, %c0_21], %41 {strides = array<i32>} : memref<192x128xbf16, #tpu.memory_space<vmem>>, vector<8x128xbf16>,
    %c8 = arith.constant 8 : index
    %c0_22 = arith.constant 0 : index
    %43 = vector.load %arg7[%c8, %c0_22] : memref<64x512xf32, #tpu.memory_space<vmem>>, vector<8x512xf32>
    %44 = arith.truncf %40 : vector<8x128xf32> to vector<8x128xbf16>
    %c0_23 = arith.constant 0 : index
    %c0_24 = arith.constant 0 : index
    %45 = vector.load %arg2[%c0_23, %c0_24] : memref<128x512xbf16, #tpu.memory_space<vmem>>, vector<128x512xbf16>
    %cst_25 = arith.constant dense<0.000000e+00> : vector<8x512xf32>
    %46 = tpu.matmul %44, %45, %cst_25 {dimension_numbers = #tpu.dot_dimension_numbers<[1], [0], [0], [1], [0, 0, 1, 1], [], []>} : vector<8x128xbf16>, vector<128x512xbf16>, vector<8x512xf32> -> vector<8x512xf32>
    %47 = arith.addf %43, %46 : vector<8x512xf32>
    %48 = vector.extract_strided_slice %47 {offsets = [0, 0], sizes = [8, 128], strides = [1, 1]} : vector<8x512xf32> to vector<8x128xf32>
    %49 = arith.negf %48 : vector<8x128xf32>
    %50 = math.exp %49 : vector<8x128xf32>
    %cst_26 = arith.constant 1.000000e+00 : f32
    %51 = vector.broadcast %cst_26 : f32 to vector<8x128xf32>
    %52 = arith.addf %51, %50 : vector<8x128xf32>
    %53 = arith.divf %51, %52 : vector<8x128xf32>
    %54 = vector.extract_strided_slice %47 {offsets = [0, 128], sizes = [8, 128], strides = [1, 1]} : vector<8x512xf32> to vector<8x128xf32>
    %55 = arith.negf %54 : vector<8x128xf32>
    %56 = math.exp %55 : vector<8x128xf32>
    %cst_27 = arith.constant 1.000000e+00 : f32
    %57 = vector.broadcast %cst_27 : f32 to vector<8x128xf32>
    %58 = arith.addf %57, %56 : vector<8x128xf32>
    %59 = arith.divf %57, %58 : vector<8x128xf32>
    %60 = vector.extract_strided_slice %47 {offsets = [0, 256], sizes = [8, 128], strides = [1, 1]} : vector<8x512xf32> to vector<8x128xf32>
    %61 = math.tanh %60 : vector<8x128xf32>
    %62 = vector.extract_strided_slice %47 {offsets = [0, 384], sizes = [8, 128], strides = [1, 1]} : vector<8x512xf32> to vector<8x128xf32>
    %63 = arith.negf %62 : vector<8x128xf32>
    %64 = math.exp %63 : vector<8x128xf32>
    %cst_28 = arith.constant 1.000000e+00 : f32
    %65 = vector.broadcast %cst_28 : f32 to vector<8x128xf32>
    %66 = arith.addf %65, %64 : vector<8x128xf32>
    %67 = arith.divf %65, %66 : vector<8x128xf32>
    %68 = arith.mulf %59, %38 : vector<8x128xf32>
    %69 = arith.mulf %53, %61 : vector<8x128xf32>
    %70 = arith.addf %68, %69 : vector<8x128xf32>
    %71 = math.tanh %70 : vector<8x128xf32>
    %72 = arith.mulf %67, %71 : vector<8x128xf32>
    %73 = arith.truncf %72 : vector<8x128xf32> to vector<8x128xbf16>
    %c8_29 = arith.constant 8 : index
    %c0_30 = arith.constant 0 : index
    %74 = vector.load %arg6[%c8_29, %c0_30] : memref<192x128xbf16, #tpu.memory_space<vmem>>, vector<8x128xbf16>
    tpu.vector_store %arg6[%c8_29, %c0_30], %73 {strides = array<i32>} : memref<192x128xbf16, #tpu.memory_space<vmem>>, vector<8x128xbf16>,
    %c16 = arith.constant 16 : index
    %c0_31 = arith.constant 0 : index
    %75 = vector.load %arg7[%c16, %c0_31] : memref<64x512xf32, #tpu.memory_space<vmem>>, vector<8x512xf32>
    %76 = arith.truncf %72 : vector<8x128xf32> to vector<8x128xbf16>
    %c0_32 = arith.constant 0 : index
    %c0_33 = arith.constant 0 : index
    %77 = vector.load %arg2[%c0_32, %c0_33] : memref<128x512xbf16, #tpu.memory_space<vmem>>, vector<128x512xbf16>
    %cst_34 = arith.constant dense<0.000000e+00> : vector<8x512xf32>
    %78 = tpu.matmul %76, %77, %cst_34 {dimension_numbers = #tpu.dot_dimension_numbers<[1], [0], [0], [1], [0, 0, 1, 1], [], []>} : vector<8x128xbf16>, vector<128x512xbf16>, vector<8x512xf32> -> vector<8x512xf32>
    %79 = arith.addf %75, %78 : vector<8x512xf32>
    %80 = vector.extract_strided_slice %79 {offsets = [0, 0], sizes = [8, 128], strides = [1, 1]} : vector<8x512xf32> to vector<8x128xf32>
    %81 = arith.negf %80 : vector<8x128xf32>
    %82 = math.exp %81 : vector<8x128xf32>
    %cst_35 = arith.constant 1.000000e+00 : f32
    %83 = vector.broadcast %cst_35 : f32 to vector<8x128xf32>
    %84 = arith.addf %83, %82 : vector<8x128xf32>
    %85 = arith.divf %83, %84 : vector<8x128xf32>
    %86 = vector.extract_strided_slice %79 {offsets = [0, 128], sizes = [8, 128], strides = [1, 1]} : vector<8x512xf32> to vector<8x128xf32>
    %87 = arith.negf %86 : vector<8x128xf32>
    %88 = math.exp %87 : vector<8x128xf32>
    %cst_36 = arith.constant 1.000000e+00 : f32
    %89 = vector.broadcast %cst_36 : f32 to vector<8x128xf32>
    %90 = arith.addf %89, %88 : vector<8x128xf32>
    %91 = arith.divf %89, %90 : vector<8x128xf32>
    %92 = vector.extract_strided_slice %79 {offsets = [0, 256], sizes = [8, 128], strides = [1, 1]} : vector<8x512xf32> to vector<8x128xf32>
    %93 = math.tanh %92 : vector<8x128xf32>
    %94 = vector.extract_strided_slice %79 {offsets = [0, 384], sizes = [8, 128], strides = [1, 1]} : vector<8x512xf32> to vector<8x128xf32>
    %95 = arith.negf %94 : vector<8x128xf32>
    %96 = math.exp %95 : vector<8x128xf32>
    %cst_37 = arith.constant 1.000000e+00 : f32
    %97 = vector.broadcast %cst_37 : f32 to vector<8x128xf32>
    %98 = arith.addf %97, %96 : vector<8x128xf32>
    %99 = arith.divf %97, %98 : vector<8x128xf32>
    %100 = arith.mulf %91, %70 : vector<8x128xf32>
    %101 = arith.mulf %85, %93 : vector<8x128xf32>
    %102 = arith.addf %100, %101 : vector<8x128xf32>
    %103 = math.tanh %102 : vector<8x128xf32>
    %104 = arith.mulf %99, %103 : vector<8x128xf32>
    %105 = arith.truncf %104 : vector<8x128xf32> to vector<8x128xbf16>
    %c16_38 = arith.constant 16 : index
    %c0_39 = arith.constant 0 : index
    %106 = vector.load %arg6[%c16_38, %c0_39] : memref<192x128xbf16, #tpu.memory_space<vmem>>, vector<8x128xbf16>
    tpu.vector_store %arg6[%c16_38, %c0_39], %105 {strides = array<i32>} : memref<192x128xbf16, #tpu.memory_space<vmem>>, vector<8x128xbf16>,
    %c24 = arith.constant 24 : index
    %c0_40 = arith.constant 0 : index
    %107 = vector.load %arg7[%c24, %c0_40] : memref<64x512xf32, #tpu.memory_space<vmem>>, vector<8x512xf32>
    %108 = arith.truncf %104 : vector<8x128xf32> to vector<8x128xbf16>
    %c0_41 = arith.constant 0 : index
    %c0_42 = arith.constant 0 : index
    %109 = vector.load %arg2[%c0_41, %c0_42] : memref<128x512xbf16, #tpu.memory_space<vmem>>, vector<128x512xbf16>
    %cst_43 = arith.constant dense<0.000000e+00> : vector<8x512xf32>
    %110 = tpu.matmul %108, %109, %cst_43 {dimension_numbers = #tpu.dot_dimension_numbers<[1], [0], [0], [1], [0, 0, 1, 1], [], []>} : vector<8x128xbf16>, vector<128x512xbf16>, vector<8x512xf32> -> vector<8x512xf32>
    %111 = arith.addf %107, %110 : vector<8x512xf32>
    %112 = vector.extract_strided_slice %111 {offsets = [0, 0], sizes = [8, 128], strides = [1, 1]} : vector<8x512xf32> to vector<8x128xf32>
    %113 = arith.negf %112 : vector<8x128xf32>
    %114 = math.exp %113 : vector<8x128xf32>
    %cst_44 = arith.constant 1.000000e+00 : f32
    %115 = vector.broadcast %cst_44 : f32 to vector<8x128xf32>
    %116 = arith.addf %115, %114 : vector<8x128xf32>
    %117 = arith.divf %115, %116 : vector<8x128xf32>
    %118 = vector.extract_strided_slice %111 {offsets = [0, 128], sizes = [8, 128], strides = [1, 1]} : vector<8x512xf32> to vector<8x128xf32>
    %119 = arith.negf %118 : vector<8x128xf32>
    %120 = math.exp %119 : vector<8x128xf32>
    %cst_45 = arith.constant 1.000000e+00 : f32
    %121 = vector.broadcast %cst_45 : f32 to vector<8x128xf32>
    %122 = arith.addf %121, %120 : vector<8x128xf32>
    %123 = arith.divf %121, %122 : vector<8x128xf32>
    %124 = vector.extract_strided_slice %111 {offsets = [0, 256], sizes = [8, 128], strides = [1, 1]} : vector<8x512xf32> to vector<8x128xf32>
    %125 = math.tanh %124 : vector<8x128xf32>
    %126 = vector.extract_strided_slice %111 {offsets = [0, 384], sizes = [8, 128], strides = [1, 1]} : vector<8x512xf32> to vector<8x128xf32>
    %127 = arith.negf %126 : vector<8x128xf32>
    %128 = math.exp %127 : vector<8x128xf32>
    %cst_46 = arith.constant 1.000000e+00 : f32
    %129 = vector.broadcast %cst_46 : f32 to vector<8x128xf32>
    %130 = arith.addf %129, %128 : vector<8x128xf32>
    %131 = arith.divf %129, %130 : vector<8x128xf32>
    %132 = arith.mulf %123, %102 : vector<8x128xf32>
    %133 = arith.mulf %117, %125 : vector<8x128xf32>
    %134 = arith.addf %132, %133 : vector<8x128xf32>
    %135 = math.tanh %134 : vector<8x128xf32>
    %136 = arith.mulf %131, %135 : vector<8x128xf32>
    %137 = arith.truncf %136 : vector<8x128xf32> to vector<8x128xbf16>
    %c24_47 = arith.constant 24 : index
    %c0_48 = arith.constant 0 : index
    %138 = vector.load %arg6[%c24_47, %c0_48] : memref<192x128xbf16, #tpu.memory_space<vmem>>, vector<8x128xbf16>
    tpu.vector_store %arg6[%c24_47, %c0_48], %137 {strides = array<i32>} : memref<192x128xbf16, #tpu.memory_space<vmem>>, vector<8x128xbf16>,
    %c32 = arith.constant 32 : index
    %c0_49 = arith.constant 0 : index
    %139 = vector.load %arg7[%c32, %c0_49] : memref<64x512xf32, #tpu.memory_space<vmem>>, vector<8x512xf32>
    %140 = arith.truncf %136 : vector<8x128xf32> to vector<8x128xbf16>
    %c0_50 = arith.constant 0 : index
    %c0_51 = arith.constant 0 : index
    %141 = vector.load %arg2[%c0_50, %c0_51] : memref<128x512xbf16, #tpu.memory_space<vmem>>, vector<128x512xbf16>
    %cst_52 = arith.constant dense<0.000000e+00> : vector<8x512xf32>
    %142 = tpu.matmul %140, %141, %cst_52 {dimension_numbers = #tpu.dot_dimension_numbers<[1], [0], [0], [1], [0, 0, 1, 1], [], []>} : vector<8x128xbf16>, vector<128x512xbf16>, vector<8x512xf32> -> vector<8x512xf32>
    %143 = arith.addf %139, %142 : vector<8x512xf32>
    %144 = vector.extract_strided_slice %143 {offsets = [0, 0], sizes = [8, 128], strides = [1, 1]} : vector<8x512xf32> to vector<8x128xf32>
    %145 = arith.negf %144 : vector<8x128xf32>
    %146 = math.exp %145 : vector<8x128xf32>
    %cst_53 = arith.constant 1.000000e+00 : f32
    %147 = vector.broadcast %cst_53 : f32 to vector<8x128xf32>
    %148 = arith.addf %147, %146 : vector<8x128xf32>
    %149 = arith.divf %147, %148 : vector<8x128xf32>
    %150 = vector.extract_strided_slice %143 {offsets = [0, 128], sizes = [8, 128], strides = [1, 1]} : vector<8x512xf32> to vector<8x128xf32>
    %151 = arith.negf %150 : vector<8x128xf32>
    %152 = math.exp %151 : vector<8x128xf32>
    %cst_54 = arith.constant 1.000000e+00 : f32
    %153 = vector.broadcast %cst_54 : f32 to vector<8x128xf32>
    %154 = arith.addf %153, %152 : vector<8x128xf32>
    %155 = arith.divf %153, %154 : vector<8x128xf32>
    %156 = vector.extract_strided_slice %143 {offsets = [0, 256], sizes = [8, 128], strides = [1, 1]} : vector<8x512xf32> to vector<8x128xf32>
    %157 = math.tanh %156 : vector<8x128xf32>
    %158 = vector.extract_strided_slice %143 {offsets = [0, 384], sizes = [8, 128], strides = [1, 1]} : vector<8x512xf32> to vector<8x128xf32>
    %159 = arith.negf %158 : vector<8x128xf32>
    %160 = math.exp %159 : vector<8x128xf32>
    %cst_55 = arith.constant 1.000000e+00 : f32
    %161 = vector.broadcast %cst_55 : f32 to vector<8x128xf32>
    %162 = arith.addf %161, %160 : vector<8x128xf32>
    %163 = arith.divf %161, %162 : vector<8x128xf32>
    %164 = arith.mulf %155, %134 : vector<8x128xf32>
    %165 = arith.mulf %149, %157 : vector<8x128xf32>
    %166 = arith.addf %164, %165 : vector<8x128xf32>
    %167 = math.tanh %166 : vector<8x128xf32>
    %168 = arith.mulf %163, %167 : vector<8x128xf32>
    %169 = arith.truncf %168 : vector<8x128xf32> to vector<8x128xbf16>
    %c32_56 = arith.constant 32 : index
    %c0_57 = arith.constant 0 : index
    %170 = vector.load %arg6[%c32_56, %c0_57] : memref<192x128xbf16, #tpu.memory_space<vmem>>, vector<8x128xbf16>
    tpu.vector_store %arg6[%c32_56, %c0_57], %169 {strides = array<i32>} : memref<192x128xbf16, #tpu.memory_space<vmem>>, vector<8x128xbf16>,
    %c40 = arith.constant 40 : index
    %c0_58 = arith.constant 0 : index
    %171 = vector.load %arg7[%c40, %c0_58] : memref<64x512xf32, #tpu.memory_space<vmem>>, vector<8x512xf32>
    %172 = arith.truncf %168 : vector<8x128xf32> to vector<8x128xbf16>
    %c0_59 = arith.constant 0 : index
    %c0_60 = arith.constant 0 : index
    %173 = vector.load %arg2[%c0_59, %c0_60] : memref<128x512xbf16, #tpu.memory_space<vmem>>, vector<128x512xbf16>
    %cst_61 = arith.constant dense<0.000000e+00> : vector<8x512xf32>
    %174 = tpu.matmul %172, %173, %cst_61 {dimension_numbers = #tpu.dot_dimension_numbers<[1], [0], [0], [1], [0, 0, 1, 1], [], []>} : vector<8x128xbf16>, vector<128x512xbf16>, vector<8x512xf32> -> vector<8x512xf32>
    %175 = arith.addf %171, %174 : vector<8x512xf32>
    %176 = vector.extract_strided_slice %175 {offsets = [0, 0], sizes = [8, 128], strides = [1, 1]} : vector<8x512xf32> to vector<8x128xf32>
    %177 = arith.negf %176 : vector<8x128xf32>
    %178 = math.exp %177 : vector<8x128xf32>
    %cst_62 = arith.constant 1.000000e+00 : f32
    %179 = vector.broadcast %cst_62 : f32 to vector<8x128xf32>
    %180 = arith.addf %179, %178 : vector<8x128xf32>
    %181 = arith.divf %179, %180 : vector<8x128xf32>
    %182 = vector.extract_strided_slice %175 {offsets = [0, 128], sizes = [8, 128], strides = [1, 1]} : vector<8x512xf32> to vector<8x128xf32>
    %183 = arith.negf %182 : vector<8x128xf32>
    %184 = math.exp %183 : vector<8x128xf32>
    %cst_63 = arith.constant 1.000000e+00 : f32
    %185 = vector.broadcast %cst_63 : f32 to vector<8x128xf32>
    %186 = arith.addf %185, %184 : vector<8x128xf32>
    %187 = arith.divf %185, %186 : vector<8x128xf32>
    %188 = vector.extract_strided_slice %175 {offsets = [0, 256], sizes = [8, 128], strides = [1, 1]} : vector<8x512xf32> to vector<8x128xf32>
    %189 = math.tanh %188 : vector<8x128xf32>
    %190 = vector.extract_strided_slice %175 {offsets = [0, 384], sizes = [8, 128], strides = [1, 1]} : vector<8x512xf32> to vector<8x128xf32>
    %191 = arith.negf %190 : vector<8x128xf32>
    %192 = math.exp %191 : vector<8x128xf32>
    %cst_64 = arith.constant 1.000000e+00 : f32
    %193 = vector.broadcast %cst_64 : f32 to vector<8x128xf32>
    %194 = arith.addf %193, %192 : vector<8x128xf32>
    %195 = arith.divf %193, %194 : vector<8x128xf32>
    %196 = arith.mulf %187, %166 : vector<8x128xf32>
    %197 = arith.mulf %181, %189 : vector<8x128xf32>
    %198 = arith.addf %196, %197 : vector<8x128xf32>
    %199 = math.tanh %198 : vector<8x128xf32>
    %200 = arith.mulf %195, %199 : vector<8x128xf32>
    %201 = arith.truncf %200 : vector<8x128xf32> to vector<8x128xbf16>
    %c40_65 = arith.constant 40 : index
    %c0_66 = arith.constant 0 : index
    %202 = vector.load %arg6[%c40_65, %c0_66] : memref<192x128xbf16, #tpu.memory_space<vmem>>, vector<8x128xbf16>
    tpu.vector_store %arg6[%c40_65, %c0_66], %201 {strides = array<i32>} : memref<192x128xbf16, #tpu.memory_space<vmem>>, vector<8x128xbf16>,
    %c48 = arith.constant 48 : index
    %c0_67 = arith.constant 0 : index
    %203 = vector.load %arg7[%c48, %c0_67] : memref<64x512xf32, #tpu.memory_space<vmem>>, vector<8x512xf32>
    %204 = arith.truncf %200 : vector<8x128xf32> to vector<8x128xbf16>
    %c0_68 = arith.constant 0 : index
    %c0_69 = arith.constant 0 : index
    %205 = vector.load %arg2[%c0_68, %c0_69] : memref<128x512xbf16, #tpu.memory_space<vmem>>, vector<128x512xbf16>
    %cst_70 = arith.constant dense<0.000000e+00> : vector<8x512xf32>
    %206 = tpu.matmul %204, %205, %cst_70 {dimension_numbers = #tpu.dot_dimension_numbers<[1], [0], [0], [1], [0, 0, 1, 1], [], []>} : vector<8x128xbf16>, vector<128x512xbf16>, vector<8x512xf32> -> vector<8x512xf32>
    %207 = arith.addf %203, %206 : vector<8x512xf32>
    %208 = vector.extract_strided_slice %207 {offsets = [0, 0], sizes = [8, 128], strides = [1, 1]} : vector<8x512xf32> to vector<8x128xf32>
    %209 = arith.negf %208 : vector<8x128xf32>
    %210 = math.exp %209 : vector<8x128xf32>
    %cst_71 = arith.constant 1.000000e+00 : f32
    %211 = vector.broadcast %cst_71 : f32 to vector<8x128xf32>
    %212 = arith.addf %211, %210 : vector<8x128xf32>
    %213 = arith.divf %211, %212 : vector<8x128xf32>
    %214 = vector.extract_strided_slice %207 {offsets = [0, 128], sizes = [8, 128], strides = [1, 1]} : vector<8x512xf32> to vector<8x128xf32>
    %215 = arith.negf %214 : vector<8x128xf32>
    %216 = math.exp %215 : vector<8x128xf32>
    %cst_72 = arith.constant 1.000000e+00 : f32
    %217 = vector.broadcast %cst_72 : f32 to vector<8x128xf32>
    %218 = arith.addf %217, %216 : vector<8x128xf32>
    %219 = arith.divf %217, %218 : vector<8x128xf32>
    %220 = vector.extract_strided_slice %207 {offsets = [0, 256], sizes = [8, 128], strides = [1, 1]} : vector<8x512xf32> to vector<8x128xf32>
    %221 = math.tanh %220 : vector<8x128xf32>
    %222 = vector.extract_strided_slice %207 {offsets = [0, 384], sizes = [8, 128], strides = [1, 1]} : vector<8x512xf32> to vector<8x128xf32>
    %223 = arith.negf %222 : vector<8x128xf32>
    %224 = math.exp %223 : vector<8x128xf32>
    %cst_73 = arith.constant 1.000000e+00 : f32
    %225 = vector.broadcast %cst_73 : f32 to vector<8x128xf32>
    %226 = arith.addf %225, %224 : vector<8x128xf32>
    %227 = arith.divf %225, %226 : vector<8x128xf32>
    %228 = arith.mulf %219, %198 : vector<8x128xf32>
    %229 = arith.mulf %213, %221 : vector<8x128xf32>
    %230 = arith.addf %228, %229 : vector<8x128xf32>
    %231 = math.tanh %230 : vector<8x128xf32>
    %232 = arith.mulf %227, %231 : vector<8x128xf32>
    %233 = arith.truncf %232 : vector<8x128xf32> to vector<8x128xbf16>
    %c48_74 = arith.constant 48 : index
    %c0_75 = arith.constant 0 : index
    %234 = vector.load %arg6[%c48_74, %c0_75] : memref<192x128xbf16, #tpu.memory_space<vmem>>, vector<8x128xbf16>
    tpu.vector_store %arg6[%c48_74, %c0_75], %233 {strides = array<i32>} : memref<192x128xbf16, #tpu.memory_space<vmem>>, vector<8x128xbf16>,
    %c56 = arith.constant 56 : index
    %c0_76 = arith.constant 0 : index
    %235 = vector.load %arg7[%c56, %c0_76] : memref<64x512xf32, #tpu.memory_space<vmem>>, vector<8x512xf32>
    %236 = arith.truncf %232 : vector<8x128xf32> to vector<8x128xbf16>
    %c0_77 = arith.constant 0 : index
    %c0_78 = arith.constant 0 : index
    %237 = vector.load %arg2[%c0_77, %c0_78] : memref<128x512xbf16, #tpu.memory_space<vmem>>, vector<128x512xbf16>
    %cst_79 = arith.constant dense<0.000000e+00> : vector<8x512xf32>
    %238 = tpu.matmul %236, %237, %cst_79 {dimension_numbers = #tpu.dot_dimension_numbers<[1], [0], [0], [1], [0, 0, 1, 1], [], []>} : vector<8x128xbf16>, vector<128x512xbf16>, vector<8x512xf32> -> vector<8x512xf32>
    %239 = arith.addf %235, %238 : vector<8x512xf32>
    %240 = vector.extract_strided_slice %239 {offsets = [0, 0], sizes = [8, 128], strides = [1, 1]} : vector<8x512xf32> to vector<8x128xf32>
    %241 = arith.negf %240 : vector<8x128xf32>
    %242 = math.exp %241 : vector<8x128xf32>
    %cst_80 = arith.constant 1.000000e+00 : f32
    %243 = vector.broadcast %cst_80 : f32 to vector<8x128xf32>
    %244 = arith.addf %243, %242 : vector<8x128xf32>
    %245 = arith.divf %243, %244 : vector<8x128xf32>
    %246 = vector.extract_strided_slice %239 {offsets = [0, 128], sizes = [8, 128], strides = [1, 1]} : vector<8x512xf32> to vector<8x128xf32>
    %247 = arith.negf %246 : vector<8x128xf32>
    %248 = math.exp %247 : vector<8x128xf32>
    %cst_81 = arith.constant 1.000000e+00 : f32
    %249 = vector.broadcast %cst_81 : f32 to vector<8x128xf32>
    %250 = arith.addf %249, %248 : vector<8x128xf32>
    %251 = arith.divf %249, %250 : vector<8x128xf32>
    %252 = vector.extract_strided_slice %239 {offsets = [0, 256], sizes = [8, 128], strides = [1, 1]} : vector<8x512xf32> to vector<8x128xf32>
    %253 = math.tanh %252 : vector<8x128xf32>
    %254 = vector.extract_strided_slice %239 {offsets = [0, 384], sizes = [8, 128], strides = [1, 1]} : vector<8x512xf32> to vector<8x128xf32>
    %255 = arith.negf %254 : vector<8x128xf32>
    %256 = math.exp %255 : vector<8x128xf32>
    %cst_82 = arith.constant 1.000000e+00 : f32
    %257 = vector.broadcast %cst_82 : f32 to vector<8x128xf32>
    %258 = arith.addf %257, %256 : vector<8x128xf32>
    %259 = arith.divf %257, %258 : vector<8x128xf32>
    %260 = arith.mulf %251, %230 : vector<8x128xf32>
    %261 = arith.mulf %245, %253 : vector<8x128xf32>
    %262 = arith.addf %260, %261 : vector<8x128xf32>
    %263 = math.tanh %262 : vector<8x128xf32>
    %264 = arith.mulf %259, %263 : vector<8x128xf32>
    %265 = arith.truncf %264 : vector<8x128xf32> to vector<8x128xbf16>
    %c56_83 = arith.constant 56 : index
    %c0_84 = arith.constant 0 : index
    %266 = vector.load %arg6[%c56_83, %c0_84] : memref<192x128xbf16, #tpu.memory_space<vmem>>, vector<8x128xbf16>
    tpu.vector_store %arg6[%c56_83, %c0_84], %265 {strides = array<i32>} : memref<192x128xbf16, #tpu.memory_space<vmem>>, vector<8x128xbf16>,
    %267 = tpu.concatenate %262, %3 in 1 : vector<8x128xf32>, vector<8x128xf32> -> vector<8x256xf32>
    %268 = arith.truncf %267 : vector<8x256xf32> to vector<8x256xbf16>
    %c0_85 = arith.constant 0 : index
    %c0_86 = arith.constant 0 : index
    %269 = vector.load %arg4[%c0_85, %c0_86] : memref<256x512xbf16, #tpu.memory_space<vmem>>, vector<256x512xbf16>
    %cst_87 = arith.constant dense<0.000000e+00> : vector<8x512xf32>
    %270 = tpu.matmul %268, %269, %cst_87 {dimension_numbers = #tpu.dot_dimension_numbers<[1], [0], [0], [1], [0, 0, 1, 1], [], []>} : vector<8x256xbf16>, vector<256x512xbf16>, vector<8x512xf32> -> vector<8x512xf32>
    %271 = vector.broadcast %1 : vector<1x512xf32> to vector<8x512xf32>
    %272 = arith.addf %270, %271 : vector<8x512xf32>
    %273 = vector.extract_strided_slice %272 {offsets = [0, 0], sizes = [8, 128], strides = [1, 1]} : vector<8x512xf32> to vector<8x128xf32>
    %274 = arith.negf %273 : vector<8x128xf32>
    %275 = math.exp %274 : vector<8x128xf32>
    %cst_88 = arith.constant 1.000000e+00 : f32
    %276 = vector.broadcast %cst_88 : f32 to vector<8x128xf32>
    %277 = arith.addf %276, %275 : vector<8x128xf32>
    %278 = arith.divf %276, %277 : vector<8x128xf32>
    %279 = vector.extract_strided_slice %272 {offsets = [0, 128], sizes = [8, 128], strides = [1, 1]} : vector<8x512xf32> to vector<8x128xf32>
    %280 = arith.negf %279 : vector<8x128xf32>
    %281 = math.exp %280 : vector<8x128xf32>
    %cst_89 = arith.constant 1.000000e+00 : f32
    %282 = vector.broadcast %cst_89 : f32 to vector<8x128xf32>
    %283 = arith.addf %282, %281 : vector<8x128xf32>
    %284 = arith.divf %282, %283 : vector<8x128xf32>
    %285 = vector.extract_strided_slice %272 {offsets = [0, 256], sizes = [8, 128], strides = [1, 1]} : vector<8x512xf32> to vector<8x128xf32>
    %286 = math.tanh %285 : vector<8x128xf32>
    %287 = vector.extract_strided_slice %272 {offsets = [0, 384], sizes = [8, 128], strides = [1, 1]} : vector<8x512xf32> to vector<8x128xf32>
    %288 = arith.negf %287 : vector<8x128xf32>
    %289 = math.exp %288 : vector<8x128xf32>
    %cst_90 = arith.constant 1.000000e+00 : f32
    %290 = vector.broadcast %cst_90 : f32 to vector<8x128xf32>
    %291 = arith.addf %290, %289 : vector<8x128xf32>
    %292 = arith.divf %290, %291 : vector<8x128xf32>
    %293 = arith.mulf %284, %4 : vector<8x128xf32>
    %294 = arith.mulf %278, %286 : vector<8x128xf32>
    %295 = arith.addf %293, %294 : vector<8x128xf32>
    %296 = math.tanh %295 : vector<8x128xf32>
    %297 = arith.mulf %292, %296 : vector<8x128xf32>
    %c64 = arith.constant 64 : index
    %c0_91 = arith.constant 0 : index
    %298 = vector.load %arg0[%c64, %c0_91] : memref<192x128xbf16, #tpu.memory_space<vmem>>, vector<64x128xbf16>
    %c0_92 = arith.constant 0 : index
    %c0_93 = arith.constant 0 : index
    %299 = vector.load %arg1[%c0_92, %c0_93] : memref<128x512xbf16, #tpu.memory_space<vmem>>, vector<128x512xbf16>
    %cst_94 = arith.constant dense<0.000000e+00> : vector<64x512xf32>
    %300 = tpu.matmul %298, %299, %cst_94 {dimension_numbers = #tpu.dot_dimension_numbers<[1], [0], [0], [1], [0, 0, 1, 1], [], []>} : vector<64x128xbf16>, vector<128x512xbf16>, vector<64x512xf32> -> vector<64x512xf32>
    %301 = vector.broadcast %0 : vector<1x512xf32> to vector<64x512xf32>
    %302 = arith.addf %300, %301 : vector<64x512xf32>
    %c0_95 = arith.constant 0 : index
    %c0_96 = arith.constant 0 : index
    %303 = vector.load %arg7[%c0_95, %c0_96] : memref<64x512xf32, #tpu.memory_space<vmem>>, vector<64x512xf32>
    tpu.vector_store %arg7[%c0_95, %c0_96], %302 {strides = array<i32>} : memref<64x512xf32, #tpu.memory_space<vmem>>, vector<64x512xf32>,
    %c0_97 = arith.constant 0 : index
    %c0_98 = arith.constant 0 : index
    %304 = vector.load %arg7[%c0_97, %c0_98] : memref<64x512xf32, #tpu.memory_space<vmem>>, vector<8x512xf32>
    %305 = arith.truncf %264 : vector<8x128xf32> to vector<8x128xbf16>
    %c0_99 = arith.constant 0 : index
    %c0_100 = arith.constant 0 : index
    %306 = vector.load %arg2[%c0_99, %c0_100] : memref<128x512xbf16, #tpu.memory_space<vmem>>, vector<128x512xbf16>
    %cst_101 = arith.constant dense<0.000000e+00> : vector<8x512xf32>
    %307 = tpu.matmul %305, %306, %cst_101 {dimension_numbers = #tpu.dot_dimension_numbers<[1], [0], [0], [1], [0, 0, 1, 1], [], []>} : vector<8x128xbf16>, vector<128x512xbf16>, vector<8x512xf32> -> vector<8x512xf32>
    %308 = arith.addf %304, %307 : vector<8x512xf32>
    %309 = vector.extract_strided_slice %308 {offsets = [0, 0], sizes = [8, 128], strides = [1, 1]} : vector<8x512xf32> to vector<8x128xf32>
    %310 = arith.negf %309 : vector<8x128xf32>
    %311 = math.exp %310 : vector<8x128xf32>
    %cst_102 = arith.constant 1.000000e+00 : f32
    %312 = vector.broadcast %cst_102 : f32 to vector<8x128xf32>
    %313 = arith.addf %312, %311 : vector<8x128xf32>
    %314 = arith.divf %312, %313 : vector<8x128xf32>
    %315 = vector.extract_strided_slice %308 {offsets = [0, 128], sizes = [8, 128], strides = [1, 1]} : vector<8x512xf32> to vector<8x128xf32>
    %316 = arith.negf %315 : vector<8x128xf32>
    %317 = math.exp %316 : vector<8x128xf32>
    %cst_103 = arith.constant 1.000000e+00 : f32
    %318 = vector.broadcast %cst_103 : f32 to vector<8x128xf32>
    %319 = arith.addf %318, %317 : vector<8x128xf32>
    %320 = arith.divf %318, %319 : vector<8x128xf32>
    %321 = vector.extract_strided_slice %308 {offsets = [0, 256], sizes = [8, 128], strides = [1, 1]} : vector<8x512xf32> to vector<8x128xf32>
    %322 = math.tanh %321 : vector<8x128xf32>
    %323 = vector.extract_strided_slice %308 {offsets = [0, 384], sizes = [8, 128], strides = [1, 1]} : vector<8x512xf32> to vector<8x128xf32>
    %324 = arith.negf %323 : vector<8x128xf32>
    %325 = math.exp %324 : vector<8x128xf32>
    %cst_104 = arith.constant 1.000000e+00 : f32
    %326 = vector.broadcast %cst_104 : f32 to vector<8x128xf32>
    %327 = arith.addf %326, %325 : vector<8x128xf32>
    %328 = arith.divf %326, %327 : vector<8x128xf32>
    %329 = arith.mulf %320, %295 : vector<8x128xf32>
    %330 = arith.mulf %314, %322 : vector<8x128xf32>
    %331 = arith.addf %329, %330 : vector<8x128xf32>
    %332 = math.tanh %331 : vector<8x128xf32>
    %333 = arith.mulf %328, %332 : vector<8x128xf32>
    %334 = arith.truncf %333 : vector<8x128xf32> to vector<8x128xbf16>
    %c64_105 = arith.constant 64 : index
    %c0_106 = arith.constant 0 : index
    %335 = vector.load %arg6[%c64_105, %c0_106] : memref<192x128xbf16, #tpu.memory_space<vmem>>, vector<8x128xbf16>
    tpu.vector_store %arg6[%c64_105, %c0_106], %334 {strides = array<i32>} : memref<192x128xbf16, #tpu.memory_space<vmem>>, vector<8x128xbf16>,
    %c8_107 = arith.constant 8 : index
    %c0_108 = arith.constant 0 : index
    %336 = vector.load %arg7[%c8_107, %c0_108] : memref<64x512xf32, #tpu.memory_space<vmem>>, vector<8x512xf32>
    %337 = arith.truncf %333 : vector<8x128xf32> to vector<8x128xbf16>
    %c0_109 = arith.constant 0 : index
    %c0_110 = arith.constant 0 : index
    %338 = vector.load %arg2[%c0_109, %c0_110] : memref<128x512xbf16, #tpu.memory_space<vmem>>, vector<128x512xbf16>
    %cst_111 = arith.constant dense<0.000000e+00> : vector<8x512xf32>
    %339 = tpu.matmul %337, %338, %cst_111 {dimension_numbers = #tpu.dot_dimension_numbers<[1], [0], [0], [1], [0, 0, 1, 1], [], []>} : vector<8x128xbf16>, vector<128x512xbf16>, vector<8x512xf32> -> vector<8x512xf32>
    %340 = arith.addf %336, %339 : vector<8x512xf32>
    %341 = vector.extract_strided_slice %340 {offsets = [0, 0], sizes = [8, 128], strides = [1, 1]} : vector<8x512xf32> to vector<8x128xf32>
    %342 = arith.negf %341 : vector<8x128xf32>
    %343 = math.exp %342 : vector<8x128xf32>
    %cst_112 = arith.constant 1.000000e+00 : f32
    %344 = vector.broadcast %cst_112 : f32 to vector<8x128xf32>
    %345 = arith.addf %344, %343 : vector<8x128xf32>
    %346 = arith.divf %344, %345 : vector<8x128xf32>
    %347 = vector.extract_strided_slice %340 {offsets = [0, 128], sizes = [8, 128], strides = [1, 1]} : vector<8x512xf32> to vector<8x128xf32>
    %348 = arith.negf %347 : vector<8x128xf32>
    %349 = math.exp %348 : vector<8x128xf32>
    %cst_113 = arith.constant 1.000000e+00 : f32
    %350 = vector.broadcast %cst_113 : f32 to vector<8x128xf32>
    %351 = arith.addf %350, %349 : vector<8x128xf32>
    %352 = arith.divf %350, %351 : vector<8x128xf32>
    %353 = vector.extract_strided_slice %340 {offsets = [0, 256], sizes = [8, 128], strides = [1, 1]} : vector<8x512xf32> to vector<8x128xf32>
    %354 = math.tanh %353 : vector<8x128xf32>
    %355 = vector.extract_strided_slice %340 {offsets = [0, 384], sizes = [8, 128], strides = [1, 1]} : vector<8x512xf32> to vector<8x128xf32>
    %356 = arith.negf %355 : vector<8x128xf32>
    %357 = math.exp %356 : vector<8x128xf32>
    %cst_114 = arith.constant 1.000000e+00 : f32
    %358 = vector.broadcast %cst_114 : f32 to vector<8x128xf32>
    %359 = arith.addf %358, %357 : vector<8x128xf32>
    %360 = arith.divf %358, %359 : vector<8x128xf32>
    %361 = arith.mulf %352, %331 : vector<8x128xf32>
    %362 = arith.mulf %346, %354 : vector<8x128xf32>
    %363 = arith.addf %361, %362 : vector<8x128xf32>
    %364 = math.tanh %363 : vector<8x128xf32>
    %365 = arith.mulf %360, %364 : vector<8x128xf32>
    %366 = arith.truncf %365 : vector<8x128xf32> to vector<8x128xbf16>
    %c72 = arith.constant 72 : index
    %c0_115 = arith.constant 0 : index
    %367 = vector.load %arg6[%c72, %c0_115] : memref<192x128xbf16, #tpu.memory_space<vmem>>, vector<8x128xbf16>
    tpu.vector_store %arg6[%c72, %c0_115], %366 {strides = array<i32>} : memref<192x128xbf16, #tpu.memory_space<vmem>>, vector<8x128xbf16>,
    %c16_116 = arith.constant 16 : index
    %c0_117 = arith.constant 0 : index
    %368 = vector.load %arg7[%c16_116, %c0_117] : memref<64x512xf32, #tpu.memory_space<vmem>>, vector<8x512xf32>
    %369 = arith.truncf %365 : vector<8x128xf32> to vector<8x128xbf16>
    %c0_118 = arith.constant 0 : index
    %c0_119 = arith.constant 0 : index
    %370 = vector.load %arg2[%c0_118, %c0_119] : memref<128x512xbf16, #tpu.memory_space<vmem>>, vector<128x512xbf16>
    %cst_120 = arith.constant dense<0.000000e+00> : vector<8x512xf32>
    %371 = tpu.matmul %369, %370, %cst_120 {dimension_numbers = #tpu.dot_dimension_numbers<[1], [0], [0], [1], [0, 0, 1, 1], [], []>} : vector<8x128xbf16>, vector<128x512xbf16>, vector<8x512xf32> -> vector<8x512xf32>
    %372 = arith.addf %368, %371 : vector<8x512xf32>
    %373 = vector.extract_strided_slice %372 {offsets = [0, 0], sizes = [8, 128], strides = [1, 1]} : vector<8x512xf32> to vector<8x128xf32>
    %374 = arith.negf %373 : vector<8x128xf32>
    %375 = math.exp %374 : vector<8x128xf32>
    %cst_121 = arith.constant 1.000000e+00 : f32
    %376 = vector.broadcast %cst_121 : f32 to vector<8x128xf32>
    %377 = arith.addf %376, %375 : vector<8x128xf32>
    %378 = arith.divf %376, %377 : vector<8x128xf32>
    %379 = vector.extract_strided_slice %372 {offsets = [0, 128], sizes = [8, 128], strides = [1, 1]} : vector<8x512xf32> to vector<8x128xf32>
    %380 = arith.negf %379 : vector<8x128xf32>
    %381 = math.exp %380 : vector<8x128xf32>
    %cst_122 = arith.constant 1.000000e+00 : f32
    %382 = vector.broadcast %cst_122 : f32 to vector<8x128xf32>
    %383 = arith.addf %382, %381 : vector<8x128xf32>
    %384 = arith.divf %382, %383 : vector<8x128xf32>
    %385 = vector.extract_strided_slice %372 {offsets = [0, 256], sizes = [8, 128], strides = [1, 1]} : vector<8x512xf32> to vector<8x128xf32>
    %386 = math.tanh %385 : vector<8x128xf32>
    %387 = vector.extract_strided_slice %372 {offsets = [0, 384], sizes = [8, 128], strides = [1, 1]} : vector<8x512xf32> to vector<8x128xf32>
    %388 = arith.negf %387 : vector<8x128xf32>
    %389 = math.exp %388 : vector<8x128xf32>
    %cst_123 = arith.constant 1.000000e+00 : f32
    %390 = vector.broadcast %cst_123 : f32 to vector<8x128xf32>
    %391 = arith.addf %390, %389 : vector<8x128xf32>
    %392 = arith.divf %390, %391 : vector<8x128xf32>
    %393 = arith.mulf %384, %363 : vector<8x128xf32>
    %394 = arith.mulf %378, %386 : vector<8x128xf32>
    %395 = arith.addf %393, %394 : vector<8x128xf32>
    %396 = math.tanh %395 : vector<8x128xf32>
    %397 = arith.mulf %392, %396 : vector<8x128xf32>
    %398 = arith.truncf %397 : vector<8x128xf32> to vector<8x128xbf16>
    %c80 = arith.constant 80 : index
    %c0_124 = arith.constant 0 : index
    %399 = vector.load %arg6[%c80, %c0_124] : memref<192x128xbf16, #tpu.memory_space<vmem>>, vector<8x128xbf16>
    tpu.vector_store %arg6[%c80, %c0_124], %398 {strides = array<i32>} : memref<192x128xbf16, #tpu.memory_space<vmem>>, vector<8x128xbf16>,
    %c24_125 = arith.constant 24 : index
    %c0_126 = arith.constant 0 : index
    %400 = vector.load %arg7[%c24_125, %c0_126] : memref<64x512xf32, #tpu.memory_space<vmem>>, vector<8x512xf32>
    %401 = arith.truncf %397 : vector<8x128xf32> to vector<8x128xbf16>
    %c0_127 = arith.constant 0 : index
    %c0_128 = arith.constant 0 : index
    %402 = vector.load %arg2[%c0_127, %c0_128] : memref<128x512xbf16, #tpu.memory_space<vmem>>, vector<128x512xbf16>
    %cst_129 = arith.constant dense<0.000000e+00> : vector<8x512xf32>
    %403 = tpu.matmul %401, %402, %cst_129 {dimension_numbers = #tpu.dot_dimension_numbers<[1], [0], [0], [1], [0, 0, 1, 1], [], []>} : vector<8x128xbf16>, vector<128x512xbf16>, vector<8x512xf32> -> vector<8x512xf32>
    %404 = arith.addf %400, %403 : vector<8x512xf32>
    %405 = vector.extract_strided_slice %404 {offsets = [0, 0], sizes = [8, 128], strides = [1, 1]} : vector<8x512xf32> to vector<8x128xf32>
    %406 = arith.negf %405 : vector<8x128xf32>
    %407 = math.exp %406 : vector<8x128xf32>
    %cst_130 = arith.constant 1.000000e+00 : f32
    %408 = vector.broadcast %cst_130 : f32 to vector<8x128xf32>
    %409 = arith.addf %408, %407 : vector<8x128xf32>
    %410 = arith.divf %408, %409 : vector<8x128xf32>
    %411 = vector.extract_strided_slice %404 {offsets = [0, 128], sizes = [8, 128], strides = [1, 1]} : vector<8x512xf32> to vector<8x128xf32>
    %412 = arith.negf %411 : vector<8x128xf32>
    %413 = math.exp %412 : vector<8x128xf32>
    %cst_131 = arith.constant 1.000000e+00 : f32
    %414 = vector.broadcast %cst_131 : f32 to vector<8x128xf32>
    %415 = arith.addf %414, %413 : vector<8x128xf32>
    %416 = arith.divf %414, %415 : vector<8x128xf32>
    %417 = vector.extract_strided_slice %404 {offsets = [0, 256], sizes = [8, 128], strides = [1, 1]} : vector<8x512xf32> to vector<8x128xf32>
    %418 = math.tanh %417 : vector<8x128xf32>
    %419 = vector.extract_strided_slice %404 {offsets = [0, 384], sizes = [8, 128], strides = [1, 1]} : vector<8x512xf32> to vector<8x128xf32>
    %420 = arith.negf %419 : vector<8x128xf32>
    %421 = math.exp %420 : vector<8x128xf32>
    %cst_132 = arith.constant 1.000000e+00 : f32
    %422 = vector.broadcast %cst_132 : f32 to vector<8x128xf32>
    %423 = arith.addf %422, %421 : vector<8x128xf32>
    %424 = arith.divf %422, %423 : vector<8x128xf32>
    %425 = arith.mulf %416, %395 : vector<8x128xf32>
    %426 = arith.mulf %410, %418 : vector<8x128xf32>
    %427 = arith.addf %425, %426 : vector<8x128xf32>
    %428 = math.tanh %427 : vector<8x128xf32>
    %429 = arith.mulf %424, %428 : vector<8x128xf32>
    %430 = arith.truncf %429 : vector<8x128xf32> to vector<8x128xbf16>
    %c88 = arith.constant 88 : index
    %c0_133 = arith.constant 0 : index
    %431 = vector.load %arg6[%c88, %c0_133] : memref<192x128xbf16, #tpu.memory_space<vmem>>, vector<8x128xbf16>
    tpu.vector_store %arg6[%c88, %c0_133], %430 {strides = array<i32>} : memref<192x128xbf16, #tpu.memory_space<vmem>>, vector<8x128xbf16>,
    %c32_134 = arith.constant 32 : index
    %c0_135 = arith.constant 0 : index
    %432 = vector.load %arg7[%c32_134, %c0_135] : memref<64x512xf32, #tpu.memory_space<vmem>>, vector<8x512xf32>
    %433 = arith.truncf %429 : vector<8x128xf32> to vector<8x128xbf16>
    %c0_136 = arith.constant 0 : index
    %c0_137 = arith.constant 0 : index
    %434 = vector.load %arg2[%c0_136, %c0_137] : memref<128x512xbf16, #tpu.memory_space<vmem>>, vector<128x512xbf16>
    %cst_138 = arith.constant dense<0.000000e+00> : vector<8x512xf32>
    %435 = tpu.matmul %433, %434, %cst_138 {dimension_numbers = #tpu.dot_dimension_numbers<[1], [0], [0], [1], [0, 0, 1, 1], [], []>} : vector<8x128xbf16>, vector<128x512xbf16>, vector<8x512xf32> -> vector<8x512xf32>
    %436 = arith.addf %432, %435 : vector<8x512xf32>
    %437 = vector.extract_strided_slice %436 {offsets = [0, 0], sizes = [8, 128], strides = [1, 1]} : vector<8x512xf32> to vector<8x128xf32>
    %438 = arith.negf %437 : vector<8x128xf32>
    %439 = math.exp %438 : vector<8x128xf32>
    %cst_139 = arith.constant 1.000000e+00 : f32
    %440 = vector.broadcast %cst_139 : f32 to vector<8x128xf32>
    %441 = arith.addf %440, %439 : vector<8x128xf32>
    %442 = arith.divf %440, %441 : vector<8x128xf32>
    %443 = vector.extract_strided_slice %436 {offsets = [0, 128], sizes = [8, 128], strides = [1, 1]} : vector<8x512xf32> to vector<8x128xf32>
    %444 = arith.negf %443 : vector<8x128xf32>
    %445 = math.exp %444 : vector<8x128xf32>
    %cst_140 = arith.constant 1.000000e+00 : f32
    %446 = vector.broadcast %cst_140 : f32 to vector<8x128xf32>
    %447 = arith.addf %446, %445 : vector<8x128xf32>
    %448 = arith.divf %446, %447 : vector<8x128xf32>
    %449 = vector.extract_strided_slice %436 {offsets = [0, 256], sizes = [8, 128], strides = [1, 1]} : vector<8x512xf32> to vector<8x128xf32>
    %450 = math.tanh %449 : vector<8x128xf32>
    %451 = vector.extract_strided_slice %436 {offsets = [0, 384], sizes = [8, 128], strides = [1, 1]} : vector<8x512xf32> to vector<8x128xf32>
    %452 = arith.negf %451 : vector<8x128xf32>
    %453 = math.exp %452 : vector<8x128xf32>
    %cst_141 = arith.constant 1.000000e+00 : f32
    %454 = vector.broadcast %cst_141 : f32 to vector<8x128xf32>
    %455 = arith.addf %454, %453 : vector<8x128xf32>
    %456 = arith.divf %454, %455 : vector<8x128xf32>
    %457 = arith.mulf %448, %427 : vector<8x128xf32>
    %458 = arith.mulf %442, %450 : vector<8x128xf32>
    %459 = arith.addf %457, %458 : vector<8x128xf32>
    %460 = math.tanh %459 : vector<8x128xf32>
    %461 = arith.mulf %456, %460 : vector<8x128xf32>
    %462 = arith.truncf %461 : vector<8x128xf32> to vector<8x128xbf16>
    %c96 = arith.constant 96 : index
    %c0_142 = arith.constant 0 : index
    %463 = vector.load %arg6[%c96, %c0_142] : memref<192x128xbf16, #tpu.memory_space<vmem>>, vector<8x128xbf16>
    tpu.vector_store %arg6[%c96, %c0_142], %462 {strides = array<i32>} : memref<192x128xbf16, #tpu.memory_space<vmem>>, vector<8x128xbf16>,
    %c40_143 = arith.constant 40 : index
    %c0_144 = arith.constant 0 : index
    %464 = vector.load %arg7[%c40_143, %c0_144] : memref<64x512xf32, #tpu.memory_space<vmem>>, vector<8x512xf32>
    %465 = arith.truncf %461 : vector<8x128xf32> to vector<8x128xbf16>
    %c0_145 = arith.constant 0 : index
    %c0_146 = arith.constant 0 : index
    %466 = vector.load %arg2[%c0_145, %c0_146] : memref<128x512xbf16, #tpu.memory_space<vmem>>, vector<128x512xbf16>
    %cst_147 = arith.constant dense<0.000000e+00> : vector<8x512xf32>
    %467 = tpu.matmul %465, %466, %cst_147 {dimension_numbers = #tpu.dot_dimension_numbers<[1], [0], [0], [1], [0, 0, 1, 1], [], []>} : vector<8x128xbf16>, vector<128x512xbf16>, vector<8x512xf32> -> vector<8x512xf32>
    %468 = arith.addf %464, %467 : vector<8x512xf32>
    %469 = vector.extract_strided_slice %468 {offsets = [0, 0], sizes = [8, 128], strides = [1, 1]} : vector<8x512xf32> to vector<8x128xf32>
    %470 = arith.negf %469 : vector<8x128xf32>
    %471 = math.exp %470 : vector<8x128xf32>
    %cst_148 = arith.constant 1.000000e+00 : f32
    %472 = vector.broadcast %cst_148 : f32 to vector<8x128xf32>
    %473 = arith.addf %472, %471 : vector<8x128xf32>
    %474 = arith.divf %472, %473 : vector<8x128xf32>
    %475 = vector.extract_strided_slice %468 {offsets = [0, 128], sizes = [8, 128], strides = [1, 1]} : vector<8x512xf32> to vector<8x128xf32>
    %476 = arith.negf %475 : vector<8x128xf32>
    %477 = math.exp %476 : vector<8x128xf32>
    %cst_149 = arith.constant 1.000000e+00 : f32
    %478 = vector.broadcast %cst_149 : f32 to vector<8x128xf32>
    %479 = arith.addf %478, %477 : vector<8x128xf32>
    %480 = arith.divf %478, %479 : vector<8x128xf32>
    %481 = vector.extract_strided_slice %468 {offsets = [0, 256], sizes = [8, 128], strides = [1, 1]} : vector<8x512xf32> to vector<8x128xf32>
    %482 = math.tanh %481 : vector<8x128xf32>
    %483 = vector.extract_strided_slice %468 {offsets = [0, 384], sizes = [8, 128], strides = [1, 1]} : vector<8x512xf32> to vector<8x128xf32>
    %484 = arith.negf %483 : vector<8x128xf32>
    %485 = math.exp %484 : vector<8x128xf32>
    %cst_150 = arith.constant 1.000000e+00 : f32
    %486 = vector.broadcast %cst_150 : f32 to vector<8x128xf32>
    %487 = arith.addf %486, %485 : vector<8x128xf32>
    %488 = arith.divf %486, %487 : vector<8x128xf32>
    %489 = arith.mulf %480, %459 : vector<8x128xf32>
    %490 = arith.mulf %474, %482 : vector<8x128xf32>
    %491 = arith.addf %489, %490 : vector<8x128xf32>
    %492 = math.tanh %491 : vector<8x128xf32>
    %493 = arith.mulf %488, %492 : vector<8x128xf32>
    %494 = arith.truncf %493 : vector<8x128xf32> to vector<8x128xbf16>
    %c104 = arith.constant 104 : index
    %c0_151 = arith.constant 0 : index
    %495 = vector.load %arg6[%c104, %c0_151] : memref<192x128xbf16, #tpu.memory_space<vmem>>, vector<8x128xbf16>
    tpu.vector_store %arg6[%c104, %c0_151], %494 {strides = array<i32>} : memref<192x128xbf16, #tpu.memory_space<vmem>>, vector<8x128xbf16>,
    %c48_152 = arith.constant 48 : index
    %c0_153 = arith.constant 0 : index
    %496 = vector.load %arg7[%c48_152, %c0_153] : memref<64x512xf32, #tpu.memory_space<vmem>>, vector<8x512xf32>
    %497 = arith.truncf %493 : vector<8x128xf32> to vector<8x128xbf16>
    %c0_154 = arith.constant 0 : index
    %c0_155 = arith.constant 0 : index
    %498 = vector.load %arg2[%c0_154, %c0_155] : memref<128x512xbf16, #tpu.memory_space<vmem>>, vector<128x512xbf16>
    %cst_156 = arith.constant dense<0.000000e+00> : vector<8x512xf32>
    %499 = tpu.matmul %497, %498, %cst_156 {dimension_numbers = #tpu.dot_dimension_numbers<[1], [0], [0], [1], [0, 0, 1, 1], [], []>} : vector<8x128xbf16>, vector<128x512xbf16>, vector<8x512xf32> -> vector<8x512xf32>
    %500 = arith.addf %496, %499 : vector<8x512xf32>
    %501 = vector.extract_strided_slice %500 {offsets = [0, 0], sizes = [8, 128], strides = [1, 1]} : vector<8x512xf32> to vector<8x128xf32>
    %502 = arith.negf %501 : vector<8x128xf32>
    %503 = math.exp %502 : vector<8x128xf32>
    %cst_157 = arith.constant 1.000000e+00 : f32
    %504 = vector.broadcast %cst_157 : f32 to vector<8x128xf32>
    %505 = arith.addf %504, %503 : vector<8x128xf32>
    %506 = arith.divf %504, %505 : vector<8x128xf32>
    %507 = vector.extract_strided_slice %500 {offsets = [0, 128], sizes = [8, 128], strides = [1, 1]} : vector<8x512xf32> to vector<8x128xf32>
    %508 = arith.negf %507 : vector<8x128xf32>
    %509 = math.exp %508 : vector<8x128xf32>
    %cst_158 = arith.constant 1.000000e+00 : f32
    %510 = vector.broadcast %cst_158 : f32 to vector<8x128xf32>
    %511 = arith.addf %510, %509 : vector<8x128xf32>
    %512 = arith.divf %510, %511 : vector<8x128xf32>
    %513 = vector.extract_strided_slice %500 {offsets = [0, 256], sizes = [8, 128], strides = [1, 1]} : vector<8x512xf32> to vector<8x128xf32>
    %514 = math.tanh %513 : vector<8x128xf32>
    %515 = vector.extract_strided_slice %500 {offsets = [0, 384], sizes = [8, 128], strides = [1, 1]} : vector<8x512xf32> to vector<8x128xf32>
    %516 = arith.negf %515 : vector<8x128xf32>
    %517 = math.exp %516 : vector<8x128xf32>
    %cst_159 = arith.constant 1.000000e+00 : f32
    %518 = vector.broadcast %cst_159 : f32 to vector<8x128xf32>
    %519 = arith.addf %518, %517 : vector<8x128xf32>
    %520 = arith.divf %518, %519 : vector<8x128xf32>
    %521 = arith.mulf %512, %491 : vector<8x128xf32>
    %522 = arith.mulf %506, %514 : vector<8x128xf32>
    %523 = arith.addf %521, %522 : vector<8x128xf32>
    %524 = math.tanh %523 : vector<8x128xf32>
    %525 = arith.mulf %520, %524 : vector<8x128xf32>
    %526 = arith.truncf %525 : vector<8x128xf32> to vector<8x128xbf16>
    %c112 = arith.constant 112 : index
    %c0_160 = arith.constant 0 : index
    %527 = vector.load %arg6[%c112, %c0_160] : memref<192x128xbf16, #tpu.memory_space<vmem>>, vector<8x128xbf16>
    tpu.vector_store %arg6[%c112, %c0_160], %526 {strides = array<i32>} : memref<192x128xbf16, #tpu.memory_space<vmem>>, vector<8x128xbf16>,
    %c56_161 = arith.constant 56 : index
    %c0_162 = arith.constant 0 : index
    %528 = vector.load %arg7[%c56_161, %c0_162] : memref<64x512xf32, #tpu.memory_space<vmem>>, vector<8x512xf32>
    %529 = arith.truncf %525 : vector<8x128xf32> to vector<8x128xbf16>
    %c0_163 = arith.constant 0 : index
    %c0_164 = arith.constant 0 : index
    %530 = vector.load %arg2[%c0_163, %c0_164] : memref<128x512xbf16, #tpu.memory_space<vmem>>, vector<128x512xbf16>
    %cst_165 = arith.constant dense<0.000000e+00> : vector<8x512xf32>
    %531 = tpu.matmul %529, %530, %cst_165 {dimension_numbers = #tpu.dot_dimension_numbers<[1], [0], [0], [1], [0, 0, 1, 1], [], []>} : vector<8x128xbf16>, vector<128x512xbf16>, vector<8x512xf32> -> vector<8x512xf32>
    %532 = arith.addf %528, %531 : vector<8x512xf32>
    %533 = vector.extract_strided_slice %532 {offsets = [0, 0], sizes = [8, 128], strides = [1, 1]} : vector<8x512xf32> to vector<8x128xf32>
    %534 = arith.negf %533 : vector<8x128xf32>
    %535 = math.exp %534 : vector<8x128xf32>
    %cst_166 = arith.constant 1.000000e+00 : f32
    %536 = vector.broadcast %cst_166 : f32 to vector<8x128xf32>
    %537 = arith.addf %536, %535 : vector<8x128xf32>
    %538 = arith.divf %536, %537 : vector<8x128xf32>
    %539 = vector.extract_strided_slice %532 {offsets = [0, 128], sizes = [8, 128], strides = [1, 1]} : vector<8x512xf32> to vector<8x128xf32>
    %540 = arith.negf %539 : vector<8x128xf32>
    %541 = math.exp %540 : vector<8x128xf32>
    %cst_167 = arith.constant 1.000000e+00 : f32
    %542 = vector.broadcast %cst_167 : f32 to vector<8x128xf32>
    %543 = arith.addf %542, %541 : vector<8x128xf32>
    %544 = arith.divf %542, %543 : vector<8x128xf32>
    %545 = vector.extract_strided_slice %532 {offsets = [0, 256], sizes = [8, 128], strides = [1, 1]} : vector<8x512xf32> to vector<8x128xf32>
    %546 = math.tanh %545 : vector<8x128xf32>
    %547 = vector.extract_strided_slice %532 {offsets = [0, 384], sizes = [8, 128], strides = [1, 1]} : vector<8x512xf32> to vector<8x128xf32>
    %548 = arith.negf %547 : vector<8x128xf32>
    %549 = math.exp %548 : vector<8x128xf32>
    %cst_168 = arith.constant 1.000000e+00 : f32
    %550 = vector.broadcast %cst_168 : f32 to vector<8x128xf32>
    %551 = arith.addf %550, %549 : vector<8x128xf32>
    %552 = arith.divf %550, %551 : vector<8x128xf32>
    %553 = arith.mulf %544, %523 : vector<8x128xf32>
    %554 = arith.mulf %538, %546 : vector<8x128xf32>
    %555 = arith.addf %553, %554 : vector<8x128xf32>
    %556 = math.tanh %555 : vector<8x128xf32>
    %557 = arith.mulf %552, %556 : vector<8x128xf32>
    %558 = arith.truncf %557 : vector<8x128xf32> to vector<8x128xbf16>
    %c120 = arith.constant 120 : index
    %c0_169 = arith.constant 0 : index
    %559 = vector.load %arg6[%c120, %c0_169] : memref<192x128xbf16, #tpu.memory_space<vmem>>, vector<8x128xbf16>
    tpu.vector_store %arg6[%c120, %c0_169], %558 {strides = array<i32>} : memref<192x128xbf16, #tpu.memory_space<vmem>>, vector<8x128xbf16>,
    %560 = tpu.concatenate %555, %297 in 1 : vector<8x128xf32>, vector<8x128xf32> -> vector<8x256xf32>
    %561 = arith.truncf %560 : vector<8x256xf32> to vector<8x256xbf16>
    %c0_170 = arith.constant 0 : index
    %c0_171 = arith.constant 0 : index
    %562 = vector.load %arg4[%c0_170, %c0_171] : memref<256x512xbf16, #tpu.memory_space<vmem>>, vector<256x512xbf16>
    %cst_172 = arith.constant dense<0.000000e+00> : vector<8x512xf32>
    %563 = tpu.matmul %561, %562, %cst_172 {dimension_numbers = #tpu.dot_dimension_numbers<[1], [0], [0], [1], [0, 0, 1, 1], [], []>} : vector<8x256xbf16>, vector<256x512xbf16>, vector<8x512xf32> -> vector<8x512xf32>
    %564 = vector.broadcast %1 : vector<1x512xf32> to vector<8x512xf32>
    %565 = arith.addf %563, %564 : vector<8x512xf32>
    %566 = vector.extract_strided_slice %565 {offsets = [0, 0], sizes = [8, 128], strides = [1, 1]} : vector<8x512xf32> to vector<8x128xf32>
    %567 = arith.negf %566 : vector<8x128xf32>
    %568 = math.exp %567 : vector<8x128xf32>
    %cst_173 = arith.constant 1.000000e+00 : f32
    %569 = vector.broadcast %cst_173 : f32 to vector<8x128xf32>
    %570 = arith.addf %569, %568 : vector<8x128xf32>
    %571 = arith.divf %569, %570 : vector<8x128xf32>
    %572 = vector.extract_strided_slice %565 {offsets = [0, 128], sizes = [8, 128], strides = [1, 1]} : vector<8x512xf32> to vector<8x128xf32>
    %573 = arith.negf %572 : vector<8x128xf32>
    %574 = math.exp %573 : vector<8x128xf32>
    %cst_174 = arith.constant 1.000000e+00 : f32
    %575 = vector.broadcast %cst_174 : f32 to vector<8x128xf32>
    %576 = arith.addf %575, %574 : vector<8x128xf32>
    %577 = arith.divf %575, %576 : vector<8x128xf32>
    %578 = vector.extract_strided_slice %565 {offsets = [0, 256], sizes = [8, 128], strides = [1, 1]} : vector<8x512xf32> to vector<8x128xf32>
    %579 = math.tanh %578 : vector<8x128xf32>
    %580 = arith.mulf %577, %295 : vector<8x128xf32>
    %581 = arith.mulf %571, %579 : vector<8x128xf32>
    %582 = arith.addf %580, %581 : vector<8x128xf32>
    %c128 = arith.constant 128 : index
    %c0_175 = arith.constant 0 : index
    %583 = vector.load %arg0[%c128, %c0_175] : memref<192x128xbf16, #tpu.memory_space<vmem>>, vector<64x128xbf16>
    %c0_176 = arith.constant 0 : index
    %c0_177 = arith.constant 0 : index
    %584 = vector.load %arg1[%c0_176, %c0_177] : memref<128x512xbf16, #tpu.memory_space<vmem>>, vector<128x512xbf16>
    %cst_178 = arith.constant dense<0.000000e+00> : vector<64x512xf32>
    %585 = tpu.matmul %583, %584, %cst_178 {dimension_numbers = #tpu.dot_dimension_numbers<[1], [0], [0], [1], [0, 0, 1, 1], [], []>} : vector<64x128xbf16>, vector<128x512xbf16>, vector<64x512xf32> -> vector<64x512xf32>
    %586 = vector.broadcast %0 : vector<1x512xf32> to vector<64x512xf32>
    %587 = arith.addf %585, %586 : vector<64x512xf32>
    %c0_179 = arith.constant 0 : index
    %c0_180 = arith.constant 0 : index
    %588 = vector.load %arg7[%c0_179, %c0_180] : memref<64x512xf32, #tpu.memory_space<vmem>>, vector<64x512xf32>
    tpu.vector_store %arg7[%c0_179, %c0_180], %587 {strides = array<i32>} : memref<64x512xf32, #tpu.memory_space<vmem>>, vector<64x512xf32>,
    %c0_181 = arith.constant 0 : index
    %c0_182 = arith.constant 0 : index
    %589 = vector.load %arg7[%c0_181, %c0_182] : memref<64x512xf32, #tpu.memory_space<vmem>>, vector<8x512xf32>
    %590 = arith.truncf %557 : vector<8x128xf32> to vector<8x128xbf16>
    %c0_183 = arith.constant 0 : index
    %c0_184 = arith.constant 0 : index
    %591 = vector.load %arg2[%c0_183, %c0_184] : memref<128x512xbf16, #tpu.memory_space<vmem>>, vector<128x512xbf16>
    %cst_185 = arith.constant dense<0.000000e+00> : vector<8x512xf32>
    %592 = tpu.matmul %590, %591, %cst_185 {dimension_numbers = #tpu.dot_dimension_numbers<[1], [0], [0], [1], [0, 0, 1, 1], [], []>} : vector<8x128xbf16>, vector<128x512xbf16>, vector<8x512xf32> -> vector<8x512xf32>
    %593 = arith.addf %589, %592 : vector<8x512xf32>
    %594 = vector.extract_strided_slice %593 {offsets = [0, 0], sizes = [8, 128], strides = [1, 1]} : vector<8x512xf32> to vector<8x128xf32>
    %595 = arith.negf %594 : vector<8x128xf32>
    %596 = math.exp %595 : vector<8x128xf32>
    %cst_186 = arith.constant 1.000000e+00 : f32
    %597 = vector.broadcast %cst_186 : f32 to vector<8x128xf32>
    %598 = arith.addf %597, %596 : vector<8x128xf32>
    %599 = arith.divf %597, %598 : vector<8x128xf32>
    %600 = vector.extract_strided_slice %593 {offsets = [0, 128], sizes = [8, 128], strides = [1, 1]} : vector<8x512xf32> to vector<8x128xf32>
    %601 = arith.negf %600 : vector<8x128xf32>
    %602 = math.exp %601 : vector<8x128xf32>
    %cst_187 = arith.constant 1.000000e+00 : f32
    %603 = vector.broadcast %cst_187 : f32 to vector<8x128xf32>
    %604 = arith.addf %603, %602 : vector<8x128xf32>
    %605 = arith.divf %603, %604 : vector<8x128xf32>
    %606 = vector.extract_strided_slice %593 {offsets = [0, 256], sizes = [8, 128], strides = [1, 1]} : vector<8x512xf32> to vector<8x128xf32>
    %607 = math.tanh %606 : vector<8x128xf32>
    %608 = vector.extract_strided_slice %593 {offsets = [0, 384], sizes = [8, 128], strides = [1, 1]} : vector<8x512xf32> to vector<8x128xf32>
    %609 = arith.negf %608 : vector<8x128xf32>
    %610 = math.exp %609 : vector<8x128xf32>
    %cst_188 = arith.constant 1.000000e+00 : f32
    %611 = vector.broadcast %cst_188 : f32 to vector<8x128xf32>
    %612 = arith.addf %611, %610 : vector<8x128xf32>
    %613 = arith.divf %611, %612 : vector<8x128xf32>
    %614 = arith.mulf %605, %582 : vector<8x128xf32>
    %615 = arith.mulf %599, %607 : vector<8x128xf32>
    %616 = arith.addf %614, %615 : vector<8x128xf32>
    %617 = math.tanh %616 : vector<8x128xf32>
    %618 = arith.mulf %613, %617 : vector<8x128xf32>
    %619 = arith.truncf %618 : vector<8x128xf32> to vector<8x128xbf16>
    %c128_189 = arith.constant 128 : index
    %c0_190 = arith.constant 0 : index
    %620 = vector.load %arg6[%c128_189, %c0_190] : memref<192x128xbf16, #tpu.memory_space<vmem>>, vector<8x128xbf16>
    tpu.vector_store %arg6[%c128_189, %c0_190], %619 {strides = array<i32>} : memref<192x128xbf16, #tpu.memory_space<vmem>>, vector<8x128xbf16>,
    %c8_191 = arith.constant 8 : index
    %c0_192 = arith.constant 0 : index
    %621 = vector.load %arg7[%c8_191, %c0_192] : memref<64x512xf32, #tpu.memory_space<vmem>>, vector<8x512xf32>
    %622 = arith.truncf %618 : vector<8x128xf32> to vector<8x128xbf16>
    %c0_193 = arith.constant 0 : index
    %c0_194 = arith.constant 0 : index
    %623 = vector.load %arg2[%c0_193, %c0_194] : memref<128x512xbf16, #tpu.memory_space<vmem>>, vector<128x512xbf16>
    %cst_195 = arith.constant dense<0.000000e+00> : vector<8x512xf32>
    %624 = tpu.matmul %622, %623, %cst_195 {dimension_numbers = #tpu.dot_dimension_numbers<[1], [0], [0], [1], [0, 0, 1, 1], [], []>} : vector<8x128xbf16>, vector<128x512xbf16>, vector<8x512xf32> -> vector<8x512xf32>
    %625 = arith.addf %621, %624 : vector<8x512xf32>
    %626 = vector.extract_strided_slice %625 {offsets = [0, 0], sizes = [8, 128], strides = [1, 1]} : vector<8x512xf32> to vector<8x128xf32>
    %627 = arith.negf %626 : vector<8x128xf32>
    %628 = math.exp %627 : vector<8x128xf32>
    %cst_196 = arith.constant 1.000000e+00 : f32
    %629 = vector.broadcast %cst_196 : f32 to vector<8x128xf32>
    %630 = arith.addf %629, %628 : vector<8x128xf32>
    %631 = arith.divf %629, %630 : vector<8x128xf32>
    %632 = vector.extract_strided_slice %625 {offsets = [0, 128], sizes = [8, 128], strides = [1, 1]} : vector<8x512xf32> to vector<8x128xf32>
    %633 = arith.negf %632 : vector<8x128xf32>
    %634 = math.exp %633 : vector<8x128xf32>
    %cst_197 = arith.constant 1.000000e+00 : f32
    %635 = vector.broadcast %cst_197 : f32 to vector<8x128xf32>
    %636 = arith.addf %635, %634 : vector<8x128xf32>
    %637 = arith.divf %635, %636 : vector<8x128xf32>
    %638 = vector.extract_strided_slice %625 {offsets = [0, 256], sizes = [8, 128], strides = [1, 1]} : vector<8x512xf32> to vector<8x128xf32>
    %639 = math.tanh %638 : vector<8x128xf32>
    %640 = vector.extract_strided_slice %625 {offsets = [0, 384], sizes = [8, 128], strides = [1, 1]} : vector<8x512xf32> to vector<8x128xf32>
    %641 = arith.negf %640 : vector<8x128xf32>
    %642 = math.exp %641 : vector<8x128xf32>
    %cst_198 = arith.constant 1.000000e+00 : f32
    %643 = vector.broadcast %cst_198 : f32 to vector<8x128xf32>
    %644 = arith.addf %643, %642 : vector<8x128xf32>
    %645 = arith.divf %643, %644 : vector<8x128xf32>
    %646 = arith.mulf %637, %616 : vector<8x128xf32>
    %647 = arith.mulf %631, %639 : vector<8x128xf32>
    %648 = arith.addf %646, %647 : vector<8x128xf32>
    %649 = math.tanh %648 : vector<8x128xf32>
    %650 = arith.mulf %645, %649 : vector<8x128xf32>
    %651 = arith.truncf %650 : vector<8x128xf32> to vector<8x128xbf16>
    %c136 = arith.constant 136 : index
    %c0_199 = arith.constant 0 : index
    %652 = vector.load %arg6[%c136, %c0_199] : memref<192x128xbf16, #tpu.memory_space<vmem>>, vector<8x128xbf16>
    tpu.vector_store %arg6[%c136, %c0_199], %651 {strides = array<i32>} : memref<192x128xbf16, #tpu.memory_space<vmem>>, vector<8x128xbf16>,
    %c16_200 = arith.constant 16 : index
    %c0_201 = arith.constant 0 : index
    %653 = vector.load %arg7[%c16_200, %c0_201] : memref<64x512xf32, #tpu.memory_space<vmem>>, vector<8x512xf32>
    %654 = arith.truncf %650 : vector<8x128xf32> to vector<8x128xbf16>
    %c0_202 = arith.constant 0 : index
    %c0_203 = arith.constant 0 : index
    %655 = vector.load %arg2[%c0_202, %c0_203] : memref<128x512xbf16, #tpu.memory_space<vmem>>, vector<128x512xbf16>
    %cst_204 = arith.constant dense<0.000000e+00> : vector<8x512xf32>
    %656 = tpu.matmul %654, %655, %cst_204 {dimension_numbers = #tpu.dot_dimension_numbers<[1], [0], [0], [1], [0, 0, 1, 1], [], []>} : vector<8x128xbf16>, vector<128x512xbf16>, vector<8x512xf32> -> vector<8x512xf32>
    %657 = arith.addf %653, %656 : vector<8x512xf32>
    %658 = vector.extract_strided_slice %657 {offsets = [0, 0], sizes = [8, 128], strides = [1, 1]} : vector<8x512xf32> to vector<8x128xf32>
    %659 = arith.negf %658 : vector<8x128xf32>
    %660 = math.exp %659 : vector<8x128xf32>
    %cst_205 = arith.constant 1.000000e+00 : f32
    %661 = vector.broadcast %cst_205 : f32 to vector<8x128xf32>
    %662 = arith.addf %661, %660 : vector<8x128xf32>
    %663 = arith.divf %661, %662 : vector<8x128xf32>
    %664 = vector.extract_strided_slice %657 {offsets = [0, 128], sizes = [8, 128], strides = [1, 1]} : vector<8x512xf32> to vector<8x128xf32>
    %665 = arith.negf %664 : vector<8x128xf32>
    %666 = math.exp %665 : vector<8x128xf32>
    %cst_206 = arith.constant 1.000000e+00 : f32
    %667 = vector.broadcast %cst_206 : f32 to vector<8x128xf32>
    %668 = arith.addf %667, %666 : vector<8x128xf32>
    %669 = arith.divf %667, %668 : vector<8x128xf32>
    %670 = vector.extract_strided_slice %657 {offsets = [0, 256], sizes = [8, 128], strides = [1, 1]} : vector<8x512xf32> to vector<8x128xf32>
    %671 = math.tanh %670 : vector<8x128xf32>
    %672 = vector.extract_strided_slice %657 {offsets = [0, 384], sizes = [8, 128], strides = [1, 1]} : vector<8x512xf32> to vector<8x128xf32>
    %673 = arith.negf %672 : vector<8x128xf32>
    %674 = math.exp %673 : vector<8x128xf32>
    %cst_207 = arith.constant 1.000000e+00 : f32
    %675 = vector.broadcast %cst_207 : f32 to vector<8x128xf32>
    %676 = arith.addf %675, %674 : vector<8x128xf32>
    %677 = arith.divf %675, %676 : vector<8x128xf32>
    %678 = arith.mulf %669, %648 : vector<8x128xf32>
    %679 = arith.mulf %663, %671 : vector<8x128xf32>
    %680 = arith.addf %678, %679 : vector<8x128xf32>
    %681 = math.tanh %680 : vector<8x128xf32>
    %682 = arith.mulf %677, %681 : vector<8x128xf32>
    %683 = arith.truncf %682 : vector<8x128xf32> to vector<8x128xbf16>
    %c144 = arith.constant 144 : index
    %c0_208 = arith.constant 0 : index
    %684 = vector.load %arg6[%c144, %c0_208] : memref<192x128xbf16, #tpu.memory_space<vmem>>, vector<8x128xbf16>
    tpu.vector_store %arg6[%c144, %c0_208], %683 {strides = array<i32>} : memref<192x128xbf16, #tpu.memory_space<vmem>>, vector<8x128xbf16>,
    %c24_209 = arith.constant 24 : index
    %c0_210 = arith.constant 0 : index
    %685 = vector.load %arg7[%c24_209, %c0_210] : memref<64x512xf32, #tpu.memory_space<vmem>>, vector<8x512xf32>
    %686 = arith.truncf %682 : vector<8x128xf32> to vector<8x128xbf16>
    %c0_211 = arith.constant 0 : index
    %c0_212 = arith.constant 0 : index
    %687 = vector.load %arg2[%c0_211, %c0_212] : memref<128x512xbf16, #tpu.memory_space<vmem>>, vector<128x512xbf16>
    %cst_213 = arith.constant dense<0.000000e+00> : vector<8x512xf32>
    %688 = tpu.matmul %686, %687, %cst_213 {dimension_numbers = #tpu.dot_dimension_numbers<[1], [0], [0], [1], [0, 0, 1, 1], [], []>} : vector<8x128xbf16>, vector<128x512xbf16>, vector<8x512xf32> -> vector<8x512xf32>
    %689 = arith.addf %685, %688 : vector<8x512xf32>
    %690 = vector.extract_strided_slice %689 {offsets = [0, 0], sizes = [8, 128], strides = [1, 1]} : vector<8x512xf32> to vector<8x128xf32>
    %691 = arith.negf %690 : vector<8x128xf32>
    %692 = math.exp %691 : vector<8x128xf32>
    %cst_214 = arith.constant 1.000000e+00 : f32
    %693 = vector.broadcast %cst_214 : f32 to vector<8x128xf32>
    %694 = arith.addf %693, %692 : vector<8x128xf32>
    %695 = arith.divf %693, %694 : vector<8x128xf32>
    %696 = vector.extract_strided_slice %689 {offsets = [0, 128], sizes = [8, 128], strides = [1, 1]} : vector<8x512xf32> to vector<8x128xf32>
    %697 = arith.negf %696 : vector<8x128xf32>
    %698 = math.exp %697 : vector<8x128xf32>
    %cst_215 = arith.constant 1.000000e+00 : f32
    %699 = vector.broadcast %cst_215 : f32 to vector<8x128xf32>
    %700 = arith.addf %699, %698 : vector<8x128xf32>
    %701 = arith.divf %699, %700 : vector<8x128xf32>
    %702 = vector.extract_strided_slice %689 {offsets = [0, 256], sizes = [8, 128], strides = [1, 1]} : vector<8x512xf32> to vector<8x128xf32>
    %703 = math.tanh %702 : vector<8x128xf32>
    %704 = vector.extract_strided_slice %689 {offsets = [0, 384], sizes = [8, 128], strides = [1, 1]} : vector<8x512xf32> to vector<8x128xf32>
    %705 = arith.negf %704 : vector<8x128xf32>
    %706 = math.exp %705 : vector<8x128xf32>
    %cst_216 = arith.constant 1.000000e+00 : f32
    %707 = vector.broadcast %cst_216 : f32 to vector<8x128xf32>
    %708 = arith.addf %707, %706 : vector<8x128xf32>
    %709 = arith.divf %707, %708 : vector<8x128xf32>
    %710 = arith.mulf %701, %680 : vector<8x128xf32>
    %711 = arith.mulf %695, %703 : vector<8x128xf32>
    %712 = arith.addf %710, %711 : vector<8x128xf32>
    %713 = math.tanh %712 : vector<8x128xf32>
    %714 = arith.mulf %709, %713 : vector<8x128xf32>
    %715 = arith.truncf %714 : vector<8x128xf32> to vector<8x128xbf16>
    %c152 = arith.constant 152 : index
    %c0_217 = arith.constant 0 : index
    %716 = vector.load %arg6[%c152, %c0_217] : memref<192x128xbf16, #tpu.memory_space<vmem>>, vector<8x128xbf16>
    tpu.vector_store %arg6[%c152, %c0_217], %715 {strides = array<i32>} : memref<192x128xbf16, #tpu.memory_space<vmem>>, vector<8x128xbf16>,
    %c32_218 = arith.constant 32 : index
    %c0_219 = arith.constant 0 : index
    %717 = vector.load %arg7[%c32_218, %c0_219] : memref<64x512xf32, #tpu.memory_space<vmem>>, vector<8x512xf32>
    %718 = arith.truncf %714 : vector<8x128xf32> to vector<8x128xbf16>
    %c0_220 = arith.constant 0 : index
    %c0_221 = arith.constant 0 : index
    %719 = vector.load %arg2[%c0_220, %c0_221] : memref<128x512xbf16, #tpu.memory_space<vmem>>, vector<128x512xbf16>
    %cst_222 = arith.constant dense<0.000000e+00> : vector<8x512xf32>
    %720 = tpu.matmul %718, %719, %cst_222 {dimension_numbers = #tpu.dot_dimension_numbers<[1], [0], [0], [1], [0, 0, 1, 1], [], []>} : vector<8x128xbf16>, vector<128x512xbf16>, vector<8x512xf32> -> vector<8x512xf32>
    %721 = arith.addf %717, %720 : vector<8x512xf32>
    %722 = vector.extract_strided_slice %721 {offsets = [0, 0], sizes = [8, 128], strides = [1, 1]} : vector<8x512xf32> to vector<8x128xf32>
    %723 = arith.negf %722 : vector<8x128xf32>
    %724 = math.exp %723 : vector<8x128xf32>
    %cst_223 = arith.constant 1.000000e+00 : f32
    %725 = vector.broadcast %cst_223 : f32 to vector<8x128xf32>
    %726 = arith.addf %725, %724 : vector<8x128xf32>
    %727 = arith.divf %725, %726 : vector<8x128xf32>
    %728 = vector.extract_strided_slice %721 {offsets = [0, 128], sizes = [8, 128], strides = [1, 1]} : vector<8x512xf32> to vector<8x128xf32>
    %729 = arith.negf %728 : vector<8x128xf32>
    %730 = math.exp %729 : vector<8x128xf32>
    %cst_224 = arith.constant 1.000000e+00 : f32
    %731 = vector.broadcast %cst_224 : f32 to vector<8x128xf32>
    %732 = arith.addf %731, %730 : vector<8x128xf32>
    %733 = arith.divf %731, %732 : vector<8x128xf32>
    %734 = vector.extract_strided_slice %721 {offsets = [0, 256], sizes = [8, 128], strides = [1, 1]} : vector<8x512xf32> to vector<8x128xf32>
    %735 = math.tanh %734 : vector<8x128xf32>
    %736 = vector.extract_strided_slice %721 {offsets = [0, 384], sizes = [8, 128], strides = [1, 1]} : vector<8x512xf32> to vector<8x128xf32>
    %737 = arith.negf %736 : vector<8x128xf32>
    %738 = math.exp %737 : vector<8x128xf32>
    %cst_225 = arith.constant 1.000000e+00 : f32
    %739 = vector.broadcast %cst_225 : f32 to vector<8x128xf32>
    %740 = arith.addf %739, %738 : vector<8x128xf32>
    %741 = arith.divf %739, %740 : vector<8x128xf32>
    %742 = arith.mulf %733, %712 : vector<8x128xf32>
    %743 = arith.mulf %727, %735 : vector<8x128xf32>
    %744 = arith.addf %742, %743 : vector<8x128xf32>
    %745 = math.tanh %744 : vector<8x128xf32>
    %746 = arith.mulf %741, %745 : vector<8x128xf32>
    %747 = arith.truncf %746 : vector<8x128xf32> to vector<8x128xbf16>
    %c160 = arith.constant 160 : index
    %c0_226 = arith.constant 0 : index
    %748 = vector.load %arg6[%c160, %c0_226] : memref<192x128xbf16, #tpu.memory_space<vmem>>, vector<8x128xbf16>
    tpu.vector_store %arg6[%c160, %c0_226], %747 {strides = array<i32>} : memref<192x128xbf16, #tpu.memory_space<vmem>>, vector<8x128xbf16>,
    %c40_227 = arith.constant 40 : index
    %c0_228 = arith.constant 0 : index
    %749 = vector.load %arg7[%c40_227, %c0_228] : memref<64x512xf32, #tpu.memory_space<vmem>>, vector<8x512xf32>
    %750 = arith.truncf %746 : vector<8x128xf32> to vector<8x128xbf16>
    %c0_229 = arith.constant 0 : index
    %c0_230 = arith.constant 0 : index
    %751 = vector.load %arg2[%c0_229, %c0_230] : memref<128x512xbf16, #tpu.memory_space<vmem>>, vector<128x512xbf16>
    %cst_231 = arith.constant dense<0.000000e+00> : vector<8x512xf32>
    %752 = tpu.matmul %750, %751, %cst_231 {dimension_numbers = #tpu.dot_dimension_numbers<[1], [0], [0], [1], [0, 0, 1, 1], [], []>} : vector<8x128xbf16>, vector<128x512xbf16>, vector<8x512xf32> -> vector<8x512xf32>
    %753 = arith.addf %749, %752 : vector<8x512xf32>
    %754 = vector.extract_strided_slice %753 {offsets = [0, 0], sizes = [8, 128], strides = [1, 1]} : vector<8x512xf32> to vector<8x128xf32>
    %755 = arith.negf %754 : vector<8x128xf32>
    %756 = math.exp %755 : vector<8x128xf32>
    %cst_232 = arith.constant 1.000000e+00 : f32
    %757 = vector.broadcast %cst_232 : f32 to vector<8x128xf32>
    %758 = arith.addf %757, %756 : vector<8x128xf32>
    %759 = arith.divf %757, %758 : vector<8x128xf32>
    %760 = vector.extract_strided_slice %753 {offsets = [0, 128], sizes = [8, 128], strides = [1, 1]} : vector<8x512xf32> to vector<8x128xf32>
    %761 = arith.negf %760 : vector<8x128xf32>
    %762 = math.exp %761 : vector<8x128xf32>
    %cst_233 = arith.constant 1.000000e+00 : f32
    %763 = vector.broadcast %cst_233 : f32 to vector<8x128xf32>
    %764 = arith.addf %763, %762 : vector<8x128xf32>
    %765 = arith.divf %763, %764 : vector<8x128xf32>
    %766 = vector.extract_strided_slice %753 {offsets = [0, 256], sizes = [8, 128], strides = [1, 1]} : vector<8x512xf32> to vector<8x128xf32>
    %767 = math.tanh %766 : vector<8x128xf32>
    %768 = vector.extract_strided_slice %753 {offsets = [0, 384], sizes = [8, 128], strides = [1, 1]} : vector<8x512xf32> to vector<8x128xf32>
    %769 = arith.negf %768 : vector<8x128xf32>
    %770 = math.exp %769 : vector<8x128xf32>
    %cst_234 = arith.constant 1.000000e+00 : f32
    %771 = vector.broadcast %cst_234 : f32 to vector<8x128xf32>
    %772 = arith.addf %771, %770 : vector<8x128xf32>
    %773 = arith.divf %771, %772 : vector<8x128xf32>
    %774 = arith.mulf %765, %744 : vector<8x128xf32>
    %775 = arith.mulf %759, %767 : vector<8x128xf32>
    %776 = arith.addf %774, %775 : vector<8x128xf32>
    %777 = math.tanh %776 : vector<8x128xf32>
    %778 = arith.mulf %773, %777 : vector<8x128xf32>
    %779 = arith.truncf %778 : vector<8x128xf32> to vector<8x128xbf16>
    %c168 = arith.constant 168 : index
    %c0_235 = arith.constant 0 : index
    %780 = vector.load %arg6[%c168, %c0_235] : memref<192x128xbf16, #tpu.memory_space<vmem>>, vector<8x128xbf16>
    tpu.vector_store %arg6[%c168, %c0_235], %779 {strides = array<i32>} : memref<192x128xbf16, #tpu.memory_space<vmem>>, vector<8x128xbf16>,
    %c48_236 = arith.constant 48 : index
    %c0_237 = arith.constant 0 : index
    %781 = vector.load %arg7[%c48_236, %c0_237] : memref<64x512xf32, #tpu.memory_space<vmem>>, vector<8x512xf32>
    %782 = arith.truncf %778 : vector<8x128xf32> to vector<8x128xbf16>
    %c0_238 = arith.constant 0 : index
    %c0_239 = arith.constant 0 : index
    %783 = vector.load %arg2[%c0_238, %c0_239] : memref<128x512xbf16, #tpu.memory_space<vmem>>, vector<128x512xbf16>
    %cst_240 = arith.constant dense<0.000000e+00> : vector<8x512xf32>
    %784 = tpu.matmul %782, %783, %cst_240 {dimension_numbers = #tpu.dot_dimension_numbers<[1], [0], [0], [1], [0, 0, 1, 1], [], []>} : vector<8x128xbf16>, vector<128x512xbf16>, vector<8x512xf32> -> vector<8x512xf32>
    %785 = arith.addf %781, %784 : vector<8x512xf32>
    %786 = vector.extract_strided_slice %785 {offsets = [0, 0], sizes = [8, 128], strides = [1, 1]} : vector<8x512xf32> to vector<8x128xf32>
    %787 = arith.negf %786 : vector<8x128xf32>
    %788 = math.exp %787 : vector<8x128xf32>
    %cst_241 = arith.constant 1.000000e+00 : f32
    %789 = vector.broadcast %cst_241 : f32 to vector<8x128xf32>
    %790 = arith.addf %789, %788 : vector<8x128xf32>
    %791 = arith.divf %789, %790 : vector<8x128xf32>
    %792 = vector.extract_strided_slice %785 {offsets = [0, 128], sizes = [8, 128], strides = [1, 1]} : vector<8x512xf32> to vector<8x128xf32>
    %793 = arith.negf %792 : vector<8x128xf32>
    %794 = math.exp %793 : vector<8x128xf32>
    %cst_242 = arith.constant 1.000000e+00 : f32
    %795 = vector.broadcast %cst_242 : f32 to vector<8x128xf32>
    %796 = arith.addf %795, %794 : vector<8x128xf32>
    %797 = arith.divf %795, %796 : vector<8x128xf32>
    %798 = vector.extract_strided_slice %785 {offsets = [0, 256], sizes = [8, 128], strides = [1, 1]} : vector<8x512xf32> to vector<8x128xf32>
    %799 = math.tanh %798 : vector<8x128xf32>
    %800 = vector.extract_strided_slice %785 {offsets = [0, 384], sizes = [8, 128], strides = [1, 1]} : vector<8x512xf32> to vector<8x128xf32>
    %801 = arith.negf %800 : vector<8x128xf32>
    %802 = math.exp %801 : vector<8x128xf32>
    %cst_243 = arith.constant 1.000000e+00 : f32
    %803 = vector.broadcast %cst_243 : f32 to vector<8x128xf32>
    %804 = arith.addf %803, %802 : vector<8x128xf32>
    %805 = arith.divf %803, %804 : vector<8x128xf32>
    %806 = arith.mulf %797, %776 : vector<8x128xf32>
    %807 = arith.mulf %791, %799 : vector<8x128xf32>
    %808 = arith.addf %806, %807 : vector<8x128xf32>
    %809 = math.tanh %808 : vector<8x128xf32>
    %810 = arith.mulf %805, %809 : vector<8x128xf32>
    %811 = arith.truncf %810 : vector<8x128xf32> to vector<8x128xbf16>
    %c176 = arith.constant 176 : index
    %c0_244 = arith.constant 0 : index
    %812 = vector.load %arg6[%c176, %c0_244] : memref<192x128xbf16, #tpu.memory_space<vmem>>, vector<8x128xbf16>
    tpu.vector_store %arg6[%c176, %c0_244], %811 {strides = array<i32>} : memref<192x128xbf16, #tpu.memory_space<vmem>>, vector<8x128xbf16>,
    %c56_245 = arith.constant 56 : index
    %c0_246 = arith.constant 0 : index
    %813 = vector.load %arg7[%c56_245, %c0_246] : memref<64x512xf32, #tpu.memory_space<vmem>>, vector<8x512xf32>
    %814 = arith.truncf %810 : vector<8x128xf32> to vector<8x128xbf16>
    %c0_247 = arith.constant 0 : index
    %c0_248 = arith.constant 0 : index
    %815 = vector.load %arg2[%c0_247, %c0_248] : memref<128x512xbf16, #tpu.memory_space<vmem>>, vector<128x512xbf16>
    %cst_249 = arith.constant dense<0.000000e+00> : vector<8x512xf32>
    %816 = tpu.matmul %814, %815, %cst_249 {dimension_numbers = #tpu.dot_dimension_numbers<[1], [0], [0], [1], [0, 0, 1, 1], [], []>} : vector<8x128xbf16>, vector<128x512xbf16>, vector<8x512xf32> -> vector<8x512xf32>
    %817 = arith.addf %813, %816 : vector<8x512xf32>
    %818 = vector.extract_strided_slice %817 {offsets = [0, 0], sizes = [8, 128], strides = [1, 1]} : vector<8x512xf32> to vector<8x128xf32>
    %819 = arith.negf %818 : vector<8x128xf32>
    %820 = math.exp %819 : vector<8x128xf32>
    %cst_250 = arith.constant 1.000000e+00 : f32
    %821 = vector.broadcast %cst_250 : f32 to vector<8x128xf32>
    %822 = arith.addf %821, %820 : vector<8x128xf32>
    %823 = arith.divf %821, %822 : vector<8x128xf32>
    %824 = vector.extract_strided_slice %817 {offsets = [0, 128], sizes = [8, 128], strides = [1, 1]} : vector<8x512xf32> to vector<8x128xf32>
    %825 = arith.negf %824 : vector<8x128xf32>
    %826 = math.exp %825 : vector<8x128xf32>
    %cst_251 = arith.constant 1.000000e+00 : f32
    %827 = vector.broadcast %cst_251 : f32 to vector<8x128xf32>
    %828 = arith.addf %827, %826 : vector<8x128xf32>
    %829 = arith.divf %827, %828 : vector<8x128xf32>
    %830 = vector.extract_strided_slice %817 {offsets = [0, 256], sizes = [8, 128], strides = [1, 1]} : vector<8x512xf32> to vector<8x128xf32>
    %831 = math.tanh %830 : vector<8x128xf32>
    %832 = vector.extract_strided_slice %817 {offsets = [0, 384], sizes = [8, 128], strides = [1, 1]} : vector<8x512xf32> to vector<8x128xf32>
    %833 = arith.negf %832 : vector<8x128xf32>
    %834 = math.exp %833 : vector<8x128xf32>
    %cst_252 = arith.constant 1.000000e+00 : f32
    %835 = vector.broadcast %cst_252 : f32 to vector<8x128xf32>
    %836 = arith.addf %835, %834 : vector<8x128xf32>
    %837 = arith.divf %835, %836 : vector<8x128xf32>
    %838 = arith.mulf %829, %808 : vector<8x128xf32>
    %839 = arith.mulf %823, %831 : vector<8x128xf32>
    %840 = arith.addf %838, %839 : vector<8x128xf32>
    %841 = math.tanh %840 : vector<8x128xf32>
    %842 = arith.mulf %837, %841 : vector<8x128xf32>
    %843 = arith.truncf %842 : vector<8x128xf32> to vector<8x128xbf16>
    %c184 = arith.constant 184 : index
    %c0_253 = arith.constant 0 : index
    %844 = vector.load %arg6[%c184, %c0_253] : memref<192x128xbf16, #tpu.memory_space<vmem>>, vector<8x128xbf16>
    tpu.vector_store %arg6[%c184, %c0_253], %843 {strides = array<i32>} : memref<192x128xbf16, #tpu.memory_space<vmem>>, vector<8x128xbf16>,
    return
  }
}

</mosaic_0001>

<llo_original>
// kernel: design_forward.3
$region0: #{design_forward.3}
  #allocation0 [shape = 'u32[]', space=smem, size = 0x4, offset = 0x4, fixed_abs, tag = 'smem constant byte address 0x4 - core index']
  #allocation1 [shape = 'u32[72,128]{1,0:T(1,128)}', space=vmem, size = 0x9000, scoped, tag = 'internal scratch']
  %s0 = inlined_call_operand.vmem [shape: bf16[48,128], index: 0, kind: input, shape index: {}]
  %s1 = inlined_call_operand.hbm [shape: bf16[128,512], index: 1, kind: input, shape index: {}]
  %s2 = inlined_call_operand.vmem [shape: f32[1,512], index: 2, kind: input, shape index: {}]
  %s3 = inlined_call_operand.hbm [shape: f32[48,512], index: 3, kind: output, shape index: {}]
  %s4 = sld [smem:[#allocation0]]
  $region49: #{design_forward.3} parent=0
    _
  %s6 = ssub.s32 1, %s4
  %s7 = scalar_select 0, %s6, %s4
  $region1: #{design_forward.3} parent=0
    #allocation2 [shape = 'u8[131072]{0}', space=vmem, size = 0x20000, scoped, tag = 'input window, operand 1']
    #allocation3 [shape = 's32[2]{0}', space=sflag, size = 0x8, scoped, tag = 'scoped memory for design_forward.3']
    #allocation4 [shape = 's32[2]{0}', space=sflag, size = 0x8, scoped, tag = 'scoped memory for design_forward.3']
    #allocation5 [shape = 'u8[98304]{0}', space=vmem, size = 0x18000, scoped, tag = 'output window, operand 0']
    %8 = vsyncpa [#allocation3], 0
    %s9 = scalar_lea.sflag [#allocation3], 1
    %10 = vsyncpa %s9, 0
    %11 = vsyncpa [#allocation4], 0
    %s12 = scalar_lea.sflag [#allocation4], 1
    %13 = vsyncpa %s12, 0
    loop: start=0, step=1, limit=4
    $region2: #{design_forward.3} parent=1 // loop_pre_header
      _
    $region3: #{design_forward.3} parent=1 // loop_header
      %s15 = sphi 0, %s19
      %p16 = scmp.ge.s32.totalorder %s15, 4
      %s23 = sphi 0, %s23
      %s25 = sphi 0, %s23
      %s26 = sphi 0, %s25
      %s40 = sphi 0, %s26
      %s46 = sphi 0, %s48
      %s49 = sphi 0, %s46
      %s50 = sphi 0, %s49
      %s66 = sphi 0, %s50
      %s72 = sphi 0, %s74
      %s75 = sphi 0, %s72
      %s76 = sphi 0, %s75
      %s92 = sphi 0, %s76
      %s98 = sphi 0, %s100
      %s101 = sphi 0, %s98
      %s102 = sphi 0, %s101
      %s118 = sphi 0, %s102
    $region4: #{design_forward.3} parent=1 // loop_header_branch
      %18 = sbr.rel (%p16) target = $region8
    $region5: #{design_forward.3} parent=1 // loop_body
      %s20 = ssub.s32 %s15, 1
      %s21 = ssub.s32 %s15, 2
      %s22 = sadd.s32 %s15, 1
      %s24 = sadd.s32 %s23, 1
      %p27 = scmp.eq.s32.totalorder %s15, 1
      %p28 = scmp.ne.s32.totalorder %s23, %s25
      %p29 = scmp.eq.s32.totalorder %s15, 0
      %p30 = por %p28, %p29
      %p31 = scmp.ne.s32.totalorder %s23, %s25
      %p32 = scmp.eq.s32.totalorder %s20, 1
      %p33 = por %p31, %p32
      %p34 = scmp.ne.s32.totalorder %s25, %s26
      %p35 = scmp.eq.s32.totalorder %s20, 0
      %p36 = por %p34, %p35
      %p37 = scmp.ne.s32.totalorder %s25, %s26
      %p38 = scmp.eq.s32.totalorder %s21, 1
      %p39 = por %p37, %p38
      %p41 = scmp.ne.s32.totalorder %s26, %s40
      %p42 = scmp.eq.s32.totalorder %s21, 0
      %p43 = por %p41, %p42
      %s44 = ssub.s32 %s15, %s22
      %p45 = scmp.eq.s32.totalorder %s44, 0
      %s47 = sadd.s32 %s46, 1
      %s48 = scalar_select %p45, %s46, %s47
      %p51 = pneg %p45
      %p52 = scmp.eq.s32.totalorder %s15, 1
      %p53 = por %p51, %p52
      %p54 = scmp.ne.s32.totalorder %s46, %s49
      %p55 = scmp.eq.s32.totalorder %s15, 0
      %p56 = por %p54, %p55
      %p57 = scmp.ne.s32.totalorder %s46, %s49
      %p58 = scmp.eq.s32.totalorder %s20, 1
      %p59 = por %p57, %p58
      %p60 = scmp.ne.s32.totalorder %s49, %s50
      %p61 = scmp.eq.s32.totalorder %s20, 0
      %p62 = por %p60, %p61
      %p63 = scmp.ne.s32.totalorder %s49, %s50
      %p64 = scmp.eq.s32.totalorder %s21, 1
      %p65 = por %p63, %p64
      %p67 = scmp.ne.s32.totalorder %s50, %s66
      %p68 = scmp.eq.s32.totalorder %s21, 0
      %p69 = por %p67, %p68
      %s70 = ssub.s32 %s15, %s22
      %p71 = scmp.eq.s32.totalorder %s70, 0
      %s73 = sadd.s32 %s72, 1
      %s74 = scalar_select %p71, %s72, %s73
      %p77 = pneg %p71
      %p78 = scmp.eq.s32.totalorder %s15, 1
      %p79 = por %p77, %p78
      %p80 = scmp.ne.s32.totalorder %s72, %s75
      %p81 = scmp.eq.s32.totalorder %s15, 0
      %p82 = por %p80, %p81
      %p83 = scmp.ne.s32.totalorder %s72, %s75
      %p84 = scmp.eq.s32.totalorder %s20, 1
      %p85 = por %p83, %p84
      %p86 = scmp.ne.s32.totalorder %s75, %s76
      %p87 = scmp.eq.s32.totalorder %s20, 0
      %p88 = por %p86, %p87
      %p89 = scmp.ne.s32.totalorder %s75, %s76
      %p90 = scmp.eq.s32.totalorder %s21, 1
      %p91 = por %p89, %p90
      %p93 = scmp.ne.s32.totalorder %s76, %s92
      %p94 = scmp.eq.s32.totalorder %s21, 0
      %p95 = por %p93, %p94
      %s96 = ssub.s32 %s15, %s22
      %p97 = scmp.eq.s32.totalorder %s96, 0
      %s99 = sadd.s32 %s98, 1
      %s100 = scalar_select %p97, %s98, %s99
      %p103 = pneg %p97
      %p104 = scmp.eq.s32.totalorder %s15, 1
      %p105 = por %p103, %p104
      %p106 = scmp.ne.s32.totalorder %s98, %s101
      %p107 = scmp.eq.s32.totalorder %s15, 0
      %p108 = por %p106, %p107
      %p109 = scmp.ne.s32.totalorder %s98, %s101
      %p110 = scmp.eq.s32.totalorder %s20, 1
      %p111 = por %p109, %p110
      %p112 = scmp.ne.s32.totalorder %s101, %s102
      %p113 = scmp.eq.s32.totalorder %s20, 0
      %p114 = por %p112, %p113
      %p115 = scmp.ne.s32.totalorder %s101, %s102
      %p116 = scmp.eq.s32.totalorder %s21, 1
      %p117 = por %p115, %p116
      %p119 = scmp.ne.s32.totalorder %s102, %s118
      %p120 = scmp.eq.s32.totalorder %s21, 0
      %p121 = por %p119, %p120
      %p122 = scmp.le.s32.totalorder 1, %s15
      %p123 = scmp.lt.s32.totalorder %s15, 3
      %p124 = pnand %p122, %p123
      %p125 = pneg %p124
      // Predicated region
      $region9: #{design_forward.3} parent=5 // pred_check
        _
      $region10: #{design_forward.3} parent=5 // pred_check_branch
        %127 = sbr.rel (%p124) target = $region12
      $region11: #{design_forward.3} parent=5 // pred_region
        %s128 = ssub.s32 %s15, 1
        // Predicated region
        $region13: #{design_forward.3} parent=11 // pred_check
          %p129 = pneg %p36
        $region14: #{design_forward.3} parent=11 // pred_check_branch
          %131 = sbr.rel (%p129) target = $region16
        $region15: #{design_forward.3} parent=11 // pred_region
          _
        $region16: #{design_forward.3} parent=11 // pred_fallthru
          _
      $region12: #{design_forward.3} parent=5 // pred_fallthru
        _
      %p132 = scmp.lt.s32.totalorder %s15, 2
      // Predicated region
      $region17: #{design_forward.3} parent=5 // pred_check
        %p133 = pneg %p132
      $region18: #{design_forward.3} parent=5 // pred_check_branch
        %135 = sbr.rel (%p133) target = $region20
      $region19: #{design_forward.3} parent=5 // pred_region
        // Predicated region
        $region21: #{design_forward.3} parent=19 // pred_check
          %p136 = pneg %p56
        $region22: #{design_forward.3} parent=19 // pred_check_branch
          %138 = sbr.rel (%p136) target = $region24
        $region23: #{design_forward.3} parent=19 // pred_region
          %s139 = sand.u32 %s46, 1
          %s140 = scalar_lea.sflag [#allocation3], %s139
          %s141 = sand.u32 %s46, 1
          %s142 = smul.addr %s141, 128
          %s143 = scalar_lea.vmem [#allocation2], %s142
          %s144 = smul.u32 2, %s15
          %146 = vsyncadd %s140, 0
          %s147 = smul.addr %s144, 4
          %s148 = scalar_lea.hbm %s1, %s147
          %s149 = sshll.u32 %s148, 4
          %s150 = int_to_ptr.hbm [resolvable:$true] %s149
          %s151 = sshll.u32 %s143, 4
          %s152 = int_to_ptr.vmem [resolvable:$true] %s151
          %157 = dma.hbm_to_vmem [thread:$0]  %s150, 2048, %s152, %s140, 256, 128, 8
        $region24: #{design_forward.3} parent=19 // pred_fallthru
          _
        // Predicated region
        $region25: #{design_forward.3} parent=19 // pred_check
          %p158 = pneg %p82
        $region26: #{design_forward.3} parent=19 // pred_check_branch
          %160 = sbr.rel (%p158) target = $region28
        $region27: #{design_forward.3} parent=19 // pred_region
          %s161 = smul.u32 2, %s15
          %p162 = scmp.lt.s32.totalorder %s161, 3
          %s163 = scalar_select %p162, %s161, 3
          %s164 = scalar_lea.vmem %s2, %s163
          %s165 = smul.u32 2, %s15
        $region28: #{design_forward.3} parent=19 // pred_fallthru
          _
      $region20: #{design_forward.3} parent=5 // pred_fallthru
        _
      %p166 = scmp.le.s32.totalorder 1, %s15
      %p167 = scmp.lt.s32.totalorder %s15, 3
      %p168 = pnand %p166, %p167
      %p169 = pneg %p168
      // Predicated region
      $region29: #{design_forward.3} parent=5 // pred_check
        _
      $region30: #{design_forward.3} parent=5 // pred_check_branch
        %171 = sbr.rel (%p168) target = $region32
      $region31: #{design_forward.3} parent=5 // pred_region
        %s172 = ssub.s32 %s15, 1
        %s173 = sand.u32 %s49, 1
        %s174 = scalar_lea.sflag [#allocation3], %s173
        %s175 = sand.u32 %s49, 1
        %s176 = smul.addr %s175, 128
        %s177 = scalar_lea.vmem [#allocation2], %s176
        // Predicated region
        $region33: #{design_forward.3} parent=31 // pred_check
          %p178 = pneg %p62
        $region34: #{design_forward.3} parent=31 // pred_check_branch
          %180 = sbr.rel (%p178) target = $region36
        $region35: #{design_forward.3} parent=31 // pred_region
          %182 = dma.done %s174, 2048
        $region36: #{design_forward.3} parent=31 // pred_fallthru
          _
        %p183 = pneg %p36
        %p184 = pneg %p33
        %s185 = sand.u32 %s49, 1
        %s186 = scalar_lea.sflag [#allocation3], %s185
        %s187 = sand.u32 %s49, 1
        %s188 = smul.addr %s187, 128
        %s189 = scalar_lea.vmem [#allocation2], %s188
        %p190 = pneg %p62
        %p191 = pneg %p59
        %s192 = smul.u32 2, %s20
        %p193 = scmp.lt.s32.totalorder %s192, 3
        %s194 = scalar_select %p193, %s192, 3
        %s195 = scalar_lea.vmem %s2, %s194
        %p196 = pneg %p88
        %p197 = pneg %p85
        %p198 = pneg %p114
        %p199 = pneg %p111
        %s200 = sand.u32 %s101, 1
        %s201 = scalar_lea.sflag [#allocation4], %s200
        %s202 = sand.u32 %s101, 1
        %s203 = smul.addr %s202, 96
        %s204 = scalar_lea.vmem [#allocation5], %s203
        %s205 = smul.u32 2, %s20
        %s206 = smul.u32 2, %s20
        %p207 = scmp.lt.s32.totalorder %s206, 3
        %s208 = scalar_select %p207, %s206, 3
        %s209 = scalar_lea.vmem %s2, %s208
        %s210 = smul.u32 2, %s20
        %s211 = smul.u32 2, %s20
        %v212 = vld [vmem:[%s0] sm:$0xf]
        %v213 = vld [vmem:[%s0 + $0x4] sm:$0xf]
        %v214 = vld [vmem:[%s0 + $0x8] sm:$0xf]
        %v215 = vld [vmem:[%s0 + $0xc] sm:$0xf]
        %v216 = vld [vmem:[%s0 + $0x10] sm:$0xf]
        %v217 = vld [vmem:[%s0 + $0x14] sm:$0xf]
        %v218 = vld [vmem:[%s177] sm:$0xff]
        %v219 = vld [vmem:[%s177 + $0x8] sm:$0xff]
        %v220 = vld [vmem:[%s177 + $0x10] sm:$0xff]
        %v221 = vld [vmem:[%s177 + $0x18] sm:$0xff]
        %v222 = vld [vmem:[%s177 + $0x20] sm:$0xff]
        %v223 = vld [vmem:[%s177 + $0x28] sm:$0xff]
        %v224 = vld [vmem:[%s177 + $0x30] sm:$0xff]
        %v225 = vld [vmem:[%s177 + $0x38] sm:$0xff]
        %v226 = vld [vmem:[%s177 + $0x40] sm:$0xff]
        %v227 = vld [vmem:[%s177 + $0x48] sm:$0xff]
        %v228 = vld [vmem:[%s177 + $0x50] sm:$0xff]
        %v229 = vld [vmem:[%s177 + $0x58] sm:$0xff]
        %v230 = vld [vmem:[%s177 + $0x60] sm:$0xff]
        %v231 = vld [vmem:[%s177 + $0x68] sm:$0xff]
        %v232 = vld [vmem:[%s177 + $0x70] sm:$0xff]
        %v233 = vld [vmem:[%s177 + $0x78] sm:$0xff]
        %v234 = vld [vmem:[%s209] sm:$0x3]
        %v236 = vperm.slane %v234, 0
        %v237 = vperm.slane %v234, 1
        %v246 = vunpack.c.l.b16 %v212
        %v247 = vunpack.c.l.b16 %v213
        %v248 = vunpack.c.l.b16 %v214
        %v249 = vunpack.c.l.b16 %v215
        %v250 = vunpack.c.l.b16 %v216
        %v251 = vunpack.c.l.b16 %v217
        %v252 = vpack.c.b16 %v247, %v246
        %v253 = vpack.c.b16 %v249, %v248
        %v254 = vpack.c.b16 %v251, %v250
        %v274 = vunpack.c.l.b16 %v218
        %v275 = vunpack.c.h.b16 %v218
        %v276 = vunpack.c.l.b16 %v219
        %v277 = vunpack.c.h.b16 %v219
        %v278 = vunpack.c.l.b16 %v220
        %v279 = vunpack.c.h.b16 %v220
        %v280 = vunpack.c.l.b16 %v221
        %v281 = vunpack.c.h.b16 %v221
        %v282 = vunpack.c.l.b16 %v222
        %v283 = vunpack.c.h.b16 %v222
        %v284 = vunpack.c.l.b16 %v223
        %v285 = vunpack.c.h.b16 %v223
        %v286 = vunpack.c.l.b16 %v224
        %v287 = vunpack.c.h.b16 %v224
        %v288 = vunpack.c.l.b16 %v225
        %v289 = vunpack.c.h.b16 %v225
        %v290 = vunpack.c.l.b16 %v226
        %v291 = vunpack.c.h.b16 %v226
        %v292 = vunpack.c.l.b16 %v227
        %v293 = vunpack.c.h.b16 %v227
        %v294 = vunpack.c.l.b16 %v228
        %v295 = vunpack.c.h.b16 %v228
        %v296 = vunpack.c.l.b16 %v229
        %v297 = vunpack.c.h.b16 %v229
        %v298 = vunpack.c.l.b16 %v230
        %v299 = vunpack.c.h.b16 %v230
        %v300 = vunpack.c.l.b16 %v231
        %v301 = vunpack.c.h.b16 %v231
        %v302 = vunpack.c.l.b16 %v232
        %v303 = vunpack.c.h.b16 %v232
        %v304 = vunpack.c.l.b16 %v233
        %v305 = vunpack.c.h.b16 %v233
        %v306 = vpack.c.b16 %v276, %v274
        %v307 = vpack.c.b16 %v277, %v275
        %v308 = vpack.c.b16 %v280, %v278
        %v309 = vpack.c.b16 %v281, %v279
        %v310 = vpack.c.b16 %v284, %v282
        %v311 = vpack.c.b16 %v285, %v283
        %v312 = vpack.c.b16 %v288, %v286
        %v313 = vpack.c.b16 %v289, %v287
        %v314 = vpack.c.b16 %v292, %v290
        %v315 = vpack.c.b16 %v293, %v291
        %v316 = vpack.c.b16 %v296, %v294
        %v317 = vpack.c.b16 %v297, %v295
        %v318 = vpack.c.b16 %v300, %v298
        %v319 = vpack.c.b16 %v301, %v299
        %v320 = vpack.c.b16 %v304, %v302
        %v321 = vpack.c.b16 %v305, %v303
        %338 = vmatpush.bf16.msra.mxu0 %v320
        %339 = vmatpush.bf16.msra.mxu0 %v318
        %340 = vmatpush.bf16.msra.mxu0 %v316
        %341 = vmatpush.bf16.msra.mxu0 %v314
        %342 = vmatpush.bf16.msra.mxu0 %v312
        %343 = vmatpush.bf16.msra.mxu0 %v310
        %344 = vmatpush.bf16.msra.mxu0 %v308
        %345 = vmatpush.bf16.msra.mxu0 %v306
        %346 = vmatmul.bf16.gmra.mxu0 %v252
        %v347 = vpop.f32.mrf.mxu0
        %v348 = vadd.f32 %v236, %v347
        %v349 = vpop.f32.mrf.mxu0
        %v350 = vadd.f32 %v236, %v349
        %351 = vmatmul.bf16.gmra.mxu0 %v253
        %v352 = vpop.f32.mrf.mxu0
        %v353 = vadd.f32 %v236, %v352
        %v354 = vpop.f32.mrf.mxu0
        %v355 = vadd.f32 %v236, %v354
        %356 = vmatmul.bf16.gmra.mxu0 %v254
        %v357 = vpop.f32.mrf.mxu0
        %v358 = vadd.f32 %v236, %v357
        %v359 = vpop.f32.mrf.mxu0
        %v360 = vadd.f32 %v236, %v359
        %361 = vdwg.mxu0
        %362 = vmatpush.bf16.msra.mxu0 %v321
        %363 = vmatpush.bf16.msra.mxu0 %v319
        %364 = vmatpush.bf16.msra.mxu0 %v317
        %365 = vmatpush.bf16.msra.mxu0 %v315
        %366 = vmatpush.bf16.msra.mxu0 %v313
        %367 = vmatpush.bf16.msra.mxu0 %v311
        %368 = vmatpush.bf16.msra.mxu0 %v309
        %369 = vmatpush.bf16.msra.mxu0 %v307
        %370 = vmatmul.bf16.gmra.mxu0 %v252
        %v371 = vpop.f32.mrf.mxu0
        %v372 = vadd.f32 %v237, %v371
        %v373 = vpop.f32.mrf.mxu0
        %v374 = vadd.f32 %v237, %v373
        %375 = vmatmul.bf16.gmra.mxu0 %v253
        %v376 = vpop.f32.mrf.mxu0
        %v377 = vadd.f32 %v237, %v376
        %v378 = vpop.f32.mrf.mxu0
        %v379 = vadd.f32 %v237, %v378
        %380 = vmatmul.bf16.gmra.mxu0 %v254
        %v381 = vpop.f32.mrf.mxu0
        %v382 = vadd.f32 %v237, %v381
        %v383 = vpop.f32.mrf.mxu0
        %v384 = vadd.f32 %v237, %v383
        %385 = vdwg.mxu0
        %386 = vst [vmem:[%s204] sm:$0xff] %v348
        %387 = vst [vmem:[%s204 + $0x8] sm:$0xff] %v372
        %388 = vst [vmem:[%s204 + $0x10] sm:$0xff] %v350
        %389 = vst [vmem:[%s204 + $0x18] sm:$0xff] %v374
        %390 = vst [vmem:[%s204 + $0x20] sm:$0xff] %v353
        %391 = vst [vmem:[%s204 + $0x28] sm:$0xff] %v377
        %392 = vst [vmem:[%s204 + $0x30] sm:$0xff] %v355
        %393 = vst [vmem:[%s204 + $0x38] sm:$0xff] %v379
        %394 = vst [vmem:[%s204 + $0x40] sm:$0xff] %v358
        %395 = vst [vmem:[%s204 + $0x48] sm:$0xff] %v382
        %396 = vst [vmem:[%s204 + $0x50] sm:$0xff] %v360
        %397 = vst [vmem:[%s204 + $0x58] sm:$0xff] %v384
        %s398 = sand.u32 %s101, 1
        %s399 = scalar_lea.sflag [#allocation4], %s398
        %s400 = sand.u32 %s101, 1
        %s401 = smul.addr %s400, 96
        %s402 = scalar_lea.vmem [#allocation5], %s401
        // Predicated region
        $region37: #{design_forward.3} parent=31 // pred_check
          %p403 = pneg %p111
        $region38: #{design_forward.3} parent=31 // pred_check_branch
          %405 = sbr.rel (%p403) target = $region40
        $region39: #{design_forward.3} parent=31 // pred_region
          %s406 = smul.u32 2, %s20
          %408 = vsyncadd %s399, 0
          %s409 = smul.addr %s406, 8
          %s410 = scalar_lea.hbm %s3, %s409
          %s411 = sshll.u32 %s402, 4
          %s412 = int_to_ptr.vmem [resolvable:$true] %s411
          %s413 = sshll.u32 %s410, 4
          %s414 = int_to_ptr.hbm [resolvable:$true] %s413
          %419 = dma.vmem_to_hbm [thread:$0]  %s412, 1536, %s414, %s399, 256, 512, 16
        $region40: #{design_forward.3} parent=31 // pred_fallthru
          _
      $region32: #{design_forward.3} parent=5 // pred_fallthru
        _
      %p420 = scmp.le.s32.totalorder 2, %s15
      // Predicated region
      $region41: #{design_forward.3} parent=5 // pred_check
        %p421 = pneg %p420
      $region42: #{design_forward.3} parent=5 // pred_check_branch
        %423 = sbr.rel (%p421) target = $region44
      $region43: #{design_forward.3} parent=5 // pred_region
        %s424 = ssub.s32 %s15, 2
        // Predicated region
        $region45: #{design_forward.3} parent=43 // pred_check
          %p425 = pneg %p117
        $region46: #{design_forward.3} parent=43 // pred_check_branch
          %427 = sbr.rel (%p425) target = $region48
        $region47: #{design_forward.3} parent=43 // pred_region
          %s428 = sand.u32 %s102, 1
          %s429 = scalar_lea.sflag [#allocation4], %s428
          %s430 = sand.u32 %s102, 1
          %s431 = smul.addr %s430, 96
          %s432 = scalar_lea.vmem [#allocation5], %s431
          %434 = dma.done %s429, 1536
        $region48: #{design_forward.3} parent=43 // pred_fallthru
          _
      $region44: #{design_forward.3} parent=5 // pred_fallthru
        _
    $region6: #{design_forward.3} parent=1 // loop_footer
      %s19 = sadd.s32 1, %s15
    $region7: #{design_forward.3} parent=1 // loop_footer_branch
      %14 = sbr.rel target = $region3
    $region8: #{design_forward.3} parent=1 // loop_exit
      _
    %435 = vsyncpa [#allocation3], 1
    %s436 = scalar_lea.sflag [#allocation3], 1
    %437 = vsyncpa %s436, 1
    %438 = vsyncpa [#allocation4], 1
    %s439 = scalar_lea.sflag [#allocation4], 1
    %440 = vsyncpa %s439, 1

// kernel: design_forward.2
$region0: #{design_forward.2}
  #allocation0 [shape = 'u32[]', space=smem, size = 0x4, offset = 0x4, fixed_abs, tag = 'smem constant byte address 0x4 - core index']
  #allocation1 [shape = 'u32[72,128]{1,0:T(1,128)}', space=vmem, size = 0x9000, scoped, tag = 'internal scratch']
  #allocation2 [shape = 'f32[64,512]{1,0:T(8,128)}', space=vmem, size = 0x20000, scoped, tag = 'scratch operand']
  %s0 = inlined_call_operand.vmem [shape: bf16[192,128], index: 0, kind: input, shape index: {}]
  %s1 = inlined_call_operand.vmem [shape: bf16[128,512], index: 1, kind: input, shape index: {}]
  %s2 = inlined_call_operand.vmem [shape: bf16[128,512], index: 2, kind: input, shape index: {}]
  %s3 = inlined_call_operand.vmem [shape: f32[1,512], index: 3, kind: input, shape index: {}]
  %s4 = inlined_call_operand.vmem [shape: bf16[256,512], index: 4, kind: input, shape index: {}]
  %s5 = inlined_call_operand.vmem [shape: f32[1,512], index: 5, kind: input, shape index: {}]
  %s6 = inlined_call_operand.vmem [shape: bf16[192,128], index: 6, kind: output, shape index: {}]
  %s7 = sld [smem:[#allocation0]]
  $region34: #{design_forward.2} parent=0
    _
  %s9 = ssub.s32 1, %s7
  %s10 = scalar_select 0, %s9, %s7
  // Predicated region
  $region2: #{design_forward.2} parent=0 // pred_check
    _
  $region3: #{design_forward.2} parent=0 // pred_check_branch
    %12 = sbr.rel (0) target = $region5
  $region4: #{design_forward.2} parent=0 // pred_region
    _
  $region5: #{design_forward.2} parent=0 // pred_fallthru
    _
  // Predicated region
  $region6: #{design_forward.2} parent=0 // pred_check
    _
  $region7: #{design_forward.2} parent=0 // pred_check_branch
    %14 = sbr.rel (0) target = $region9
  $region8: #{design_forward.2} parent=0 // pred_region
    _
  $region9: #{design_forward.2} parent=0 // pred_fallthru
    _
  // Predicated region
  $region10: #{design_forward.2} parent=0 // pred_check
    _
  $region11: #{design_forward.2} parent=0 // pred_check_branch
    %16 = sbr.rel (0) target = $region13
  $region12: #{design_forward.2} parent=0 // pred_region
    _
  $region13: #{design_forward.2} parent=0 // pred_fallthru
    _
  // Predicated region
  $region14: #{design_forward.2} parent=0 // pred_check
    _
  $region15: #{design_forward.2} parent=0 // pred_check_branch
    %18 = sbr.rel (0) target = $region17
  $region16: #{design_forward.2} parent=0 // pred_region
    _
  $region17: #{design_forward.2} parent=0 // pred_fallthru
    _
  // Predicated region
  $region18: #{design_forward.2} parent=0 // pred_check
    _
  $region19: #{design_forward.2} parent=0 // pred_check_branch
    %20 = sbr.rel (0) target = $region21
  $region20: #{design_forward.2} parent=0 // pred_region
    _
  $region21: #{design_forward.2} parent=0 // pred_fallthru
    _
  // Predicated region
  $region22: #{design_forward.2} parent=0 // pred_check
    _
  $region23: #{design_forward.2} parent=0 // pred_check_branch
    %22 = sbr.rel (0) target = $region25
  $region24: #{design_forward.2} parent=0 // pred_region
    _
  $region25: #{design_forward.2} parent=0 // pred_fallthru
    _
  %v24 = vld [vmem:[%s3] sm:$0xf]
  %v25 = vld [vmem:[%s5] sm:$0xf]
  %v26 = vld [vmem:[%s0] sm:$0xf]
  %v27 = vld [vmem:[%s0 + $0x4] sm:$0xf]
  %v28 = vld [vmem:[%s0 + $0x8] sm:$0xf]
  %v29 = vld [vmem:[%s0 + $0xc] sm:$0xf]
  %v30 = vld [vmem:[%s0 + $0x10] sm:$0xf]
  %v31 = vld [vmem:[%s0 + $0x14] sm:$0xf]
  %v32 = vld [vmem:[%s0 + $0x18] sm:$0xf]
  %v33 = vld [vmem:[%s0 + $0x1c] sm:$0xf]
  %v34 = vld [vmem:[%s1] sm:$0xff]
  %v35 = vld [vmem:[%s1 + $0x8] sm:$0xff]
  %v36 = vld [vmem:[%s1 + $0x10] sm:$0xff]
  %v37 = vld [vmem:[%s1 + $0x18] sm:$0xff]
  %v38 = vld [vmem:[%s1 + $0x20] sm:$0xff]
  %v39 = vld [vmem:[%s1 + $0x28] sm:$0xff]
  %v40 = vld [vmem:[%s1 + $0x30] sm:$0xff]
  %v41 = vld [vmem:[%s1 + $0x38] sm:$0xff]
  %v42 = vld [vmem:[%s1 + $0x40] sm:$0xff]
  %v43 = vld [vmem:[%s1 + $0x48] sm:$0xff]
  %v44 = vld [vmem:[%s1 + $0x50] sm:$0xff]
  %v45 = vld [vmem:[%s1 + $0x58] sm:$0xff]
  %v46 = vld [vmem:[%s1 + $0x60] sm:$0xff]
  %v47 = vld [vmem:[%s1 + $0x68] sm:$0xff]
  %v48 = vld [vmem:[%s1 + $0x70] sm:$0xff]
  %v49 = vld [vmem:[%s1 + $0x78] sm:$0xff]
  %v50 = vld [vmem:[%s1 + $0x80] sm:$0xff]
  %v51 = vld [vmem:[%s1 + $0x88] sm:$0xff]
  %v52 = vld [vmem:[%s1 + $0x90] sm:$0xff]
  %v53 = vld [vmem:[%s1 + $0x98] sm:$0xff]
  %v54 = vld [vmem:[%s1 + $0xa0] sm:$0xff]
  %v55 = vld [vmem:[%s1 + $0xa8] sm:$0xff]
  %v56 = vld [vmem:[%s1 + $0xb0] sm:$0xff]
  %v57 = vld [vmem:[%s1 + $0xb8] sm:$0xff]
  %v58 = vld [vmem:[%s1 + $0xc0] sm:$0xff]
  %v59 = vld [vmem:[%s1 + $0xc8] sm:$0xff]
  %v60 = vld [vmem:[%s1 + $0xd0] sm:$0xff]
  %v61 = vld [vmem:[%s1 + $0xd8] sm:$0xff]
  %v62 = vld [vmem:[%s1 + $0xe0] sm:$0xff]
  %v63 = vld [vmem:[%s1 + $0xe8] sm:$0xff]
  %v64 = vld [vmem:[%s1 + $0xf0] sm:$0xff]
  %v65 = vld [vmem:[%s1 + $0xf8] sm:$0xff]
  %v67 = vperm.slane %v24, 0
  %v68 = vperm.slane %v24, 1
  %v69 = vperm.slane %v24, 2
  %v70 = vperm.slane %v24, 3
  %v83 = vunpack.c.l.b16 %v26
  %v84 = vunpack.c.l.b16 %v27
  %v85 = vunpack.c.l.b16 %v28
  %v86 = vunpack.c.l.b16 %v29
  %v87 = vunpack.c.l.b16 %v30
  %v88 = vunpack.c.l.b16 %v31
  %v89 = vunpack.c.l.b16 %v32
  %v90 = vunpack.c.l.b16 %v33
  %v91 = vpack.c.b16 %v84, %v83
  %v92 = vpack.c.b16 %v86, %v85
  %v93 = vpack.c.b16 %v88, %v87
  %v94 = vpack.c.b16 %v90, %v89
  %v131 = vunpack.c.l.b16 %v34
  %v132 = vunpack.c.h.b16 %v34
  %v133 = vunpack.c.l.b16 %v35
  %v134 = vunpack.c.h.b16 %v35
  %v135 = vunpack.c.l.b16 %v36
  %v136 = vunpack.c.h.b16 %v36
  %v137 = vunpack.c.l.b16 %v37
  %v138 = vunpack.c.h.b16 %v37
  %v139 = vunpack.c.l.b16 %v38
  %v140 = vunpack.c.h.b16 %v38
  %v141 = vunpack.c.l.b16 %v39
  %v142 = vunpack.c.h.b16 %v39
  %v143 = vunpack.c.l.b16 %v40
  %v144 = vunpack.c.h.b16 %v40
  %v145 = vunpack.c.l.b16 %v41
  %v146 = vunpack.c.h.b16 %v41
  %v147 = vunpack.c.l.b16 %v42
  %v148 = vunpack.c.h.b16 %v42
  %v149 = vunpack.c.l.b16 %v43
  %v150 = vunpack.c.h.b16 %v43
  %v151 = vunpack.c.l.b16 %v44
  %v152 = vunpack.c.h.b16 %v44
  %v153 = vunpack.c.l.b16 %v45
  %v154 = vunpack.c.h.b16 %v45
  %v155 = vunpack.c.l.b16 %v46
  %v156 = vunpack.c.h.b16 %v46
  %v157 = vunpack.c.l.b16 %v47
  %v158 = vunpack.c.h.b16 %v47
  %v159 = vunpack.c.l.b16 %v48
  %v160 = vunpack.c.h.b16 %v48
  %v161 = vunpack.c.l.b16 %v49
  %v162 = vunpack.c.h.b16 %v49
  %v163 = vunpack.c.l.b16 %v50
  %v164 = vunpack.c.h.b16 %v50
  %v165 = vunpack.c.l.b16 %v51
  %v166 = vunpack.c.h.b16 %v51
  %v167 = vunpack.c.l.b16 %v52
  %v168 = vunpack.c.h.b16 %v52
  %v169 = vunpack.c.l.b16 %v53
  %v170 = vunpack.c.h.b16 %v53
  %v171 = vunpack.c.l.b16 %v54
  %v172 = vunpack.c.h.b16 %v54
  %v173 = vunpack.c.l.b16 %v55
  %v174 = vunpack.c.h.b16 %v55
  %v175 = vunpack.c.l.b16 %v56
  %v176 = vunpack.c.h.b16 %v56
  %v177 = vunpack.c.l.b16 %v57
  %v178 = vunpack.c.h.b16 %v57
  %v179 = vunpack.c.l.b16 %v58
  %v180 = vunpack.c.h.b16 %v58
  %v181 = vunpack.c.l.b16 %v59
  %v182 = vunpack.c.h.b16 %v59
  %v183 = vunpack.c.l.b16 %v60
  %v184 = vunpack.c.h.b16 %v60
  %v185 = vunpack.c.l.b16 %v61
  %v186 = vunpack.c.h.b16 %v61
  %v187 = vunpack.c.l.b16 %v62
  %v188 = vunpack.c.h.b16 %v62
  %v189 = vunpack.c.l.b16 %v63
  %v190 = vunpack.c.h.b16 %v63
  %v191 = vunpack.c.l.b16 %v64
  %v192 = vunpack.c.h.b16 %v64
  %v193 = vunpack.c.l.b16 %v65
  %v194 = vunpack.c.h.b16 %v65
  %v195 = vpack.c.b16 %v135, %v131
  %v196 = vpack.c.b16 %v136, %v132
  %v197 = vpack.c.b16 %v137, %v133
  %v198 = vpack.c.b16 %v138, %v134
  %v199 = vpack.c.b16 %v143, %v139
  %v200 = vpack.c.b16 %v144, %v140
  %v201 = vpack.c.b16 %v145, %v141
  %v202 = vpack.c.b16 %v146, %v142
  %v203 = vpack.c.b16 %v151, %v147
  %v204 = vpack.c.b16 %v152, %v148
  %v205 = vpack.c.b16 %v153, %v149
  %v206 = vpack.c.b16 %v154, %v150
  %v207 = vpack.c.b16 %v159, %v155
  %v208 = vpack.c.b16 %v160, %v156
  %v209 = vpack.c.b16 %v161, %v157
  %v210 = vpack.c.b16 %v162, %v158
  %v211 = vpack.c.b16 %v167, %v163
  %v212 = vpack.c.b16 %v168, %v164
  %v213 = vpack.c.b16 %v169, %v165
  %v214 = vpack.c.b16 %v170, %v166
  %v215 = vpack.c.b16 %v175, %v171
  %v216 = vpack.c.b16 %v176, %v172
  %v217 = vpack.c.b16 %v177, %v173
  %v218 = vpack.c.b16 %v178, %v174
  %v219 = vpack.c.b16 %v183, %v179
  %v220 = vpack.c.b16 %v184, %v180
  %v221 = vpack.c.b16 %v185, %v181
  %v222 = vpack.c.b16 %v186, %v182
  %v223 = vpack.c.b16 %v191, %v187
  %v224 = vpack.c.b16 %v192, %v188
  %v225 = vpack.c.b16 %v193, %v189
  %v226 = vpack.c.b16 %v194, %v190
  %259 = vmatpush.bf16.msra.mxu0 %v223
  %260 = vmatpush.bf16.msra.mxu0 %v219
  %261 = vmatpush.bf16.msra.mxu0 %v215
  %262 = vmatpush.bf16.msra.mxu0 %v211
  %263 = vmatpush.bf16.msra.mxu0 %v207
  %264 = vmatpush.bf16.msra.mxu0 %v203
  %265 = vmatpush.bf16.msra.mxu0 %v199
  %266 = vmatpush.bf16.msra.mxu0 %v195
  %267 = vmatmul.bf16.gmra.mxu0 %v91
  %v268 = vpop.f32.mrf.mxu0
  %v269 = vadd.f32 %v67, %v268
  %v270 = vpop.f32.mrf.mxu0
  %v271 = vadd.f32 %v67, %v270
  %272 = vmatmul.bf16.gmra.mxu0 %v92
  %v273 = vpop.f32.mrf.mxu0
  %v274 = vadd.f32 %v67, %v273
  %v275 = vpop.f32.mrf.mxu0
  %v276 = vadd.f32 %v67, %v275
  %277 = vmatmul.bf16.gmra.mxu0 %v93
  %v278 = vpop.f32.mrf.mxu0
  %v279 = vadd.f32 %v67, %v278
  %v280 = vpop.f32.mrf.mxu0
  %v281 = vadd.f32 %v67, %v280
  %282 = vmatmul.bf16.gmra.mxu0 %v94
  %v283 = vpop.f32.mrf.mxu0
  %v284 = vadd.f32 %v67, %v283
  %v285 = vpop.f32.mrf.mxu0
  %v286 = vadd.f32 %v67, %v285
  %287 = vdwg.mxu0
  %288 = vmatpush.bf16.msra.mxu0 %v224
  %289 = vmatpush.bf16.msra.mxu0 %v220
  %290 = vmatpush.bf16.msra.mxu0 %v216
  %291 = vmatpush.bf16.msra.mxu0 %v212
  %292 = vmatpush.bf16.msra.mxu0 %v208
  %293 = vmatpush.bf16.msra.mxu0 %v204
  %294 = vmatpush.bf16.msra.mxu0 %v200
  %295 = vmatpush.bf16.msra.mxu0 %v196
  %296 = vmatmul.bf16.gmra.mxu0 %v91
  %v297 = vpop.f32.mrf.mxu0
  %v298 = vadd.f32 %v68, %v297
  %v299 = vpop.f32.mrf.mxu0
  %v300 = vadd.f32 %v68, %v299
  %301 = vmatmul.bf16.gmra.mxu0 %v92
  %v302 = vpop.f32.mrf.mxu0
  %v303 = vadd.f32 %v68, %v302
  %v304 = vpop.f32.mrf.mxu0
  %v305 = vadd.f32 %v68, %v304
  %306 = vmatmul.bf16.gmra.mxu0 %v93
  %v307 = vpop.f32.mrf.mxu0
  %v308 = vadd.f32 %v68, %v307
  %v309 = vpop.f32.mrf.mxu0
  %v310 = vadd.f32 %v68, %v309
  %311 = vmatmul.bf16.gmra.mxu0 %v94
  %v312 = vpop.f32.mrf.mxu0
  %v313 = vadd.f32 %v68, %v312
  %v314 = vpop.f32.mrf.mxu0
  %v315 = vadd.f32 %v68, %v314
  %316 = vdwg.mxu0
  %317 = vmatpush.bf16.msra.mxu0 %v225
  %318 = vmatpush.bf16.msra.mxu0 %v221
  %319 = vmatpush.bf16.msra.mxu0 %v217
  %320 = vmatpush.bf16.msra.mxu0 %v213
  %321 = vmatpush.bf16.msra.mxu0 %v209
  %322 = vmatpush.bf16.msra.mxu0 %v205
  %323 = vmatpush.bf16.msra.mxu0 %v201
  %324 = vmatpush.bf16.msra.mxu0 %v197
  %325 = vmatmul.bf16.gmra.mxu0 %v91
  %v326 = vpop.f32.mrf.mxu0
  %v327 = vadd.f32 %v69, %v326
  %v328 = vpop.f32.mrf.mxu0
  %v329 = vadd.f32 %v69, %v328
  %330 = vmatmul.bf16.gmra.mxu0 %v92
  %v331 = vpop.f32.mrf.mxu0
  %v332 = vadd.f32 %v69, %v331
  %v333 = vpop.f32.mrf.mxu0
  %v334 = vadd.f32 %v69, %v333
  %335 = vmatmul.bf16.gmra.mxu0 %v93
  %v336 = vpop.f32.mrf.mxu0
  %v337 = vadd.f32 %v69, %v336
  %v338 = vpop.f32.mrf.mxu0
  %v339 = vadd.f32 %v69, %v338
  %340 = vmatmul.bf16.gmra.mxu0 %v94
  %v341 = vpop.f32.mrf.mxu0
  %v342 = vadd.f32 %v69, %v341
  %v343 = vpop.f32.mrf.mxu0
  %v344 = vadd.f32 %v69, %v343
  %345 = vdwg.mxu0
  %346 = vmatpush.bf16.msra.mxu0 %v226
  %347 = vmatpush.bf16.msra.mxu0 %v222
  %348 = vmatpush.bf16.msra.mxu0 %v218
  %349 = vmatpush.bf16.msra.mxu0 %v214
  %350 = vmatpush.bf16.msra.mxu0 %v210
  %351 = vmatpush.bf16.msra.mxu0 %v206
  %352 = vmatpush.bf16.msra.mxu0 %v202
  %353 = vmatpush.bf16.msra.mxu0 %v198
  %354 = vmatmul.bf16.gmra.mxu0 %v91
  %v355 = vpop.f32.mrf.mxu0
  %v356 = vadd.f32 %v70, %v355
  %v357 = vpop.f32.mrf.mxu0
  %v358 = vadd.f32 %v70, %v357
  %359 = vmatmul.bf16.gmra.mxu0 %v92
  %v360 = vpop.f32.mrf.mxu0
  %v361 = vadd.f32 %v70, %v360
  %v362 = vpop.f32.mrf.mxu0
  %v363 = vadd.f32 %v70, %v362
  %364 = vmatmul.bf16.gmra.mxu0 %v93
  %v365 = vpop.f32.mrf.mxu0
  %v366 = vadd.f32 %v70, %v365
  %v367 = vpop.f32.mrf.mxu0
  %v368 = vadd.f32 %v70, %v367
  %369 = vmatmul.bf16.gmra.mxu0 %v94
  %v370 = vpop.f32.mrf.mxu0
  %v371 = vadd.f32 %v70, %v370
  %v372 = vpop.f32.mrf.mxu0
  %v373 = vadd.f32 %v70, %v372
  %374 = vdwg.mxu0
  %375 = vst [vmem:[#allocation2] sm:$0xff] %v269
  %376 = vst [vmem:[#allocation2 + $0x8] sm:$0xff] %v298
  %377 = vst [vmem:[#allocation2 + $0x10] sm:$0xff] %v327
  %378 = vst [vmem:[#allocation2 + $0x18] sm:$0xff] %v356
  %379 = vst [vmem:[#allocation2 + $0x20] sm:$0xff] %v271
  %380 = vst [vmem:[#allocation2 + $0x28] sm:$0xff] %v300
  %381 = vst [vmem:[#allocation2 + $0x30] sm:$0xff] %v329
  %382 = vst [vmem:[#allocation2 + $0x38] sm:$0xff] %v358
  %383 = vst [vmem:[#allocation2 + $0x40] sm:$0xff] %v274
  %384 = vst [vmem:[#allocation2 + $0x48] sm:$0xff] %v303
  %385 = vst [vmem:[#allocation2 + $0x50] sm:$0xff] %v332
  %386 = vst [vmem:[#allocation2 + $0x58] sm:$0xff] %v361
  %387 = vst [vmem:[#allocation2 + $0x60] sm:$0xff] %v276
  %388 = vst [vmem:[#allocation2 + $0x68] sm:$0xff] %v305
  %389 = vst [vmem:[#allocation2 + $0x70] sm:$0xff] %v334
  %390 = vst [vmem:[#allocation2 + $0x78] sm:$0xff] %v363
  %391 = vst [vmem:[#allocation2 + $0x80] sm:$0xff] %v279
  %392 = vst [vmem:[#allocation2 + $0x88] sm:$0xff] %v308
  %393 = vst [vmem:[#allocation2 + $0x90] sm:$0xff] %v337
  %394 = vst [vmem:[#allocation2 + $0x98] sm:$0xff] %v366
  %395 = vst [vmem:[#allocation2 + $0xa0] sm:$0xff] %v281
  %396 = vst [vmem:[#allocation2 + $0xa8] sm:$0xff] %v310
  %397 = vst [vmem:[#allocation2 + $0xb0] sm:$0xff] %v339
  %398 = vst [vmem:[#allocation2 + $0xb8] sm:$0xff] %v368
  %399 = vst [vmem:[#allocation2 + $0xc0] sm:$0xff] %v284
  %400 = vst [vmem:[#allocation2 + $0xc8] sm:$0xff] %v313
  %401 = vst [vmem:[#allocation2 + $0xd0] sm:$0xff] %v342
  %402 = vst [vmem:[#allocation2 + $0xd8] sm:$0xff] %v371
  %403 = vst [vmem:[#allocation2 + $0xe0] sm:$0xff] %v286
  %404 = vst [vmem:[#allocation2 + $0xe8] sm:$0xff] %v315
  %405 = vst [vmem:[#allocation2 + $0xf0] sm:$0xff] %v344
  %406 = vst [vmem:[#allocation2 + $0xf8] sm:$0xff] %v373
  %v407 = vld [vmem:[#allocation2] sm:$0xff]
  %v408 = vld [vmem:[#allocation2 + $0x8] sm:$0xff]
  %v409 = vld [vmem:[#allocation2 + $0x10] sm:$0xff]
  %v410 = vld [vmem:[#allocation2 + $0x18] sm:$0xff]
  %v411 = vld [vmem:[%s2] sm:$0xff]
  %v412 = vld [vmem:[%s2 + $0x8] sm:$0xff]
  %v413 = vld [vmem:[%s2 + $0x10] sm:$0xff]
  %v414 = vld [vmem:[%s2 + $0x18] sm:$0xff]
  %v415 = vld [vmem:[%s2 + $0x20] sm:$0xff]
  %v416 = vld [vmem:[%s2 + $0x28] sm:$0xff]
  %v417 = vld [vmem:[%s2 + $0x30] sm:$0xff]
  %v418 = vld [vmem:[%s2 + $0x38] sm:$0xff]
  %v419 = vld [vmem:[%s2 + $0x40] sm:$0xff]
  %v420 = vld [vmem:[%s2 + $0x48] sm:$0xff]
  %v421 = vld [vmem:[%s2 + $0x50] sm:$0xff]
  %v422 = vld [vmem:[%s2 + $0x58] sm:$0xff]
  %v423 = vld [vmem:[%s2 + $0x60] sm:$0xff]
  %v424 = vld [vmem:[%s2 + $0x68] sm:$0xff]
  %v425 = vld [vmem:[%s2 + $0x70] sm:$0xff]
  %v426 = vld [vmem:[%s2 + $0x78] sm:$0xff]
  %v427 = vld [vmem:[%s2 + $0x80] sm:$0xff]
  %v428 = vld [vmem:[%s2 + $0x88] sm:$0xff]
  %v429 = vld [vmem:[%s2 + $0x90] sm:$0xff]
  %v430 = vld [vmem:[%s2 + $0x98] sm:$0xff]
  %v431 = vld [vmem:[%s2 + $0xa0] sm:$0xff]
  %v432 = vld [vmem:[%s2 + $0xa8] sm:$0xff]
  %v433 = vld [vmem:[%s2 + $0xb0] sm:$0xff]
  %v434 = vld [vmem:[%s2 + $0xb8] sm:$0xff]
  %v435 = vld [vmem:[%s2 + $0xc0] sm:$0xff]
  %v436 = vld [vmem:[%s2 + $0xc8] sm:$0xff]
  %v437 = vld [vmem:[%s2 + $0xd0] sm:$0xff]
  %v438 = vld [vmem:[%s2 + $0xd8] sm:$0xff]
  %v439 = vld [vmem:[%s2 + $0xe0] sm:$0xff]
  %v440 = vld [vmem:[%s2 + $0xe8] sm:$0xff]
  %v441 = vld [vmem:[%s2 + $0xf0] sm:$0xff]
  %v442 = vld [vmem:[%s2 + $0xf8] sm:$0xff]
  %v475 = vunpack.c.l.b16 %v411
  %v476 = vunpack.c.h.b16 %v411
  %v477 = vunpack.c.l.b16 %v412
  %v478 = vunpack.c.h.b16 %v412
  %v479 = vunpack.c.l.b16 %v413
  %v480 = vunpack.c.h.b16 %v413
  %v481 = vunpack.c.l.b16 %v414
  %v482 = vunpack.c.h.b16 %v414
  %v483 = vunpack.c.l.b16 %v415
  %v484 = vunpack.c.h.b16 %v415
  %v485 = vunpack.c.l.b16 %v416
  %v486 = vunpack.c.h.b16 %v416
  %v487 = vunpack.c.l.b16 %v417
  %v488 = vunpack.c.h.b16 %v417
  %v489 = vunpack.c.l.b16 %v418
  %v490 = vunpack.c.h.b16 %v418
  %v491 = vunpack.c.l.b16 %v419
  %v492 = vunpack.c.h.b16 %v419
  %v493 = vunpack.c.l.b16 %v420
  %v494 = vunpack.c.h.b16 %v420
  %v495 = vunpack.c.l.b16 %v421
  %v496 = vunpack.c.h.b16 %v421
  %v497 = vunpack.c.l.b16 %v422
  %v498 = vunpack.c.h.b16 %v422
  %v499 = vunpack.c.l.b16 %v423
  %v500 = vunpack.c.h.b16 %v423
  %v501 = vunpack.c.l.b16 %v424
  %v502 = vunpack.c.h.b16 %v424
  %v503 = vunpack.c.l.b16 %v425
  %v504 = vunpack.c.h.b16 %v425
  %v505 = vunpack.c.l.b16 %v426
  %v506 = vunpack.c.h.b16 %v426
  %v507 = vunpack.c.l.b16 %v427
  %v508 = vunpack.c.h.b16 %v427
  %v509 = vunpack.c.l.b16 %v428
  %v510 = vunpack.c.h.b16 %v428
  %v511 = vunpack.c.l.b16 %v429
  %v512 = vunpack.c.h.b16 %v429
  %v513 = vunpack.c.l.b16 %v430
  %v514 = vunpack.c.h.b16 %v430
  %v515 = vunpack.c.l.b16 %v431
  %v516 = vunpack.c.h.b16 %v431
  %v517 = vunpack.c.l.b16 %v432
  %v518 = vunpack.c.h.b16 %v432
  %v519 = vunpack.c.l.b16 %v433
  %v520 = vunpack.c.h.b16 %v433
  %v521 = vunpack.c.l.b16 %v434
  %v522 = vunpack.c.h.b16 %v434
  %v523 = vunpack.c.l.b16 %v435
  %v524 = vunpack.c.h.b16 %v435
  %v525 = vunpack.c.l.b16 %v436
  %v526 = vunpack.c.h.b16 %v436
  %v527 = vunpack.c.l.b16 %v437
  %v528 = vunpack.c.h.b16 %v437
  %v529 = vunpack.c.l.b16 %v438
  %v530 = vunpack.c.h.b16 %v438
  %v531 = vunpack.c.l.b16 %v439
  %v532 = vunpack.c.h.b16 %v439
  %v533 = vunpack.c.l.b16 %v440
  %v534 = vunpack.c.h.b16 %v440
  %v535 = vunpack.c.l.b16 %v441
  %v536 = vunpack.c.h.b16 %v441
  %v537 = vunpack.c.l.b16 %v442
  %v538 = vunpack.c.h.b16 %v442
  %v539 = vpack.c.b16 %v479, %v475
  %v540 = vpack.c.b16 %v480, %v476
  %v541 = vpack.c.b16 %v481, %v477
  %v542 = vpack.c.b16 %v482, %v478
  %v543 = vpack.c.b16 %v487, %v483
  %v544 = vpack.c.b16 %v488, %v484
  %v545 = vpack.c.b16 %v489, %v485
  %v546 = vpack.c.b16 %v490, %v486
  %v547 = vpack.c.b16 %v495, %v491
  %v548 = vpack.c.b16 %v496, %v492
  %v549 = vpack.c.b16 %v497, %v493
  %v550 = vpack.c.b16 %v498, %v494
  %v551 = vpack.c.b16 %v503, %v499
  %v552 = vpack.c.b16 %v504, %v500
  %v553 = vpack.c.b16 %v505, %v501
  %v554 = vpack.c.b16 %v506, %v502
  %v555 = vpack.c.b16 %v511, %v507
  %v556 = vpack.c.b16 %v512, %v508
  %v557 = vpack.c.b16 %v513, %v509
  %v558 = vpack.c.b16 %v514, %v510
  %v559 = vpack.c.b16 %v519, %v515
  %v560 = vpack.c.b16 %v520, %v516
  %v561 = vpack.c.b16 %v521, %v517
  %v562 = vpack.c.b16 %v522, %v518
  %v563 = vpack.c.b16 %v527, %v523
  %v564 = vpack.c.b16 %v528, %v524
  %v565 = vpack.c.b16 %v529, %v525
  %v566 = vpack.c.b16 %v530, %v526
  %v567 = vpack.c.b16 %v535, %v531
  %v568 = vpack.c.b16 %v536, %v532
  %v569 = vpack.c.b16 %v537, %v533
  %v570 = vpack.c.b16 %v538, %v534
  %603 = vmatpush.bf16.msra.mxu0 %v567
  %604 = vmatpush.bf16.msra.mxu0 %v563
  %605 = vmatpush.bf16.msra.mxu0 %v559
  %606 = vmatpush.bf16.msra.mxu0 %v555
  %607 = vmatpush.bf16.msra.mxu0 %v551
  %608 = vmatpush.bf16.msra.mxu0 %v547
  %609 = vmatpush.bf16.msra.mxu0 %v543
  %610 = vmatpush.bf16.msra.mxu0 %v539
  %611 = vmatmul.bf16.gmra.mxu0 0
  %v612 = vpop.f32.mrf.mxu0
  %v613 = vadd.f32 0.0, %v612
  %v614 = vpop.f32.mrf.mxu0
  %615 = vdwg.mxu0
  %616 = vmatpush.bf16.msra.mxu0 %v568
  %617 = vmatpush.bf16.msra.mxu0 %v564
  %618 = vmatpush.bf16.msra.mxu0 %v560
  %619 = vmatpush.bf16.msra.mxu0 %v556
  %620 = vmatpush.bf16.msra.mxu0 %v552
  %621 = vmatpush.bf16.msra.mxu0 %v548
  %622 = vmatpush.bf16.msra.mxu0 %v544
  %623 = vmatpush.bf16.msra.mxu0 %v540
  %624 = vmatmul.bf16.gmra.mxu0 0
  %v625 = vpop.f32.mrf.mxu0
  %v626 = vadd.f32 0.0, %v625
  %v627 = vpop.f32.mrf.mxu0
  %628 = vdwg.mxu0
  %629 = vmatpush.bf16.msra.mxu0 %v569
  %630 = vmatpush.bf16.msra.mxu0 %v565
  %631 = vmatpush.bf16.msra.mxu0 %v561
  %632 = vmatpush.bf16.msra.mxu0 %v557
  %633 = vmatpush.bf16.msra.mxu0 %v553
  %634 = vmatpush.bf16.msra.mxu0 %v549
  %635 = vmatpush.bf16.msra.mxu0 %v545
  %636 = vmatpush.bf16.msra.mxu0 %v541
  %637 = vmatmul.bf16.gmra.mxu0 0
  %v638 = vpop.f32.mrf.mxu0
  %v639 = vadd.f32 0.0, %v638
  %v640 = vpop.f32.mrf.mxu0
  %641 = vdwg.mxu0
  %642 = vmatpush.bf16.msra.mxu0 %v570
  %643 = vmatpush.bf16.msra.mxu0 %v566
  %644 = vmatpush.bf16.msra.mxu0 %v562
  %645 = vmatpush.bf16.msra.mxu0 %v558
  %646 = vmatpush.bf16.msra.mxu0 %v554
  %647 = vmatpush.bf16.msra.mxu0 %v550
  %648 = vmatpush.bf16.msra.mxu0 %v546
  %649 = vmatpush.bf16.msra.mxu0 %v542
  %650 = vmatmul.bf16.gmra.mxu0 0
  %v651 = vpop.f32.mrf.mxu0
  %v652 = vadd.f32 0.0, %v651
  %v653 = vpop.f32.mrf.mxu0
  %654 = vdwg.mxu0
  %v655 = vadd.f32 %v407, %v613
  %v656 = vadd.f32 %v408, %v626
  %v657 = vadd.f32 %v409, %v639
  %v658 = vadd.f32 %v410, %v652
  %v659 = vxor.u32 %v655, 2147483648
  %v660 = vmul.f32 %v659, 1.442695
  %v661 = vpow.pop %v660
  %v662 = vadd.f32 %v661, 1.0
  %v663 = vrcp.pop %v662
  %v664 = vmul.f32 %v662, %v663
  %v665 = vsub.f32 1.0, %v664
  %v666 = vmul.f32 %v663, %v665
  %v667 = vadd.f32 %v663, %v666
  %vm668 = vweird.f32 %v662
  %vm669 = vweird.f32 %v663
  %vm670 = vmor %vm668, %vm669
  %v671 = vsel %vm670, %v663, %v667
  %v672 = vand.u32 2147483647, %v662
  %vm673 = vcmp.eq.f32.partialorder %v672, 8.507059e+37
  %v674 = vand.u32 %v662, 2147483648
  %v675 = vor.u32 1.1754944e-38, %v674
  %v676 = vsel %vm673, %v675, %v671
  %v677 = vmul.f32 1.0, %v676
  %v678 = vxor.u32 %v656, 2147483648
  %v679 = vmul.f32 %v678, 1.442695
  %v680 = vpow.pop %v679
  %v681 = vadd.f32 %v680, 1.0
  %v682 = vrcp.pop %v681
  %v683 = vmul.f32 %v681, %v682
  %v684 = vsub.f32 1.0, %v683
  %v685 = vmul.f32 %v682, %v684
  %v686 = vadd.f32 %v682, %v685
  %vm687 = vweird.f32 %v681
  %vm688 = vweird.f32 %v682
  %vm689 = vmor %vm687, %vm688
  %v690 = vsel %vm689, %v682, %v686
  %v691 = vand.u32 2147483647, %v681
  %vm692 = vcmp.eq.f32.partialorder %v691, 8.507059e+37
  %v693 = vand.u32 %v681, 2147483648
  %v694 = vor.u32 1.1754944e-38, %v693
  %v695 = vsel %vm692, %v694, %v690
  %v696 = vmul.f32 1.0, %v695
  %v697 = vtanh.pop %v657
  %v698 = vxor.u32 %v658, 2147483648
  %v699 = vmul.f32 %v698, 1.442695
  %v700 = vpow.pop %v699
  %v701 = vadd.f32 %v700, 1.0
  %v702 = vrcp.pop %v701
  %v703 = vmul.f32 %v701, %v702
  %v704 = vsub.f32 1.0, %v703
  %v705 = vmul.f32 %v702, %v704
  %v706 = vadd.f32 %v702, %v705
  %vm707 = vweird.f32 %v701
  %vm708 = vweird.f32 %v702
  %vm709 = vmor %vm707, %vm708
  %v710 = vsel %vm709, %v702, %v706
  %v711 = vand.u32 2147483647, %v701
  %vm712 = vcmp.eq.f32.partialorder %v711, 8.507059e+37
  %v713 = vand.u32 %v701, 2147483648
  %v714 = vor.u32 1.1754944e-38, %v713
  %v715 = vsel %vm712, %v714, %v710
  %v716 = vmul.f32 1.0, %v715
  %v717 = vmul.f32 %v696, 0.0
  %v718 = vmul.f32 %v677, %v697
  %v719 = vadd.f32 %v717, %v718
  %v720 = vtanh.pop %v719
  %v721 = vmul.f32 %v716, %v720
  %v722 = vpack.c.bf16 %v721, %v721
  %723 = vst [vmem:[%s6] sm:$0xf] %v722
  %v724 = vld [vmem:[#allocation2 + $0x20] sm:$0xff]
  %v725 = vld [vmem:[#allocation2 + $0x28] sm:$0xff]
  %v726 = vld [vmem:[#allocation2 + $0x30] sm:$0xff]
  %v727 = vld [vmem:[#allocation2 + $0x38] sm:$0xff]
  %v728 = vld [vmem:[%s2] sm:$0xff]
  %v729 = vld [vmem:[%s2 + $0x8] sm:$0xff]
  %v730 = vld [vmem:[%s2 + $0x10] sm:$0xff]
  %v731 = vld [vmem:[%s2 + $0x18] sm:$0xff]
  %v732 = vld [vmem:[%s2 + $0x20] sm:$0xff]
  %v733 = vld [vmem:[%s2 + $0x28] sm:$0xff]
  %v734 = vld [vmem:[%s2 + $0x30] sm:$0xff]
  %v735 = vld [vmem:[%s2 + $0x38] sm:$0xff]
  %v736 = vld [vmem:[%s2 + $0x40] sm:$0xff]
  %v737 = vld [vmem:[%s2 + $0x48] sm:$0xff]
  %v738 = vld [vmem:[%s2 + $0x50] sm:$0xff]
  %v739 = vld [vmem:[%s2 + $0x58] sm:$0xff]
  %v740 = vld [vmem:[%s2 + $0x60] sm:$0xff]
  %v741 = vld [vmem:[%s2 + $0x68] sm:$0xff]
  %v742 = vld [vmem:[%s2 + $0x70] sm:$0xff]
  %v743 = vld [vmem:[%s2 + $0x78] sm:$0xff]
  %v744 = vld [vmem:[%s2 + $0x80] sm:$0xff]
  %v745 = vld [vmem:[%s2 + $0x88] sm:$0xff]
  %v746 = vld [vmem:[%s2 + $0x90] sm:$0xff]
  %v747 = vld [vmem:[%s2 + $0x98] sm:$0xff]
  %v748 = vld [vmem:[%s2 + $0xa0] sm:$0xff]
  %v749 = vld [vmem:[%s2 + $0xa8] sm:$0xff]
  %v750 = vld [vmem:[%s2 + $0xb0] sm:$0xff]
  %v751 = vld [vmem:[%s2 + $0xb8] sm:$0xff]
  %v752 = vld [vmem:[%s2 + $0xc0] sm:$0xff]
  %v753 = vld [vmem:[%s2 + $0xc8] sm:$0xff]
  %v754 = vld [vmem:[%s2 + $0xd0] sm:$0xff]
  %v755 = vld [vmem:[%s2 + $0xd8] sm:$0xff]
  %v756 = vld [vmem:[%s2 + $0xe0] sm:$0xff]
  %v757 = vld [vmem:[%s2 + $0xe8] sm:$0xff]
  %v758 = vld [vmem:[%s2 + $0xf0] sm:$0xff]
  %v759 = vld [vmem:[%s2 + $0xf8] sm:$0xff]
  %v792 = vunpack.c.l.b16 %v728
  %v793 = vunpack.c.h.b16 %v728
  %v794 = vunpack.c.l.b16 %v729
  %v795 = vunpack.c.h.b16 %v729
  %v796 = vunpack.c.l.b16 %v730
  %v797 = vunpack.c.h.b16 %v730
  %v798 = vunpack.c.l.b16 %v731
  %v799 = vunpack.c.h.b16 %v731
  %v800 = vunpack.c.l.b16 %v732
  %v801 = vunpack.c.h.b16 %v732
  %v802 = vunpack.c.l.b16 %v733
  %v803 = vunpack.c.h.b16 %v733
  %v804 = vunpack.c.l.b16 %v734
  %v805 = vunpack.c.h.b16 %v734
  %v806 = vunpack.c.l.b16 %v735
  %v807 = vunpack.c.h.b16 %v735
  %v808 = vunpack.c.l.b16 %v736
  %v809 = vunpack.c.h.b16 %v736
  %v810 = vunpack.c.l.b16 %v737
  %v811 = vunpack.c.h.b16 %v737
  %v812 = vunpack.c.l.b16 %v738
  %v813 = vunpack.c.h.b16 %v738
  %v814 = vunpack.c.l.b16 %v739
  %v815 = vunpack.c.h.b16 %v739
  %v816 = vunpack.c.l.b16 %v740
  %v817 = vunpack.c.h.b16 %v740
  %v818 = vunpack.c.l.b16 %v741
  %v819 = vunpack.c.h.b16 %v741
  %v820 = vunpack.c.l.b16 %v742
  %v821 = vunpack.c.h.b16 %v742
  %v822 = vunpack.c.l.b16 %v743
  %v823 = vunpack.c.h.b16 %v743
  %v824 = vunpack.c.l.b16 %v744
  %v825 = vunpack.c.h.b16 %v744
  %v826 = vunpack.c.l.b16 %v745
  %v827 = vunpack.c.h.b16 %v745
  %v828 = vunpack.c.l.b16 %v746
  %v829 = vunpack.c.h.b16 %v746
  %v830 = vunpack.c.l.b16 %v747
  %v831 = vunpack.c.h.b16 %v747
  %v832 = vunpack.c.l.b16 %v748
  %v833 = vunpack.c.h.b16 %v748
  %v834 = vunpack.c.l.b16 %v749
  %v835 = vunpack.c.h.b16 %v749
  %v836 = vunpack.c.l.b16 %v750
  %v837 = vunpack.c.h.b16 %v750
  %v838 = vunpack.c.l.b16 %v751
  %v839 = vunpack.c.h.b16 %v751
  %v840 = vunpack.c.l.b16 %v752
  %v841 = vunpack.c.h.b16 %v752
  %v842 = vunpack.c.l.b16 %v753
  %v843 = vunpack.c.h.b16 %v753
  %v844 = vunpack.c.l.b16 %v754
  %v845 = vunpack.c.h.b16 %v754
  %v846 = vunpack.c.l.b16 %v755
  %v847 = vunpack.c.h.b16 %v755
  %v848 = vunpack.c.l.b16 %v756
  %v849 = vunpack.c.h.b16 %v756
  %v850 = vunpack.c.l.b16 %v757
  %v851 = vunpack.c.h.b16 %v757
  %v852 = vunpack.c.l.b16 %v758
  %v853 = vunpack.c.h.b16 %v758
  %v854 = vunpack.c.l.b16 %v759
  %v855 = vunpack.c.h.b16 %v759
  %v856 = vpack.c.b16 %v796, %v792
  %v857 = vpack.c.b16 %v797, %v793
  %v858 = vpack.c.b16 %v798, %v794
  %v859 = vpack.c.b16 %v799, %v795
  %v860 = vpack.c.b16 %v804, %v800
  %v861 = vpack.c.b16 %v805, %v801
  %v862 = vpack.c.b16 %v806, %v802
  %v863 = vpack.c.b16 %v807, %v803
  %v864 = vpack.c.b16 %v812, %v808
  %v865 = vpack.c.b16 %v813, %v809
  %v866 = vpack.c.b16 %v814, %v810
  %v867 = vpack.c.b16 %v815, %v811
  %v868 = vpack.c.b16 %v820, %v816
  %v869 = vpack.c.b16 %v821, %v817
  %v870 = vpack.c.b16 %v822, %v818
  %v871 = vpack.c.b16 %v823, %v819
  %v872 = vpack.c.b16 %v828, %v824
  %v873 = vpack.c.b16 %v829, %v825
  %v874 = vpack.c.b16 %v830, %v826
  %v875 = vpack.c.b16 %v831, %v827
  %v876 = vpack.c.b16 %v836, %v832
  %v877 = vpack.c.b16 %v837, %v833
  %v878 = vpack.c.b16 %v838, %v834
  %v879 = vpack.c.b16 %v839, %v835
  %v880 = vpack.c.b16 %v844, %v840
  %v881 = vpack.c.b16 %v845, %v841
  %v882 = vpack.c.b16 %v846, %v842
  %v883 = vpack.c.b16 %v847, %v843
  %v884 = vpack.c.b16 %v852, %v848
  %v885 = vpack.c.b16 %v853, %v849
  %v886 = vpack.c.b16 %v854, %v850
  %v887 = vpack.c.b16 %v855, %v851
  %920 = vmatpush.bf16.msra.mxu0 %v884
  %921 = vmatpush.bf16.msra.mxu0 %v880
  %922 = vmatpush.bf16.msra.mxu0 %v876
  %923 = vmatpush.bf16.msra.mxu0 %v872
  %924 = vmatpush.bf16.msra.mxu0 %v868
  %925 = vmatpush.bf16.msra.mxu0 %v864
  %926 = vmatpush.bf16.msra.mxu0 %v860
  %927 = vmatpush.bf16.msra.mxu0 %v856
  %928 = vmatmul.bf16.gmra.mxu0 %v722
  %v929 = vpop.f32.mrf.mxu0
  %v930 = vadd.f32 0.0, %v929
  %v931 = vpop.f32.mrf.mxu0
  %932 = vdwg.mxu0
  %933 = vmatpush.bf16.msra.mxu0 %v885
  %934 = vmatpush.bf16.msra.mxu0 %v881
  %935 = vmatpush.bf16.msra.mxu0 %v877
  %936 = vmatpush.bf16.msra.mxu0 %v873
  %937 = vmatpush.bf16.msra.mxu0 %v869
  %938 = vmatpush.bf16.msra.mxu0 %v865
  %939 = vmatpush.bf16.msra.mxu0 %v861
  %940 = vmatpush.bf16.msra.mxu0 %v857
  %941 = vmatmul.bf16.gmra.mxu0 %v722
  %v942 = vpop.f32.mrf.mxu0
  %v943 = vadd.f32 0.0, %v942
  %v944 = vpop.f32.mrf.mxu0
  %945 = vdwg.mxu0
  %946 = vmatpush.bf16.msra.mxu0 %v886
  %947 = vmatpush.bf16.msra.mxu0 %v882
  %948 = vmatpush.bf16.msra.mxu0 %v878
  %949 = vmatpush.bf16.msra.mxu0 %v874
  %950 = vmatpush.bf16.msra.mxu0 %v870
  %951 = vmatpush.bf16.msra.mxu0 %v866
  %952 = vmatpush.bf16.msra.mxu0 %v862
  %953 = vmatpush.bf16.msra.mxu0 %v858
  %954 = vmatmul.bf16.gmra.mxu0 %v722
  %v955 = vpop.f32.mrf.mxu0
  %v956 = vadd.f32 0.0, %v955
  %v957 = vpop.f32.mrf.mxu0
  %958 = vdwg.mxu0
  %959 = vmatpush.bf16.msra.mxu0 %v887
  %960 = vmatpush.bf16.msra.mxu0 %v883
  %961 = vmatpush.bf16.msra.mxu0 %v879
  %962 = vmatpush.bf16.msra.mxu0 %v875
  %963 = vmatpush.bf16.msra.mxu0 %v871
  %964 = vmatpush.bf16.msra.mxu0 %v867
  %965 = vmatpush.bf16.msra.mxu0 %v863
  %966 = vmatpush.bf16.msra.mxu0 %v859
  %967 = vmatmul.bf16.gmra.mxu0 %v722
  %v968 = vpop.f32.mrf.mxu0
  %v969 = vadd.f32 0.0, %v968
  %v970 = vpop.f32.mrf.mxu0
  %971 = vdwg.mxu0
  %v972 = vadd.f32 %v724, %v930
  %v973 = vadd.f32 %v725, %v943
  %v974 = vadd.f32 %v726, %v956
  %v975 = vadd.f32 %v727, %v969
  %v976 = vxor.u32 %v972, 2147483648
  %v977 = vmul.f32 %v976, 1.442695
  %v978 = vpow.pop %v977
  %v979 = vadd.f32 %v978, 1.0
  %v980 = vrcp.pop %v979
  %v981 = vmul.f32 %v979, %v980
  %v982 = vsub.f32 1.0, %v981
  %v983 = vmul.f32 %v980, %v982
  %v984 = vadd.f32 %v980, %v983
  %vm985 = vweird.f32 %v979
  %vm986 = vweird.f32 %v980
  %vm987 = vmor %vm985, %vm986
  %v988 = vsel %vm987, %v980, %v984
  %v989 = vand.u32 2147483647, %v979
  %vm990 = vcmp.eq.f32.partialorder %v989, 8.507059e+37
  %v991 = vand.u32 %v979, 2147483648
  %v992 = vor.u32 1.1754944e-38, %v991
  %v993 = vsel %vm990, %v992, %v988
  %v994 = vmul.f32 1.0, %v993
  %v995 = vxor.u32 %v973, 2147483648
  %v996 = vmul.f32 %v995, 1.442695
  %v997 = vpow.pop %v996
  %v998 = vadd.f32 %v997, 1.0
  %v999 = vrcp.pop %v998
  %v1000 = vmul.f32 %v998, %v999
  %v1001 = vsub.f32 1.0, %v1000
  %v1002 = vmul.f32 %v999, %v1001
  %v1003 = vadd.f32 %v999, %v1002
  %vm1004 = vweird.f32 %v998
  %vm1005 = vweird.f32 %v999
  %vm1006 = vmor %vm1004, %vm1005
  %v1007 = vsel %vm1006, %v999, %v1003
  %v1008 = vand.u32 2147483647, %v998
  %vm1009 = vcmp.eq.f32.partialorder %v1008, 8.507059e+37
  %v1010 = vand.u32 %v998, 2147483648
  %v1011 = vor.u32 1.1754944e-38, %v1010
  %v1012 = vsel %vm1009, %v1011, %v1007
  %v1013 = vmul.f32 1.0, %v1012
  %v1014 = vtanh.pop %v974
  %v1015 = vxor.u32 %v975, 2147483648
  %v1016 = vmul.f32 %v1015, 1.442695
  %v1017 = vpow.pop %v1016
  %v1018 = vadd.f32 %v1017, 1.0
  %v1019 = vrcp.pop %v1018
  %v1020 = vmul.f32 %v1018, %v1019
  %v1021 = vsub.f32 1.0, %v1020
  %v1022 = vmul.f32 %v1019, %v1021
  %v1023 = vadd.f32 %v1019, %v1022
  %vm1024 = vweird.f32 %v1018
  %vm1025 = vweird.f32 %v1019
  %vm1026 = vmor %vm1024, %vm1025
  %v1027 = vsel %vm1026, %v1019, %v1023
  %v1028 = vand.u32 2147483647, %v1018
  %vm1029 = vcmp.eq.f32.partialorder %v1028, 8.507059e+37
  %v1030 = vand.u32 %v1018, 2147483648
  %v1031 = vor.u32 1.1754944e-38, %v1030
  %v1032 = vsel %vm1029, %v1031, %v1027
  %v1033 = vmul.f32 1.0, %v1032
  %v1034 = vmul.f32 %v1013, %v719
  %v1035 = vmul.f32 %v994, %v1014
  %v1036 = vadd.f32 %v1034, %v1035
  %v1037 = vtanh.pop %v1036
  %v1038 = vmul.f32 %v1033, %v1037
  %v1039 = vpack.c.bf16 %v1038, %v1038
  %1040 = vst [vmem:[%s6 + $0x4] sm:$0xf] %v1039
  %v1041 = vld [vmem:[#allocation2 + $0x40] sm:$0xff]
  %v1042 = vld [vmem:[#allocation2 + $0x48] sm:$0xff]
  %v1043 = vld [vmem:[#allocation2 + $0x50] sm:$0xff]
  %v1044 = vld [vmem:[#allocation2 + $0x58] sm:$0xff]
  %v1045 = vld [vmem:[%s2] sm:$0xff]
  %v1046 = vld [vmem:[%s2 + $0x8] sm:$0xff]
  %v1047 = vld [vmem:[%s2 + $0x10] sm:$0xff]
  %v1048 = vld [vmem:[%s2 + $0x18] sm:$0xff]
  %v1049 = vld [vmem:[%s2 + $0x20] sm:$0xff]
  %v1050 = vld [vmem:[%s2 + $0x28] sm:$0xff]
  %v1051 = vld [vmem:[%s2 + $0x30] sm:$0xff]
  %v1052 = vld [vmem:[%s2 + $0x38] sm:$0xff]
  %v1053 = vld [vmem:[%s2 + $0x40] sm:$0xff]
  %v1054 = vld [vmem:[%s2 + $0x48] sm:$0xff]
  %v1055 = vld [vmem:[%s2 + $0x50] sm:$0xff]
  %v1056 = vld [vmem:[%s2 + $0x58] sm:$0xff]
  %v1057 = vld [vmem:[%s2 + $0x60] sm:$0xff]
  %v1058 = vld [vmem:[%s2 + $0x68] sm:$0xff]
  %v1059 = vld [vmem:[%s2 + $0x70] sm:$0xff]
  %v1060 = vld [vmem:[%s2 + $0x78] sm:$0xff]
  %v1061 = vld [vmem:[%s2 + $0x80] sm:$0xff]
  %v1062 = vld [vmem:[%s2 + $0x88] sm:$0xff]
  %v1063 = vld [vmem:[%s2 + $0x90] sm:$0xff]
  %v1064 = vld [vmem:[%s2 + $0x98] sm:$0xff]
  %v1065 = vld [vmem:[%s2 + $0xa0] sm:$0xff]
  %v1066 = vld [vmem:[%s2 + $0xa8] sm:$0xff]
  %v1067 = vld [vmem:[%s2 + $0xb0] sm:$0xff]
  %v1068 = vld [vmem:[%s2 + $0xb8] sm:$0xff]
  %v1069 = vld [vmem:[%s2 + $0xc0] sm:$0xff]
  %v1070 = vld [vmem:[%s2 + $0xc8] sm:$0xff]
  %v1071 = vld [vmem:[%s2 + $0xd0] sm:$0xff]
  %v1072 = vld [vmem:[%s2 + $0xd8] sm:$0xff]
  %v1073 = vld [vmem:[%s2 + $0xe0] sm:$0xff]
  %v1074 = vld [vmem:[%s2 + $0xe8] sm:$0xff]
  %v1075 = vld [vmem:[%s2 + $0xf0] sm:$0xff]
  %v1076 = vld [vmem:[%s2 + $0xf8] sm:$0xff]
  %v1109 = vunpack.c.l.b16 %v1045
  %v1110 = vunpack.c.h.b16 %v1045
  %v1111 = vunpack.c.l.b16 %v1046
  %v1112 = vunpack.c.h.b16 %v1046
  %v1113 = vunpack.c.l.b16 %v1047
  %v1114 = vunpack.c.h.b16 %v1047
  %v1115 = vunpack.c.l.b16 %v1048
  %v1116 = vunpack.c.h.b16 %v1048
  %v1117 = vunpack.c.l.b16 %v1049
  %v1118 = vunpack.c.h.b16 %v1049
  %v1119 = vunpack.c.l.b16 %v1050
  %v1120 = vunpack.c.h.b16 %v1050
  %v1121 = vunpack.c.l.b16 %v1051
  %v1122 = vunpack.c.h.b16 %v1051
  %v1123 = vunpack.c.l.b16 %v1052
  %v1124 = vunpack.c.h.b16 %v1052
  %v1125 = vunpack.c.l.b16 %v1053
  %v1126 = vunpack.c.h.b16 %v1053
  %v1127 = vunpack.c.l.b16 %v1054
  %v1128 = vunpack.c.h.b16 %v1054
  %v1129 = vunpack.c.l.b16 %v1055
  %v1130 = vunpack.c.h.b16 %v1055
  %v1131 = vunpack.c.l.b16 %v1056
  %v1132 = vunpack.c.h.b16 %v1056
  %v1133 = vunpack.c.l.b16 %v1057
  %v1134 = vunpack.c.h.b16 %v1057
  %v1135 = vunpack.c.l.b16 %v1058
  %v1136 = vunpack.c.h.b16 %v1058
  %v1137 = vunpack.c.l.b16 %v1059
  %v1138 = vunpack.c.h.b16 %v1059
  %v1139 = vunpack.c.l.b16 %v1060
  %v1140 = vunpack.c.h.b16 %v1060
  %v1141 = vunpack.c.l.b16 %v1061
  %v1142 = vunpack.c.h.b16 %v1061
  %v1143 = vunpack.c.l.b16 %v1062
  %v1144 = vunpack.c.h.b16 %v1062
  %v1145 = vunpack.c.l.b16 %v1063
  %v1146 = vunpack.c.h.b16 %v1063
  %v1147 = vunpack.c.l.b16 %v1064
  %v1148 = vunpack.c.h.b16 %v1064
  %v1149 = vunpack.c.l.b16 %v1065
  %v1150 = vunpack.c.h.b16 %v1065
  %v1151 = vunpack.c.l.b16 %v1066
  %v1152 = vunpack.c.h.b16 %v1066
  %v1153 = vunpack.c.l.b16 %v1067
  %v1154 = vunpack.c.h.b16 %v1067
  %v1155 = vunpack.c.l.b16 %v1068
  %v1156 = vunpack.c.h.b16 %v1068
  %v1157 = vunpack.c.l.b16 %v1069
  %v1158 = vunpack.c.h.b16 %v1069
  %v1159 = vunpack.c.l.b16 %v1070
  %v1160 = vunpack.c.h.b16 %v1070
  %v1161 = vunpack.c.l.b16 %v1071
  %v1162 = vunpack.c.h.b16 %v1071
  %v1163 = vunpack.c.l.b16 %v1072
  %v1164 = vunpack.c.h.b16 %v1072
  %v1165 = vunpack.c.l.b16 %v1073
  %v1166 = vunpack.c.h.b16 %v1073
  %v1167 = vunpack.c.l.b16 %v1074
  %v1168 = vunpack.c.h.b16 %v1074
  %v1169 = vunpack.c.l.b16 %v1075
  %v1170 = vunpack.c.h.b16 %v1075
  %v1171 = vunpack.c.l.b16 %v1076
  %v1172 = vunpack.c.h.b16 %v1076
  %v1173 = vpack.c.b16 %v1113, %v1109
  %v1174 = vpack.c.b16 %v1114, %v1110
  %v1175 = vpack.c.b16 %v1115, %v1111
  %v1176 = vpack.c.b16 %v1116, %v1112
  %v1177 = vpack.c.b16 %v1121, %v1117
  %v1178 = vpack.c.b16 %v1122, %v1118
  %v1179 = vpack.c.b16 %v1123, %v1119
  %v1180 = vpack.c.b16 %v1124, %v1120
  %v1181 = vpack.c.b16 %v1129, %v1125
  %v1182 = vpack.c.b16 %v1130, %v1126
  %v1183 = vpack.c.b16 %v1131, %v1127
  %v1184 = vpack.c.b16 %v1132, %v1128
  %v1185 = vpack.c.b16 %v1137, %v1133
  %v1186 = vpack.c.b16 %v1138, %v1134
  %v1187 = vpack.c.b16 %v1139, %v1135
  %v1188 = vpack.c.b16 %v1140, %v1136
  %v1189 = vpack.c.b16 %v1145, %v1141
  %v1190 = vpack.c.b16 %v1146, %v1142
  %v1191 = vpack.c.b16 %v1147, %v1143
  %v1192 = vpack.c.b16 %v1148, %v1144
  %v1193 = vpack.c.b16 %v1153, %v1149
  %v1194 = vpack.c.b16 %v1154, %v1150
  %v1195 = vpack.c.b16 %v1155, %v1151
  %v1196 = vpack.c.b16 %v1156, %v1152
  %v1197 = vpack.c.b16 %v1161, %v1157
  %v1198 = vpack.c.b16 %v1162, %v1158
  %v1199 = vpack.c.b16 %v1163, %v1159
  %v1200 = vpack.c.b16 %v1164, %v1160
  %v1201 = vpack.c.b16 %v1169, %v1165
  %v1202 = vpack.c.b16 %v1170, %v1166
  %v1203 = vpack.c.b16 %v1171, %v1167
  %v1204 = vpack.c.b16 %v1172, %v1168
  %1237 = vmatpush.bf16.msra.mxu0 %v1201
  %1238 = vmatpush.bf16.msra.mxu0 %v1197
  %1239 = vmatpush.bf16.msra.mxu0 %v1193
  %1240 = vmatpush.bf16.msra.mxu0 %v1189
  %1241 = vmatpush.bf16.msra.mxu0 %v1185
  %1242 = vmatpush.bf16.msra.mxu0 %v1181
  %1243 = vmatpush.bf16.msra.mxu0 %v1177
  %1244 = vmatpush.bf16.msra.mxu0 %v1173
  %1245 = vmatmul.bf16.gmra.mxu0 %v1039
  %v1246 = vpop.f32.mrf.mxu0
  %v1247 = vadd.f32 0.0, %v1246
  %v1248 = vpop.f32.mrf.mxu0
  %1249 = vdwg.mxu0
  %1250 = vmatpush.bf16.msra.mxu0 %v1202
  %1251 = vmatpush.bf16.msra.mxu0 %v1198
  %1252 = vmatpush.bf16.msra.mxu0 %v1194
  %1253 = vmatpush.bf16.msra.mxu0 %v1190
  %1254 = vmatpush.bf16.msra.mxu0 %v1186
  %1255 = vmatpush.bf16.msra.mxu0 %v1182
  %1256 = vmatpush.bf16.msra.mxu0 %v1178
  %1257 = vmatpush.bf16.msra.mxu0 %v1174
  %1258 = vmatmul.bf16.gmra.mxu0 %v1039
  %v1259 = vpop.f32.mrf.mxu0
  %v1260 = vadd.f32 0.0, %v1259
  %v1261 = vpop.f32.mrf.mxu0
  %1262 = vdwg.mxu0
  %1263 = vmatpush.bf16.msra.mxu0 %v1203
  %1264 = vmatpush.bf16.msra.mxu0 %v1199
  %1265 = vmatpush.bf16.msra.mxu0 %v1195
  %1266 = vmatpush.bf16.msra.mxu0 %v1191
  %1267 = vmatpush.bf16.msra.mxu0 %v1187
  %1268 = vmatpush.bf16.msra.mxu0 %v1183
  %1269 = vmatpush.bf16.msra.mxu0 %v1179
  %1270 = vmatpush.bf16.msra.mxu0 %v1175
  %1271 = vmatmul.bf16.gmra.mxu0 %v1039
  %v1272 = vpop.f32.mrf.mxu0
  %v1273 = vadd.f32 0.0, %v1272
  %v1274 = vpop.f32.mrf.mxu0
  %1275 = vdwg.mxu0
  %1276 = vmatpush.bf16.msra.mxu0 %v1204
  %1277 = vmatpush.bf16.msra.mxu0 %v1200
  %1278 = vmatpush.bf16.msra.mxu0 %v1196
  %1279 = vmatpush.bf16.msra.mxu0 %v1192
  %1280 = vmatpush.bf16.msra.mxu0 %v1188
  %1281 = vmatpush.bf16.msra.mxu0 %v1184
  %1282 = vmatpush.bf16.msra.mxu0 %v1180
  %1283 = vmatpush.bf16.msra.mxu0 %v1176
  %1284 = vmatmul.bf16.gmra.mxu0 %v1039
  %v1285 = vpop.f32.mrf.mxu0
  %v1286 = vadd.f32 0.0, %v1285
  %v1287 = vpop.f32.mrf.mxu0
  %1288 = vdwg.mxu0
  %v1289 = vadd.f32 %v1041, %v1247
  %v1290 = vadd.f32 %v1042, %v1260
  %v1291 = vadd.f32 %v1043, %v1273
  %v1292 = vadd.f32 %v1044, %v1286
  %v1293 = vxor.u32 %v1289, 2147483648
  %v1294 = vmul.f32 %v1293, 1.442695
  %v1295 = vpow.pop %v1294
  %v1296 = vadd.f32 %v1295, 1.0
  %v1297 = vrcp.pop %v1296
  %v1298 = vmul.f32 %v1296, %v1297
  %v1299 = vsub.f32 1.0, %v1298
  %v1300 = vmul.f32 %v1297, %v1299
  %v1301 = vadd.f32 %v1297, %v1300
  %vm1302 = vweird.f32 %v1296
  %vm1303 = vweird.f32 %v1297
  %vm1304 = vmor %vm1302, %vm1303
  %v1305 = vsel %vm1304, %v1297, %v1301
  %v1306 = vand.u32 2147483647, %v1296
  %vm1307 = vcmp.eq.f32.partialorder %v1306, 8.507059e+37
  %v1308 = vand.u32 %v1296, 2147483648
  %v1309 = vor.u32 1.1754944e-38, %v1308
  %v1310 = vsel %vm1307, %v1309, %v1305
  %v1311 = vmul.f32 1.0, %v1310
  %v1312 = vxor.u32 %v1290, 2147483648
  %v1313 = vmul.f32 %v1312, 1.442695
  %v1314 = vpow.pop %v1313
  %v1315 = vadd.f32 %v1314, 1.0
  %v1316 = vrcp.pop %v1315
  %v1317 = vmul.f32 %v1315, %v1316
  %v1318 = vsub.f32 1.0, %v1317
  %v1319 = vmul.f32 %v1316, %v1318
  %v1320 = vadd.f32 %v1316, %v1319
  %vm1321 = vweird.f32 %v1315
  %vm1322 = vweird.f32 %v1316
  %vm1323 = vmor %vm1321, %vm1322
  %v1324 = vsel %vm1323, %v1316, %v1320
  %v1325 = vand.u32 2147483647, %v1315
  %vm1326 = vcmp.eq.f32.partialorder %v1325, 8.507059e+37
  %v1327 = vand.u32 %v1315, 2147483648
  %v1328 = vor.u32 1.1754944e-38, %v1327
  %v1329 = vsel %vm1326, %v1328, %v1324
  %v1330 = vmul.f32 1.0, %v1329
  %v1331 = vtanh.pop %v1291
  %v1332 = vxor.u32 %v1292, 2147483648
  %v1333 = vmul.f32 %v1332, 1.442695
  %v1334 = vpow.pop %v1333
  %v1335 = vadd.f32 %v1334, 1.0
  %v1336 = vrcp.pop %v1335
  %v1337 = vmul.f32 %v1335, %v1336
  %v1338 = vsub.f32 1.0, %v1337
  %v1339 = vmul.f32 %v1336, %v1338
  %v1340 = vadd.f32 %v1336, %v1339
  %vm1341 = vweird.f32 %v1335
  %vm1342 = vweird.f32 %v1336
  %vm1343 = vmor %vm1341, %vm1342
  %v1344 = vsel %vm1343, %v1336, %v1340
  %v1345 = vand.u32 2147483647, %v1335
  %vm1346 = vcmp.eq.f32.partialorder %v1345, 8.507059e+37
  %v1347 = vand.u32 %v1335, 2147483648
  %v1348 = vor.u32 1.1754944e-38, %v1347
  %v1349 = vsel %vm1346, %v1348, %v1344
  %v1350 = vmul.f32 1.0, %v1349
  %v1351 = vmul.f32 %v1330, %v1036
  %v1352 = vmul.f32 %v1311, %v1331
  %v1353 = vadd.f32 %v1351, %v1352
  %v1354 = vtanh.pop %v1353
  %v1355 = vmul.f32 %v1350, %v1354
  %v1356 = vpack.c.bf16 %v1355, %v1355
  %1357 = vst [vmem:[%s6 + $0x8] sm:$0xf] %v1356
  %v1358 = vld [vmem:[#allocation2 + $0x60] sm:$0xff]
  %v1359 = vld [vmem:[#allocation2 + $0x68] sm:$0xff]
  %v1360 = vld [vmem:[#allocation2 + $0x70] sm:$0xff]
  %v1361 = vld [vmem:[#allocation2 + $0x78] sm:$0xff]
  %v1362 = vld [vmem:[%s2] sm:$0xff]
  %v1363 = vld [vmem:[%s2 + $0x8] sm:$0xff]
  %v1364 = vld [vmem:[%s2 + $0x10] sm:$0xff]
  %v1365 = vld [vmem:[%s2 + $0x18] sm:$0xff]
  %v1366 = vld [vmem:[%s2 + $0x20] sm:$0xff]
  %v1367 = vld [vmem:[%s2 + $0x28] sm:$0xff]
  %v1368 = vld [vmem:[%s2 + $0x30] sm:$0xff]
  %v1369 = vld [vmem:[%s2 + $0x38] sm:$0xff]
  %v1370 = vld [vmem:[%s2 + $0x40] sm:$0xff]
  %v1371 = vld [vmem:[%s2 + $0x48] sm:$0xff]
  %v1372 = vld [vmem:[%s2 + $0x50] sm:$0xff]
  %v1373 = vld [vmem:[%s2 + $0x58] sm:$0xff]
  %v1374 = vld [vmem:[%s2 + $0x60] sm:$0xff]
  %v1375 = vld [vmem:[%s2 + $0x68] sm:$0xff]
  %v1376 = vld [vmem:[%s2 + $0x70] sm:$0xff]
  %v1377 = vld [vmem:[%s2 + $0x78] sm:$0xff]
  %v1378 = vld [vmem:[%s2 + $0x80] sm:$0xff]
  %v1379 = vld [vmem:[%s2 + $0x88] sm:$0xff]
  %v1380 = vld [vmem:[%s2 + $0x90] sm:$0xff]
  %v1381 = vld [vmem:[%s2 + $0x98] sm:$0xff]
  %v1382 = vld [vmem:[%s2 + $0xa0] sm:$0xff]
  %v1383 = vld [vmem:[%s2 + $0xa8] sm:$0xff]
  %v1384 = vld [vmem:[%s2 + $0xb0] sm:$0xff]
  %v1385 = vld [vmem:[%s2 + $0xb8] sm:$0xff]
  %v1386 = vld [vmem:[%s2 + $0xc0] sm:$0xff]
  %v1387 = vld [vmem:[%s2 + $0xc8] sm:$0xff]
  %v1388 = vld [vmem:[%s2 + $0xd0] sm:$0xff]
  %v1389 = vld [vmem:[%s2 + $0xd8] sm:$0xff]
  %v1390 = vld [vmem:[%s2 + $0xe0] sm:$0xff]
  %v1391 = vld [vmem:[%s2 + $0xe8] sm:$0xff]
  %v1392 = vld [vmem:[%s2 + $0xf0] sm:$0xff]
  %v1393 = vld [vmem:[%s2 + $0xf8] sm:$0xff]
  %v1426 = vunpack.c.l.b16 %v1362
  %v1427 = vunpack.c.h.b16 %v1362
  %v1428 = vunpack.c.l.b16 %v1363
  %v1429 = vunpack.c.h.b16 %v1363
  %v1430 = vunpack.c.l.b16 %v1364
  %v1431 = vunpack.c.h.b16 %v1364
  %v1432 = vunpack.c.l.b16 %v1365
  %v1433 = vunpack.c.h.b16 %v1365
  %v1434 = vunpack.c.l.b16 %v1366
  %v1435 = vunpack.c.h.b16 %v1366
  %v1436 = vunpack.c.l.b16 %v1367
  %v1437 = vunpack.c.h.b16 %v1367
  %v1438 = vunpack.c.l.b16 %v1368
  %v1439 = vunpack.c.h.b16 %v1368
  %v1440 = vunpack.c.l.b16 %v1369
  %v1441 = vunpack.c.h.b16 %v1369
  %v1442 = vunpack.c.l.b16 %v1370
  %v1443 = vunpack.c.h.b16 %v1370
  %v1444 = vunpack.c.l.b16 %v1371
  %v1445 = vunpack.c.h.b16 %v1371
  %v1446 = vunpack.c.l.b16 %v1372
  %v1447 = vunpack.c.h.b16 %v1372
  %v1448 = vunpack.c.l.b16 %v1373
  %v1449 = vunpack.c.h.b16 %v1373
  %v1450 = vunpack.c.l.b16 %v1374
  %v1451 = vunpack.c.h.b16 %v1374
  %v1452 = vunpack.c.l.b16 %v1375
  %v1453 = vunpack.c.h.b16 %v1375
  %v1454 = vunpack.c.l.b16 %v1376
  %v1455 = vunpack.c.h.b16 %v1376
  %v1456 = vunpack.c.l.b16 %v1377
  %v1457 = vunpack.c.h.b16 %v1377
  %v1458 = vunpack.c.l.b16 %v1378
  %v1459 = vunpack.c.h.b16 %v1378
  %v1460 = vunpack.c.l.b16 %v1379
  %v1461 = vunpack.c.h.b16 %v1379
  %v1462 = vunpack.c.l.b16 %v1380
  %v1463 = vunpack.c.h.b16 %v1380
  %v1464 = vunpack.c.l.b16 %v1381
  %v1465 = vunpack.c.h.b16 %v1381
  %v1466 = vunpack.c.l.b16 %v1382
  %v1467 = vunpack.c.h.b16 %v1382
  %v1468 = vunpack.c.l.b16 %v1383
  %v1469 = vunpack.c.h.b16 %v1383
  %v1470 = vunpack.c.l.b16 %v1384
  %v1471 = vunpack.c.h.b16 %v1384
  %v1472 = vunpack.c.l.b16 %v1385
  %v1473 = vunpack.c.h.b16 %v1385
  %v1474 = vunpack.c.l.b16 %v1386
  %v1475 = vunpack.c.h.b16 %v1386
  %v1476 = vunpack.c.l.b16 %v1387
  %v1477 = vunpack.c.h.b16 %v1387
  %v1478 = vunpack.c.l.b16 %v1388
  %v1479 = vunpack.c.h.b16 %v1388
  %v1480 = vunpack.c.l.b16 %v1389
  %v1481 = vunpack.c.h.b16 %v1389
  %v1482 = vunpack.c.l.b16 %v1390
  %v1483 = vunpack.c.h.b16 %v1390
  %v1484 = vunpack.c.l.b16 %v1391
  %v1485 = vunpack.c.h.b16 %v1391
  %v1486 = vunpack.c.l.b16 %v1392
  %v1487 = vunpack.c.h.b16 %v1392
  %v1488 = vunpack.c.l.b16 %v1393
  %v1489 = vunpack.c.h.b16 %v1393
  %v1490 = vpack.c.b16 %v1430, %v1426
  %v1491 = vpack.c.b16 %v1431, %v1427
  %v1492 = vpack.c.b16 %v1432, %v1428
  %v1493 = vpack.c.b16 %v1433, %v1429
  %v1494 = vpack.c.b16 %v1438, %v1434
  %v1495 = vpack.c.b16 %v1439, %v1435
  %v1496 = vpack.c.b16 %v1440, %v1436
  %v1497 = vpack.c.b16 %v1441, %v1437
  %v1498 = vpack.c.b16 %v1446, %v1442
  %v1499 = vpack.c.b16 %v1447, %v1443
  %v1500 = vpack.c.b16 %v1448, %v1444
  %v1501 = vpack.c.b16 %v1449, %v1445
  %v1502 = vpack.c.b16 %v1454, %v1450
  %v1503 = vpack.c.b16 %v1455, %v1451
  %v1504 = vpack.c.b16 %v1456, %v1452
  %v1505 = vpack.c.b16 %v1457, %v1453
  %v1506 = vpack.c.b16 %v1462, %v1458
  %v1507 = vpack.c.b16 %v1463, %v1459
  %v1508 = vpack.c.b16 %v1464, %v1460
  %v1509 = vpack.c.b16 %v1465, %v1461
  %v1510 = vpack.c.b16 %v1470, %v1466
  %v1511 = vpack.c.b16 %v1471, %v1467
  %v1512 = vpack.c.b16 %v1472, %v1468
  %v1513 = vpack.c.b16 %v1473, %v1469
  %v1514 = vpack.c.b16 %v1478, %v1474
  %v1515 = vpack.c.b16 %v1479, %v1475
  %v1516 = vpack.c.b16 %v1480, %v1476
  %v1517 = vpack.c.b16 %v1481, %v1477
  %v1518 = vpack.c.b16 %v1486, %v1482
  %v1519 = vpack.c.b16 %v1487, %v1483
  %v1520 = vpack.c.b16 %v1488, %v1484
  %v1521 = vpack.c.b16 %v1489, %v1485
  %1554 = vmatpush.bf16.msra.mxu0 %v1518
  %1555 = vmatpush.bf16.msra.mxu0 %v1514
  %1556 = vmatpush.bf16.msra.mxu0 %v1510
  %1557 = vmatpush.bf16.msra.mxu0 %v1506
  %1558 = vmatpush.bf16.msra.mxu0 %v1502
  %1559 = vmatpush.bf16.msra.mxu0 %v1498
  %1560 = vmatpush.bf16.msra.mxu0 %v1494
  %1561 = vmatpush.bf16.msra.mxu0 %v1490
  %1562 = vmatmul.bf16.gmra.mxu0 %v1356
  %v1563 = vpop.f32.mrf.mxu0
  %v1564 = vadd.f32 0.0, %v1563
  %v1565 = vpop.f32.mrf.mxu0
  %1566 = vdwg.mxu0
  %1567 = vmatpush.bf16.msra.mxu0 %v1519
  %1568 = vmatpush.bf16.msra.mxu0 %v1515
  %1569 = vmatpush.bf16.msra.mxu0 %v1511
  %1570 = vmatpush.bf16.msra.mxu0 %v1507
  %1571 = vmatpush.bf16.msra.mxu0 %v1503
  %1572 = vmatpush.bf16.msra.mxu0 %v1499
  %1573 = vmatpush.bf16.msra.mxu0 %v1495
  %1574 = vmatpush.bf16.msra.mxu0 %v1491
  %1575 = vmatmul.bf16.gmra.mxu0 %v1356
  %v1576 = vpop.f32.mrf.mxu0
  %v1577 = vadd.f32 0.0, %v1576
  %v1578 = vpop.f32.mrf.mxu0
  %1579 = vdwg.mxu0
  %1580 = vmatpush.bf16.msra.mxu0 %v1520
  %1581 = vmatpush.bf16.msra.mxu0 %v1516
  %1582 = vmatpush.bf16.msra.mxu0 %v1512
  %1583 = vmatpush.bf16.msra.mxu0 %v1508
  %1584 = vmatpush.bf16.msra.mxu0 %v1504
  %1585 = vmatpush.bf16.msra.mxu0 %v1500
  %1586 = vmatpush.bf16.msra.mxu0 %v1496
  %1587 = vmatpush.bf16.msra.mxu0 %v1492
  %1588 = vmatmul.bf16.gmra.mxu0 %v1356
  %v1589 = vpop.f32.mrf.mxu0
  %v1590 = vadd.f32 0.0, %v1589
  %v1591 = vpop.f32.mrf.mxu0
  %1592 = vdwg.mxu0
  %1593 = vmatpush.bf16.msra.mxu0 %v1521
  %1594 = vmatpush.bf16.msra.mxu0 %v1517
  %1595 = vmatpush.bf16.msra.mxu0 %v1513
  %1596 = vmatpush.bf16.msra.mxu0 %v1509
  %1597 = vmatpush.bf16.msra.mxu0 %v1505
  %1598 = vmatpush.bf16.msra.mxu0 %v1501
  %1599 = vmatpush.bf16.msra.mxu0 %v1497
  %1600 = vmatpush.bf16.msra.mxu0 %v1493
  %1601 = vmatmul.bf16.gmra.mxu0 %v1356
  %v1602 = vpop.f32.mrf.mxu0
  %v1603 = vadd.f32 0.0, %v1602
  %v1604 = vpop.f32.mrf.mxu0
  %1605 = vdwg.mxu0
  %v1606 = vadd.f32 %v1358, %v1564
  %v1607 = vadd.f32 %v1359, %v1577
  %v1608 = vadd.f32 %v1360, %v1590
  %v1609 = vadd.f32 %v1361, %v1603
  %v1610 = vxor.u32 %v1606, 2147483648
  %v1611 = vmul.f32 %v1610, 1.442695
  %v1612 = vpow.pop %v1611
  %v1613 = vadd.f32 %v1612, 1.0
  %v1614 = vrcp.pop %v1613
  %v1615 = vmul.f32 %v1613, %v1614
  %v1616 = vsub.f32 1.0, %v1615
  %v1617 = vmul.f32 %v1614, %v1616
  %v1618 = vadd.f32 %v1614, %v1617
  %vm1619 = vweird.f32 %v1613
  %vm1620 = vweird.f32 %v1614
  %vm1621 = vmor %vm1619, %vm1620
  %v1622 = vsel %vm1621, %v1614, %v1618
  %v1623 = vand.u32 2147483647, %v1613
  %vm1624 = vcmp.eq.f32.partialorder %v1623, 8.507059e+37
  %v1625 = vand.u32 %v1613, 2147483648
  %v1626 = vor.u32 1.1754944e-38, %v1625
  %v1627 = vsel %vm1624, %v1626, %v1622
  %v1628 = vmul.f32 1.0, %v1627
  %v1629 = vxor.u32 %v1607, 2147483648
  %v1630 = vmul.f32 %v1629, 1.442695
  %v1631 = vpow.pop %v1630
  %v1632 = vadd.f32 %v1631, 1.0
  %v1633 = vrcp.pop %v1632
  %v1634 = vmul.f32 %v1632, %v1633
  %v1635 = vsub.f32 1.0, %v1634
  %v1636 = vmul.f32 %v1633, %v1635
  %v1637 = vadd.f32 %v1633, %v1636
  %vm1638 = vweird.f32 %v1632
  %vm1639 = vweird.f32 %v1633
  %vm1640 = vmor %vm1638, %vm1639
  %v1641 = vsel %vm1640, %v1633, %v1637
  %v1642 = vand.u32 2147483647, %v1632
  %vm1643 = vcmp.eq.f32.partialorder %v1642, 8.507059e+37
  %v1644 = vand.u32 %v1632, 2147483648
  %v1645 = vor.u32 1.1754944e-38, %v1644
  %v1646 = vsel %vm1643, %v1645, %v1641
  %v1647 = vmul.f32 1.0, %v1646
  %v1648 = vtanh.pop %v1608
  %v1649 = vxor.u32 %v1609, 2147483648
  %v1650 = vmul.f32 %v1649, 1.442695
  %v1651 = vpow.pop %v1650
  %v1652 = vadd.f32 %v1651, 1.0
  %v1653 = vrcp.pop %v1652
  %v1654 = vmul.f32 %v1652, %v1653
  %v1655 = vsub.f32 1.0, %v1654
  %v1656 = vmul.f32 %v1653, %v1655
  %v1657 = vadd.f32 %v1653, %v1656
  %vm1658 = vweird.f32 %v1652
  %vm1659 = vweird.f32 %v1653
  %vm1660 = vmor %vm1658, %vm1659
  %v1661 = vsel %vm1660, %v1653, %v1657
  %v1662 = vand.u32 2147483647, %v1652
  %vm1663 = vcmp.eq.f32.partialorder %v1662, 8.507059e+37
  %v1664 = vand.u32 %v1652, 2147483648
  %v1665 = vor.u32 1.1754944e-38, %v1664
  %v1666 = vsel %vm1663, %v1665, %v1661
  %v1667 = vmul.f32 1.0, %v1666
  %v1668 = vmul.f32 %v1647, %v1353
  %v1669 = vmul.f32 %v1628, %v1648
  %v1670 = vadd.f32 %v1668, %v1669
  %v1671 = vtanh.pop %v1670
  %v1672 = vmul.f32 %v1667, %v1671
  %v1673 = vpack.c.bf16 %v1672, %v1672
  %1674 = vst [vmem:[%s6 + $0xc] sm:$0xf] %v1673
  %v1675 = vld [vmem:[#allocation2 + $0x80] sm:$0xff]
  %v1676 = vld [vmem:[#allocation2 + $0x88] sm:$0xff]
  %v1677 = vld [vmem:[#allocation2 + $0x90] sm:$0xff]
  %v1678 = vld [vmem:[#allocation2 + $0x98] sm:$0xff]
  %v1679 = vld [vmem:[%s2] sm:$0xff]
  %v1680 = vld [vmem:[%s2 + $0x8] sm:$0xff]
  %v1681 = vld [vmem:[%s2 + $0x10] sm:$0xff]
  %v1682 = vld [vmem:[%s2 + $0x18] sm:$0xff]
  %v1683 = vld [vmem:[%s2 + $0x20] sm:$0xff]
  %v1684 = vld [vmem:[%s2 + $0x28] sm:$0xff]
  %v1685 = vld [vmem:[%s2 + $0x30] sm:$0xff]
  %v1686 = vld [vmem:[%s2 + $0x38] sm:$0xff]
  %v1687 = vld [vmem:[%s2 + $0x40] sm:$0xff]
  %v1688 = vld [vmem:[%s2 + $0x48] sm:$0xff]
  %v1689 = vld [vmem:[%s2 + $0x50] sm:$0xff]
  %v1690 = vld [vmem:[%s2 + $0x58] sm:$0xff]
  %v1691 = vld [vmem:[%s2 + $0x60] sm:$0xff]
  %v1692 = vld [vmem:[%s2 + $0x68] sm:$0xff]
  %v1693 = vld [vmem:[%s2 + $0x70] sm:$0xff]
  %v1694 = vld [vmem:[%s2 + $0x78] sm:$0xff]
  %v1695 = vld [vmem:[%s2 + $0x80] sm:$0xff]
  %v1696 = vld [vmem:[%s2 + $0x88] sm:$0xff]
  %v1697 = vld [vmem:[%s2 + $0x90] sm:$0xff]
  %v1698 = vld [vmem:[%s2 + $0x98] sm:$0xff]
  %v1699 = vld [vmem:[%s2 + $0xa0] sm:$0xff]
  %v1700 = vld [vmem:[%s2 + $0xa8] sm:$0xff]
  %v1701 = vld [vmem:[%s2 + $0xb0] sm:$0xff]
  %v1702 = vld [vmem:[%s2 + $0xb8] sm:$0xff]
  %v1703 = vld [vmem:[%s2 + $0xc0] sm:$0xff]
  %v1704 = vld [vmem:[%s2 + $0xc8] sm:$0xff]
  %v1705 = vld [vmem:[%s2 + $0xd0] sm:$0xff]
  %v1706 = vld [vmem:[%s2 + $0xd8] sm:$0xff]
  %v1707 = vld [vmem:[%s2 + $0xe0] sm:$0xff]
  %v1708 = vld [vmem:[%s2 + $0xe8] sm:$0xff]
  %v1709 = vld [vmem:[%s2 + $0xf0] sm:$0xff]
  %v1710 = vld [vmem:[%s2 + $0xf8] sm:$0xff]
  %v1743 = vunpack.c.l.b16 %v1679
  %v1744 = vunpack.c.h.b16 %v1679
  %v1745 = vunpack.c.l.b16 %v1680
  %v1746 = vunpack.c.h.b16 %v1680
  %v1747 = vunpack.c.l.b16 %v1681
  %v1748 = vunpack.c.h.b16 %v1681
  %v1749 = vunpack.c.l.b16 %v1682
  %v1750 = vunpack.c.h.b16 %v1682
  %v1751 = vunpack.c.l.b16 %v1683
  %v1752 = vunpack.c.h.b16 %v1683
  %v1753 = vunpack.c.l.b16 %v1684
  %v1754 = vunpack.c.h.b16 %v1684
  %v1755 = vunpack.c.l.b16 %v1685
  %v1756 = vunpack.c.h.b16 %v1685
  %v1757 = vunpack.c.l.b16 %v1686
  %v1758 = vunpack.c.h.b16 %v1686
  %v1759 = vunpack.c.l.b16 %v1687
  %v1760 = vunpack.c.h.b16 %v1687
  %v1761 = vunpack.c.l.b16 %v1688
  %v1762 = vunpack.c.h.b16 %v1688
  %v1763 = vunpack.c.l.b16 %v1689
  %v1764 = vunpack.c.h.b16 %v1689
  %v1765 = vunpack.c.l.b16 %v1690
  %v1766 = vunpack.c.h.b16 %v1690
  %v1767 = vunpack.c.l.b16 %v1691
  %v1768 = vunpack.c.h.b16 %v1691
  %v1769 = vunpack.c.l.b16 %v1692
  %v1770 = vunpack.c.h.b16 %v1692
  %v1771 = vunpack.c.l.b16 %v1693
  %v1772 = vunpack.c.h.b16 %v1693
  %v1773 = vunpack.c.l.b16 %v1694
  %v1774 = vunpack.c.h.b16 %v1694
  %v1775 = vunpack.c.l.b16 %v1695
  %v1776 = vunpack.c.h.b16 %v1695
  %v1777 = vunpack.c.l.b16 %v1696
  %v1778 = vunpack.c.h.b16 %v1696
  %v1779 = vunpack.c.l.b16 %v1697
  %v1780 = vunpack.c.h.b16 %v1697
  %v1781 = vunpack.c.l.b16 %v1698
  %v1782 = vunpack.c.h.b16 %v1698
  %v1783 = vunpack.c.l.b16 %v1699
  %v1784 = vunpack.c.h.b16 %v1699
  %v1785 = vunpack.c.l.b16 %v1700
  %v1786 = vunpack.c.h.b16 %v1700
  %v1787 = vunpack.c.l.b16 %v1701
  %v1788 = vunpack.c.h.b16 %v1701
  %v1789 = vunpack.c.l.b16 %v1702
  %v1790 = vunpack.c.h.b16 %v1702
  %v1791 = vunpack.c.l.b16 %v1703
  %v1792 = vunpack.c.h.b16 %v1703
  %v1793 = vunpack.c.l.b16 %v1704
  %v1794 = vunpack.c.h.b16 %v1704
  %v1795 = vunpack.c.l.b16 %v1705
  %v1796 = vunpack.c.h.b16 %v1705
  %v1797 = vunpack.c.l.b16 %v1706
  %v1798 = vunpack.c.h.b16 %v1706
  %v1799 = vunpack.c.l.b16 %v1707
  %v1800 = vunpack.c.h.b16 %v1707
  %v1801 = vunpack.c.l.b16 %v1708
  %v1802 = vunpack.c.h.b16 %v1708
  %v1803 = vunpack.c.l.b16 %v1709
  %v1804 = vunpack.c.h.b16 %v1709
  %v1805 = vunpack.c.l.b16 %v1710
  %v1806 = vunpack.c.h.b16 %v1710
  %v1807 = vpack.c.b16 %v1747, %v1743
  %v1808 = vpack.c.b16 %v1748, %v1744
  %v1809 = vpack.c.b16 %v1749, %v1745
  %v1810 = vpack.c.b16 %v1750, %v1746
  %v1811 = vpack.c.b16 %v1755, %v1751
  %v1812 = vpack.c.b16 %v1756, %v1752
  %v1813 = vpack.c.b16 %v1757, %v1753
  %v1814 = vpack.c.b16 %v1758, %v1754
  %v1815 = vpack.c.b16 %v1763, %v1759
  %v1816 = vpack.c.b16 %v1764, %v1760
  %v1817 = vpack.c.b16 %v1765, %v1761
  %v1818 = vpack.c.b16 %v1766, %v1762
  %v1819 = vpack.c.b16 %v1771, %v1767
  %v1820 = vpack.c.b16 %v1772, %v1768
  %v1821 = vpack.c.b16 %v1773, %v1769
  %v1822 = vpack.c.b16 %v1774, %v1770
  %v1823 = vpack.c.b16 %v1779, %v1775
  %v1824 = vpack.c.b16 %v1780, %v1776
  %v1825 = vpack.c.b16 %v1781, %v1777
  %v1826 = vpack.c.b16 %v1782, %v1778
  %v1827 = vpack.c.b16 %v1787, %v1783
  %v1828 = vpack.c.b16 %v1788, %v1784
  %v1829 = vpack.c.b16 %v1789, %v1785
  %v1830 = vpack.c.b16 %v1790, %v1786
  %v1831 = vpack.c.b16 %v1795, %v1791
  %v1832 = vpack.c.b16 %v1796, %v1792
  %v1833 = vpack.c.b16 %v1797, %v1793
  %v1834 = vpack.c.b16 %v1798, %v1794
  %v1835 = vpack.c.b16 %v1803, %v1799
  %v1836 = vpack.c.b16 %v1804, %v1800
  %v1837 = vpack.c.b16 %v1805, %v1801
  %v1838 = vpack.c.b16 %v1806, %v1802
  %1871 = vmatpush.bf16.msra.mxu0 %v1835
  %1872 = vmatpush.bf16.msra.mxu0 %v1831
  %1873 = vmatpush.bf16.msra.mxu0 %v1827
  %1874 = vmatpush.bf16.msra.mxu0 %v1823
  %1875 = vmatpush.bf16.msra.mxu0 %v1819
  %1876 = vmatpush.bf16.msra.mxu0 %v1815
  %1877 = vmatpush.bf16.msra.mxu0 %v1811
  %1878 = vmatpush.bf16.msra.mxu0 %v1807
  %1879 = vmatmul.bf16.gmra.mxu0 %v1673
  %v1880 = vpop.f32.mrf.mxu0
  %v1881 = vadd.f32 0.0, %v1880
  %v1882 = vpop.f32.mrf.mxu0
  %1883 = vdwg.mxu0
  %1884 = vmatpush.bf16.msra.mxu0 %v1836
  %1885 = vmatpush.bf16.msra.mxu0 %v1832
  %1886 = vmatpush.bf16.msra.mxu0 %v1828
  %1887 = vmatpush.bf16.msra.mxu0 %v1824
  %1888 = vmatpush.bf16.msra.mxu0 %v1820
  %1889 = vmatpush.bf16.msra.mxu0 %v1816
  %1890 = vmatpush.bf16.msra.mxu0 %v1812
  %1891 = vmatpush.bf16.msra.mxu0 %v1808
  %1892 = vmatmul.bf16.gmra.mxu0 %v1673
  %v1893 = vpop.f32.mrf.mxu0
  %v1894 = vadd.f32 0.0, %v1893
  %v1895 = vpop.f32.mrf.mxu0
  %1896 = vdwg.mxu0
  %1897 = vmatpush.bf16.msra.mxu0 %v1837
  %1898 = vmatpush.bf16.msra.mxu0 %v1833
  %1899 = vmatpush.bf16.msra.mxu0 %v1829
  %1900 = vmatpush.bf16.msra.mxu0 %v1825
  %1901 = vmatpush.bf16.msra.mxu0 %v1821
  %1902 = vmatpush.bf16.msra.mxu0 %v1817
  %1903 = vmatpush.bf16.msra.mxu0 %v1813
  %1904 = vmatpush.bf16.msra.mxu0 %v1809
  %1905 = vmatmul.bf16.gmra.mxu0 %v1673
  %v1906 = vpop.f32.mrf.mxu0
  %v1907 = vadd.f32 0.0, %v1906
  %v1908 = vpop.f32.mrf.mxu0
  %1909 = vdwg.mxu0
  %1910 = vmatpush.bf16.msra.mxu0 %v1838
  %1911 = vmatpush.bf16.msra.mxu0 %v1834
  %1912 = vmatpush.bf16.msra.mxu0 %v1830
  %1913 = vmatpush.bf16.msra.mxu0 %v1826
  %1914 = vmatpush.bf16.msra.mxu0 %v1822
  %1915 = vmatpush.bf16.msra.mxu0 %v1818
  %1916 = vmatpush.bf16.msra.mxu0 %v1814
  %1917 = vmatpush.bf16.msra.mxu0 %v1810
  %1918 = vmatmul.bf16.gmra.mxu0 %v1673
  %v1919 = vpop.f32.mrf.mxu0
  %v1920 = vadd.f32 0.0, %v1919
  %v1921 = vpop.f32.mrf.mxu0
  %1922 = vdwg.mxu0
  %v1923 = vadd.f32 %v1675, %v1881
  %v1924 = vadd.f32 %v1676, %v1894
  %v1925 = vadd.f32 %v1677, %v1907
  %v1926 = vadd.f32 %v1678, %v1920
  %v1927 = vxor.u32 %v1923, 2147483648
  %v1928 = vmul.f32 %v1927, 1.442695
  %v1929 = vpow.pop %v1928
  %v1930 = vadd.f32 %v1929, 1.0
  %v1931 = vrcp.pop %v1930
  %v1932 = vmul.f32 %v1930, %v1931
  %v1933 = vsub.f32 1.0, %v1932
  %v1934 = vmul.f32 %v1931, %v1933
  %v1935 = vadd.f32 %v1931, %v1934
  %vm1936 = vweird.f32 %v1930
  %vm1937 = vweird.f32 %v1931
  %vm1938 = vmor %vm1936, %vm1937
  %v1939 = vsel %vm1938, %v1931, %v1935
  %v1940 = vand.u32 2147483647, %v1930
  %vm1941 = vcmp.eq.f32.partialorder %v1940, 8.507059e+37
  %v1942 = vand.u32 %v1930, 2147483648
  %v1943 = vor.u32 1.1754944e-38, %v1942
  %v1944 = vsel %vm1941, %v1943, %v1939
  %v1945 = vmul.f32 1.0, %v1944
  %v1946 = vxor.u32 %v1924, 2147483648
  %v1947 = vmul.f32 %v1946, 1.442695
  %v1948 = vpow.pop %v1947
  %v1949 = vadd.f32 %v1948, 1.0
  %v1950 = vrcp.pop %v1949
  %v1951 = vmul.f32 %v1949, %v1950
  %v1952 = vsub.f32 1.0, %v1951
  %v1953 = vmul.f32 %v1950, %v1952
  %v1954 = vadd.f32 %v1950, %v1953
  %vm1955 = vweird.f32 %v1949
  %vm1956 = vweird.f32 %v1950
  %vm1957 = vmor %vm1955, %vm1956
  %v1958 = vsel %vm1957, %v1950, %v1954
  %v1959 = vand.u32 2147483647, %v1949
  %vm1960 = vcmp.eq.f32.partialorder %v1959, 8.507059e+37
  %v1961 = vand.u32 %v1949, 2147483648
  %v1962 = vor.u32 1.1754944e-38, %v1961
  %v1963 = vsel %vm1960, %v1962, %v1958
  %v1964 = vmul.f32 1.0, %v1963
  %v1965 = vtanh.pop %v1925
  %v1966 = vxor.u32 %v1926, 2147483648
  %v1967 = vmul.f32 %v1966, 1.442695
  %v1968 = vpow.pop %v1967
  %v1969 = vadd.f32 %v1968, 1.0
  %v1970 = vrcp.pop %v1969
  %v1971 = vmul.f32 %v1969, %v1970
  %v1972 = vsub.f32 1.0, %v1971
  %v1973 = vmul.f32 %v1970, %v1972
  %v1974 = vadd.f32 %v1970, %v1973
  %vm1975 = vweird.f32 %v1969
  %vm1976 = vweird.f32 %v1970
  %vm1977 = vmor %vm1975, %vm1976
  %v1978 = vsel %vm1977, %v1970, %v1974
  %v1979 = vand.u32 2147483647, %v1969
  %vm1980 = vcmp.eq.f32.partialorder %v1979, 8.507059e+37
  %v1981 = vand.u32 %v1969, 2147483648
  %v1982 = vor.u32 1.1754944e-38, %v1981
  %v1983 = vsel %vm1980, %v1982, %v1978
  %v1984 = vmul.f32 1.0, %v1983
  %v1985 = vmul.f32 %v1964, %v1670
  %v1986 = vmul.f32 %v1945, %v1965
  %v1987 = vadd.f32 %v1985, %v1986
  %v1988 = vtanh.pop %v1987
  %v1989 = vmul.f32 %v1984, %v1988
  %v1990 = vpack.c.bf16 %v1989, %v1989
  %1991 = vst [vmem:[%s6 + $0x10] sm:$0xf] %v1990
  %v1992 = vld [vmem:[#allocation2 + $0xa0] sm:$0xff]
  %v1993 = vld [vmem:[#allocation2 + $0xa8] sm:$0xff]
  %v1994 = vld [vmem:[#allocation2 + $0xb0] sm:$0xff]
  %v1995 = vld [vmem:[#allocation2 + $0xb8] sm:$0xff]
  %v1996 = vld [vmem:[%s2] sm:$0xff]
  %v1997 = vld [vmem:[%s2 + $0x8] sm:$0xff]
  %v1998 = vld [vmem:[%s2 + $0x10] sm:$0xff]
  %v1999 = vld [vmem:[%s2 + $0x18] sm:$0xff]
  %v2000 = vld [vmem:[%s2 + $0x20] sm:$0xff]
  %v2001 = vld [vmem:[%s2 + $0x28] sm:$0xff]
  %v2002 = vld [vmem:[%s2 + $0x30] sm:$0xff]
  %v2003 = vld [vmem:[%s2 + $0x38] sm:$0xff]
  %v2004 = vld [vmem:[%s2 + $0x40] sm:$0xff]
  %v2005 = vld [vmem:[%s2 + $0x48] sm:$0xff]
  %v2006 = vld [vmem:[%s2 + $0x50] sm:$0xff]
  %v2007 = vld [vmem:[%s2 + $0x58] sm:$0xff]
  %v2008 = vld [vmem:[%s2 + $0x60] sm:$0xff]
  %v2009 = vld [vmem:[%s2 + $0x68] sm:$0xff]
  %v2010 = vld [vmem:[%s2 + $0x70] sm:$0xff]
  %v2011 = vld [vmem:[%s2 + $0x78] sm:$0xff]
  %v2012 = vld [vmem:[%s2 + $0x80] sm:$0xff]
  %v2013 = vld [vmem:[%s2 + $0x88] sm:$0xff]
  %v2014 = vld [vmem:[%s2 + $0x90] sm:$0xff]
  %v2015 = vld [vmem:[%s2 + $0x98] sm:$0xff]
  %v2016 = vld [vmem:[%s2 + $0xa0] sm:$0xff]
  %v2017 = vld [vmem:[%s2 + $0xa8] sm:$0xff]
  %v2018 = vld [vmem:[%s2 + $0xb0] sm:$0xff]
  %v2019 = vld [vmem:[%s2 + $0xb8] sm:$0xff]
  %v2020 = vld [vmem:[%s2 + $0xc0] sm:$0xff]
  %v2021 = vld [vmem:[%s2 + $0xc8] sm:$0xff]
  %v2022 = vld [vmem:[%s2 + $0xd0] sm:$0xff]
  %v2023 = vld [vmem:[%s2 + $0xd8] sm:$0xff]
  %v2024 = vld [vmem:[%s2 + $0xe0] sm:$0xff]
  %v2025 = vld [vmem:[%s2 + $0xe8] sm:$0xff]
  %v2026 = vld [vmem:[%s2 + $0xf0] sm:$0xff]
  %v2027 = vld [vmem:[%s2 + $0xf8] sm:$0xff]
  %v2060 = vunpack.c.l.b16 %v1996
  %v2061 = vunpack.c.h.b16 %v1996
  %v2062 = vunpack.c.l.b16 %v1997
  %v2063 = vunpack.c.h.b16 %v1997
  %v2064 = vunpack.c.l.b16 %v1998
  %v2065 = vunpack.c.h.b16 %v1998
  %v2066 = vunpack.c.l.b16 %v1999
  %v2067 = vunpack.c.h.b16 %v1999
  %v2068 = vunpack.c.l.b16 %v2000
  %v2069 = vunpack.c.h.b16 %v2000
  %v2070 = vunpack.c.l.b16 %v2001
  %v2071 = vunpack.c.h.b16 %v2001
  %v2072 = vunpack.c.l.b16 %v2002
  %v2073 = vunpack.c.h.b16 %v2002
  %v2074 = vunpack.c.l.b16 %v2003
  %v2075 = vunpack.c.h.b16 %v2003
  %v2076 = vunpack.c.l.b16 %v2004
  %v2077 = vunpack.c.h.b16 %v2004
  %v2078 = vunpack.c.l.b16 %v2005
  %v2079 = vunpack.c.h.b16 %v2005
  %v2080 = vunpack.c.l.b16 %v2006
  %v2081 = vunpack.c.h.b16 %v2006
  %v2082 = vunpack.c.l.b16 %v2007
  %v2083 = vunpack.c.h.b16 %v2007
  %v2084 = vunpack.c.l.b16 %v2008
  %v2085 = vunpack.c.h.b16 %v2008
  %v2086 = vunpack.c.l.b16 %v2009
  %v2087 = vunpack.c.h.b16 %v2009
  %v2088 = vunpack.c.l.b16 %v2010
  %v2089 = vunpack.c.h.b16 %v2010
  %v2090 = vunpack.c.l.b16 %v2011
  %v2091 = vunpack.c.h.b16 %v2011
  %v2092 = vunpack.c.l.b16 %v2012
  %v2093 = vunpack.c.h.b16 %v2012
  %v2094 = vunpack.c.l.b16 %v2013
  %v2095 = vunpack.c.h.b16 %v2013
  %v2096 = vunpack.c.l.b16 %v2014
  %v2097 = vunpack.c.h.b16 %v2014
  %v2098 = vunpack.c.l.b16 %v2015
  %v2099 = vunpack.c.h.b16 %v2015
  %v2100 = vunpack.c.l.b16 %v2016
  %v2101 = vunpack.c.h.b16 %v2016
  %v2102 = vunpack.c.l.b16 %v2017
  %v2103 = vunpack.c.h.b16 %v2017
  %v2104 = vunpack.c.l.b16 %v2018
  %v2105 = vunpack.c.h.b16 %v2018
  %v2106 = vunpack.c.l.b16 %v2019
  %v2107 = vunpack.c.h.b16 %v2019
  %v2108 = vunpack.c.l.b16 %v2020
  %v2109 = vunpack.c.h.b16 %v2020
  %v2110 = vunpack.c.l.b16 %v2021
  %v2111 = vunpack.c.h.b16 %v2021
  %v2112 = vunpack.c.l.b16 %v2022
  %v2113 = vunpack.c.h.b16 %v2022
  %v2114 = vunpack.c.l.b16 %v2023
  %v2115 = vunpack.c.h.b16 %v2023
  %v2116 = vunpack.c.l.b16 %v2024
  %v2117 = vunpack.c.h.b16 %v2024
  %v2118 = vunpack.c.l.b16 %v2025
  %v2119 = vunpack.c.h.b16 %v2025
  %v2120 = vunpack.c.l.b16 %v2026
  %v2121 = vunpack.c.h.b16 %v2026
  %v2122 = vunpack.c.l.b16 %v2027
  %v2123 = vunpack.c.h.b16 %v2027
  %v2124 = vpack.c.b16 %v2064, %v2060
  %v2125 = vpack.c.b16 %v2065, %v2061
  %v2126 = vpack.c.b16 %v2066, %v2062
  %v2127 = vpack.c.b16 %v2067, %v2063
  %v2128 = vpack.c.b16 %v2072, %v2068
  %v2129 = vpack.c.b16 %v2073, %v2069
  %v2130 = vpack.c.b16 %v2074, %v2070
  %v2131 = vpack.c.b16 %v2075, %v2071
  %v2132 = vpack.c.b16 %v2080, %v2076
  %v2133 = vpack.c.b16 %v2081, %v2077
  %v2134 = vpack.c.b16 %v2082, %v2078
  %v2135 = vpack.c.b16 %v2083, %v2079
  %v2136 = vpack.c.b16 %v2088, %v2084
  %v2137 = vpack.c.b16 %v2089, %v2085
  %v2138 = vpack.c.b16 %v2090, %v2086
  %v2139 = vpack.c.b16 %v2091, %v2087
  %v2140 = vpack.c.b16 %v2096, %v2092
  %v2141 = vpack.c.b16 %v2097, %v2093
  %v2142 = vpack.c.b16 %v2098, %v2094
  %v2143 = vpack.c.b16 %v2099, %v2095
  %v2144 = vpack.c.b16 %v2104, %v2100
  %v2145 = vpack.c.b16 %v2105, %v2101
  %v2146 = vpack.c.b16 %v2106, %v2102
  %v2147 = vpack.c.b16 %v2107, %v2103
  %v2148 = vpack.c.b16 %v2112, %v2108
  %v2149 = vpack.c.b16 %v2113, %v2109
  %v2150 = vpack.c.b16 %v2114, %v2110
  %v2151 = vpack.c.b16 %v2115, %v2111
  %v2152 = vpack.c.b16 %v2120, %v2116
  %v2153 = vpack.c.b16 %v2121, %v2117
  %v2154 = vpack.c.b16 %v2122, %v2118
  %v2155 = vpack.c.b16 %v2123, %v2119
  %2188 = vmatpush.bf16.msra.mxu0 %v2152
  %2189 = vmatpush.bf16.msra.mxu0 %v2148
  %2190 = vmatpush.bf16.msra.mxu0 %v2144
  %2191 = vmatpush.bf16.msra.mxu0 %v2140
  %2192 = vmatpush.bf16.msra.mxu0 %v2136
  %2193 = vmatpush.bf16.msra.mxu0 %v2132
  %2194 = vmatpush.bf16.msra.mxu0 %v2128
  %2195 = vmatpush.bf16.msra.mxu0 %v2124
  %2196 = vmatmul.bf16.gmra.mxu0 %v1990
  %v2197 = vpop.f32.mrf.mxu0
  %v2198 = vadd.f32 0.0, %v2197
  %v2199 = vpop.f32.mrf.mxu0
  %2200 = vdwg.mxu0
  %2201 = vmatpush.bf16.msra.mxu0 %v2153
  %2202 = vmatpush.bf16.msra.mxu0 %v2149
  %2203 = vmatpush.bf16.msra.mxu0 %v2145
  %2204 = vmatpush.bf16.msra.mxu0 %v2141
  %2205 = vmatpush.bf16.msra.mxu0 %v2137
  %2206 = vmatpush.bf16.msra.mxu0 %v2133
  %2207 = vmatpush.bf16.msra.mxu0 %v2129
  %2208 = vmatpush.bf16.msra.mxu0 %v2125
  %2209 = vmatmul.bf16.gmra.mxu0 %v1990
  %v2210 = vpop.f32.mrf.mxu0
  %v2211 = vadd.f32 0.0, %v2210
  %v2212 = vpop.f32.mrf.mxu0
  %2213 = vdwg.mxu0
  %2214 = vmatpush.bf16.msra.mxu0 %v2154
  %2215 = vmatpush.bf16.msra.mxu0 %v2150
  %2216 = vmatpush.bf16.msra.mxu0 %v2146
  %2217 = vmatpush.bf16.msra.mxu0 %v2142
  %2218 = vmatpush.bf16.msra.mxu0 %v2138
  %2219 = vmatpush.bf16.msra.mxu0 %v2134
  %2220 = vmatpush.bf16.msra.mxu0 %v2130
  %2221 = vmatpush.bf16.msra.mxu0 %v2126
  %2222 = vmatmul.bf16.gmra.mxu0 %v1990
  %v2223 = vpop.f32.mrf.mxu0
  %v2224 = vadd.f32 0.0, %v2223
  %v2225 = vpop.f32.mrf.mxu0
  %2226 = vdwg.mxu0
  %2227 = vmatpush.bf16.msra.mxu0 %v2155
  %2228 = vmatpush.bf16.msra.mxu0 %v2151
  %2229 = vmatpush.bf16.msra.mxu0 %v2147
  %2230 = vmatpush.bf16.msra.mxu0 %v2143
  %2231 = vmatpush.bf16.msra.mxu0 %v2139
  %2232 = vmatpush.bf16.msra.mxu0 %v2135
  %2233 = vmatpush.bf16.msra.mxu0 %v2131
  %2234 = vmatpush.bf16.msra.mxu0 %v2127
  %2235 = vmatmul.bf16.gmra.mxu0 %v1990
  %v2236 = vpop.f32.mrf.mxu0
  %v2237 = vadd.f32 0.0, %v2236
  %v2238 = vpop.f32.mrf.mxu0
  %2239 = vdwg.mxu0
  %v2240 = vadd.f32 %v1992, %v2198
  %v2241 = vadd.f32 %v1993, %v2211
  %v2242 = vadd.f32 %v1994, %v2224
  %v2243 = vadd.f32 %v1995, %v2237
  %v2244 = vxor.u32 %v2240, 2147483648
  %v2245 = vmul.f32 %v2244, 1.442695
  %v2246 = vpow.pop %v2245
  %v2247 = vadd.f32 %v2246, 1.0
  %v2248 = vrcp.pop %v2247
  %v2249 = vmul.f32 %v2247, %v2248
  %v2250 = vsub.f32 1.0, %v2249
  %v2251 = vmul.f32 %v2248, %v2250
  %v2252 = vadd.f32 %v2248, %v2251
  %vm2253 = vweird.f32 %v2247
  %vm2254 = vweird.f32 %v2248
  %vm2255 = vmor %vm2253, %vm2254
  %v2256 = vsel %vm2255, %v2248, %v2252
  %v2257 = vand.u32 2147483647, %v2247
  %vm2258 = vcmp.eq.f32.partialorder %v2257, 8.507059e+37
  %v2259 = vand.u32 %v2247, 2147483648
  %v2260 = vor.u32 1.1754944e-38, %v2259
  %v2261 = vsel %vm2258, %v2260, %v2256
  %v2262 = vmul.f32 1.0, %v2261
  %v2263 = vxor.u32 %v2241, 2147483648
  %v2264 = vmul.f32 %v2263, 1.442695
  %v2265 = vpow.pop %v2264
  %v2266 = vadd.f32 %v2265, 1.0
  %v2267 = vrcp.pop %v2266
  %v2268 = vmul.f32 %v2266, %v2267
  %v2269 = vsub.f32 1.0, %v2268
  %v2270 = vmul.f32 %v2267, %v2269
  %v2271 = vadd.f32 %v2267, %v2270
  %vm2272 = vweird.f32 %v2266
  %vm2273 = vweird.f32 %v2267
  %vm2274 = vmor %vm2272, %vm2273
  %v2275 = vsel %vm2274, %v2267, %v2271
  %v2276 = vand.u32 2147483647, %v2266
  %vm2277 = vcmp.eq.f32.partialorder %v2276, 8.507059e+37
  %v2278 = vand.u32 %v2266, 2147483648
  %v2279 = vor.u32 1.1754944e-38, %v2278
  %v2280 = vsel %vm2277, %v2279, %v2275
  %v2281 = vmul.f32 1.0, %v2280
  %v2282 = vtanh.pop %v2242
  %v2283 = vxor.u32 %v2243, 2147483648
  %v2284 = vmul.f32 %v2283, 1.442695
  %v2285 = vpow.pop %v2284
  %v2286 = vadd.f32 %v2285, 1.0
  %v2287 = vrcp.pop %v2286
  %v2288 = vmul.f32 %v2286, %v2287
  %v2289 = vsub.f32 1.0, %v2288
  %v2290 = vmul.f32 %v2287, %v2289
  %v2291 = vadd.f32 %v2287, %v2290
  %vm2292 = vweird.f32 %v2286
  %vm2293 = vweird.f32 %v2287
  %vm2294 = vmor %vm2292, %vm2293
  %v2295 = vsel %vm2294, %v2287, %v2291
  %v2296 = vand.u32 2147483647, %v2286
  %vm2297 = vcmp.eq.f32.partialorder %v2296, 8.507059e+37
  %v2298 = vand.u32 %v2286, 2147483648
  %v2299 = vor.u32 1.1754944e-38, %v2298
  %v2300 = vsel %vm2297, %v2299, %v2295
  %v2301 = vmul.f32 1.0, %v2300
  %v2302 = vmul.f32 %v2281, %v1987
  %v2303 = vmul.f32 %v2262, %v2282
  %v2304 = vadd.f32 %v2302, %v2303
  %v2305 = vtanh.pop %v2304
  %v2306 = vmul.f32 %v2301, %v2305
  %v2307 = vpack.c.bf16 %v2306, %v2306
  %2308 = vst [vmem:[%s6 + $0x14] sm:$0xf] %v2307
  %v2309 = vld [vmem:[#allocation2 + $0xc0] sm:$0xff]
  %v2310 = vld [vmem:[#allocation2 + $0xc8] sm:$0xff]
  %v2311 = vld [vmem:[#allocation2 + $0xd0] sm:$0xff]
  %v2312 = vld [vmem:[#allocation2 + $0xd8] sm:$0xff]
  %v2313 = vld [vmem:[%s2] sm:$0xff]
  %v2314 = vld [vmem:[%s2 + $0x8] sm:$0xff]
  %v2315 = vld [vmem:[%s2 + $0x10] sm:$0xff]
  %v2316 = vld [vmem:[%s2 + $0x18] sm:$0xff]
  %v2317 = vld [vmem:[%s2 + $0x20] sm:$0xff]
  %v2318 = vld [vmem:[%s2 + $0x28] sm:$0xff]
  %v2319 = vld [vmem:[%s2 + $0x30] sm:$0xff]
  %v2320 = vld [vmem:[%s2 + $0x38] sm:$0xff]
  %v2321 = vld [vmem:[%s2 + $0x40] sm:$0xff]
  %v2322 = vld [vmem:[%s2 + $0x48] sm:$0xff]
  %v2323 = vld [vmem:[%s2 + $0x50] sm:$0xff]
  %v2324 = vld [vmem:[%s2 + $0x58] sm:$0xff]
  %v2325 = vld [vmem:[%s2 + $0x60] sm:$0xff]
  %v2326 = vld [vmem:[%s2 + $0x68] sm:$0xff]
  %v2327 = vld [vmem:[%s2 + $0x70] sm:$0xff]
  %v2328 = vld [vmem:[%s2 + $0x78] sm:$0xff]
  %v2329 = vld [vmem:[%s2 + $0x80] sm:$0xff]
  %v2330 = vld [vmem:[%s2 + $0x88] sm:$0xff]
  %v2331 = vld [vmem:[%s2 + $0x90] sm:$0xff]
  %v2332 = vld [vmem:[%s2 + $0x98] sm:$0xff]
  %v2333 = vld [vmem:[%s2 + $0xa0] sm:$0xff]
  %v2334 = vld [vmem:[%s2 + $0xa8] sm:$0xff]
  %v2335 = vld [vmem:[%s2 + $0xb0] sm:$0xff]
  %v2336 = vld [vmem:[%s2 + $0xb8] sm:$0xff]
  %v2337 = vld [vmem:[%s2 + $0xc0] sm:$0xff]
  %v2338 = vld [vmem:[%s2 + $0xc8] sm:$0xff]
  %v2339 = vld [vmem:[%s2 + $0xd0] sm:$0xff]
  %v2340 = vld [vmem:[%s2 + $0xd8] sm:$0xff]
  %v2341 = vld [vmem:[%s2 + $0xe0] sm:$0xff]
  %v2342 = vld [vmem:[%s2 + $0xe8] sm:$0xff]
  %v2343 = vld [vmem:[%s2 + $0xf0] sm:$0xff]
  %v2344 = vld [vmem:[%s2 + $0xf8] sm:$0xff]
  %v2377 = vunpack.c.l.b16 %v2313
  %v2378 = vunpack.c.h.b16 %v2313
  %v2379 = vunpack.c.l.b16 %v2314
  %v2380 = vunpack.c.h.b16 %v2314
  %v2381 = vunpack.c.l.b16 %v2315
  %v2382 = vunpack.c.h.b16 %v2315
  %v2383 = vunpack.c.l.b16 %v2316
  %v2384 = vunpack.c.h.b16 %v2316
  %v2385 = vunpack.c.l.b16 %v2317
  %v2386 = vunpack.c.h.b16 %v2317
  %v2387 = vunpack.c.l.b16 %v2318
  %v2388 = vunpack.c.h.b16 %v2318
  %v2389 = vunpack.c.l.b16 %v2319
  %v2390 = vunpack.c.h.b16 %v2319
  %v2391 = vunpack.c.l.b16 %v2320
  %v2392 = vunpack.c.h.b16 %v2320
  %v2393 = vunpack.c.l.b16 %v2321
  %v2394 = vunpack.c.h.b16 %v2321
  %v2395 = vunpack.c.l.b16 %v2322
  %v2396 = vunpack.c.h.b16 %v2322
  %v2397 = vunpack.c.l.b16 %v2323
  %v2398 = vunpack.c.h.b16 %v2323
  %v2399 = vunpack.c.l.b16 %v2324
  %v2400 = vunpack.c.h.b16 %v2324
  %v2401 = vunpack.c.l.b16 %v2325
  %v2402 = vunpack.c.h.b16 %v2325
  %v2403 = vunpack.c.l.b16 %v2326
  %v2404 = vunpack.c.h.b16 %v2326
  %v2405 = vunpack.c.l.b16 %v2327
  %v2406 = vunpack.c.h.b16 %v2327
  %v2407 = vunpack.c.l.b16 %v2328
  %v2408 = vunpack.c.h.b16 %v2328
  %v2409 = vunpack.c.l.b16 %v2329
  %v2410 = vunpack.c.h.b16 %v2329
  %v2411 = vunpack.c.l.b16 %v2330
  %v2412 = vunpack.c.h.b16 %v2330
  %v2413 = vunpack.c.l.b16 %v2331
  %v2414 = vunpack.c.h.b16 %v2331
  %v2415 = vunpack.c.l.b16 %v2332
  %v2416 = vunpack.c.h.b16 %v2332
  %v2417 = vunpack.c.l.b16 %v2333
  %v2418 = vunpack.c.h.b16 %v2333
  %v2419 = vunpack.c.l.b16 %v2334
  %v2420 = vunpack.c.h.b16 %v2334
  %v2421 = vunpack.c.l.b16 %v2335
  %v2422 = vunpack.c.h.b16 %v2335
  %v2423 = vunpack.c.l.b16 %v2336
  %v2424 = vunpack.c.h.b16 %v2336
  %v2425 = vunpack.c.l.b16 %v2337
  %v2426 = vunpack.c.h.b16 %v2337
  %v2427 = vunpack.c.l.b16 %v2338
  %v2428 = vunpack.c.h.b16 %v2338
  %v2429 = vunpack.c.l.b16 %v2339
  %v2430 = vunpack.c.h.b16 %v2339
  %v2431 = vunpack.c.l.b16 %v2340
  %v2432 = vunpack.c.h.b16 %v2340
  %v2433 = vunpack.c.l.b16 %v2341
  %v2434 = vunpack.c.h.b16 %v2341
  %v2435 = vunpack.c.l.b16 %v2342
  %v2436 = vunpack.c.h.b16 %v2342
  %v2437 = vunpack.c.l.b16 %v2343
  %v2438 = vunpack.c.h.b16 %v2343
  %v2439 = vunpack.c.l.b16 %v2344
  %v2440 = vunpack.c.h.b16 %v2344
  %v2441 = vpack.c.b16 %v2381, %v2377
  %v2442 = vpack.c.b16 %v2382, %v2378
  %v2443 = vpack.c.b16 %v2383, %v2379
  %v2444 = vpack.c.b16 %v2384, %v2380
  %v2445 = vpack.c.b16 %v2389, %v2385
  %v2446 = vpack.c.b16 %v2390, %v2386
  %v2447 = vpack.c.b16 %v2391, %v2387
  %v2448 = vpack.c.b16 %v2392, %v2388
  %v2449 = vpack.c.b16 %v2397, %v2393
  %v2450 = vpack.c.b16 %v2398, %v2394
  %v2451 = vpack.c.b16 %v2399, %v2395
  %v2452 = vpack.c.b16 %v2400, %v2396
  %v2453 = vpack.c.b16 %v2405, %v2401
  %v2454 = vpack.c.b16 %v2406, %v2402
  %v2455 = vpack.c.b16 %v2407, %v2403
  %v2456 = vpack.c.b16 %v2408, %v2404
  %v2457 = vpack.c.b16 %v2413, %v2409
  %v2458 = vpack.c.b16 %v2414, %v2410
  %v2459 = vpack.c.b16 %v2415, %v2411
  %v2460 = vpack.c.b16 %v2416, %v2412
  %v2461 = vpack.c.b16 %v2421, %v2417
  %v2462 = vpack.c.b16 %v2422, %v2418
  %v2463 = vpack.c.b16 %v2423, %v2419
  %v2464 = vpack.c.b16 %v2424, %v2420
  %v2465 = vpack.c.b16 %v2429, %v2425
  %v2466 = vpack.c.b16 %v2430, %v2426
  %v2467 = vpack.c.b16 %v2431, %v2427
  %v2468 = vpack.c.b16 %v2432, %v2428
  %v2469 = vpack.c.b16 %v2437, %v2433
  %v2470 = vpack.c.b16 %v2438, %v2434
  %v2471 = vpack.c.b16 %v2439, %v2435
  %v2472 = vpack.c.b16 %v2440, %v2436
  %2505 = vmatpush.bf16.msra.mxu0 %v2469
  %2506 = vmatpush.bf16.msra.mxu0 %v2465
  %2507 = vmatpush.bf16.msra.mxu0 %v2461
  %2508 = vmatpush.bf16.msra.mxu0 %v2457
  %2509 = vmatpush.bf16.msra.mxu0 %v2453
  %2510 = vmatpush.bf16.msra.mxu0 %v2449
  %2511 = vmatpush.bf16.msra.mxu0 %v2445
  %2512 = vmatpush.bf16.msra.mxu0 %v2441
  %2513 = vmatmul.bf16.gmra.mxu0 %v2307
  %v2514 = vpop.f32.mrf.mxu0
  %v2515 = vadd.f32 0.0, %v2514
  %v2516 = vpop.f32.mrf.mxu0
  %2517 = vdwg.mxu0
  %2518 = vmatpush.bf16.msra.mxu0 %v2470
  %2519 = vmatpush.bf16.msra.mxu0 %v2466
  %2520 = vmatpush.bf16.msra.mxu0 %v2462
  %2521 = vmatpush.bf16.msra.mxu0 %v2458
  %2522 = vmatpush.bf16.msra.mxu0 %v2454
  %2523 = vmatpush.bf16.msra.mxu0 %v2450
  %2524 = vmatpush.bf16.msra.mxu0 %v2446
  %2525 = vmatpush.bf16.msra.mxu0 %v2442
  %2526 = vmatmul.bf16.gmra.mxu0 %v2307
  %v2527 = vpop.f32.mrf.mxu0
  %v2528 = vadd.f32 0.0, %v2527
  %v2529 = vpop.f32.mrf.mxu0
  %2530 = vdwg.mxu0
  %2531 = vmatpush.bf16.msra.mxu0 %v2471
  %2532 = vmatpush.bf16.msra.mxu0 %v2467
  %2533 = vmatpush.bf16.msra.mxu0 %v2463
  %2534 = vmatpush.bf16.msra.mxu0 %v2459
  %2535 = vmatpush.bf16.msra.mxu0 %v2455
  %2536 = vmatpush.bf16.msra.mxu0 %v2451
  %2537 = vmatpush.bf16.msra.mxu0 %v2447
  %2538 = vmatpush.bf16.msra.mxu0 %v2443
  %2539 = vmatmul.bf16.gmra.mxu0 %v2307
  %v2540 = vpop.f32.mrf.mxu0
  %v2541 = vadd.f32 0.0, %v2540
  %v2542 = vpop.f32.mrf.mxu0
  %2543 = vdwg.mxu0
  %2544 = vmatpush.bf16.msra.mxu0 %v2472
  %2545 = vmatpush.bf16.msra.mxu0 %v2468
  %2546 = vmatpush.bf16.msra.mxu0 %v2464
  %2547 = vmatpush.bf16.msra.mxu0 %v2460
  %2548 = vmatpush.bf16.msra.mxu0 %v2456
  %2549 = vmatpush.bf16.msra.mxu0 %v2452
  %2550 = vmatpush.bf16.msra.mxu0 %v2448
  %2551 = vmatpush.bf16.msra.mxu0 %v2444
  %2552 = vmatmul.bf16.gmra.mxu0 %v2307
  %v2553 = vpop.f32.mrf.mxu0
  %v2554 = vadd.f32 0.0, %v2553
  %v2555 = vpop.f32.mrf.mxu0
  %2556 = vdwg.mxu0
  %v2557 = vadd.f32 %v2309, %v2515
  %v2558 = vadd.f32 %v2310, %v2528
  %v2559 = vadd.f32 %v2311, %v2541
  %v2560 = vadd.f32 %v2312, %v2554
  %v2561 = vxor.u32 %v2557, 2147483648
  %v2562 = vmul.f32 %v2561, 1.442695
  %v2563 = vpow.pop %v2562
  %v2564 = vadd.f32 %v2563, 1.0
  %v2565 = vrcp.pop %v2564
  %v2566 = vmul.f32 %v2564, %v2565
  %v2567 = vsub.f32 1.0, %v2566
  %v2568 = vmul.f32 %v2565, %v2567
  %v2569 = vadd.f32 %v2565, %v2568
  %vm2570 = vweird.f32 %v2564
  %vm2571 = vweird.f32 %v2565
  %vm2572 = vmor %vm2570, %vm2571
  %v2573 = vsel %vm2572, %v2565, %v2569
  %v2574 = vand.u32 2147483647, %v2564
  %vm2575 = vcmp.eq.f32.partialorder %v2574, 8.507059e+37
  %v2576 = vand.u32 %v2564, 2147483648
  %v2577 = vor.u32 1.1754944e-38, %v2576
  %v2578 = vsel %vm2575, %v2577, %v2573
  %v2579 = vmul.f32 1.0, %v2578
  %v2580 = vxor.u32 %v2558, 2147483648
  %v2581 = vmul.f32 %v2580, 1.442695
  %v2582 = vpow.pop %v2581
  %v2583 = vadd.f32 %v2582, 1.0
  %v2584 = vrcp.pop %v2583
  %v2585 = vmul.f32 %v2583, %v2584
  %v2586 = vsub.f32 1.0, %v2585
  %v2587 = vmul.f32 %v2584, %v2586
  %v2588 = vadd.f32 %v2584, %v2587
  %vm2589 = vweird.f32 %v2583
  %vm2590 = vweird.f32 %v2584
  %vm2591 = vmor %vm2589, %vm2590
  %v2592 = vsel %vm2591, %v2584, %v2588
  %v2593 = vand.u32 2147483647, %v2583
  %vm2594 = vcmp.eq.f32.partialorder %v2593, 8.507059e+37
  %v2595 = vand.u32 %v2583, 2147483648
  %v2596 = vor.u32 1.1754944e-38, %v2595
  %v2597 = vsel %vm2594, %v2596, %v2592
  %v2598 = vmul.f32 1.0, %v2597
  %v2599 = vtanh.pop %v2559
  %v2600 = vxor.u32 %v2560, 2147483648
  %v2601 = vmul.f32 %v2600, 1.442695
  %v2602 = vpow.pop %v2601
  %v2603 = vadd.f32 %v2602, 1.0
  %v2604 = vrcp.pop %v2603
  %v2605 = vmul.f32 %v2603, %v2604
  %v2606 = vsub.f32 1.0, %v2605
  %v2607 = vmul.f32 %v2604, %v2606
  %v2608 = vadd.f32 %v2604, %v2607
  %vm2609 = vweird.f32 %v2603
  %vm2610 = vweird.f32 %v2604
  %vm2611 = vmor %vm2609, %vm2610
  %v2612 = vsel %vm2611, %v2604, %v2608
  %v2613 = vand.u32 2147483647, %v2603
  %vm2614 = vcmp.eq.f32.partialorder %v2613, 8.507059e+37
  %v2615 = vand.u32 %v2603, 2147483648
  %v2616 = vor.u32 1.1754944e-38, %v2615
  %v2617 = vsel %vm2614, %v2616, %v2612
  %v2618 = vmul.f32 1.0, %v2617
  %v2619 = vmul.f32 %v2598, %v2304
  %v2620 = vmul.f32 %v2579, %v2599
  %v2621 = vadd.f32 %v2619, %v2620
  %v2622 = vtanh.pop %v2621
  %v2623 = vmul.f32 %v2618, %v2622
  %v2624 = vpack.c.bf16 %v2623, %v2623
  %2625 = vst [vmem:[%s6 + $0x18] sm:$0xf] %v2624
  %v2626 = vld [vmem:[#allocation2 + $0xe0] sm:$0xff]
  %v2627 = vld [vmem:[#allocation2 + $0xe8] sm:$0xff]
  %v2628 = vld [vmem:[#allocation2 + $0xf0] sm:$0xff]
  %v2629 = vld [vmem:[#allocation2 + $0xf8] sm:$0xff]
  %v2630 = vld [vmem:[%s2] sm:$0xff]
  %v2631 = vld [vmem:[%s2 + $0x8] sm:$0xff]
  %v2632 = vld [vmem:[%s2 + $0x10] sm:$0xff]
  %v2633 = vld [vmem:[%s2 + $0x18] sm:$0xff]
  %v2634 = vld [vmem:[%s2 + $0x20] sm:$0xff]
  %v2635 = vld [vmem:[%s2 + $0x28] sm:$0xff]
  %v2636 = vld [vmem:[%s2 + $0x30] sm:$0xff]
  %v2637 = vld [vmem:[%s2 + $0x38] sm:$0xff]
  %v2638 = vld [vmem:[%s2 + $0x40] sm:$0xff]
  %v2639 = vld [vmem:[%s2 + $0x48] sm:$0xff]
  %v2640 = vld [vmem:[%s2 + $0x50] sm:$0xff]
  %v2641 = vld [vmem:[%s2 + $0x58] sm:$0xff]
  %v2642 = vld [vmem:[%s2 + $0x60] sm:$0xff]
  %v2643 = vld [vmem:[%s2 + $0x68] sm:$0xff]
  %v2644 = vld [vmem:[%s2 + $0x70] sm:$0xff]
  %v2645 = vld [vmem:[%s2 + $0x78] sm:$0xff]
  %v2646 = vld [vmem:[%s2 + $0x80] sm:$0xff]
  %v2647 = vld [vmem:[%s2 + $0x88] sm:$0xff]
  %v2648 = vld [vmem:[%s2 + $0x90] sm:$0xff]
  %v2649 = vld [vmem:[%s2 + $0x98] sm:$0xff]
  %v2650 = vld [vmem:[%s2 + $0xa0] sm:$0xff]
  %v2651 = vld [vmem:[%s2 + $0xa8] sm:$0xff]
  %v2652 = vld [vmem:[%s2 + $0xb0] sm:$0xff]
  %v2653 = vld [vmem:[%s2 + $0xb8] sm:$0xff]
  %v2654 = vld [vmem:[%s2 + $0xc0] sm:$0xff]
  %v2655 = vld [vmem:[%s2 + $0xc8] sm:$0xff]
  %v2656 = vld [vmem:[%s2 + $0xd0] sm:$0xff]
  %v2657 = vld [vmem:[%s2 + $0xd8] sm:$0xff]
  %v2658 = vld [vmem:[%s2 + $0xe0] sm:$0xff]
  %v2659 = vld [vmem:[%s2 + $0xe8] sm:$0xff]
  %v2660 = vld [vmem:[%s2 + $0xf0] sm:$0xff]
  %v2661 = vld [vmem:[%s2 + $0xf8] sm:$0xff]
  %v2694 = vunpack.c.l.b16 %v2630
  %v2695 = vunpack.c.h.b16 %v2630
  %v2696 = vunpack.c.l.b16 %v2631
  %v2697 = vunpack.c.h.b16 %v2631
  %v2698 = vunpack.c.l.b16 %v2632
  %v2699 = vunpack.c.h.b16 %v2632
  %v2700 = vunpack.c.l.b16 %v2633
  %v2701 = vunpack.c.h.b16 %v2633
  %v2702 = vunpack.c.l.b16 %v2634
  %v2703 = vunpack.c.h.b16 %v2634
  %v2704 = vunpack.c.l.b16 %v2635
  %v2705 = vunpack.c.h.b16 %v2635
  %v2706 = vunpack.c.l.b16 %v2636
  %v2707 = vunpack.c.h.b16 %v2636
  %v2708 = vunpack.c.l.b16 %v2637
  %v2709 = vunpack.c.h.b16 %v2637
  %v2710 = vunpack.c.l.b16 %v2638
  %v2711 = vunpack.c.h.b16 %v2638
  %v2712 = vunpack.c.l.b16 %v2639
  %v2713 = vunpack.c.h.b16 %v2639
  %v2714 = vunpack.c.l.b16 %v2640
  %v2715 = vunpack.c.h.b16 %v2640
  %v2716 = vunpack.c.l.b16 %v2641
  %v2717 = vunpack.c.h.b16 %v2641
  %v2718 = vunpack.c.l.b16 %v2642
  %v2719 = vunpack.c.h.b16 %v2642
  %v2720 = vunpack.c.l.b16 %v2643
  %v2721 = vunpack.c.h.b16 %v2643
  %v2722 = vunpack.c.l.b16 %v2644
  %v2723 = vunpack.c.h.b16 %v2644
  %v2724 = vunpack.c.l.b16 %v2645
  %v2725 = vunpack.c.h.b16 %v2645
  %v2726 = vunpack.c.l.b16 %v2646
  %v2727 = vunpack.c.h.b16 %v2646
  %v2728 = vunpack.c.l.b16 %v2647
  %v2729 = vunpack.c.h.b16 %v2647
  %v2730 = vunpack.c.l.b16 %v2648
  %v2731 = vunpack.c.h.b16 %v2648
  %v2732 = vunpack.c.l.b16 %v2649
  %v2733 = vunpack.c.h.b16 %v2649
  %v2734 = vunpack.c.l.b16 %v2650
  %v2735 = vunpack.c.h.b16 %v2650
  %v2736 = vunpack.c.l.b16 %v2651
  %v2737 = vunpack.c.h.b16 %v2651
  %v2738 = vunpack.c.l.b16 %v2652
  %v2739 = vunpack.c.h.b16 %v2652
  %v2740 = vunpack.c.l.b16 %v2653
  %v2741 = vunpack.c.h.b16 %v2653
  %v2742 = vunpack.c.l.b16 %v2654
  %v2743 = vunpack.c.h.b16 %v2654
  %v2744 = vunpack.c.l.b16 %v2655
  %v2745 = vunpack.c.h.b16 %v2655
  %v2746 = vunpack.c.l.b16 %v2656
  %v2747 = vunpack.c.h.b16 %v2656
  %v2748 = vunpack.c.l.b16 %v2657
  %v2749 = vunpack.c.h.b16 %v2657
  %v2750 = vunpack.c.l.b16 %v2658
  %v2751 = vunpack.c.h.b16 %v2658
  %v2752 = vunpack.c.l.b16 %v2659
  %v2753 = vunpack.c.h.b16 %v2659
  %v2754 = vunpack.c.l.b16 %v2660
  %v2755 = vunpack.c.h.b16 %v2660
  %v2756 = vunpack.c.l.b16 %v2661
  %v2757 = vunpack.c.h.b16 %v2661
  %v2758 = vpack.c.b16 %v2698, %v2694
  %v2759 = vpack.c.b16 %v2699, %v2695
  %v2760 = vpack.c.b16 %v2700, %v2696
  %v2761 = vpack.c.b16 %v2701, %v2697
  %v2762 = vpack.c.b16 %v2706, %v2702
  %v2763 = vpack.c.b16 %v2707, %v2703
  %v2764 = vpack.c.b16 %v2708, %v2704
  %v2765 = vpack.c.b16 %v2709, %v2705
  %v2766 = vpack.c.b16 %v2714, %v2710
  %v2767 = vpack.c.b16 %v2715, %v2711
  %v2768 = vpack.c.b16 %v2716, %v2712
  %v2769 = vpack.c.b16 %v2717, %v2713
  %v2770 = vpack.c.b16 %v2722, %v2718
  %v2771 = vpack.c.b16 %v2723, %v2719
  %v2772 = vpack.c.b16 %v2724, %v2720
  %v2773 = vpack.c.b16 %v2725, %v2721
  %v2774 = vpack.c.b16 %v2730, %v2726
  %v2775 = vpack.c.b16 %v2731, %v2727
  %v2776 = vpack.c.b16 %v2732, %v2728
  %v2777 = vpack.c.b16 %v2733, %v2729
  %v2778 = vpack.c.b16 %v2738, %v2734
  %v2779 = vpack.c.b16 %v2739, %v2735
  %v2780 = vpack.c.b16 %v2740, %v2736
  %v2781 = vpack.c.b16 %v2741, %v2737
  %v2782 = vpack.c.b16 %v2746, %v2742
  %v2783 = vpack.c.b16 %v2747, %v2743
  %v2784 = vpack.c.b16 %v2748, %v2744
  %v2785 = vpack.c.b16 %v2749, %v2745
  %v2786 = vpack.c.b16 %v2754, %v2750
  %v2787 = vpack.c.b16 %v2755, %v2751
  %v2788 = vpack.c.b16 %v2756, %v2752
  %v2789 = vpack.c.b16 %v2757, %v2753
  %2822 = vmatpush.bf16.msra.mxu0 %v2786
  %2823 = vmatpush.bf16.msra.mxu0 %v2782
  %2824 = vmatpush.bf16.msra.mxu0 %v2778
  %2825 = vmatpush.bf16.msra.mxu0 %v2774
  %2826 = vmatpush.bf16.msra.mxu0 %v2770
  %2827 = vmatpush.bf16.msra.mxu0 %v2766
  %2828 = vmatpush.bf16.msra.mxu0 %v2762
  %2829 = vmatpush.bf16.msra.mxu0 %v2758
  %2830 = vmatmul.bf16.gmra.mxu0 %v2624
  %v2831 = vpop.f32.mrf.mxu0
  %v2832 = vadd.f32 0.0, %v2831
  %v2833 = vpop.f32.mrf.mxu0
  %2834 = vdwg.mxu0
  %2835 = vmatpush.bf16.msra.mxu0 %v2787
  %2836 = vmatpush.bf16.msra.mxu0 %v2783
  %2837 = vmatpush.bf16.msra.mxu0 %v2779
  %2838 = vmatpush.bf16.msra.mxu0 %v2775
  %2839 = vmatpush.bf16.msra.mxu0 %v2771
  %2840 = vmatpush.bf16.msra.mxu0 %v2767
  %2841 = vmatpush.bf16.msra.mxu0 %v2763
  %2842 = vmatpush.bf16.msra.mxu0 %v2759
  %2843 = vmatmul.bf16.gmra.mxu0 %v2624
  %v2844 = vpop.f32.mrf.mxu0
  %v2845 = vadd.f32 0.0, %v2844
  %v2846 = vpop.f32.mrf.mxu0
  %2847 = vdwg.mxu0
  %2848 = vmatpush.bf16.msra.mxu0 %v2788
  %2849 = vmatpush.bf16.msra.mxu0 %v2784
  %2850 = vmatpush.bf16.msra.mxu0 %v2780
  %2851 = vmatpush.bf16.msra.mxu0 %v2776
  %2852 = vmatpush.bf16.msra.mxu0 %v2772
  %2853 = vmatpush.bf16.msra.mxu0 %v2768
  %2854 = vmatpush.bf16.msra.mxu0 %v2764
  %2855 = vmatpush.bf16.msra.mxu0 %v2760
  %2856 = vmatmul.bf16.gmra.mxu0 %v2624
  %v2857 = vpop.f32.mrf.mxu0
  %v2858 = vadd.f32 0.0, %v2857
  %v2859 = vpop.f32.mrf.mxu0
  %2860 = vdwg.mxu0
  %2861 = vmatpush.bf16.msra.mxu0 %v2789
  %2862 = vmatpush.bf16.msra.mxu0 %v2785
  %2863 = vmatpush.bf16.msra.mxu0 %v2781
  %2864 = vmatpush.bf16.msra.mxu0 %v2777
  %2865 = vmatpush.bf16.msra.mxu0 %v2773
  %2866 = vmatpush.bf16.msra.mxu0 %v2769
  %2867 = vmatpush.bf16.msra.mxu0 %v2765
  %2868 = vmatpush.bf16.msra.mxu0 %v2761
  %2869 = vmatmul.bf16.gmra.mxu0 %v2624
  %v2870 = vpop.f32.mrf.mxu0
  %v2871 = vadd.f32 0.0, %v2870
  %v2872 = vpop.f32.mrf.mxu0
  %2873 = vdwg.mxu0
  %v2874 = vadd.f32 %v2626, %v2832
  %v2875 = vadd.f32 %v2627, %v2845
  %v2876 = vadd.f32 %v2628, %v2858
  %v2877 = vadd.f32 %v2629, %v2871
  %v2878 = vxor.u32 %v2874, 2147483648
  %v2879 = vmul.f32 %v2878, 1.442695
  %v2880 = vpow.pop %v2879
  %v2881 = vadd.f32 %v2880, 1.0
  %v2882 = vrcp.pop %v2881
  %v2883 = vmul.f32 %v2881, %v2882
  %v2884 = vsub.f32 1.0, %v2883
  %v2885 = vmul.f32 %v2882, %v2884
  %v2886 = vadd.f32 %v2882, %v2885
  %vm2887 = vweird.f32 %v2881
  %vm2888 = vweird.f32 %v2882
  %vm2889 = vmor %vm2887, %vm2888
  %v2890 = vsel %vm2889, %v2882, %v2886
  %v2891 = vand.u32 2147483647, %v2881
  %vm2892 = vcmp.eq.f32.partialorder %v2891, 8.507059e+37
  %v2893 = vand.u32 %v2881, 2147483648
  %v2894 = vor.u32 1.1754944e-38, %v2893
  %v2895 = vsel %vm2892, %v2894, %v2890
  %v2896 = vmul.f32 1.0, %v2895
  %v2897 = vxor.u32 %v2875, 2147483648
  %v2898 = vmul.f32 %v2897, 1.442695
  %v2899 = vpow.pop %v2898
  %v2900 = vadd.f32 %v2899, 1.0
  %v2901 = vrcp.pop %v2900
  %v2902 = vmul.f32 %v2900, %v2901
  %v2903 = vsub.f32 1.0, %v2902
  %v2904 = vmul.f32 %v2901, %v2903
  %v2905 = vadd.f32 %v2901, %v2904
  %vm2906 = vweird.f32 %v2900
  %vm2907 = vweird.f32 %v2901
  %vm2908 = vmor %vm2906, %vm2907
  %v2909 = vsel %vm2908, %v2901, %v2905
  %v2910 = vand.u32 2147483647, %v2900
  %vm2911 = vcmp.eq.f32.partialorder %v2910, 8.507059e+37
  %v2912 = vand.u32 %v2900, 2147483648
  %v2913 = vor.u32 1.1754944e-38, %v2912
  %v2914 = vsel %vm2911, %v2913, %v2909
  %v2915 = vmul.f32 1.0, %v2914
  %v2916 = vtanh.pop %v2876
  %v2917 = vxor.u32 %v2877, 2147483648
  %v2918 = vmul.f32 %v2917, 1.442695
  %v2919 = vpow.pop %v2918
  %v2920 = vadd.f32 %v2919, 1.0
  %v2921 = vrcp.pop %v2920
  %v2922 = vmul.f32 %v2920, %v2921
  %v2923 = vsub.f32 1.0, %v2922
  %v2924 = vmul.f32 %v2921, %v2923
  %v2925 = vadd.f32 %v2921, %v2924
  %vm2926 = vweird.f32 %v2920
  %vm2927 = vweird.f32 %v2921
  %vm2928 = vmor %vm2926, %vm2927
  %v2929 = vsel %vm2928, %v2921, %v2925
  %v2930 = vand.u32 2147483647, %v2920
  %vm2931 = vcmp.eq.f32.partialorder %v2930, 8.507059e+37
  %v2932 = vand.u32 %v2920, 2147483648
  %v2933 = vor.u32 1.1754944e-38, %v2932
  %v2934 = vsel %vm2931, %v2933, %v2929
  %v2935 = vmul.f32 1.0, %v2934
  %v2936 = vmul.f32 %v2915, %v2621
  %v2937 = vmul.f32 %v2896, %v2916
  %v2938 = vadd.f32 %v2936, %v2937
  %v2939 = vtanh.pop %v2938
  %v2940 = vmul.f32 %v2935, %v2939
  %v2941 = vpack.c.bf16 %v2940, %v2940
  %2942 = vst [vmem:[%s6 + $0x1c] sm:$0xf] %v2941
  %v2943 = vpack.c.bf16 %v2938, %v2938
  %v2944 = vpack.c.bf16 0.0, 0.0
  %v2945 = vld [vmem:[%s4] sm:$0xff]
  %v2946 = vld [vmem:[%s4 + $0x8] sm:$0xff]
  %v2947 = vld [vmem:[%s4 + $0x10] sm:$0xff]
  %v2948 = vld [vmem:[%s4 + $0x18] sm:$0xff]
  %v2949 = vld [vmem:[%s4 + $0x20] sm:$0xff]
  %v2950 = vld [vmem:[%s4 + $0x28] sm:$0xff]
  %v2951 = vld [vmem:[%s4 + $0x30] sm:$0xff]
  %v2952 = vld [vmem:[%s4 + $0x38] sm:$0xff]
  %v2953 = vld [vmem:[%s4 + $0x40] sm:$0xff]
  %v2954 = vld [vmem:[%s4 + $0x48] sm:$0xff]
  %v2955 = vld [vmem:[%s4 + $0x50] sm:$0xff]
  %v2956 = vld [vmem:[%s4 + $0x58] sm:$0xff]
  %v2957 = vld [vmem:[%s4 + $0x60] sm:$0xff]
  %v2958 = vld [vmem:[%s4 + $0x68] sm:$0xff]
  %v2959 = vld [vmem:[%s4 + $0x70] sm:$0xff]
  %v2960 = vld [vmem:[%s4 + $0x78] sm:$0xff]
  %v2961 = vld [vmem:[%s4 + $0x80] sm:$0xff]
  %v2962 = vld [vmem:[%s4 + $0x88] sm:$0xff]
  %v2963 = vld [vmem:[%s4 + $0x90] sm:$0xff]
  %v2964 = vld [vmem:[%s4 + $0x98] sm:$0xff]
  %v2965 = vld [vmem:[%s4 + $0xa0] sm:$0xff]
  %v2966 = vld [vmem:[%s4 + $0xa8] sm:$0xff]
  %v2967 = vld [vmem:[%s4 + $0xb0] sm:$0xff]
  %v2968 = vld [vmem:[%s4 + $0xb8] sm:$0xff]
  %v2969 = vld [vmem:[%s4 + $0xc0] sm:$0xff]
  %v2970 = vld [vmem:[%s4 + $0xc8] sm:$0xff]
  %v2971 = vld [vmem:[%s4 + $0xd0] sm:$0xff]
  %v2972 = vld [vmem:[%s4 + $0xd8] sm:$0xff]
  %v2973 = vld [vmem:[%s4 + $0xe0] sm:$0xff]
  %v2974 = vld [vmem:[%s4 + $0xe8] sm:$0xff]
  %v2975 = vld [vmem:[%s4 + $0xf0] sm:$0xff]
  %v2976 = vld [vmem:[%s4 + $0xf8] sm:$0xff]
  %v2977 = vld [vmem:[%s4 + $0x100] sm:$0xff]
  %v2978 = vld [vmem:[%s4 + $0x108] sm:$0xff]
  %v2979 = vld [vmem:[%s4 + $0x110] sm:$0xff]
  %v2980 = vld [vmem:[%s4 + $0x118] sm:$0xff]
  %v2981 = vld [vmem:[%s4 + $0x120] sm:$0xff]
  %v2982 = vld [vmem:[%s4 + $0x128] sm:$0xff]
  %v2983 = vld [vmem:[%s4 + $0x130] sm:$0xff]
  %v2984 = vld [vmem:[%s4 + $0x138] sm:$0xff]
  %v2985 = vld [vmem:[%s4 + $0x140] sm:$0xff]
  %v2986 = vld [vmem:[%s4 + $0x148] sm:$0xff]
  %v2987 = vld [vmem:[%s4 + $0x150] sm:$0xff]
  %v2988 = vld [vmem:[%s4 + $0x158] sm:$0xff]
  %v2989 = vld [vmem:[%s4 + $0x160] sm:$0xff]
  %v2990 = vld [vmem:[%s4 + $0x168] sm:$0xff]
  %v2991 = vld [vmem:[%s4 + $0x170] sm:$0xff]
  %v2992 = vld [vmem:[%s4 + $0x178] sm:$0xff]
  %v2993 = vld [vmem:[%s4 + $0x180] sm:$0xff]
  %v2994 = vld [vmem:[%s4 + $0x188] sm:$0xff]
  %v2995 = vld [vmem:[%s4 + $0x190] sm:$0xff]
  %v2996 = vld [vmem:[%s4 + $0x198] sm:$0xff]
  %v2997 = vld [vmem:[%s4 + $0x1a0] sm:$0xff]
  %v2998 = vld [vmem:[%s4 + $0x1a8] sm:$0xff]
  %v2999 = vld [vmem:[%s4 + $0x1b0] sm:$0xff]
  %v3000 = vld [vmem:[%s4 + $0x1b8] sm:$0xff]
  %v3001 = vld [vmem:[%s4 + $0x1c0] sm:$0xff]
  %v3002 = vld [vmem:[%s4 + $0x1c8] sm:$0xff]
  %v3003 = vld [vmem:[%s4 + $0x1d0] sm:$0xff]
  %v3004 = vld [vmem:[%s4 + $0x1d8] sm:$0xff]
  %v3005 = vld [vmem:[%s4 + $0x1e0] sm:$0xff]
  %v3006 = vld [vmem:[%s4 + $0x1e8] sm:$0xff]
  %v3007 = vld [vmem:[%s4 + $0x1f0] sm:$0xff]
  %v3008 = vld [vmem:[%s4 + $0x1f8] sm:$0xff]
  %v3010 = vperm.slane %v25, 0
  %v3011 = vperm.slane %v25, 1
  %v3012 = vperm.slane %v25, 2
  %v3013 = vperm.slane %v25, 3
  %v3082 = vunpack.c.l.b16 %v2945
  %v3083 = vunpack.c.h.b16 %v2945
  %v3084 = vunpack.c.l.b16 %v2946
  %v3085 = vunpack.c.h.b16 %v2946
  %v3086 = vunpack.c.l.b16 %v2947
  %v3087 = vunpack.c.h.b16 %v2947
  %v3088 = vunpack.c.l.b16 %v2948
  %v3089 = vunpack.c.h.b16 %v2948
  %v3090 = vunpack.c.l.b16 %v2949
  %v3091 = vunpack.c.h.b16 %v2949
  %v3092 = vunpack.c.l.b16 %v2950
  %v3093 = vunpack.c.h.b16 %v2950
  %v3094 = vunpack.c.l.b16 %v2951
  %v3095 = vunpack.c.h.b16 %v2951
  %v3096 = vunpack.c.l.b16 %v2952
  %v3097 = vunpack.c.h.b16 %v2952
  %v3098 = vunpack.c.l.b16 %v2953
  %v3099 = vunpack.c.h.b16 %v2953
  %v3100 = vunpack.c.l.b16 %v2954
  %v3101 = vunpack.c.h.b16 %v2954
  %v3102 = vunpack.c.l.b16 %v2955
  %v3103 = vunpack.c.h.b16 %v2955
  %v3104 = vunpack.c.l.b16 %v2956
  %v3105 = vunpack.c.h.b16 %v2956
  %v3106 = vunpack.c.l.b16 %v2957
  %v3107 = vunpack.c.h.b16 %v2957
  %v3108 = vunpack.c.l.b16 %v2958
  %v3109 = vunpack.c.h.b16 %v2958
  %v3110 = vunpack.c.l.b16 %v2959
  %v3111 = vunpack.c.h.b16 %v2959
  %v3112 = vunpack.c.l.b16 %v2960
  %v3113 = vunpack.c.h.b16 %v2960
  %v3114 = vunpack.c.l.b16 %v2961
  %v3115 = vunpack.c.h.b16 %v2961
  %v3116 = vunpack.c.l.b16 %v2962
  %v3117 = vunpack.c.h.b16 %v2962
  %v3118 = vunpack.c.l.b16 %v2963
  %v3119 = vunpack.c.h.b16 %v2963
  %v3120 = vunpack.c.l.b16 %v2964
  %v3121 = vunpack.c.h.b16 %v2964
  %v3122 = vunpack.c.l.b16 %v2965
  %v3123 = vunpack.c.h.b16 %v2965
  %v3124 = vunpack.c.l.b16 %v2966
  %v3125 = vunpack.c.h.b16 %v2966
  %v3126 = vunpack.c.l.b16 %v2967
  %v3127 = vunpack.c.h.b16 %v2967
  %v3128 = vunpack.c.l.b16 %v2968
  %v3129 = vunpack.c.h.b16 %v2968
  %v3130 = vunpack.c.l.b16 %v2969
  %v3131 = vunpack.c.h.b16 %v2969
  %v3132 = vunpack.c.l.b16 %v2970
  %v3133 = vunpack.c.h.b16 %v2970
  %v3134 = vunpack.c.l.b16 %v2971
  %v3135 = vunpack.c.h.b16 %v2971
  %v3136 = vunpack.c.l.b16 %v2972
  %v3137 = vunpack.c.h.b16 %v2972
  %v3138 = vunpack.c.l.b16 %v2973
  %v3139 = vunpack.c.h.b16 %v2973
  %v3140 = vunpack.c.l.b16 %v2974
  %v3141 = vunpack.c.h.b16 %v2974
  %v3142 = vunpack.c.l.b16 %v2975
  %v3143 = vunpack.c.h.b16 %v2975
  %v3144 = vunpack.c.l.b16 %v2976
  %v3145 = vunpack.c.h.b16 %v2976
  %v3146 = vunpack.c.l.b16 %v2977
  %v3147 = vunpack.c.h.b16 %v2977
  %v3148 = vunpack.c.l.b16 %v2978
  %v3149 = vunpack.c.h.b16 %v2978
  %v3150 = vunpack.c.l.b16 %v2979
  %v3151 = vunpack.c.h.b16 %v2979
  %v3152 = vunpack.c.l.b16 %v2980
  %v3153 = vunpack.c.h.b16 %v2980
  %v3154 = vunpack.c.l.b16 %v2981
  %v3155 = vunpack.c.h.b16 %v2981
  %v3156 = vunpack.c.l.b16 %v2982
  %v3157 = vunpack.c.h.b16 %v2982
  %v3158 = vunpack.c.l.b16 %v2983
  %v3159 = vunpack.c.h.b16 %v2983
  %v3160 = vunpack.c.l.b16 %v2984
  %v3161 = vunpack.c.h.b16 %v2984
  %v3162 = vunpack.c.l.b16 %v2985
  %v3163 = vunpack.c.h.b16 %v2985
  %v3164 = vunpack.c.l.b16 %v2986
  %v3165 = vunpack.c.h.b16 %v2986
  %v3166 = vunpack.c.l.b16 %v2987
  %v3167 = vunpack.c.h.b16 %v2987
  %v3168 = vunpack.c.l.b16 %v2988
  %v3169 = vunpack.c.h.b16 %v2988
  %v3170 = vunpack.c.l.b16 %v2989
  %v3171 = vunpack.c.h.b16 %v2989
  %v3172 = vunpack.c.l.b16 %v2990
  %v3173 = vunpack.c.h.b16 %v2990
  %v3174 = vunpack.c.l.b16 %v2991
  %v3175 = vunpack.c.h.b16 %v2991
  %v3176 = vunpack.c.l.b16 %v2992
  %v3177 = vunpack.c.h.b16 %v2992
  %v3178 = vunpack.c.l.b16 %v2993
  %v3179 = vunpack.c.h.b16 %v2993
  %v3180 = vunpack.c.l.b16 %v2994
  %v3181 = vunpack.c.h.b16 %v2994
  %v3182 = vunpack.c.l.b16 %v2995
  %v3183 = vunpack.c.h.b16 %v2995
  %v3184 = vunpack.c.l.b16 %v2996
  %v3185 = vunpack.c.h.b16 %v2996
  %v3186 = vunpack.c.l.b16 %v2997
  %v3187 = vunpack.c.h.b16 %v2997
  %v3188 = vunpack.c.l.b16 %v2998
  %v3189 = vunpack.c.h.b16 %v2998
  %v3190 = vunpack.c.l.b16 %v2999
  %v3191 = vunpack.c.h.b16 %v2999
  %v3192 = vunpack.c.l.b16 %v3000
  %v3193 = vunpack.c.h.b16 %v3000
  %v3194 = vunpack.c.l.b16 %v3001
  %v3195 = vunpack.c.h.b16 %v3001
  %v3196 = vunpack.c.l.b16 %v3002
  %v3197 = vunpack.c.h.b16 %v3002
  %v3198 = vunpack.c.l.b16 %v3003
  %v3199 = vunpack.c.h.b16 %v3003
  %v3200 = vunpack.c.l.b16 %v3004
  %v3201 = vunpack.c.h.b16 %v3004
  %v3202 = vunpack.c.l.b16 %v3005
  %v3203 = vunpack.c.h.b16 %v3005
  %v3204 = vunpack.c.l.b16 %v3006
  %v3205 = vunpack.c.h.b16 %v3006
  %v3206 = vunpack.c.l.b16 %v3007
  %v3207 = vunpack.c.h.b16 %v3007
  %v3208 = vunpack.c.l.b16 %v3008
  %v3209 = vunpack.c.h.b16 %v3008
  %v3210 = vpack.c.b16 %v3086, %v3082
  %v3211 = vpack.c.b16 %v3087, %v3083
  %v3212 = vpack.c.b16 %v3088, %v3084
  %v3213 = vpack.c.b16 %v3089, %v3085
  %v3214 = vpack.c.b16 %v3094, %v3090
  %v3215 = vpack.c.b16 %v3095, %v3091
  %v3216 = vpack.c.b16 %v3096, %v3092
  %v3217 = vpack.c.b16 %v3097, %v3093
  %v3218 = vpack.c.b16 %v3102, %v3098
  %v3219 = vpack.c.b16 %v3103, %v3099
  %v3220 = vpack.c.b16 %v3104, %v3100
  %v3221 = vpack.c.b16 %v3105, %v3101
  %v3222 = vpack.c.b16 %v3110, %v3106
  %v3223 = vpack.c.b16 %v3111, %v3107
  %v3224 = vpack.c.b16 %v3112, %v3108
  %v3225 = vpack.c.b16 %v3113, %v3109
  %v3226 = vpack.c.b16 %v3118, %v3114
  %v3227 = vpack.c.b16 %v3119, %v3115
  %v3228 = vpack.c.b16 %v3120, %v3116
  %v3229 = vpack.c.b16 %v3121, %v3117
  %v3230 = vpack.c.b16 %v3126, %v3122
  %v3231 = vpack.c.b16 %v3127, %v3123
  %v3232 = vpack.c.b16 %v3128, %v3124
  %v3233 = vpack.c.b16 %v3129, %v3125
  %v3234 = vpack.c.b16 %v3134, %v3130
  %v3235 = vpack.c.b16 %v3135, %v3131
  %v3236 = vpack.c.b16 %v3136, %v3132
  %v3237 = vpack.c.b16 %v3137, %v3133
  %v3238 = vpack.c.b16 %v3142, %v3138
  %v3239 = vpack.c.b16 %v3143, %v3139
  %v3240 = vpack.c.b16 %v3144, %v3140
  %v3241 = vpack.c.b16 %v3145, %v3141
  %v3242 = vpack.c.b16 %v3150, %v3146
  %v3243 = vpack.c.b16 %v3151, %v3147
  %v3244 = vpack.c.b16 %v3152, %v3148
  %v3245 = vpack.c.b16 %v3153, %v3149
  %v3246 = vpack.c.b16 %v3158, %v3154
  %v3247 = vpack.c.b16 %v3159, %v3155
  %v3248 = vpack.c.b16 %v3160, %v3156
  %v3249 = vpack.c.b16 %v3161, %v3157
  %v3250 = vpack.c.b16 %v3166, %v3162
  %v3251 = vpack.c.b16 %v3167, %v3163
  %v3252 = vpack.c.b16 %v3168, %v3164
  %v3253 = vpack.c.b16 %v3169, %v3165
  %v3254 = vpack.c.b16 %v3174, %v3170
  %v3255 = vpack.c.b16 %v3175, %v3171
  %v3256 = vpack.c.b16 %v3176, %v3172
  %v3257 = vpack.c.b16 %v3177, %v3173
  %v3258 = vpack.c.b16 %v3182, %v3178
  %v3259 = vpack.c.b16 %v3183, %v3179
  %v3260 = vpack.c.b16 %v3184, %v3180
  %v3261 = vpack.c.b16 %v3185, %v3181
  %v3262 = vpack.c.b16 %v3190, %v3186
  %v3263 = vpack.c.b16 %v3191, %v3187
  %v3264 = vpack.c.b16 %v3192, %v3188
  %v3265 = vpack.c.b16 %v3193, %v3189
  %v3266 = vpack.c.b16 %v3198, %v3194
  %v3267 = vpack.c.b16 %v3199, %v3195
  %v3268 = vpack.c.b16 %v3200, %v3196
  %v3269 = vpack.c.b16 %v3201, %v3197
  %v3270 = vpack.c.b16 %v3206, %v3202
  %v3271 = vpack.c.b16 %v3207, %v3203
  %v3272 = vpack.c.b16 %v3208, %v3204
  %v3273 = vpack.c.b16 %v3209, %v3205
  %3338 = vmatpush.bf16.msra.mxu0 %v3238
  %3339 = vmatpush.bf16.msra.mxu0 %v3234
  %3340 = vmatpush.bf16.msra.mxu0 %v3230
  %3341 = vmatpush.bf16.msra.mxu0 %v3226
  %3342 = vmatpush.bf16.msra.mxu0 %v3222
  %3343 = vmatpush.bf16.msra.mxu0 %v3218
  %3344 = vmatpush.bf16.msra.mxu0 %v3214
  %3345 = vmatpush.bf16.msra.mxu0 %v3210
  %3346 = vmatmul.bf16.gmra.mxu0 %v2943
  %v3347 = vpop.f32.mrf.mxu0
  %v3348 = vadd.f32 %v3010, %v3347
  %v3349 = vpop.f32.mrf.mxu0
  %3350 = vdwg.mxu0
  %3351 = vmatpush.bf16.msra.mxu0 %v3270
  %3352 = vmatpush.bf16.msra.mxu0 %v3266
  %3353 = vmatpush.bf16.msra.mxu0 %v3262
  %3354 = vmatpush.bf16.msra.mxu0 %v3258
  %3355 = vmatpush.bf16.msra.mxu0 %v3254
  %3356 = vmatpush.bf16.msra.mxu0 %v3250
  %3357 = vmatpush.bf16.msra.mxu0 %v3246
  %3358 = vmatpush.bf16.msra.mxu0 %v3242
  %3359 = vmatmul.bf16.gmra.mxu0 %v2944
  %v3360 = vpop.f32.mrf.mxu0
  %v3361 = vadd.f32 %v3348, %v3360
  %v3362 = vpop.f32.mrf.mxu0
  %3363 = vdwg.mxu0
  %3364 = vmatpush.bf16.msra.mxu0 %v3239
  %3365 = vmatpush.bf16.msra.mxu0 %v3235
  %3366 = vmatpush.bf16.msra.mxu0 %v3231
  %3367 = vmatpush.bf16.msra.mxu0 %v3227
  %3368 = vmatpush.bf16.msra.mxu0 %v3223
  %3369 = vmatpush.bf16.msra.mxu0 %v3219
  %3370 = vmatpush.bf16.msra.mxu0 %v3215
  %3371 = vmatpush.bf16.msra.mxu0 %v3211
  %3372 = vmatmul.bf16.gmra.mxu0 %v2943
  %v3373 = vpop.f32.mrf.mxu0
  %v3374 = vadd.f32 %v3011, %v3373
  %v3375 = vpop.f32.mrf.mxu0
  %3376 = vdwg.mxu0
  %3377 = vmatpush.bf16.msra.mxu0 %v3271
  %3378 = vmatpush.bf16.msra.mxu0 %v3267
  %3379 = vmatpush.bf16.msra.mxu0 %v3263
  %3380 = vmatpush.bf16.msra.mxu0 %v3259
  %3381 = vmatpush.bf16.msra.mxu0 %v3255
  %3382 = vmatpush.bf16.msra.mxu0 %v3251
  %3383 = vmatpush.bf16.msra.mxu0 %v3247
  %3384 = vmatpush.bf16.msra.mxu0 %v3243
  %3385 = vmatmul.bf16.gmra.mxu0 %v2944
  %v3386 = vpop.f32.mrf.mxu0
  %v3387 = vadd.f32 %v3374, %v3386
  %v3388 = vpop.f32.mrf.mxu0
  %3389 = vdwg.mxu0
  %3390 = vmatpush.bf16.msra.mxu0 %v3240
  %3391 = vmatpush.bf16.msra.mxu0 %v3236
  %3392 = vmatpush.bf16.msra.mxu0 %v3232
  %3393 = vmatpush.bf16.msra.mxu0 %v3228
  %3394 = vmatpush.bf16.msra.mxu0 %v3224
  %3395 = vmatpush.bf16.msra.mxu0 %v3220
  %3396 = vmatpush.bf16.msra.mxu0 %v3216
  %3397 = vmatpush.bf16.msra.mxu0 %v3212
  %3398 = vmatmul.bf16.gmra.mxu0 %v2943
  %v3399 = vpop.f32.mrf.mxu0
  %v3400 = vadd.f32 %v3012, %v3399
  %v3401 = vpop.f32.mrf.mxu0
  %3402 = vdwg.mxu0
  %3403 = vmatpush.bf16.msra.mxu0 %v3272
  %3404 = vmatpush.bf16.msra.mxu0 %v3268
  %3405 = vmatpush.bf16.msra.mxu0 %v3264
  %3406 = vmatpush.bf16.msra.mxu0 %v3260
  %3407 = vmatpush.bf16.msra.mxu0 %v3256
  %3408 = vmatpush.bf16.msra.mxu0 %v3252
  %3409 = vmatpush.bf16.msra.mxu0 %v3248
  %3410 = vmatpush.bf16.msra.mxu0 %v3244
  %3411 = vmatmul.bf16.gmra.mxu0 %v2944
  %v3412 = vpop.f32.mrf.mxu0
  %v3413 = vadd.f32 %v3400, %v3412
  %v3414 = vpop.f32.mrf.mxu0
  %3415 = vdwg.mxu0
  %3416 = vmatpush.bf16.msra.mxu0 %v3241
  %3417 = vmatpush.bf16.msra.mxu0 %v3237
  %3418 = vmatpush.bf16.msra.mxu0 %v3233
  %3419 = vmatpush.bf16.msra.mxu0 %v3229
  %3420 = vmatpush.bf16.msra.mxu0 %v3225
  %3421 = vmatpush.bf16.msra.mxu0 %v3221
  %3422 = vmatpush.bf16.msra.mxu0 %v3217
  %3423 = vmatpush.bf16.msra.mxu0 %v3213
  %3424 = vmatmul.bf16.gmra.mxu0 %v2943
  %v3425 = vpop.f32.mrf.mxu0
  %v3426 = vadd.f32 %v3013, %v3425
  %v3427 = vpop.f32.mrf.mxu0
  %3428 = vdwg.mxu0
  %3429 = vmatpush.bf16.msra.mxu0 %v3273
  %3430 = vmatpush.bf16.msra.mxu0 %v3269
  %3431 = vmatpush.bf16.msra.mxu0 %v3265
  %3432 = vmatpush.bf16.msra.mxu0 %v3261
  %3433 = vmatpush.bf16.msra.mxu0 %v3257
  %3434 = vmatpush.bf16.msra.mxu0 %v3253
  %3435 = vmatpush.bf16.msra.mxu0 %v3249
  %3436 = vmatpush.bf16.msra.mxu0 %v3245
  %3437 = vmatmul.bf16.gmra.mxu0 %v2944
  %v3438 = vpop.f32.mrf.mxu0
  %v3439 = vadd.f32 %v3426, %v3438
  %v3440 = vpop.f32.mrf.mxu0
  %3441 = vdwg.mxu0
  %v3442 = vxor.u32 %v3361, 2147483648
  %v3443 = vmul.f32 %v3442, 1.442695
  %v3444 = vpow.pop %v3443
  %v3445 = vadd.f32 %v3444, 1.0
  %v3446 = vrcp.pop %v3445
  %v3447 = vmul.f32 %v3445, %v3446
  %v3448 = vsub.f32 1.0, %v3447
  %v3449 = vmul.f32 %v3446, %v3448
  %v3450 = vadd.f32 %v3446, %v3449
  %vm3451 = vweird.f32 %v3445
  %vm3452 = vweird.f32 %v3446
  %vm3453 = vmor %vm3451, %vm3452
  %v3454 = vsel %vm3453, %v3446, %v3450
  %v3455 = vand.u32 2147483647, %v3445
  %vm3456 = vcmp.eq.f32.partialorder %v3455, 8.507059e+37
  %v3457 = vand.u32 %v3445, 2147483648
  %v3458 = vor.u32 1.1754944e-38, %v3457
  %v3459 = vsel %vm3456, %v3458, %v3454
  %v3460 = vmul.f32 1.0, %v3459
  %v3461 = vxor.u32 %v3387, 2147483648
  %v3462 = vmul.f32 %v3461, 1.442695
  %v3463 = vpow.pop %v3462
  %v3464 = vadd.f32 %v3463, 1.0
  %v3465 = vrcp.pop %v3464
  %v3466 = vmul.f32 %v3464, %v3465
  %v3467 = vsub.f32 1.0, %v3466
  %v3468 = vmul.f32 %v3465, %v3467
  %v3469 = vadd.f32 %v3465, %v3468
  %vm3470 = vweird.f32 %v3464
  %vm3471 = vweird.f32 %v3465
  %vm3472 = vmor %vm3470, %vm3471
  %v3473 = vsel %vm3472, %v3465, %v3469
  %v3474 = vand.u32 2147483647, %v3464
  %vm3475 = vcmp.eq.f32.partialorder %v3474, 8.507059e+37
  %v3476 = vand.u32 %v3464, 2147483648
  %v3477 = vor.u32 1.1754944e-38, %v3476
  %v3478 = vsel %vm3475, %v3477, %v3473
  %v3479 = vmul.f32 1.0, %v3478
  %v3480 = vtanh.pop %v3413
  %v3481 = vxor.u32 %v3439, 2147483648
  %v3482 = vmul.f32 %v3481, 1.442695
  %v3483 = vpow.pop %v3482
  %v3484 = vadd.f32 %v3483, 1.0
  %v3485 = vrcp.pop %v3484
  %v3486 = vmul.f32 %v3484, %v3485
  %v3487 = vsub.f32 1.0, %v3486
  %v3488 = vmul.f32 %v3485, %v3487
  %v3489 = vadd.f32 %v3485, %v3488
  %vm3490 = vweird.f32 %v3484
  %vm3491 = vweird.f32 %v3485
  %vm3492 = vmor %vm3490, %vm3491
  %v3493 = vsel %vm3492, %v3485, %v3489
  %v3494 = vand.u32 2147483647, %v3484
  %vm3495 = vcmp.eq.f32.partialorder %v3494, 8.507059e+37
  %v3496 = vand.u32 %v3484, 2147483648
  %v3497 = vor.u32 1.1754944e-38, %v3496
  %v3498 = vsel %vm3495, %v3497, %v3493
  %v3499 = vmul.f32 1.0, %v3498
  %v3500 = vmul.f32 %v3479, 0.0
  %v3501 = vmul.f32 %v3460, %v3480
  %v3502 = vadd.f32 %v3500, %v3501
  %v3503 = vtanh.pop %v3502
  %v3504 = vmul.f32 %v3499, %v3503
  %v3505 = vld [vmem:[%s0 + $0x20] sm:$0xf]
  %v3506 = vld [vmem:[%s0 + $0x24] sm:$0xf]
  %v3507 = vld [vmem:[%s0 + $0x28] sm:$0xf]
  %v3508 = vld [vmem:[%s0 + $0x2c] sm:$0xf]
  %v3509 = vld [vmem:[%s0 + $0x30] sm:$0xf]
  %v3510 = vld [vmem:[%s0 + $0x34] sm:$0xf]
  %v3511 = vld [vmem:[%s0 + $0x38] sm:$0xf]
  %v3512 = vld [vmem:[%s0 + $0x3c] sm:$0xf]
  %v3513 = vld [vmem:[%s1] sm:$0xff]
  %v3514 = vld [vmem:[%s1 + $0x8] sm:$0xff]
  %v3515 = vld [vmem:[%s1 + $0x10] sm:$0xff]
  %v3516 = vld [vmem:[%s1 + $0x18] sm:$0xff]
  %v3517 = vld [vmem:[%s1 + $0x20] sm:$0xff]
  %v3518 = vld [vmem:[%s1 + $0x28] sm:$0xff]
  %v3519 = vld [vmem:[%s1 + $0x30] sm:$0xff]
  %v3520 = vld [vmem:[%s1 + $0x38] sm:$0xff]
  %v3521 = vld [vmem:[%s1 + $0x40] sm:$0xff]
  %v3522 = vld [vmem:[%s1 + $0x48] sm:$0xff]
  %v3523 = vld [vmem:[%s1 + $0x50] sm:$0xff]
  %v3524 = vld [vmem:[%s1 + $0x58] sm:$0xff]
  %v3525 = vld [vmem:[%s1 + $0x60] sm:$0xff]
  %v3526 = vld [vmem:[%s1 + $0x68] sm:$0xff]
  %v3527 = vld [vmem:[%s1 + $0x70] sm:$0xff]
  %v3528 = vld [vmem:[%s1 + $0x78] sm:$0xff]
  %v3529 = vld [vmem:[%s1 + $0x80] sm:$0xff]
  %v3530 = vld [vmem:[%s1 + $0x88] sm:$0xff]
  %v3531 = vld [vmem:[%s1 + $0x90] sm:$0xff]
  %v3532 = vld [vmem:[%s1 + $0x98] sm:$0xff]
  %v3533 = vld [vmem:[%s1 + $0xa0] sm:$0xff]
  %v3534 = vld [vmem:[%s1 + $0xa8] sm:$0xff]
  %v3535 = vld [vmem:[%s1 + $0xb0] sm:$0xff]
  %v3536 = vld [vmem:[%s1 + $0xb8] sm:$0xff]
  %v3537 = vld [vmem:[%s1 + $0xc0] sm:$0xff]
  %v3538 = vld [vmem:[%s1 + $0xc8] sm:$0xff]
  %v3539 = vld [vmem:[%s1 + $0xd0] sm:$0xff]
  %v3540 = vld [vmem:[%s1 + $0xd8] sm:$0xff]
  %v3541 = vld [vmem:[%s1 + $0xe0] sm:$0xff]
  %v3542 = vld [vmem:[%s1 + $0xe8] sm:$0xff]
  %v3543 = vld [vmem:[%s1 + $0xf0] sm:$0xff]
  %v3544 = vld [vmem:[%s1 + $0xf8] sm:$0xff]
  %v3553 = vunpack.c.l.b16 %v3505
  %v3554 = vunpack.c.l.b16 %v3506
  %v3555 = vunpack.c.l.b16 %v3507
  %v3556 = vunpack.c.l.b16 %v3508
  %v3557 = vunpack.c.l.b16 %v3509
  %v3558 = vunpack.c.l.b16 %v3510
  %v3559 = vunpack.c.l.b16 %v3511
  %v3560 = vunpack.c.l.b16 %v3512
  %v3561 = vpack.c.b16 %v3554, %v3553
  %v3562 = vpack.c.b16 %v3556, %v3555
  %v3563 = vpack.c.b16 %v3558, %v3557
  %v3564 = vpack.c.b16 %v3560, %v3559
  %v3601 = vunpack.c.l.b16 %v3513
  %v3602 = vunpack.c.h.b16 %v3513
  %v3603 = vunpack.c.l.b16 %v3514
  %v3604 = vunpack.c.h.b16 %v3514
  %v3605 = vunpack.c.l.b16 %v3515
  %v3606 = vunpack.c.h.b16 %v3515
  %v3607 = vunpack.c.l.b16 %v3516
  %v3608 = vunpack.c.h.b16 %v3516
  %v3609 = vunpack.c.l.b16 %v3517
  %v3610 = vunpack.c.h.b16 %v3517
  %v3611 = vunpack.c.l.b16 %v3518
  %v3612 = vunpack.c.h.b16 %v3518
  %v3613 = vunpack.c.l.b16 %v3519
  %v3614 = vunpack.c.h.b16 %v3519
  %v3615 = vunpack.c.l.b16 %v3520
  %v3616 = vunpack.c.h.b16 %v3520
  %v3617 = vunpack.c.l.b16 %v3521
  %v3618 = vunpack.c.h.b16 %v3521
  %v3619 = vunpack.c.l.b16 %v3522
  %v3620 = vunpack.c.h.b16 %v3522
  %v3621 = vunpack.c.l.b16 %v3523
  %v3622 = vunpack.c.h.b16 %v3523
  %v3623 = vunpack.c.l.b16 %v3524
  %v3624 = vunpack.c.h.b16 %v3524
  %v3625 = vunpack.c.l.b16 %v3525
  %v3626 = vunpack.c.h.b16 %v3525
  %v3627 = vunpack.c.l.b16 %v3526
  %v3628 = vunpack.c.h.b16 %v3526
  %v3629 = vunpack.c.l.b16 %v3527
  %v3630 = vunpack.c.h.b16 %v3527
  %v3631 = vunpack.c.l.b16 %v3528
  %v3632 = vunpack.c.h.b16 %v3528
  %v3633 = vunpack.c.l.b16 %v3529
  %v3634 = vunpack.c.h.b16 %v3529
  %v3635 = vunpack.c.l.b16 %v3530
  %v3636 = vunpack.c.h.b16 %v3530
  %v3637 = vunpack.c.l.b16 %v3531
  %v3638 = vunpack.c.h.b16 %v3531
  %v3639 = vunpack.c.l.b16 %v3532
  %v3640 = vunpack.c.h.b16 %v3532
  %v3641 = vunpack.c.l.b16 %v3533
  %v3642 = vunpack.c.h.b16 %v3533
  %v3643 = vunpack.c.l.b16 %v3534
  %v3644 = vunpack.c.h.b16 %v3534
  %v3645 = vunpack.c.l.b16 %v3535
  %v3646 = vunpack.c.h.b16 %v3535
  %v3647 = vunpack.c.l.b16 %v3536
  %v3648 = vunpack.c.h.b16 %v3536
  %v3649 = vunpack.c.l.b16 %v3537
  %v3650 = vunpack.c.h.b16 %v3537
  %v3651 = vunpack.c.l.b16 %v3538
  %v3652 = vunpack.c.h.b16 %v3538
  %v3653 = vunpack.c.l.b16 %v3539
  %v3654 = vunpack.c.h.b16 %v3539
  %v3655 = vunpack.c.l.b16 %v3540
  %v3656 = vunpack.c.h.b16 %v3540
  %v3657 = vunpack.c.l.b16 %v3541
  %v3658 = vunpack.c.h.b16 %v3541
  %v3659 = vunpack.c.l.b16 %v3542
  %v3660 = vunpack.c.h.b16 %v3542
  %v3661 = vunpack.c.l.b16 %v3543
  %v3662 = vunpack.c.h.b16 %v3543
  %v3663 = vunpack.c.l.b16 %v3544
  %v3664 = vunpack.c.h.b16 %v3544
  %v3665 = vpack.c.b16 %v3605, %v3601
  %v3666 = vpack.c.b16 %v3606, %v3602
  %v3667 = vpack.c.b16 %v3607, %v3603
  %v3668 = vpack.c.b16 %v3608, %v3604
  %v3669 = vpack.c.b16 %v3613, %v3609
  %v3670 = vpack.c.b16 %v3614, %v3610
  %v3671 = vpack.c.b16 %v3615, %v3611
  %v3672 = vpack.c.b16 %v3616, %v3612
  %v3673 = vpack.c.b16 %v3621, %v3617
  %v3674 = vpack.c.b16 %v3622, %v3618
  %v3675 = vpack.c.b16 %v3623, %v3619
  %v3676 = vpack.c.b16 %v3624, %v3620
  %v3677 = vpack.c.b16 %v3629, %v3625
  %v3678 = vpack.c.b16 %v3630, %v3626
  %v3679 = vpack.c.b16 %v3631, %v3627
  %v3680 = vpack.c.b16 %v3632, %v3628
  %v3681 = vpack.c.b16 %v3637, %v3633
  %v3682 = vpack.c.b16 %v3638, %v3634
  %v3683 = vpack.c.b16 %v3639, %v3635
  %v3684 = vpack.c.b16 %v3640, %v3636
  %v3685 = vpack.c.b16 %v3645, %v3641
  %v3686 = vpack.c.b16 %v3646, %v3642
  %v3687 = vpack.c.b16 %v3647, %v3643
  %v3688 = vpack.c.b16 %v3648, %v3644
  %v3689 = vpack.c.b16 %v3653, %v3649
  %v3690 = vpack.c.b16 %v3654, %v3650
  %v3691 = vpack.c.b16 %v3655, %v3651
  %v3692 = vpack.c.b16 %v3656, %v3652
  %v3693 = vpack.c.b16 %v3661, %v3657
  %v3694 = vpack.c.b16 %v3662, %v3658
  %v3695 = vpack.c.b16 %v3663, %v3659
  %v3696 = vpack.c.b16 %v3664, %v3660
  %3729 = vmatpush.bf16.msra.mxu0 %v3693
  %3730 = vmatpush.bf16.msra.mxu0 %v3689
  %3731 = vmatpush.bf16.msra.mxu0 %v3685
  %3732 = vmatpush.bf16.msra.mxu0 %v3681
  %3733 = vmatpush.bf16.msra.mxu0 %v3677
  %3734 = vmatpush.bf16.msra.mxu0 %v3673
  %3735 = vmatpush.bf16.msra.mxu0 %v3669
  %3736 = vmatpush.bf16.msra.mxu0 %v3665
  %3737 = vmatmul.bf16.gmra.mxu0 %v3561
  %v3738 = vpop.f32.mrf.mxu0
  %v3739 = vadd.f32 %v67, %v3738
  %v3740 = vpop.f32.mrf.mxu0
  %v3741 = vadd.f32 %v67, %v3740
  %3742 = vmatmul.bf16.gmra.mxu0 %v3562
  %v3743 = vpop.f32.mrf.mxu0
  %v3744 = vadd.f32 %v67, %v3743
  %v3745 = vpop.f32.mrf.mxu0
  %v3746 = vadd.f32 %v67, %v3745
  %3747 = vmatmul.bf16.gmra.mxu0 %v3563
  %v3748 = vpop.f32.mrf.mxu0
  %v3749 = vadd.f32 %v67, %v3748
  %v3750 = vpop.f32.mrf.mxu0
  %v3751 = vadd.f32 %v67, %v3750
  %3752 = vmatmul.bf16.gmra.mxu0 %v3564
  %v3753 = vpop.f32.mrf.mxu0
  %v3754 = vadd.f32 %v67, %v3753
  %v3755 = vpop.f32.mrf.mxu0
  %v3756 = vadd.f32 %v67, %v3755
  %3757 = vdwg.mxu0
  %3758 = vmatpush.bf16.msra.mxu0 %v3694
  %3759 = vmatpush.bf16.msra.mxu0 %v3690
  %3760 = vmatpush.bf16.msra.mxu0 %v3686
  %3761 = vmatpush.bf16.msra.mxu0 %v3682
  %3762 = vmatpush.bf16.msra.mxu0 %v3678
  %3763 = vmatpush.bf16.msra.mxu0 %v3674
  %3764 = vmatpush.bf16.msra.mxu0 %v3670
  %3765 = vmatpush.bf16.msra.mxu0 %v3666
  %3766 = vmatmul.bf16.gmra.mxu0 %v3561
  %v3767 = vpop.f32.mrf.mxu0
  %v3768 = vadd.f32 %v68, %v3767
  %v3769 = vpop.f32.mrf.mxu0
  %v3770 = vadd.f32 %v68, %v3769
  %3771 = vmatmul.bf16.gmra.mxu0 %v3562
  %v3772 = vpop.f32.mrf.mxu0
  %v3773 = vadd.f32 %v68, %v3772
  %v3774 = vpop.f32.mrf.mxu0
  %v3775 = vadd.f32 %v68, %v3774
  %3776 = vmatmul.bf16.gmra.mxu0 %v3563
  %v3777 = vpop.f32.mrf.mxu0
  %v3778 = vadd.f32 %v68, %v3777
  %v3779 = vpop.f32.mrf.mxu0
  %v3780 = vadd.f32 %v68, %v3779
  %3781 = vmatmul.bf16.gmra.mxu0 %v3564
  %v3782 = vpop.f32.mrf.mxu0
  %v3783 = vadd.f32 %v68, %v3782
  %v3784 = vpop.f32.mrf.mxu0
  %v3785 = vadd.f32 %v68, %v3784
  %3786 = vdwg.mxu0
  %3787 = vmatpush.bf16.msra.mxu0 %v3695
  %3788 = vmatpush.bf16.msra.mxu0 %v3691
  %3789 = vmatpush.bf16.msra.mxu0 %v3687
  %3790 = vmatpush.bf16.msra.mxu0 %v3683
  %3791 = vmatpush.bf16.msra.mxu0 %v3679
  %3792 = vmatpush.bf16.msra.mxu0 %v3675
  %3793 = vmatpush.bf16.msra.mxu0 %v3671
  %3794 = vmatpush.bf16.msra.mxu0 %v3667
  %3795 = vmatmul.bf16.gmra.mxu0 %v3561
  %v3796 = vpop.f32.mrf.mxu0
  %v3797 = vadd.f32 %v69, %v3796
  %v3798 = vpop.f32.mrf.mxu0
  %v3799 = vadd.f32 %v69, %v3798
  %3800 = vmatmul.bf16.gmra.mxu0 %v3562
  %v3801 = vpop.f32.mrf.mxu0
  %v3802 = vadd.f32 %v69, %v3801
  %v3803 = vpop.f32.mrf.mxu0
  %v3804 = vadd.f32 %v69, %v3803
  %3805 = vmatmul.bf16.gmra.mxu0 %v3563
  %v3806 = vpop.f32.mrf.mxu0
  %v3807 = vadd.f32 %v69, %v3806
  %v3808 = vpop.f32.mrf.mxu0
  %v3809 = vadd.f32 %v69, %v3808
  %3810 = vmatmul.bf16.gmra.mxu0 %v3564
  %v3811 = vpop.f32.mrf.mxu0
  %v3812 = vadd.f32 %v69, %v3811
  %v3813 = vpop.f32.mrf.mxu0
  %v3814 = vadd.f32 %v69, %v3813
  %3815 = vdwg.mxu0
  %3816 = vmatpush.bf16.msra.mxu0 %v3696
  %3817 = vmatpush.bf16.msra.mxu0 %v3692
  %3818 = vmatpush.bf16.msra.mxu0 %v3688
  %3819 = vmatpush.bf16.msra.mxu0 %v3684
  %3820 = vmatpush.bf16.msra.mxu0 %v3680
  %3821 = vmatpush.bf16.msra.mxu0 %v3676
  %3822 = vmatpush.bf16.msra.mxu0 %v3672
  %3823 = vmatpush.bf16.msra.mxu0 %v3668
  %3824 = vmatmul.bf16.gmra.mxu0 %v3561
  %v3825 = vpop.f32.mrf.mxu0
  %v3826 = vadd.f32 %v70, %v3825
  %v3827 = vpop.f32.mrf.mxu0
  %v3828 = vadd.f32 %v70, %v3827
  %3829 = vmatmul.bf16.gmra.mxu0 %v3562
  %v3830 = vpop.f32.mrf.mxu0
  %v3831 = vadd.f32 %v70, %v3830
  %v3832 = vpop.f32.mrf.mxu0
  %v3833 = vadd.f32 %v70, %v3832
  %3834 = vmatmul.bf16.gmra.mxu0 %v3563
  %v3835 = vpop.f32.mrf.mxu0
  %v3836 = vadd.f32 %v70, %v3835
  %v3837 = vpop.f32.mrf.mxu0
  %v3838 = vadd.f32 %v70, %v3837
  %3839 = vmatmul.bf16.gmra.mxu0 %v3564
  %v3840 = vpop.f32.mrf.mxu0
  %v3841 = vadd.f32 %v70, %v3840
  %v3842 = vpop.f32.mrf.mxu0
  %v3843 = vadd.f32 %v70, %v3842
  %3844 = vdwg.mxu0
  %3845 = vst [vmem:[#allocation2] sm:$0xff] %v3739
  %3846 = vst [vmem:[#allocation2 + $0x8] sm:$0xff] %v3768
  %3847 = vst [vmem:[#allocation2 + $0x10] sm:$0xff] %v3797
  %3848 = vst [vmem:[#allocation2 + $0x18] sm:$0xff] %v3826
  %3849 = vst [vmem:[#allocation2 + $0x20] sm:$0xff] %v3741
  %3850 = vst [vmem:[#allocation2 + $0x28] sm:$0xff] %v3770
  %3851 = vst [vmem:[#allocation2 + $0x30] sm:$0xff] %v3799
  %3852 = vst [vmem:[#allocation2 + $0x38] sm:$0xff] %v3828
  %3853 = vst [vmem:[#allocation2 + $0x40] sm:$0xff] %v3744
  %3854 = vst [vmem:[#allocation2 + $0x48] sm:$0xff] %v3773
  %3855 = vst [vmem:[#allocation2 + $0x50] sm:$0xff] %v3802
  %3856 = vst [vmem:[#allocation2 + $0x58] sm:$0xff] %v3831
  %3857 = vst [vmem:[#allocation2 + $0x60] sm:$0xff] %v3746
  %3858 = vst [vmem:[#allocation2 + $0x68] sm:$0xff] %v3775
  %3859 = vst [vmem:[#allocation2 + $0x70] sm:$0xff] %v3804
  %3860 = vst [vmem:[#allocation2 + $0x78] sm:$0xff] %v3833
  %3861 = vst [vmem:[#allocation2 + $0x80] sm:$0xff] %v3749
  %3862 = vst [vmem:[#allocation2 + $0x88] sm:$0xff] %v3778
  %3863 = vst [vmem:[#allocation2 + $0x90] sm:$0xff] %v3807
  %3864 = vst [vmem:[#allocation2 + $0x98] sm:$0xff] %v3836
  %3865 = vst [vmem:[#allocation2 + $0xa0] sm:$0xff] %v3751
  %3866 = vst [vmem:[#allocation2 + $0xa8] sm:$0xff] %v3780
  %3867 = vst [vmem:[#allocation2 + $0xb0] sm:$0xff] %v3809
  %3868 = vst [vmem:[#allocation2 + $0xb8] sm:$0xff] %v3838
  %3869 = vst [vmem:[#allocation2 + $0xc0] sm:$0xff] %v3754
  %3870 = vst [vmem:[#allocation2 + $0xc8] sm:$0xff] %v3783
  %3871 = vst [vmem:[#allocation2 + $0xd0] sm:$0xff] %v3812
  %3872 = vst [vmem:[#allocation2 + $0xd8] sm:$0xff] %v3841
  %3873 = vst [vmem:[#allocation2 + $0xe0] sm:$0xff] %v3756
  %3874 = vst [vmem:[#allocation2 + $0xe8] sm:$0xff] %v3785
  %3875 = vst [vmem:[#allocation2 + $0xf0] sm:$0xff] %v3814
  %3876 = vst [vmem:[#allocation2 + $0xf8] sm:$0xff] %v3843
  %v3877 = vld [vmem:[#allocation2] sm:$0xff]
  %v3878 = vld [vmem:[#allocation2 + $0x8] sm:$0xff]
  %v3879 = vld [vmem:[#allocation2 + $0x10] sm:$0xff]
  %v3880 = vld [vmem:[#allocation2 + $0x18] sm:$0xff]
  %v3881 = vld [vmem:[%s2] sm:$0xff]
  %v3882 = vld [vmem:[%s2 + $0x8] sm:$0xff]
  %v3883 = vld [vmem:[%s2 + $0x10] sm:$0xff]
  %v3884 = vld [vmem:[%s2 + $0x18] sm:$0xff]
  %v3885 = vld [vmem:[%s2 + $0x20] sm:$0xff]
  %v3886 = vld [vmem:[%s2 + $0x28] sm:$0xff]
  %v3887 = vld [vmem:[%s2 + $0x30] sm:$0xff]
  %v3888 = vld [vmem:[%s2 + $0x38] sm:$0xff]
  %v3889 = vld [vmem:[%s2 + $0x40] sm:$0xff]
  %v3890 = vld [vmem:[%s2 + $0x48] sm:$0xff]
  %v3891 = vld [vmem:[%s2 + $0x50] sm:$0xff]
  %v3892 = vld [vmem:[%s2 + $0x58] sm:$0xff]
  %v3893 = vld [vmem:[%s2 + $0x60] sm:$0xff]
  %v3894 = vld [vmem:[%s2 + $0x68] sm:$0xff]
  %v3895 = vld [vmem:[%s2 + $0x70] sm:$0xff]
  %v3896 = vld [vmem:[%s2 + $0x78] sm:$0xff]
  %v3897 = vld [vmem:[%s2 + $0x80] sm:$0xff]
  %v3898 = vld [vmem:[%s2 + $0x88] sm:$0xff]
  %v3899 = vld [vmem:[%s2 + $0x90] sm:$0xff]
  %v3900 = vld [vmem:[%s2 + $0x98] sm:$0xff]
  %v3901 = vld [vmem:[%s2 + $0xa0] sm:$0xff]
  %v3902 = vld [vmem:[%s2 + $0xa8] sm:$0xff]
  %v3903 = vld [vmem:[%s2 + $0xb0] sm:$0xff]
  %v3904 = vld [vmem:[%s2 + $0xb8] sm:$0xff]
  %v3905 = vld [vmem:[%s2 + $0xc0] sm:$0xff]
  %v3906 = vld [vmem:[%s2 + $0xc8] sm:$0xff]
  %v3907 = vld [vmem:[%s2 + $0xd0] sm:$0xff]
  %v3908 = vld [vmem:[%s2 + $0xd8] sm:$0xff]
  %v3909 = vld [vmem:[%s2 + $0xe0] sm:$0xff]
  %v3910 = vld [vmem:[%s2 + $0xe8] sm:$0xff]
  %v3911 = vld [vmem:[%s2 + $0xf0] sm:$0xff]
  %v3912 = vld [vmem:[%s2 + $0xf8] sm:$0xff]
  %v3945 = vunpack.c.l.b16 %v3881
  %v3946 = vunpack.c.h.b16 %v3881
  %v3947 = vunpack.c.l.b16 %v3882
  %v3948 = vunpack.c.h.b16 %v3882
  %v3949 = vunpack.c.l.b16 %v3883
  %v3950 = vunpack.c.h.b16 %v3883
  %v3951 = vunpack.c.l.b16 %v3884
  %v3952 = vunpack.c.h.b16 %v3884
  %v3953 = vunpack.c.l.b16 %v3885
  %v3954 = vunpack.c.h.b16 %v3885
  %v3955 = vunpack.c.l.b16 %v3886
  %v3956 = vunpack.c.h.b16 %v3886
  %v3957 = vunpack.c.l.b16 %v3887
  %v3958 = vunpack.c.h.b16 %v3887
  %v3959 = vunpack.c.l.b16 %v3888
  %v3960 = vunpack.c.h.b16 %v3888
  %v3961 = vunpack.c.l.b16 %v3889
  %v3962 = vunpack.c.h.b16 %v3889
  %v3963 = vunpack.c.l.b16 %v3890
  %v3964 = vunpack.c.h.b16 %v3890
  %v3965 = vunpack.c.l.b16 %v3891
  %v3966 = vunpack.c.h.b16 %v3891
  %v3967 = vunpack.c.l.b16 %v3892
  %v3968 = vunpack.c.h.b16 %v3892
  %v3969 = vunpack.c.l.b16 %v3893
  %v3970 = vunpack.c.h.b16 %v3893
  %v3971 = vunpack.c.l.b16 %v3894
  %v3972 = vunpack.c.h.b16 %v3894
  %v3973 = vunpack.c.l.b16 %v3895
  %v3974 = vunpack.c.h.b16 %v3895
  %v3975 = vunpack.c.l.b16 %v3896
  %v3976 = vunpack.c.h.b16 %v3896
  %v3977 = vunpack.c.l.b16 %v3897
  %v3978 = vunpack.c.h.b16 %v3897
  %v3979 = vunpack.c.l.b16 %v3898
  %v3980 = vunpack.c.h.b16 %v3898
  %v3981 = vunpack.c.l.b16 %v3899
  %v3982 = vunpack.c.h.b16 %v3899
  %v3983 = vunpack.c.l.b16 %v3900
  %v3984 = vunpack.c.h.b16 %v3900
  %v3985 = vunpack.c.l.b16 %v3901
  %v3986 = vunpack.c.h.b16 %v3901
  %v3987 = vunpack.c.l.b16 %v3902
  %v3988 = vunpack.c.h.b16 %v3902
  %v3989 = vunpack.c.l.b16 %v3903
  %v3990 = vunpack.c.h.b16 %v3903
  %v3991 = vunpack.c.l.b16 %v3904
  %v3992 = vunpack.c.h.b16 %v3904
  %v3993 = vunpack.c.l.b16 %v3905
  %v3994 = vunpack.c.h.b16 %v3905
  %v3995 = vunpack.c.l.b16 %v3906
  %v3996 = vunpack.c.h.b16 %v3906
  %v3997 = vunpack.c.l.b16 %v3907
  %v3998 = vunpack.c.h.b16 %v3907
  %v3999 = vunpack.c.l.b16 %v3908
  %v4000 = vunpack.c.h.b16 %v3908
  %v4001 = vunpack.c.l.b16 %v3909
  %v4002 = vunpack.c.h.b16 %v3909
  %v4003 = vunpack.c.l.b16 %v3910
  %v4004 = vunpack.c.h.b16 %v3910
  %v4005 = vunpack.c.l.b16 %v3911
  %v4006 = vunpack.c.h.b16 %v3911
  %v4007 = vunpack.c.l.b16 %v3912
  %v4008 = vunpack.c.h.b16 %v3912
  %v4009 = vpack.c.b16 %v3949, %v3945
  %v4010 = vpack.c.b16 %v3950, %v3946
  %v4011 = vpack.c.b16 %v3951, %v3947
  %v4012 = vpack.c.b16 %v3952, %v3948
  %v4013 = vpack.c.b16 %v3957, %v3953
  %v4014 = vpack.c.b16 %v3958, %v3954
  %v4015 = vpack.c.b16 %v3959, %v3955
  %v4016 = vpack.c.b16 %v3960, %v3956
  %v4017 = vpack.c.b16 %v3965, %v3961
  %v4018 = vpack.c.b16 %v3966, %v3962
  %v4019 = vpack.c.b16 %v3967, %v3963
  %v4020 = vpack.c.b16 %v3968, %v3964
  %v4021 = vpack.c.b16 %v3973, %v3969
  %v4022 = vpack.c.b16 %v3974, %v3970
  %v4023 = vpack.c.b16 %v3975, %v3971
  %v4024 = vpack.c.b16 %v3976, %v3972
  %v4025 = vpack.c.b16 %v3981, %v3977
  %v4026 = vpack.c.b16 %v3982, %v3978
  %v4027 = vpack.c.b16 %v3983, %v3979
  %v4028 = vpack.c.b16 %v3984, %v3980
  %v4029 = vpack.c.b16 %v3989, %v3985
  %v4030 = vpack.c.b16 %v3990, %v3986
  %v4031 = vpack.c.b16 %v3991, %v3987
  %v4032 = vpack.c.b16 %v3992, %v3988
  %v4033 = vpack.c.b16 %v3997, %v3993
  %v4034 = vpack.c.b16 %v3998, %v3994
  %v4035 = vpack.c.b16 %v3999, %v3995
  %v4036 = vpack.c.b16 %v4000, %v3996
  %v4037 = vpack.c.b16 %v4005, %v4001
  %v4038 = vpack.c.b16 %v4006, %v4002
  %v4039 = vpack.c.b16 %v4007, %v4003
  %v4040 = vpack.c.b16 %v4008, %v4004
  %4073 = vmatpush.bf16.msra.mxu0 %v4037
  %4074 = vmatpush.bf16.msra.mxu0 %v4033
  %4075 = vmatpush.bf16.msra.mxu0 %v4029
  %4076 = vmatpush.bf16.msra.mxu0 %v4025
  %4077 = vmatpush.bf16.msra.mxu0 %v4021
  %4078 = vmatpush.bf16.msra.mxu0 %v4017
  %4079 = vmatpush.bf16.msra.mxu0 %v4013
  %4080 = vmatpush.bf16.msra.mxu0 %v4009
  %4081 = vmatmul.bf16.gmra.mxu0 %v2941
  %v4082 = vpop.f32.mrf.mxu0
  %v4083 = vadd.f32 0.0, %v4082
  %v4084 = vpop.f32.mrf.mxu0
  %4085 = vdwg.mxu0
  %4086 = vmatpush.bf16.msra.mxu0 %v4038
  %4087 = vmatpush.bf16.msra.mxu0 %v4034
  %4088 = vmatpush.bf16.msra.mxu0 %v4030
  %4089 = vmatpush.bf16.msra.mxu0 %v4026
  %4090 = vmatpush.bf16.msra.mxu0 %v4022
  %4091 = vmatpush.bf16.msra.mxu0 %v4018
  %4092 = vmatpush.bf16.msra.mxu0 %v4014
  %4093 = vmatpush.bf16.msra.mxu0 %v4010
  %4094 = vmatmul.bf16.gmra.mxu0 %v2941
  %v4095 = vpop.f32.mrf.mxu0
  %v4096 = vadd.f32 0.0, %v4095
  %v4097 = vpop.f32.mrf.mxu0
  %4098 = vdwg.mxu0
  %4099 = vmatpush.bf16.msra.mxu0 %v4039
  %4100 = vmatpush.bf16.msra.mxu0 %v4035
  %4101 = vmatpush.bf16.msra.mxu0 %v4031
  %4102 = vmatpush.bf16.msra.mxu0 %v4027
  %4103 = vmatpush.bf16.msra.mxu0 %v4023
  %4104 = vmatpush.bf16.msra.mxu0 %v4019
  %4105 = vmatpush.bf16.msra.mxu0 %v4015
  %4106 = vmatpush.bf16.msra.mxu0 %v4011
  %4107 = vmatmul.bf16.gmra.mxu0 %v2941
  %v4108 = vpop.f32.mrf.mxu0
  %v4109 = vadd.f32 0.0, %v4108
  %v4110 = vpop.f32.mrf.mxu0
  %4111 = vdwg.mxu0
  %4112 = vmatpush.bf16.msra.mxu0 %v4040
  %4113 = vmatpush.bf16.msra.mxu0 %v4036
  %4114 = vmatpush.bf16.msra.mxu0 %v4032
  %4115 = vmatpush.bf16.msra.mxu0 %v4028
  %4116 = vmatpush.bf16.msra.mxu0 %v4024
  %4117 = vmatpush.bf16.msra.mxu0 %v4020
  %4118 = vmatpush.bf16.msra.mxu0 %v4016
  %4119 = vmatpush.bf16.msra.mxu0 %v4012
  %4120 = vmatmul.bf16.gmra.mxu0 %v2941
  %v4121 = vpop.f32.mrf.mxu0
  %v4122 = vadd.f32 0.0, %v4121
  %v4123 = vpop.f32.mrf.mxu0
  %4124 = vdwg.mxu0
  %v4125 = vadd.f32 %v3877, %v4083
  %v4126 = vadd.f32 %v3878, %v4096
  %v4127 = vadd.f32 %v3879, %v4109
  %v4128 = vadd.f32 %v3880, %v4122
  %v4129 = vxor.u32 %v4125, 2147483648
  %v4130 = vmul.f32 %v4129, 1.442695
  %v4131 = vpow.pop %v4130
  %v4132 = vadd.f32 %v4131, 1.0
  %v4133 = vrcp.pop %v4132
  %v4134 = vmul.f32 %v4132, %v4133
  %v4135 = vsub.f32 1.0, %v4134
  %v4136 = vmul.f32 %v4133, %v4135
  %v4137 = vadd.f32 %v4133, %v4136
  %vm4138 = vweird.f32 %v4132
  %vm4139 = vweird.f32 %v4133
  %vm4140 = vmor %vm4138, %vm4139
  %v4141 = vsel %vm4140, %v4133, %v4137
  %v4142 = vand.u32 2147483647, %v4132
  %vm4143 = vcmp.eq.f32.partialorder %v4142, 8.507059e+37
  %v4144 = vand.u32 %v4132, 2147483648
  %v4145 = vor.u32 1.1754944e-38, %v4144
  %v4146 = vsel %vm4143, %v4145, %v4141
  %v4147 = vmul.f32 1.0, %v4146
  %v4148 = vxor.u32 %v4126, 2147483648
  %v4149 = vmul.f32 %v4148, 1.442695
  %v4150 = vpow.pop %v4149
  %v4151 = vadd.f32 %v4150, 1.0
  %v4152 = vrcp.pop %v4151
  %v4153 = vmul.f32 %v4151, %v4152
  %v4154 = vsub.f32 1.0, %v4153
  %v4155 = vmul.f32 %v4152, %v4154
  %v4156 = vadd.f32 %v4152, %v4155
  %vm4157 = vweird.f32 %v4151
  %vm4158 = vweird.f32 %v4152
  %vm4159 = vmor %vm4157, %vm4158
  %v4160 = vsel %vm4159, %v4152, %v4156
  %v4161 = vand.u32 2147483647, %v4151
  %vm4162 = vcmp.eq.f32.partialorder %v4161, 8.507059e+37
  %v4163 = vand.u32 %v4151, 2147483648
  %v4164 = vor.u32 1.1754944e-38, %v4163
  %v4165 = vsel %vm4162, %v4164, %v4160
  %v4166 = vmul.f32 1.0, %v4165
  %v4167 = vtanh.pop %v4127
  %v4168 = vxor.u32 %v4128, 2147483648
  %v4169 = vmul.f32 %v4168, 1.442695
  %v4170 = vpow.pop %v4169
  %v4171 = vadd.f32 %v4170, 1.0
  %v4172 = vrcp.pop %v4171
  %v4173 = vmul.f32 %v4171, %v4172
  %v4174 = vsub.f32 1.0, %v4173
  %v4175 = vmul.f32 %v4172, %v4174
  %v4176 = vadd.f32 %v4172, %v4175
  %vm4177 = vweird.f32 %v4171
  %vm4178 = vweird.f32 %v4172
  %vm4179 = vmor %vm4177, %vm4178
  %v4180 = vsel %vm4179, %v4172, %v4176
  %v4181 = vand.u32 2147483647, %v4171
  %vm4182 = vcmp.eq.f32.partialorder %v4181, 8.507059e+37
  %v4183 = vand.u32 %v4171, 2147483648
  %v4184 = vor.u32 1.1754944e-38, %v4183
  %v4185 = vsel %vm4182, %v4184, %v4180
  %v4186 = vmul.f32 1.0, %v4185
  %v4187 = vmul.f32 %v4166, %v3502
  %v4188 = vmul.f32 %v4147, %v4167
  %v4189 = vadd.f32 %v4187, %v4188
  %v4190 = vtanh.pop %v4189
  %v4191 = vmul.f32 %v4186, %v4190
  %v4192 = vpack.c.bf16 %v4191, %v4191
  %4193 = vst [vmem:[%s6 + $0x20] sm:$0xf] %v4192
  %v4194 = vld [vmem:[#allocation2 + $0x20] sm:$0xff]
  %v4195 = vld [vmem:[#allocation2 + $0x28] sm:$0xff]
  %v4196 = vld [vmem:[#allocation2 + $0x30] sm:$0xff]
  %v4197 = vld [vmem:[#allocation2 + $0x38] sm:$0xff]
  %v4198 = vld [vmem:[%s2] sm:$0xff]
  %v4199 = vld [vmem:[%s2 + $0x8] sm:$0xff]
  %v4200 = vld [vmem:[%s2 + $0x10] sm:$0xff]
  %v4201 = vld [vmem:[%s2 + $0x18] sm:$0xff]
  %v4202 = vld [vmem:[%s2 + $0x20] sm:$0xff]
  %v4203 = vld [vmem:[%s2 + $0x28] sm:$0xff]
  %v4204 = vld [vmem:[%s2 + $0x30] sm:$0xff]
  %v4205 = vld [vmem:[%s2 + $0x38] sm:$0xff]
  %v4206 = vld [vmem:[%s2 + $0x40] sm:$0xff]
  %v4207 = vld [vmem:[%s2 + $0x48] sm:$0xff]
  %v4208 = vld [vmem:[%s2 + $0x50] sm:$0xff]
  %v4209 = vld [vmem:[%s2 + $0x58] sm:$0xff]
  %v4210 = vld [vmem:[%s2 + $0x60] sm:$0xff]
  %v4211 = vld [vmem:[%s2 + $0x68] sm:$0xff]
  %v4212 = vld [vmem:[%s2 + $0x70] sm:$0xff]
  %v4213 = vld [vmem:[%s2 + $0x78] sm:$0xff]
  %v4214 = vld [vmem:[%s2 + $0x80] sm:$0xff]
  %v4215 = vld [vmem:[%s2 + $0x88] sm:$0xff]
  %v4216 = vld [vmem:[%s2 + $0x90] sm:$0xff]
  %v4217 = vld [vmem:[%s2 + $0x98] sm:$0xff]
  %v4218 = vld [vmem:[%s2 + $0xa0] sm:$0xff]
  %v4219 = vld [vmem:[%s2 + $0xa8] sm:$0xff]
  %v4220 = vld [vmem:[%s2 + $0xb0] sm:$0xff]
  %v4221 = vld [vmem:[%s2 + $0xb8] sm:$0xff]
  %v4222 = vld [vmem:[%s2 + $0xc0] sm:$0xff]
  %v4223 = vld [vmem:[%s2 + $0xc8] sm:$0xff]
  %v4224 = vld [vmem:[%s2 + $0xd0] sm:$0xff]
  %v4225 = vld [vmem:[%s2 + $0xd8] sm:$0xff]
  %v4226 = vld [vmem:[%s2 + $0xe0] sm:$0xff]
  %v4227 = vld [vmem:[%s2 + $0xe8] sm:$0xff]
  %v4228 = vld [vmem:[%s2 + $0xf0] sm:$0xff]
  %v4229 = vld [vmem:[%s2 + $0xf8] sm:$0xff]
  %v4262 = vunpack.c.l.b16 %v4198
  %v4263 = vunpack.c.h.b16 %v4198
  %v4264 = vunpack.c.l.b16 %v4199
  %v4265 = vunpack.c.h.b16 %v4199
  %v4266 = vunpack.c.l.b16 %v4200
  %v4267 = vunpack.c.h.b16 %v4200
  %v4268 = vunpack.c.l.b16 %v4201
  %v4269 = vunpack.c.h.b16 %v4201
  %v4270 = vunpack.c.l.b16 %v4202
  %v4271 = vunpack.c.h.b16 %v4202
  %v4272 = vunpack.c.l.b16 %v4203
  %v4273 = vunpack.c.h.b16 %v4203
  %v4274 = vunpack.c.l.b16 %v4204
  %v4275 = vunpack.c.h.b16 %v4204
  %v4276 = vunpack.c.l.b16 %v4205
  %v4277 = vunpack.c.h.b16 %v4205
  %v4278 = vunpack.c.l.b16 %v4206
  %v4279 = vunpack.c.h.b16 %v4206
  %v4280 = vunpack.c.l.b16 %v4207
  %v4281 = vunpack.c.h.b16 %v4207
  %v4282 = vunpack.c.l.b16 %v4208
  %v4283 = vunpack.c.h.b16 %v4208
  %v4284 = vunpack.c.l.b16 %v4209
  %v4285 = vunpack.c.h.b16 %v4209
  %v4286 = vunpack.c.l.b16 %v4210
  %v4287 = vunpack.c.h.b16 %v4210
  %v4288 = vunpack.c.l.b16 %v4211
  %v4289 = vunpack.c.h.b16 %v4211
  %v4290 = vunpack.c.l.b16 %v4212
  %v4291 = vunpack.c.h.b16 %v4212
  %v4292 = vunpack.c.l.b16 %v4213
  %v4293 = vunpack.c.h.b16 %v4213
  %v4294 = vunpack.c.l.b16 %v4214
  %v4295 = vunpack.c.h.b16 %v4214
  %v4296 = vunpack.c.l.b16 %v4215
  %v4297 = vunpack.c.h.b16 %v4215
  %v4298 = vunpack.c.l.b16 %v4216
  %v4299 = vunpack.c.h.b16 %v4216
  %v4300 = vunpack.c.l.b16 %v4217
  %v4301 = vunpack.c.h.b16 %v4217
  %v4302 = vunpack.c.l.b16 %v4218
  %v4303 = vunpack.c.h.b16 %v4218
  %v4304 = vunpack.c.l.b16 %v4219
  %v4305 = vunpack.c.h.b16 %v4219
  %v4306 = vunpack.c.l.b16 %v4220
  %v4307 = vunpack.c.h.b16 %v4220
  %v4308 = vunpack.c.l.b16 %v4221
  %v4309 = vunpack.c.h.b16 %v4221
  %v4310 = vunpack.c.l.b16 %v4222
  %v4311 = vunpack.c.h.b16 %v4222
  %v4312 = vunpack.c.l.b16 %v4223
  %v4313 = vunpack.c.h.b16 %v4223
  %v4314 = vunpack.c.l.b16 %v4224
  %v4315 = vunpack.c.h.b16 %v4224
  %v4316 = vunpack.c.l.b16 %v4225
  %v4317 = vunpack.c.h.b16 %v4225
  %v4318 = vunpack.c.l.b16 %v4226
  %v4319 = vunpack.c.h.b16 %v4226
  %v4320 = vunpack.c.l.b16 %v4227
  %v4321 = vunpack.c.h.b16 %v4227
  %v4322 = vunpack.c.l.b16 %v4228
  %v4323 = vunpack.c.h.b16 %v4228
  %v4324 = vunpack.c.l.b16 %v4229
  %v4325 = vunpack.c.h.b16 %v4229
  %v4326 = vpack.c.b16 %v4266, %v4262
  %v4327 = vpack.c.b16 %v4267, %v4263
  %v4328 = vpack.c.b16 %v4268, %v4264
  %v4329 = vpack.c.b16 %v4269, %v4265
  %v4330 = vpack.c.b16 %v4274, %v4270
  %v4331 = vpack.c.b16 %v4275, %v4271
  %v4332 = vpack.c.b16 %v4276, %v4272
  %v4333 = vpack.c.b16 %v4277, %v4273
  %v4334 = vpack.c.b16 %v4282, %v4278
  %v4335 = vpack.c.b16 %v4283, %v4279
  %v4336 = vpack.c.b16 %v4284, %v4280
  %v4337 = vpack.c.b16 %v4285, %v4281
  %v4338 = vpack.c.b16 %v4290, %v4286
  %v4339 = vpack.c.b16 %v4291, %v4287
  %v4340 = vpack.c.b16 %v4292, %v4288
  %v4341 = vpack.c.b16 %v4293, %v4289
  %v4342 = vpack.c.b16 %v4298, %v4294
  %v4343 = vpack.c.b16 %v4299, %v4295
  %v4344 = vpack.c.b16 %v4300, %v4296
  %v4345 = vpack.c.b16 %v4301, %v4297
  %v4346 = vpack.c.b16 %v4306, %v4302
  %v4347 = vpack.c.b16 %v4307, %v4303
  %v4348 = vpack.c.b16 %v4308, %v4304
  %v4349 = vpack.c.b16 %v4309, %v4305
  %v4350 = vpack.c.b16 %v4314, %v4310
  %v4351 = vpack.c.b16 %v4315, %v4311
  %v4352 = vpack.c.b16 %v4316, %v4312
  %v4353 = vpack.c.b16 %v4317, %v4313
  %v4354 = vpack.c.b16 %v4322, %v4318
  %v4355 = vpack.c.b16 %v4323, %v4319
  %v4356 = vpack.c.b16 %v4324, %v4320
  %v4357 = vpack.c.b16 %v4325, %v4321
  %4390 = vmatpush.bf16.msra.mxu0 %v4354
  %4391 = vmatpush.bf16.msra.mxu0 %v4350
  %4392 = vmatpush.bf16.msra.mxu0 %v4346
  %4393 = vmatpush.bf16.msra.mxu0 %v4342
  %4394 = vmatpush.bf16.msra.mxu0 %v4338
  %4395 = vmatpush.bf16.msra.mxu0 %v4334
  %4396 = vmatpush.bf16.msra.mxu0 %v4330
  %4397 = vmatpush.bf16.msra.mxu0 %v4326
  %4398 = vmatmul.bf16.gmra.mxu0 %v4192
  %v4399 = vpop.f32.mrf.mxu0
  %v4400 = vadd.f32 0.0, %v4399
  %v4401 = vpop.f32.mrf.mxu0
  %4402 = vdwg.mxu0
  %4403 = vmatpush.bf16.msra.mxu0 %v4355
  %4404 = vmatpush.bf16.msra.mxu0 %v4351
  %4405 = vmatpush.bf16.msra.mxu0 %v4347
  %4406 = vmatpush.bf16.msra.mxu0 %v4343
  %4407 = vmatpush.bf16.msra.mxu0 %v4339
  %4408 = vmatpush.bf16.msra.mxu0 %v4335
  %4409 = vmatpush.bf16.msra.mxu0 %v4331
  %4410 = vmatpush.bf16.msra.mxu0 %v4327
  %4411 = vmatmul.bf16.gmra.mxu0 %v4192
  %v4412 = vpop.f32.mrf.mxu0
  %v4413 = vadd.f32 0.0, %v4412
  %v4414 = vpop.f32.mrf.mxu0
  %4415 = vdwg.mxu0
  %4416 = vmatpush.bf16.msra.mxu0 %v4356
  %4417 = vmatpush.bf16.msra.mxu0 %v4352
  %4418 = vmatpush.bf16.msra.mxu0 %v4348
  %4419 = vmatpush.bf16.msra.mxu0 %v4344
  %4420 = vmatpush.bf16.msra.mxu0 %v4340
  %4421 = vmatpush.bf16.msra.mxu0 %v4336
  %4422 = vmatpush.bf16.msra.mxu0 %v4332
  %4423 = vmatpush.bf16.msra.mxu0 %v4328
  %4424 = vmatmul.bf16.gmra.mxu0 %v4192
  %v4425 = vpop.f32.mrf.mxu0
  %v4426 = vadd.f32 0.0, %v4425
  %v4427 = vpop.f32.mrf.mxu0
  %4428 = vdwg.mxu0
  %4429 = vmatpush.bf16.msra.mxu0 %v4357
  %4430 = vmatpush.bf16.msra.mxu0 %v4353
  %4431 = vmatpush.bf16.msra.mxu0 %v4349
  %4432 = vmatpush.bf16.msra.mxu0 %v4345
  %4433 = vmatpush.bf16.msra.mxu0 %v4341
  %4434 = vmatpush.bf16.msra.mxu0 %v4337
  %4435 = vmatpush.bf16.msra.mxu0 %v4333
  %4436 = vmatpush.bf16.msra.mxu0 %v4329
  %4437 = vmatmul.bf16.gmra.mxu0 %v4192
  %v4438 = vpop.f32.mrf.mxu0
  %v4439 = vadd.f32 0.0, %v4438
  %v4440 = vpop.f32.mrf.mxu0
  %4441 = vdwg.mxu0
  %v4442 = vadd.f32 %v4194, %v4400
  %v4443 = vadd.f32 %v4195, %v4413
  %v4444 = vadd.f32 %v4196, %v4426
  %v4445 = vadd.f32 %v4197, %v4439
  %v4446 = vxor.u32 %v4442, 2147483648
  %v4447 = vmul.f32 %v4446, 1.442695
  %v4448 = vpow.pop %v4447
  %v4449 = vadd.f32 %v4448, 1.0
  %v4450 = vrcp.pop %v4449
  %v4451 = vmul.f32 %v4449, %v4450
  %v4452 = vsub.f32 1.0, %v4451
  %v4453 = vmul.f32 %v4450, %v4452
  %v4454 = vadd.f32 %v4450, %v4453
  %vm4455 = vweird.f32 %v4449
  %vm4456 = vweird.f32 %v4450
  %vm4457 = vmor %vm4455, %vm4456
  %v4458 = vsel %vm4457, %v4450, %v4454
  %v4459 = vand.u32 2147483647, %v4449
  %vm4460 = vcmp.eq.f32.partialorder %v4459, 8.507059e+37
  %v4461 = vand.u32 %v4449, 2147483648
  %v4462 = vor.u32 1.1754944e-38, %v4461
  %v4463 = vsel %vm4460, %v4462, %v4458
  %v4464 = vmul.f32 1.0, %v4463
  %v4465 = vxor.u32 %v4443, 2147483648
  %v4466 = vmul.f32 %v4465, 1.442695
  %v4467 = vpow.pop %v4466
  %v4468 = vadd.f32 %v4467, 1.0
  %v4469 = vrcp.pop %v4468
  %v4470 = vmul.f32 %v4468, %v4469
  %v4471 = vsub.f32 1.0, %v4470
  %v4472 = vmul.f32 %v4469, %v4471
  %v4473 = vadd.f32 %v4469, %v4472
  %vm4474 = vweird.f32 %v4468
  %vm4475 = vweird.f32 %v4469
  %vm4476 = vmor %vm4474, %vm4475
  %v4477 = vsel %vm4476, %v4469, %v4473
  %v4478 = vand.u32 2147483647, %v4468
  %vm4479 = vcmp.eq.f32.partialorder %v4478, 8.507059e+37
  %v4480 = vand.u32 %v4468, 2147483648
  %v4481 = vor.u32 1.1754944e-38, %v4480
  %v4482 = vsel %vm4479, %v4481, %v4477
  %v4483 = vmul.f32 1.0, %v4482
  %v4484 = vtanh.pop %v4444
  %v4485 = vxor.u32 %v4445, 2147483648
  %v4486 = vmul.f32 %v4485, 1.442695
  %v4487 = vpow.pop %v4486
  %v4488 = vadd.f32 %v4487, 1.0
  %v4489 = vrcp.pop %v4488
  %v4490 = vmul.f32 %v4488, %v4489
  %v4491 = vsub.f32 1.0, %v4490
  %v4492 = vmul.f32 %v4489, %v4491
  %v4493 = vadd.f32 %v4489, %v4492
  %vm4494 = vweird.f32 %v4488
  %vm4495 = vweird.f32 %v4489
  %vm4496 = vmor %vm4494, %vm4495
  %v4497 = vsel %vm4496, %v4489, %v4493
  %v4498 = vand.u32 2147483647, %v4488
  %vm4499 = vcmp.eq.f32.partialorder %v4498, 8.507059e+37
  %v4500 = vand.u32 %v4488, 2147483648
  %v4501 = vor.u32 1.1754944e-38, %v4500
  %v4502 = vsel %vm4499, %v4501, %v4497
  %v4503 = vmul.f32 1.0, %v4502
  %v4504 = vmul.f32 %v4483, %v4189
  %v4505 = vmul.f32 %v4464, %v4484
  %v4506 = vadd.f32 %v4504, %v4505
  %v4507 = vtanh.pop %v4506
  %v4508 = vmul.f32 %v4503, %v4507
  %v4509 = vpack.c.bf16 %v4508, %v4508
  %4510 = vst [vmem:[%s6 + $0x24] sm:$0xf] %v4509
  %v4511 = vld [vmem:[#allocation2 + $0x40] sm:$0xff]
  %v4512 = vld [vmem:[#allocation2 + $0x48] sm:$0xff]
  %v4513 = vld [vmem:[#allocation2 + $0x50] sm:$0xff]
  %v4514 = vld [vmem:[#allocation2 + $0x58] sm:$0xff]
  %v4515 = vld [vmem:[%s2] sm:$0xff]
  %v4516 = vld [vmem:[%s2 + $0x8] sm:$0xff]
  %v4517 = vld [vmem:[%s2 + $0x10] sm:$0xff]
  %v4518 = vld [vmem:[%s2 + $0x18] sm:$0xff]
  %v4519 = vld [vmem:[%s2 + $0x20] sm:$0xff]
  %v4520 = vld [vmem:[%s2 + $0x28] sm:$0xff]
  %v4521 = vld [vmem:[%s2 + $0x30] sm:$0xff]
  %v4522 = vld [vmem:[%s2 + $0x38] sm:$0xff]
  %v4523 = vld [vmem:[%s2 + $0x40] sm:$0xff]
  %v4524 = vld [vmem:[%s2 + $0x48] sm:$0xff]
  %v4525 = vld [vmem:[%s2 + $0x50] sm:$0xff]
  %v4526 = vld [vmem:[%s2 + $0x58] sm:$0xff]
  %v4527 = vld [vmem:[%s2 + $0x60] sm:$0xff]
  %v4528 = vld [vmem:[%s2 + $0x68] sm:$0xff]
  %v4529 = vld [vmem:[%s2 + $0x70] sm:$0xff]
  %v4530 = vld [vmem:[%s2 + $0x78] sm:$0xff]
  %v4531 = vld [vmem:[%s2 + $0x80] sm:$0xff]
  %v4532 = vld [vmem:[%s2 + $0x88] sm:$0xff]
  %v4533 = vld [vmem:[%s2 + $0x90] sm:$0xff]
  %v4534 = vld [vmem:[%s2 + $0x98] sm:$0xff]
  %v4535 = vld [vmem:[%s2 + $0xa0] sm:$0xff]
  %v4536 = vld [vmem:[%s2 + $0xa8] sm:$0xff]
  %v4537 = vld [vmem:[%s2 + $0xb0] sm:$0xff]
  %v4538 = vld [vmem:[%s2 + $0xb8] sm:$0xff]
  %v4539 = vld [vmem:[%s2 + $0xc0] sm:$0xff]
  %v4540 = vld [vmem:[%s2 + $0xc8] sm:$0xff]
  %v4541 = vld [vmem:[%s2 + $0xd0] sm:$0xff]
  %v4542 = vld [vmem:[%s2 + $0xd8] sm:$0xff]
  %v4543 = vld [vmem:[%s2 + $0xe0] sm:$0xff]
  %v4544 = vld [vmem:[%s2 + $0xe8] sm:$0xff]
  %v4545 = vld [vmem:[%s2 + $0xf0] sm:$0xff]
  %v4546 = vld [vmem:[%s2 + $0xf8] sm:$0xff]
  %v4579 = vunpack.c.l.b16 %v4515
  %v4580 = vunpack.c.h.b16 %v4515
  %v4581 = vunpack.c.l.b16 %v4516
  %v4582 = vunpack.c.h.b16 %v4516
  %v4583 = vunpack.c.l.b16 %v4517
  %v4584 = vunpack.c.h.b16 %v4517
  %v4585 = vunpack.c.l.b16 %v4518
  %v4586 = vunpack.c.h.b16 %v4518
  %v4587 = vunpack.c.l.b16 %v4519
  %v4588 = vunpack.c.h.b16 %v4519
  %v4589 = vunpack.c.l.b16 %v4520
  %v4590 = vunpack.c.h.b16 %v4520
  %v4591 = vunpack.c.l.b16 %v4521
  %v4592 = vunpack.c.h.b16 %v4521
  %v4593 = vunpack.c.l.b16 %v4522
  %v4594 = vunpack.c.h.b16 %v4522
  %v4595 = vunpack.c.l.b16 %v4523
  %v4596 = vunpack.c.h.b16 %v4523
  %v4597 = vunpack.c.l.b16 %v4524
  %v4598 = vunpack.c.h.b16 %v4524
  %v4599 = vunpack.c.l.b16 %v4525
  %v4600 = vunpack.c.h.b16 %v4525
  %v4601 = vunpack.c.l.b16 %v4526
  %v4602 = vunpack.c.h.b16 %v4526
  %v4603 = vunpack.c.l.b16 %v4527
  %v4604 = vunpack.c.h.b16 %v4527
  %v4605 = vunpack.c.l.b16 %v4528
  %v4606 = vunpack.c.h.b16 %v4528
  %v4607 = vunpack.c.l.b16 %v4529
  %v4608 = vunpack.c.h.b16 %v4529
  %v4609 = vunpack.c.l.b16 %v4530
  %v4610 = vunpack.c.h.b16 %v4530
  %v4611 = vunpack.c.l.b16 %v4531
  %v4612 = vunpack.c.h.b16 %v4531
  %v4613 = vunpack.c.l.b16 %v4532
  %v4614 = vunpack.c.h.b16 %v4532
  %v4615 = vunpack.c.l.b16 %v4533
  %v4616 = vunpack.c.h.b16 %v4533
  %v4617 = vunpack.c.l.b16 %v4534
  %v4618 = vunpack.c.h.b16 %v4534
  %v4619 = vunpack.c.l.b16 %v4535
  %v4620 = vunpack.c.h.b16 %v4535
  %v4621 = vunpack.c.l.b16 %v4536
  %v4622 = vunpack.c.h.b16 %v4536
  %v4623 = vunpack.c.l.b16 %v4537
  %v4624 = vunpack.c.h.b16 %v4537
  %v4625 = vunpack.c.l.b16 %v4538
  %v4626 = vunpack.c.h.b16 %v4538
  %v4627 = vunpack.c.l.b16 %v4539
  %v4628 = vunpack.c.h.b16 %v4539
  %v4629 = vunpack.c.l.b16 %v4540
  %v4630 = vunpack.c.h.b16 %v4540
  %v4631 = vunpack.c.l.b16 %v4541
  %v4632 = vunpack.c.h.b16 %v4541
  %v4633 = vunpack.c.l.b16 %v4542
  %v4634 = vunpack.c.h.b16 %v4542
  %v4635 = vunpack.c.l.b16 %v4543
  %v4636 = vunpack.c.h.b16 %v4543
  %v4637 = vunpack.c.l.b16 %v4544
  %v4638 = vunpack.c.h.b16 %v4544
  %v4639 = vunpack.c.l.b16 %v4545
  %v4640 = vunpack.c.h.b16 %v4545
  %v4641 = vunpack.c.l.b16 %v4546
  %v4642 = vunpack.c.h.b16 %v4546
  %v4643 = vpack.c.b16 %v4583, %v4579
  %v4644 = vpack.c.b16 %v4584, %v4580
  %v4645 = vpack.c.b16 %v4585, %v4581
  %v4646 = vpack.c.b16 %v4586, %v4582
  %v4647 = vpack.c.b16 %v4591, %v4587
  %v4648 = vpack.c.b16 %v4592, %v4588
  %v4649 = vpack.c.b16 %v4593, %v4589
  %v4650 = vpack.c.b16 %v4594, %v4590
  %v4651 = vpack.c.b16 %v4599, %v4595
  %v4652 = vpack.c.b16 %v4600, %v4596
  %v4653 = vpack.c.b16 %v4601, %v4597
  %v4654 = vpack.c.b16 %v4602, %v4598
  %v4655 = vpack.c.b16 %v4607, %v4603
  %v4656 = vpack.c.b16 %v4608, %v4604
  %v4657 = vpack.c.b16 %v4609, %v4605
  %v4658 = vpack.c.b16 %v4610, %v4606
  %v4659 = vpack.c.b16 %v4615, %v4611
  %v4660 = vpack.c.b16 %v4616, %v4612
  %v4661 = vpack.c.b16 %v4617, %v4613
  %v4662 = vpack.c.b16 %v4618, %v4614
  %v4663 = vpack.c.b16 %v4623, %v4619
  %v4664 = vpack.c.b16 %v4624, %v4620
  %v4665 = vpack.c.b16 %v4625, %v4621
  %v4666 = vpack.c.b16 %v4626, %v4622
  %v4667 = vpack.c.b16 %v4631, %v4627
  %v4668 = vpack.c.b16 %v4632, %v4628
  %v4669 = vpack.c.b16 %v4633, %v4629
  %v4670 = vpack.c.b16 %v4634, %v4630
  %v4671 = vpack.c.b16 %v4639, %v4635
  %v4672 = vpack.c.b16 %v4640, %v4636
  %v4673 = vpack.c.b16 %v4641, %v4637
  %v4674 = vpack.c.b16 %v4642, %v4638
  %4707 = vmatpush.bf16.msra.mxu0 %v4671
  %4708 = vmatpush.bf16.msra.mxu0 %v4667
  %4709 = vmatpush.bf16.msra.mxu0 %v4663
  %4710 = vmatpush.bf16.msra.mxu0 %v4659
  %4711 = vmatpush.bf16.msra.mxu0 %v4655
  %4712 = vmatpush.bf16.msra.mxu0 %v4651
  %4713 = vmatpush.bf16.msra.mxu0 %v4647
  %4714 = vmatpush.bf16.msra.mxu0 %v4643
  %4715 = vmatmul.bf16.gmra.mxu0 %v4509
  %v4716 = vpop.f32.mrf.mxu0
  %v4717 = vadd.f32 0.0, %v4716
  %v4718 = vpop.f32.mrf.mxu0
  %4719 = vdwg.mxu0
  %4720 = vmatpush.bf16.msra.mxu0 %v4672
  %4721 = vmatpush.bf16.msra.mxu0 %v4668
  %4722 = vmatpush.bf16.msra.mxu0 %v4664
  %4723 = vmatpush.bf16.msra.mxu0 %v4660
  %4724 = vmatpush.bf16.msra.mxu0 %v4656
  %4725 = vmatpush.bf16.msra.mxu0 %v4652
  %4726 = vmatpush.bf16.msra.mxu0 %v4648
  %4727 = vmatpush.bf16.msra.mxu0 %v4644
  %4728 = vmatmul.bf16.gmra.mxu0 %v4509
  %v4729 = vpop.f32.mrf.mxu0
  %v4730 = vadd.f32 0.0, %v4729
  %v4731 = vpop.f32.mrf.mxu0
  %4732 = vdwg.mxu0
  %4733 = vmatpush.bf16.msra.mxu0 %v4673
  %4734 = vmatpush.bf16.msra.mxu0 %v4669
  %4735 = vmatpush.bf16.msra.mxu0 %v4665
  %4736 = vmatpush.bf16.msra.mxu0 %v4661
  %4737 = vmatpush.bf16.msra.mxu0 %v4657
  %4738 = vmatpush.bf16.msra.mxu0 %v4653
  %4739 = vmatpush.bf16.msra.mxu0 %v4649
  %4740 = vmatpush.bf16.msra.mxu0 %v4645
  %4741 = vmatmul.bf16.gmra.mxu0 %v4509
  %v4742 = vpop.f32.mrf.mxu0
  %v4743 = vadd.f32 0.0, %v4742
  %v4744 = vpop.f32.mrf.mxu0
  %4745 = vdwg.mxu0
  %4746 = vmatpush.bf16.msra.mxu0 %v4674
  %4747 = vmatpush.bf16.msra.mxu0 %v4670
  %4748 = vmatpush.bf16.msra.mxu0 %v4666
  %4749 = vmatpush.bf16.msra.mxu0 %v4662
  %4750 = vmatpush.bf16.msra.mxu0 %v4658
  %4751 = vmatpush.bf16.msra.mxu0 %v4654
  %4752 = vmatpush.bf16.msra.mxu0 %v4650
  %4753 = vmatpush.bf16.msra.mxu0 %v4646
  %4754 = vmatmul.bf16.gmra.mxu0 %v4509
  %v4755 = vpop.f32.mrf.mxu0
  %v4756 = vadd.f32 0.0, %v4755
  %v4757 = vpop.f32.mrf.mxu0
  %4758 = vdwg.mxu0
  %v4759 = vadd.f32 %v4511, %v4717
  %v4760 = vadd.f32 %v4512, %v4730
  %v4761 = vadd.f32 %v4513, %v4743
  %v4762 = vadd.f32 %v4514, %v4756
  %v4763 = vxor.u32 %v4759, 2147483648
  %v4764 = vmul.f32 %v4763, 1.442695
  %v4765 = vpow.pop %v4764
  %v4766 = vadd.f32 %v4765, 1.0
  %v4767 = vrcp.pop %v4766
  %v4768 = vmul.f32 %v4766, %v4767
  %v4769 = vsub.f32 1.0, %v4768
  %v4770 = vmul.f32 %v4767, %v4769
  %v4771 = vadd.f32 %v4767, %v4770
  %vm4772 = vweird.f32 %v4766
  %vm4773 = vweird.f32 %v4767
  %vm4774 = vmor %vm4772, %vm4773
  %v4775 = vsel %vm4774, %v4767, %v4771
  %v4776 = vand.u32 2147483647, %v4766
  %vm4777 = vcmp.eq.f32.partialorder %v4776, 8.507059e+37
  %v4778 = vand.u32 %v4766, 2147483648
  %v4779 = vor.u32 1.1754944e-38, %v4778
  %v4780 = vsel %vm4777, %v4779, %v4775
  %v4781 = vmul.f32 1.0, %v4780
  %v4782 = vxor.u32 %v4760, 2147483648
  %v4783 = vmul.f32 %v4782, 1.442695
  %v4784 = vpow.pop %v4783
  %v4785 = vadd.f32 %v4784, 1.0
  %v4786 = vrcp.pop %v4785
  %v4787 = vmul.f32 %v4785, %v4786
  %v4788 = vsub.f32 1.0, %v4787
  %v4789 = vmul.f32 %v4786, %v4788
  %v4790 = vadd.f32 %v4786, %v4789
  %vm4791 = vweird.f32 %v4785
  %vm4792 = vweird.f32 %v4786
  %vm4793 = vmor %vm4791, %vm4792
  %v4794 = vsel %vm4793, %v4786, %v4790
  %v4795 = vand.u32 2147483647, %v4785
  %vm4796 = vcmp.eq.f32.partialorder %v4795, 8.507059e+37
  %v4797 = vand.u32 %v4785, 2147483648
  %v4798 = vor.u32 1.1754944e-38, %v4797
  %v4799 = vsel %vm4796, %v4798, %v4794
  %v4800 = vmul.f32 1.0, %v4799
  %v4801 = vtanh.pop %v4761
  %v4802 = vxor.u32 %v4762, 2147483648
  %v4803 = vmul.f32 %v4802, 1.442695
  %v4804 = vpow.pop %v4803
  %v4805 = vadd.f32 %v4804, 1.0
  %v4806 = vrcp.pop %v4805
  %v4807 = vmul.f32 %v4805, %v4806
  %v4808 = vsub.f32 1.0, %v4807
  %v4809 = vmul.f32 %v4806, %v4808
  %v4810 = vadd.f32 %v4806, %v4809
  %vm4811 = vweird.f32 %v4805
  %vm4812 = vweird.f32 %v4806
  %vm4813 = vmor %vm4811, %vm4812
  %v4814 = vsel %vm4813, %v4806, %v4810
  %v4815 = vand.u32 2147483647, %v4805
  %vm4816 = vcmp.eq.f32.partialorder %v4815, 8.507059e+37
  %v4817 = vand.u32 %v4805, 2147483648
  %v4818 = vor.u32 1.1754944e-38, %v4817
  %v4819 = vsel %vm4816, %v4818, %v4814
  %v4820 = vmul.f32 1.0, %v4819
  %v4821 = vmul.f32 %v4800, %v4506
  %v4822 = vmul.f32 %v4781, %v4801
  %v4823 = vadd.f32 %v4821, %v4822
  %v4824 = vtanh.pop %v4823
  %v4825 = vmul.f32 %v4820, %v4824
  %v4826 = vpack.c.bf16 %v4825, %v4825
  %4827 = vst [vmem:[%s6 + $0x28] sm:$0xf] %v4826
  %v4828 = vld [vmem:[#allocation2 + $0x60] sm:$0xff]
  %v4829 = vld [vmem:[#allocation2 + $0x68] sm:$0xff]
  %v4830 = vld [vmem:[#allocation2 + $0x70] sm:$0xff]
  %v4831 = vld [vmem:[#allocation2 + $0x78] sm:$0xff]
  %v4832 = vld [vmem:[%s2] sm:$0xff]
  %v4833 = vld [vmem:[%s2 + $0x8] sm:$0xff]
  %v4834 = vld [vmem:[%s2 + $0x10] sm:$0xff]
  %v4835 = vld [vmem:[%s2 + $0x18] sm:$0xff]
  %v4836 = vld [vmem:[%s2 + $0x20] sm:$0xff]
  %v4837 = vld [vmem:[%s2 + $0x28] sm:$0xff]
  %v4838 = vld [vmem:[%s2 + $0x30] sm:$0xff]
  %v4839 = vld [vmem:[%s2 + $0x38] sm:$0xff]
  %v4840 = vld [vmem:[%s2 + $0x40] sm:$0xff]
  %v4841 = vld [vmem:[%s2 + $0x48] sm:$0xff]
  %v4842 = vld [vmem:[%s2 + $0x50] sm:$0xff]
  %v4843 = vld [vmem:[%s2 + $0x58] sm:$0xff]
  %v4844 = vld [vmem:[%s2 + $0x60] sm:$0xff]
  %v4845 = vld [vmem:[%s2 + $0x68] sm:$0xff]
  %v4846 = vld [vmem:[%s2 + $0x70] sm:$0xff]
  %v4847 = vld [vmem:[%s2 + $0x78] sm:$0xff]
  %v4848 = vld [vmem:[%s2 + $0x80] sm:$0xff]
  %v4849 = vld [vmem:[%s2 + $0x88] sm:$0xff]
  %v4850 = vld [vmem:[%s2 + $0x90] sm:$0xff]
  %v4851 = vld [vmem:[%s2 + $0x98] sm:$0xff]
  %v4852 = vld [vmem:[%s2 + $0xa0] sm:$0xff]
  %v4853 = vld [vmem:[%s2 + $0xa8] sm:$0xff]
  %v4854 = vld [vmem:[%s2 + $0xb0] sm:$0xff]
  %v4855 = vld [vmem:[%s2 + $0xb8] sm:$0xff]
  %v4856 = vld [vmem:[%s2 + $0xc0] sm:$0xff]
  %v4857 = vld [vmem:[%s2 + $0xc8] sm:$0xff]
  %v4858 = vld [vmem:[%s2 + $0xd0] sm:$0xff]
  %v4859 = vld [vmem:[%s2 + $0xd8] sm:$0xff]
  %v4860 = vld [vmem:[%s2 + $0xe0] sm:$0xff]
  %v4861 = vld [vmem:[%s2 + $0xe8] sm:$0xff]
  %v4862 = vld [vmem:[%s2 + $0xf0] sm:$0xff]
  %v4863 = vld [vmem:[%s2 + $0xf8] sm:$0xff]
  %v4896 = vunpack.c.l.b16 %v4832
  %v4897 = vunpack.c.h.b16 %v4832
  %v4898 = vunpack.c.l.b16 %v4833
  %v4899 = vunpack.c.h.b16 %v4833
  %v4900 = vunpack.c.l.b16 %v4834
  %v4901 = vunpack.c.h.b16 %v4834
  %v4902 = vunpack.c.l.b16 %v4835
  %v4903 = vunpack.c.h.b16 %v4835
  %v4904 = vunpack.c.l.b16 %v4836
  %v4905 = vunpack.c.h.b16 %v4836
  %v4906 = vunpack.c.l.b16 %v4837
  %v4907 = vunpack.c.h.b16 %v4837
  %v4908 = vunpack.c.l.b16 %v4838
  %v4909 = vunpack.c.h.b16 %v4838
  %v4910 = vunpack.c.l.b16 %v4839
  %v4911 = vunpack.c.h.b16 %v4839
  %v4912 = vunpack.c.l.b16 %v4840
  %v4913 = vunpack.c.h.b16 %v4840
  %v4914 = vunpack.c.l.b16 %v4841
  %v4915 = vunpack.c.h.b16 %v4841
  %v4916 = vunpack.c.l.b16 %v4842
  %v4917 = vunpack.c.h.b16 %v4842
  %v4918 = vunpack.c.l.b16 %v4843
  %v4919 = vunpack.c.h.b16 %v4843
  %v4920 = vunpack.c.l.b16 %v4844
  %v4921 = vunpack.c.h.b16 %v4844
  %v4922 = vunpack.c.l.b16 %v4845
  %v4923 = vunpack.c.h.b16 %v4845
  %v4924 = vunpack.c.l.b16 %v4846
  %v4925 = vunpack.c.h.b16 %v4846
  %v4926 = vunpack.c.l.b16 %v4847
  %v4927 = vunpack.c.h.b16 %v4847
  %v4928 = vunpack.c.l.b16 %v4848
  %v4929 = vunpack.c.h.b16 %v4848
  %v4930 = vunpack.c.l.b16 %v4849
  %v4931 = vunpack.c.h.b16 %v4849
  %v4932 = vunpack.c.l.b16 %v4850
  %v4933 = vunpack.c.h.b16 %v4850
  %v4934 = vunpack.c.l.b16 %v4851
  %v4935 = vunpack.c.h.b16 %v4851
  %v4936 = vunpack.c.l.b16 %v4852
  %v4937 = vunpack.c.h.b16 %v4852
  %v4938 = vunpack.c.l.b16 %v4853
  %v4939 = vunpack.c.h.b16 %v4853
  %v4940 = vunpack.c.l.b16 %v4854
  %v4941 = vunpack.c.h.b16 %v4854
  %v4942 = vunpack.c.l.b16 %v4855
  %v4943 = vunpack.c.h.b16 %v4855
  %v4944 = vunpack.c.l.b16 %v4856
  %v4945 = vunpack.c.h.b16 %v4856
  %v4946 = vunpack.c.l.b16 %v4857
  %v4947 = vunpack.c.h.b16 %v4857
  %v4948 = vunpack.c.l.b16 %v4858
  %v4949 = vunpack.c.h.b16 %v4858
  %v4950 = vunpack.c.l.b16 %v4859
  %v4951 = vunpack.c.h.b16 %v4859
  %v4952 = vunpack.c.l.b16 %v4860
  %v4953 = vunpack.c.h.b16 %v4860
  %v4954 = vunpack.c.l.b16 %v4861
  %v4955 = vunpack.c.h.b16 %v4861
  %v4956 = vunpack.c.l.b16 %v4862
  %v4957 = vunpack.c.h.b16 %v4862
  %v4958 = vunpack.c.l.b16 %v4863
  %v4959 = vunpack.c.h.b16 %v4863
  %v4960 = vpack.c.b16 %v4900, %v4896
  %v4961 = vpack.c.b16 %v4901, %v4897
  %v4962 = vpack.c.b16 %v4902, %v4898
  %v4963 = vpack.c.b16 %v4903, %v4899
  %v4964 = vpack.c.b16 %v4908, %v4904
  %v4965 = vpack.c.b16 %v4909, %v4905
  %v4966 = vpack.c.b16 %v4910, %v4906
  %v4967 = vpack.c.b16 %v4911, %v4907
  %v4968 = vpack.c.b16 %v4916, %v4912
  %v4969 = vpack.c.b16 %v4917, %v4913
  %v4970 = vpack.c.b16 %v4918, %v4914
  %v4971 = vpack.c.b16 %v4919, %v4915
  %v4972 = vpack.c.b16 %v4924, %v4920
  %v4973 = vpack.c.b16 %v4925, %v4921
  %v4974 = vpack.c.b16 %v4926, %v4922
  %v4975 = vpack.c.b16 %v4927, %v4923
  %v4976 = vpack.c.b16 %v4932, %v4928
  %v4977 = vpack.c.b16 %v4933, %v4929
  %v4978 = vpack.c.b16 %v4934, %v4930
  %v4979 = vpack.c.b16 %v4935, %v4931
  %v4980 = vpack.c.b16 %v4940, %v4936
  %v4981 = vpack.c.b16 %v4941, %v4937
  %v4982 = vpack.c.b16 %v4942, %v4938
  %v4983 = vpack.c.b16 %v4943, %v4939
  %v4984 = vpack.c.b16 %v4948, %v4944
  %v4985 = vpack.c.b16 %v4949, %v4945
  %v4986 = vpack.c.b16 %v4950, %v4946
  %v4987 = vpack.c.b16 %v4951, %v4947
  %v4988 = vpack.c.b16 %v4956, %v4952
  %v4989 = vpack.c.b16 %v4957, %v4953
  %v4990 = vpack.c.b16 %v4958, %v4954
  %v4991 = vpack.c.b16 %v4959, %v4955
  %5024 = vmatpush.bf16.msra.mxu0 %v4988
  %5025 = vmatpush.bf16.msra.mxu0 %v4984
  %5026 = vmatpush.bf16.msra.mxu0 %v4980
  %5027 = vmatpush.bf16.msra.mxu0 %v4976
  %5028 = vmatpush.bf16.msra.mxu0 %v4972
  %5029 = vmatpush.bf16.msra.mxu0 %v4968
  %5030 = vmatpush.bf16.msra.mxu0 %v4964
  %5031 = vmatpush.bf16.msra.mxu0 %v4960
  %5032 = vmatmul.bf16.gmra.mxu0 %v4826
  %v5033 = vpop.f32.mrf.mxu0
  %v5034 = vadd.f32 0.0, %v5033
  %v5035 = vpop.f32.mrf.mxu0
  %5036 = vdwg.mxu0
  %5037 = vmatpush.bf16.msra.mxu0 %v4989
  %5038 = vmatpush.bf16.msra.mxu0 %v4985
  %5039 = vmatpush.bf16.msra.mxu0 %v4981
  %5040 = vmatpush.bf16.msra.mxu0 %v4977
  %5041 = vmatpush.bf16.msra.mxu0 %v4973
  %5042 = vmatpush.bf16.msra.mxu0 %v4969
  %5043 = vmatpush.bf16.msra.mxu0 %v4965
  %5044 = vmatpush.bf16.msra.mxu0 %v4961
  %5045 = vmatmul.bf16.gmra.mxu0 %v4826
  %v5046 = vpop.f32.mrf.mxu0
  %v5047 = vadd.f32 0.0, %v5046
  %v5048 = vpop.f32.mrf.mxu0
  %5049 = vdwg.mxu0
  %5050 = vmatpush.bf16.msra.mxu0 %v4990
  %5051 = vmatpush.bf16.msra.mxu0 %v4986
  %5052 = vmatpush.bf16.msra.mxu0 %v4982
  %5053 = vmatpush.bf16.msra.mxu0 %v4978
  %5054 = vmatpush.bf16.msra.mxu0 %v4974
  %5055 = vmatpush.bf16.msra.mxu0 %v4970
  %5056 = vmatpush.bf16.msra.mxu0 %v4966
  %5057 = vmatpush.bf16.msra.mxu0 %v4962
  %5058 = vmatmul.bf16.gmra.mxu0 %v4826
  %v5059 = vpop.f32.mrf.mxu0
  %v5060 = vadd.f32 0.0, %v5059
  %v5061 = vpop.f32.mrf.mxu0
  %5062 = vdwg.mxu0
  %5063 = vmatpush.bf16.msra.mxu0 %v4991
  %5064 = vmatpush.bf16.msra.mxu0 %v4987
  %5065 = vmatpush.bf16.msra.mxu0 %v4983
  %5066 = vmatpush.bf16.msra.mxu0 %v4979
  %5067 = vmatpush.bf16.msra.mxu0 %v4975
  %5068 = vmatpush.bf16.msra.mxu0 %v4971
  %5069 = vmatpush.bf16.msra.mxu0 %v4967
  %5070 = vmatpush.bf16.msra.mxu0 %v4963
  %5071 = vmatmul.bf16.gmra.mxu0 %v4826
  %v5072 = vpop.f32.mrf.mxu0
  %v5073 = vadd.f32 0.0, %v5072
  %v5074 = vpop.f32.mrf.mxu0
  %5075 = vdwg.mxu0
  %v5076 = vadd.f32 %v4828, %v5034
  %v5077 = vadd.f32 %v4829, %v5047
  %v5078 = vadd.f32 %v4830, %v5060
  %v5079 = vadd.f32 %v4831, %v5073
  %v5080 = vxor.u32 %v5076, 2147483648
  %v5081 = vmul.f32 %v5080, 1.442695
  %v5082 = vpow.pop %v5081
  %v5083 = vadd.f32 %v5082, 1.0
  %v5084 = vrcp.pop %v5083
  %v5085 = vmul.f32 %v5083, %v5084
  %v5086 = vsub.f32 1.0, %v5085
  %v5087 = vmul.f32 %v5084, %v5086
  %v5088 = vadd.f32 %v5084, %v5087
  %vm5089 = vweird.f32 %v5083
  %vm5090 = vweird.f32 %v5084
  %vm5091 = vmor %vm5089, %vm5090
  %v5092 = vsel %vm5091, %v5084, %v5088
  %v5093 = vand.u32 2147483647, %v5083
  %vm5094 = vcmp.eq.f32.partialorder %v5093, 8.507059e+37
  %v5095 = vand.u32 %v5083, 2147483648
  %v5096 = vor.u32 1.1754944e-38, %v5095
  %v5097 = vsel %vm5094, %v5096, %v5092
  %v5098 = vmul.f32 1.0, %v5097
  %v5099 = vxor.u32 %v5077, 2147483648
  %v5100 = vmul.f32 %v5099, 1.442695
  %v5101 = vpow.pop %v5100
  %v5102 = vadd.f32 %v5101, 1.0
  %v5103 = vrcp.pop %v5102
  %v5104 = vmul.f32 %v5102, %v5103
  %v5105 = vsub.f32 1.0, %v5104
  %v5106 = vmul.f32 %v5103, %v5105
  %v5107 = vadd.f32 %v5103, %v5106
  %vm5108 = vweird.f32 %v5102
  %vm5109 = vweird.f32 %v5103
  %vm5110 = vmor %vm5108, %vm5109
  %v5111 = vsel %vm5110, %v5103, %v5107
  %v5112 = vand.u32 2147483647, %v5102
  %vm5113 = vcmp.eq.f32.partialorder %v5112, 8.507059e+37
  %v5114 = vand.u32 %v5102, 2147483648
  %v5115 = vor.u32 1.1754944e-38, %v5114
  %v5116 = vsel %vm5113, %v5115, %v5111
  %v5117 = vmul.f32 1.0, %v5116
  %v5118 = vtanh.pop %v5078
  %v5119 = vxor.u32 %v5079, 2147483648
  %v5120 = vmul.f32 %v5119, 1.442695
  %v5121 = vpow.pop %v5120
  %v5122 = vadd.f32 %v5121, 1.0
  %v5123 = vrcp.pop %v5122
  %v5124 = vmul.f32 %v5122, %v5123
  %v5125 = vsub.f32 1.0, %v5124
  %v5126 = vmul.f32 %v5123, %v5125
  %v5127 = vadd.f32 %v5123, %v5126
  %vm5128 = vweird.f32 %v5122
  %vm5129 = vweird.f32 %v5123
  %vm5130 = vmor %vm5128, %vm5129
  %v5131 = vsel %vm5130, %v5123, %v5127
  %v5132 = vand.u32 2147483647, %v5122
  %vm5133 = vcmp.eq.f32.partialorder %v5132, 8.507059e+37
  %v5134 = vand.u32 %v5122, 2147483648
  %v5135 = vor.u32 1.1754944e-38, %v5134
  %v5136 = vsel %vm5133, %v5135, %v5131
  %v5137 = vmul.f32 1.0, %v5136
  %v5138 = vmul.f32 %v5117, %v4823
  %v5139 = vmul.f32 %v5098, %v5118
  %v5140 = vadd.f32 %v5138, %v5139
  %v5141 = vtanh.pop %v5140
  %v5142 = vmul.f32 %v5137, %v5141
  %v5143 = vpack.c.bf16 %v5142, %v5142
  %5144 = vst [vmem:[%s6 + $0x2c] sm:$0xf] %v5143
  %v5145 = vld [vmem:[#allocation2 + $0x80] sm:$0xff]
  %v5146 = vld [vmem:[#allocation2 + $0x88] sm:$0xff]
  %v5147 = vld [vmem:[#allocation2 + $0x90] sm:$0xff]
  %v5148 = vld [vmem:[#allocation2 + $0x98] sm:$0xff]
  %v5149 = vld [vmem:[%s2] sm:$0xff]
  %v5150 = vld [vmem:[%s2 + $0x8] sm:$0xff]
  %v5151 = vld [vmem:[%s2 + $0x10] sm:$0xff]
  %v5152 = vld [vmem:[%s2 + $0x18] sm:$0xff]
  %v5153 = vld [vmem:[%s2 + $0x20] sm:$0xff]
  %v5154 = vld [vmem:[%s2 + $0x28] sm:$0xff]
  %v5155 = vld [vmem:[%s2 + $0x30] sm:$0xff]
  %v5156 = vld [vmem:[%s2 + $0x38] sm:$0xff]
  %v5157 = vld [vmem:[%s2 + $0x40] sm:$0xff]
  %v5158 = vld [vmem:[%s2 + $0x48] sm:$0xff]
  %v5159 = vld [vmem:[%s2 + $0x50] sm:$0xff]
  %v5160 = vld [vmem:[%s2 + $0x58] sm:$0xff]
  %v5161 = vld [vmem:[%s2 + $0x60] sm:$0xff]
  %v5162 = vld [vmem:[%s2 + $0x68] sm:$0xff]
  %v5163 = vld [vmem:[%s2 + $0x70] sm:$0xff]
  %v5164 = vld [vmem:[%s2 + $0x78] sm:$0xff]
  %v5165 = vld [vmem:[%s2 + $0x80] sm:$0xff]
  %v5166 = vld [vmem:[%s2 + $0x88] sm:$0xff]
  %v5167 = vld [vmem:[%s2 + $0x90] sm:$0xff]
  %v5168 = vld [vmem:[%s2 + $0x98] sm:$0xff]
  %v5169 = vld [vmem:[%s2 + $0xa0] sm:$0xff]
  %v5170 = vld [vmem:[%s2 + $0xa8] sm:$0xff]
  %v5171 = vld [vmem:[%s2 + $0xb0] sm:$0xff]
  %v5172 = vld [vmem:[%s2 + $0xb8] sm:$0xff]
  %v5173 = vld [vmem:[%s2 + $0xc0] sm:$0xff]
  %v5174 = vld [vmem:[%s2 + $0xc8] sm:$0xff]
  %v5175 = vld [vmem:[%s2 + $0xd0] sm:$0xff]
  %v5176 = vld [vmem:[%s2 + $0xd8] sm:$0xff]
  %v5177 = vld [vmem:[%s2 + $0xe0] sm:$0xff]
  %v5178 = vld [vmem:[%s2 + $0xe8] sm:$0xff]
  %v5179 = vld [vmem:[%s2 + $0xf0] sm:$0xff]
  %v5180 = vld [vmem:[%s2 + $0xf8] sm:$0xff]
  %v5213 = vunpack.c.l.b16 %v5149
  %v5214 = vunpack.c.h.b16 %v5149
  %v5215 = vunpack.c.l.b16 %v5150
  %v5216 = vunpack.c.h.b16 %v5150
  %v5217 = vunpack.c.l.b16 %v5151
  %v5218 = vunpack.c.h.b16 %v5151
  %v5219 = vunpack.c.l.b16 %v5152
  %v5220 = vunpack.c.h.b16 %v5152
  %v5221 = vunpack.c.l.b16 %v5153
  %v5222 = vunpack.c.h.b16 %v5153
  %v5223 = vunpack.c.l.b16 %v5154
  %v5224 = vunpack.c.h.b16 %v5154
  %v5225 = vunpack.c.l.b16 %v5155
  %v5226 = vunpack.c.h.b16 %v5155
  %v5227 = vunpack.c.l.b16 %v5156
  %v5228 = vunpack.c.h.b16 %v5156
  %v5229 = vunpack.c.l.b16 %v5157
  %v5230 = vunpack.c.h.b16 %v5157
  %v5231 = vunpack.c.l.b16 %v5158
  %v5232 = vunpack.c.h.b16 %v5158
  %v5233 = vunpack.c.l.b16 %v5159
  %v5234 = vunpack.c.h.b16 %v5159
  %v5235 = vunpack.c.l.b16 %v5160
  %v5236 = vunpack.c.h.b16 %v5160
  %v5237 = vunpack.c.l.b16 %v5161
  %v5238 = vunpack.c.h.b16 %v5161
  %v5239 = vunpack.c.l.b16 %v5162
  %v5240 = vunpack.c.h.b16 %v5162
  %v5241 = vunpack.c.l.b16 %v5163
  %v5242 = vunpack.c.h.b16 %v5163
  %v5243 = vunpack.c.l.b16 %v5164
  %v5244 = vunpack.c.h.b16 %v5164
  %v5245 = vunpack.c.l.b16 %v5165
  %v5246 = vunpack.c.h.b16 %v5165
  %v5247 = vunpack.c.l.b16 %v5166
  %v5248 = vunpack.c.h.b16 %v5166
  %v5249 = vunpack.c.l.b16 %v5167
  %v5250 = vunpack.c.h.b16 %v5167
  %v5251 = vunpack.c.l.b16 %v5168
  %v5252 = vunpack.c.h.b16 %v5168
  %v5253 = vunpack.c.l.b16 %v5169
  %v5254 = vunpack.c.h.b16 %v5169
  %v5255 = vunpack.c.l.b16 %v5170
  %v5256 = vunpack.c.h.b16 %v5170
  %v5257 = vunpack.c.l.b16 %v5171
  %v5258 = vunpack.c.h.b16 %v5171
  %v5259 = vunpack.c.l.b16 %v5172
  %v5260 = vunpack.c.h.b16 %v5172
  %v5261 = vunpack.c.l.b16 %v5173
  %v5262 = vunpack.c.h.b16 %v5173
  %v5263 = vunpack.c.l.b16 %v5174
  %v5264 = vunpack.c.h.b16 %v5174
  %v5265 = vunpack.c.l.b16 %v5175
  %v5266 = vunpack.c.h.b16 %v5175
  %v5267 = vunpack.c.l.b16 %v5176
  %v5268 = vunpack.c.h.b16 %v5176
  %v5269 = vunpack.c.l.b16 %v5177
  %v5270 = vunpack.c.h.b16 %v5177
  %v5271 = vunpack.c.l.b16 %v5178
  %v5272 = vunpack.c.h.b16 %v5178
  %v5273 = vunpack.c.l.b16 %v5179
  %v5274 = vunpack.c.h.b16 %v5179
  %v5275 = vunpack.c.l.b16 %v5180
  %v5276 = vunpack.c.h.b16 %v5180
  %v5277 = vpack.c.b16 %v5217, %v5213
  %v5278 = vpack.c.b16 %v5218, %v5214
  %v5279 = vpack.c.b16 %v5219, %v5215
  %v5280 = vpack.c.b16 %v5220, %v5216
  %v5281 = vpack.c.b16 %v5225, %v5221
  %v5282 = vpack.c.b16 %v5226, %v5222
  %v5283 = vpack.c.b16 %v5227, %v5223
  %v5284 = vpack.c.b16 %v5228, %v5224
  %v5285 = vpack.c.b16 %v5233, %v5229
  %v5286 = vpack.c.b16 %v5234, %v5230
  %v5287 = vpack.c.b16 %v5235, %v5231
  %v5288 = vpack.c.b16 %v5236, %v5232
  %v5289 = vpack.c.b16 %v5241, %v5237
  %v5290 = vpack.c.b16 %v5242, %v5238
  %v5291 = vpack.c.b16 %v5243, %v5239
  %v5292 = vpack.c.b16 %v5244, %v5240
  %v5293 = vpack.c.b16 %v5249, %v5245
  %v5294 = vpack.c.b16 %v5250, %v5246
  %v5295 = vpack.c.b16 %v5251, %v5247
  %v5296 = vpack.c.b16 %v5252, %v5248
  %v5297 = vpack.c.b16 %v5257, %v5253
  %v5298 = vpack.c.b16 %v5258, %v5254
  %v5299 = vpack.c.b16 %v5259, %v5255
  %v5300 = vpack.c.b16 %v5260, %v5256
  %v5301 = vpack.c.b16 %v5265, %v5261
  %v5302 = vpack.c.b16 %v5266, %v5262
  %v5303 = vpack.c.b16 %v5267, %v5263
  %v5304 = vpack.c.b16 %v5268, %v5264
  %v5305 = vpack.c.b16 %v5273, %v5269
  %v5306 = vpack.c.b16 %v5274, %v5270
  %v5307 = vpack.c.b16 %v5275, %v5271
  %v5308 = vpack.c.b16 %v5276, %v5272
  %5341 = vmatpush.bf16.msra.mxu0 %v5305
  %5342 = vmatpush.bf16.msra.mxu0 %v5301
  %5343 = vmatpush.bf16.msra.mxu0 %v5297
  %5344 = vmatpush.bf16.msra.mxu0 %v5293
  %5345 = vmatpush.bf16.msra.mxu0 %v5289
  %5346 = vmatpush.bf16.msra.mxu0 %v5285
  %5347 = vmatpush.bf16.msra.mxu0 %v5281
  %5348 = vmatpush.bf16.msra.mxu0 %v5277
  %5349 = vmatmul.bf16.gmra.mxu0 %v5143
  %v5350 = vpop.f32.mrf.mxu0
  %v5351 = vadd.f32 0.0, %v5350
  %v5352 = vpop.f32.mrf.mxu0
  %5353 = vdwg.mxu0
  %5354 = vmatpush.bf16.msra.mxu0 %v5306
  %5355 = vmatpush.bf16.msra.mxu0 %v5302
  %5356 = vmatpush.bf16.msra.mxu0 %v5298
  %5357 = vmatpush.bf16.msra.mxu0 %v5294
  %5358 = vmatpush.bf16.msra.mxu0 %v5290
  %5359 = vmatpush.bf16.msra.mxu0 %v5286
  %5360 = vmatpush.bf16.msra.mxu0 %v5282
  %5361 = vmatpush.bf16.msra.mxu0 %v5278
  %5362 = vmatmul.bf16.gmra.mxu0 %v5143
  %v5363 = vpop.f32.mrf.mxu0
  %v5364 = vadd.f32 0.0, %v5363
  %v5365 = vpop.f32.mrf.mxu0
  %5366 = vdwg.mxu0
  %5367 = vmatpush.bf16.msra.mxu0 %v5307
  %5368 = vmatpush.bf16.msra.mxu0 %v5303
  %5369 = vmatpush.bf16.msra.mxu0 %v5299
  %5370 = vmatpush.bf16.msra.mxu0 %v5295
  %5371 = vmatpush.bf16.msra.mxu0 %v5291
  %5372 = vmatpush.bf16.msra.mxu0 %v5287
  %5373 = vmatpush.bf16.msra.mxu0 %v5283
  %5374 = vmatpush.bf16.msra.mxu0 %v5279
  %5375 = vmatmul.bf16.gmra.mxu0 %v5143
  %v5376 = vpop.f32.mrf.mxu0
  %v5377 = vadd.f32 0.0, %v5376
  %v5378 = vpop.f32.mrf.mxu0
  %5379 = vdwg.mxu0
  %5380 = vmatpush.bf16.msra.mxu0 %v5308
  %5381 = vmatpush.bf16.msra.mxu0 %v5304
  %5382 = vmatpush.bf16.msra.mxu0 %v5300
  %5383 = vmatpush.bf16.msra.mxu0 %v5296
  %5384 = vmatpush.bf16.msra.mxu0 %v5292
  %5385 = vmatpush.bf16.msra.mxu0 %v5288
  %5386 = vmatpush.bf16.msra.mxu0 %v5284
  %5387 = vmatpush.bf16.msra.mxu0 %v5280
  %5388 = vmatmul.bf16.gmra.mxu0 %v5143
  %v5389 = vpop.f32.mrf.mxu0
  %v5390 = vadd.f32 0.0, %v5389
  %v5391 = vpop.f32.mrf.mxu0
  %5392 = vdwg.mxu0
  %v5393 = vadd.f32 %v5145, %v5351
  %v5394 = vadd.f32 %v5146, %v5364
  %v5395 = vadd.f32 %v5147, %v5377
  %v5396 = vadd.f32 %v5148, %v5390
  %v5397 = vxor.u32 %v5393, 2147483648
  %v5398 = vmul.f32 %v5397, 1.442695
  %v5399 = vpow.pop %v5398
  %v5400 = vadd.f32 %v5399, 1.0
  %v5401 = vrcp.pop %v5400
  %v5402 = vmul.f32 %v5400, %v5401
  %v5403 = vsub.f32 1.0, %v5402
  %v5404 = vmul.f32 %v5401, %v5403
  %v5405 = vadd.f32 %v5401, %v5404
  %vm5406 = vweird.f32 %v5400
  %vm5407 = vweird.f32 %v5401
  %vm5408 = vmor %vm5406, %vm5407
  %v5409 = vsel %vm5408, %v5401, %v5405
  %v5410 = vand.u32 2147483647, %v5400
  %vm5411 = vcmp.eq.f32.partialorder %v5410, 8.507059e+37
  %v5412 = vand.u32 %v5400, 2147483648
  %v5413 = vor.u32 1.1754944e-38, %v5412
  %v5414 = vsel %vm5411, %v5413, %v5409
  %v5415 = vmul.f32 1.0, %v5414
  %v5416 = vxor.u32 %v5394, 2147483648
  %v5417 = vmul.f32 %v5416, 1.442695
  %v5418 = vpow.pop %v5417
  %v5419 = vadd.f32 %v5418, 1.0
  %v5420 = vrcp.pop %v5419
  %v5421 = vmul.f32 %v5419, %v5420
  %v5422 = vsub.f32 1.0, %v5421
  %v5423 = vmul.f32 %v5420, %v5422
  %v5424 = vadd.f32 %v5420, %v5423
  %vm5425 = vweird.f32 %v5419
  %vm5426 = vweird.f32 %v5420
  %vm5427 = vmor %vm5425, %vm5426
  %v5428 = vsel %vm5427, %v5420, %v5424
  %v5429 = vand.u32 2147483647, %v5419
  %vm5430 = vcmp.eq.f32.partialorder %v5429, 8.507059e+37
  %v5431 = vand.u32 %v5419, 2147483648
  %v5432 = vor.u32 1.1754944e-38, %v5431
  %v5433 = vsel %vm5430, %v5432, %v5428
  %v5434 = vmul.f32 1.0, %v5433
  %v5435 = vtanh.pop %v5395
  %v5436 = vxor.u32 %v5396, 2147483648
  %v5437 = vmul.f32 %v5436, 1.442695
  %v5438 = vpow.pop %v5437
  %v5439 = vadd.f32 %v5438, 1.0
  %v5440 = vrcp.pop %v5439
  %v5441 = vmul.f32 %v5439, %v5440
  %v5442 = vsub.f32 1.0, %v5441
  %v5443 = vmul.f32 %v5440, %v5442
  %v5444 = vadd.f32 %v5440, %v5443
  %vm5445 = vweird.f32 %v5439
  %vm5446 = vweird.f32 %v5440
  %vm5447 = vmor %vm5445, %vm5446
  %v5448 = vsel %vm5447, %v5440, %v5444
  %v5449 = vand.u32 2147483647, %v5439
  %vm5450 = vcmp.eq.f32.partialorder %v5449, 8.507059e+37
  %v5451 = vand.u32 %v5439, 2147483648
  %v5452 = vor.u32 1.1754944e-38, %v5451
  %v5453 = vsel %vm5450, %v5452, %v5448
  %v5454 = vmul.f32 1.0, %v5453
  %v5455 = vmul.f32 %v5434, %v5140
  %v5456 = vmul.f32 %v5415, %v5435
  %v5457 = vadd.f32 %v5455, %v5456
  %v5458 = vtanh.pop %v5457
  %v5459 = vmul.f32 %v5454, %v5458
  %v5460 = vpack.c.bf16 %v5459, %v5459
  %5461 = vst [vmem:[%s6 + $0x30] sm:$0xf] %v5460
  %v5462 = vld [vmem:[#allocation2 + $0xa0] sm:$0xff]
  %v5463 = vld [vmem:[#allocation2 + $0xa8] sm:$0xff]
  %v5464 = vld [vmem:[#allocation2 + $0xb0] sm:$0xff]
  %v5465 = vld [vmem:[#allocation2 + $0xb8] sm:$0xff]
  %v5466 = vld [vmem:[%s2] sm:$0xff]
  %v5467 = vld [vmem:[%s2 + $0x8] sm:$0xff]
  %v5468 = vld [vmem:[%s2 + $0x10] sm:$0xff]
  %v5469 = vld [vmem:[%s2 + $0x18] sm:$0xff]
  %v5470 = vld [vmem:[%s2 + $0x20] sm:$0xff]
  %v5471 = vld [vmem:[%s2 + $0x28] sm:$0xff]
  %v5472 = vld [vmem:[%s2 + $0x30] sm:$0xff]
  %v5473 = vld [vmem:[%s2 + $0x38] sm:$0xff]
  %v5474 = vld [vmem:[%s2 + $0x40] sm:$0xff]
  %v5475 = vld [vmem:[%s2 + $0x48] sm:$0xff]
  %v5476 = vld [vmem:[%s2 + $0x50] sm:$0xff]
  %v5477 = vld [vmem:[%s2 + $0x58] sm:$0xff]
  %v5478 = vld [vmem:[%s2 + $0x60] sm:$0xff]
  %v5479 = vld [vmem:[%s2 + $0x68] sm:$0xff]
  %v5480 = vld [vmem:[%s2 + $0x70] sm:$0xff]
  %v5481 = vld [vmem:[%s2 + $0x78] sm:$0xff]
  %v5482 = vld [vmem:[%s2 + $0x80] sm:$0xff]
  %v5483 = vld [vmem:[%s2 + $0x88] sm:$0xff]
  %v5484 = vld [vmem:[%s2 + $0x90] sm:$0xff]
  %v5485 = vld [vmem:[%s2 + $0x98] sm:$0xff]
  %v5486 = vld [vmem:[%s2 + $0xa0] sm:$0xff]
  %v5487 = vld [vmem:[%s2 + $0xa8] sm:$0xff]
  %v5488 = vld [vmem:[%s2 + $0xb0] sm:$0xff]
  %v5489 = vld [vmem:[%s2 + $0xb8] sm:$0xff]
  %v5490 = vld [vmem:[%s2 + $0xc0] sm:$0xff]
  %v5491 = vld [vmem:[%s2 + $0xc8] sm:$0xff]
  %v5492 = vld [vmem:[%s2 + $0xd0] sm:$0xff]
  %v5493 = vld [vmem:[%s2 + $0xd8] sm:$0xff]
  %v5494 = vld [vmem:[%s2 + $0xe0] sm:$0xff]
  %v5495 = vld [vmem:[%s2 + $0xe8] sm:$0xff]
  %v5496 = vld [vmem:[%s2 + $0xf0] sm:$0xff]
  %v5497 = vld [vmem:[%s2 + $0xf8] sm:$0xff]
  %v5530 = vunpack.c.l.b16 %v5466
  %v5531 = vunpack.c.h.b16 %v5466
  %v5532 = vunpack.c.l.b16 %v5467
  %v5533 = vunpack.c.h.b16 %v5467
  %v5534 = vunpack.c.l.b16 %v5468
  %v5535 = vunpack.c.h.b16 %v5468
  %v5536 = vunpack.c.l.b16 %v5469
  %v5537 = vunpack.c.h.b16 %v5469
  %v5538 = vunpack.c.l.b16 %v5470
  %v5539 = vunpack.c.h.b16 %v5470
  %v5540 = vunpack.c.l.b16 %v5471
  %v5541 = vunpack.c.h.b16 %v5471
  %v5542 = vunpack.c.l.b16 %v5472
  %v5543 = vunpack.c.h.b16 %v5472
  %v5544 = vunpack.c.l.b16 %v5473
  %v5545 = vunpack.c.h.b16 %v5473
  %v5546 = vunpack.c.l.b16 %v5474
  %v5547 = vunpack.c.h.b16 %v5474
  %v5548 = vunpack.c.l.b16 %v5475
  %v5549 = vunpack.c.h.b16 %v5475
  %v5550 = vunpack.c.l.b16 %v5476
  %v5551 = vunpack.c.h.b16 %v5476
  %v5552 = vunpack.c.l.b16 %v5477
  %v5553 = vunpack.c.h.b16 %v5477
  %v5554 = vunpack.c.l.b16 %v5478
  %v5555 = vunpack.c.h.b16 %v5478
  %v5556 = vunpack.c.l.b16 %v5479
  %v5557 = vunpack.c.h.b16 %v5479
  %v5558 = vunpack.c.l.b16 %v5480
  %v5559 = vunpack.c.h.b16 %v5480
  %v5560 = vunpack.c.l.b16 %v5481
  %v5561 = vunpack.c.h.b16 %v5481
  %v5562 = vunpack.c.l.b16 %v5482
  %v5563 = vunpack.c.h.b16 %v5482
  %v5564 = vunpack.c.l.b16 %v5483
  %v5565 = vunpack.c.h.b16 %v5483
  %v5566 = vunpack.c.l.b16 %v5484
  %v5567 = vunpack.c.h.b16 %v5484
  %v5568 = vunpack.c.l.b16 %v5485
  %v5569 = vunpack.c.h.b16 %v5485
  %v5570 = vunpack.c.l.b16 %v5486
  %v5571 = vunpack.c.h.b16 %v5486
  %v5572 = vunpack.c.l.b16 %v5487
  %v5573 = vunpack.c.h.b16 %v5487
  %v5574 = vunpack.c.l.b16 %v5488
  %v5575 = vunpack.c.h.b16 %v5488
  %v5576 = vunpack.c.l.b16 %v5489
  %v5577 = vunpack.c.h.b16 %v5489
  %v5578 = vunpack.c.l.b16 %v5490
  %v5579 = vunpack.c.h.b16 %v5490
  %v5580 = vunpack.c.l.b16 %v5491
  %v5581 = vunpack.c.h.b16 %v5491
  %v5582 = vunpack.c.l.b16 %v5492
  %v5583 = vunpack.c.h.b16 %v5492
  %v5584 = vunpack.c.l.b16 %v5493
  %v5585 = vunpack.c.h.b16 %v5493
  %v5586 = vunpack.c.l.b16 %v5494
  %v5587 = vunpack.c.h.b16 %v5494
  %v5588 = vunpack.c.l.b16 %v5495
  %v5589 = vunpack.c.h.b16 %v5495
  %v5590 = vunpack.c.l.b16 %v5496
  %v5591 = vunpack.c.h.b16 %v5496
  %v5592 = vunpack.c.l.b16 %v5497
  %v5593 = vunpack.c.h.b16 %v5497
  %v5594 = vpack.c.b16 %v5534, %v5530
  %v5595 = vpack.c.b16 %v5535, %v5531
  %v5596 = vpack.c.b16 %v5536, %v5532
  %v5597 = vpack.c.b16 %v5537, %v5533
  %v5598 = vpack.c.b16 %v5542, %v5538
  %v5599 = vpack.c.b16 %v5543, %v5539
  %v5600 = vpack.c.b16 %v5544, %v5540
  %v5601 = vpack.c.b16 %v5545, %v5541
  %v5602 = vpack.c.b16 %v5550, %v5546
  %v5603 = vpack.c.b16 %v5551, %v5547
  %v5604 = vpack.c.b16 %v5552, %v5548
  %v5605 = vpack.c.b16 %v5553, %v5549
  %v5606 = vpack.c.b16 %v5558, %v5554
  %v5607 = vpack.c.b16 %v5559, %v5555
  %v5608 = vpack.c.b16 %v5560, %v5556
  %v5609 = vpack.c.b16 %v5561, %v5557
  %v5610 = vpack.c.b16 %v5566, %v5562
  %v5611 = vpack.c.b16 %v5567, %v5563
  %v5612 = vpack.c.b16 %v5568, %v5564
  %v5613 = vpack.c.b16 %v5569, %v5565
  %v5614 = vpack.c.b16 %v5574, %v5570
  %v5615 = vpack.c.b16 %v5575, %v5571
  %v5616 = vpack.c.b16 %v5576, %v5572
  %v5617 = vpack.c.b16 %v5577, %v5573
  %v5618 = vpack.c.b16 %v5582, %v5578
  %v5619 = vpack.c.b16 %v5583, %v5579
  %v5620 = vpack.c.b16 %v5584, %v5580
  %v5621 = vpack.c.b16 %v5585, %v5581
  %v5622 = vpack.c.b16 %v5590, %v5586
  %v5623 = vpack.c.b16 %v5591, %v5587
  %v5624 = vpack.c.b16 %v5592, %v5588
  %v5625 = vpack.c.b16 %v5593, %v5589
  %5658 = vmatpush.bf16.msra.mxu0 %v5622
  %5659 = vmatpush.bf16.msra.mxu0 %v5618
  %5660 = vmatpush.bf16.msra.mxu0 %v5614
  %5661 = vmatpush.bf16.msra.mxu0 %v5610
  %5662 = vmatpush.bf16.msra.mxu0 %v5606
  %5663 = vmatpush.bf16.msra.mxu0 %v5602
  %5664 = vmatpush.bf16.msra.mxu0 %v5598
  %5665 = vmatpush.bf16.msra.mxu0 %v5594
  %5666 = vmatmul.bf16.gmra.mxu0 %v5460
  %v5667 = vpop.f32.mrf.mxu0
  %v5668 = vadd.f32 0.0, %v5667
  %v5669 = vpop.f32.mrf.mxu0
  %5670 = vdwg.mxu0
  %5671 = vmatpush.bf16.msra.mxu0 %v5623
  %5672 = vmatpush.bf16.msra.mxu0 %v5619
  %5673 = vmatpush.bf16.msra.mxu0 %v5615
  %5674 = vmatpush.bf16.msra.mxu0 %v5611
  %5675 = vmatpush.bf16.msra.mxu0 %v5607
  %5676 = vmatpush.bf16.msra.mxu0 %v5603
  %5677 = vmatpush.bf16.msra.mxu0 %v5599
  %5678 = vmatpush.bf16.msra.mxu0 %v5595
  %5679 = vmatmul.bf16.gmra.mxu0 %v5460
  %v5680 = vpop.f32.mrf.mxu0
  %v5681 = vadd.f32 0.0, %v5680
  %v5682 = vpop.f32.mrf.mxu0
  %5683 = vdwg.mxu0
  %5684 = vmatpush.bf16.msra.mxu0 %v5624
  %5685 = vmatpush.bf16.msra.mxu0 %v5620
  %5686 = vmatpush.bf16.msra.mxu0 %v5616
  %5687 = vmatpush.bf16.msra.mxu0 %v5612
  %5688 = vmatpush.bf16.msra.mxu0 %v5608
  %5689 = vmatpush.bf16.msra.mxu0 %v5604
  %5690 = vmatpush.bf16.msra.mxu0 %v5600
  %5691 = vmatpush.bf16.msra.mxu0 %v5596
  %5692 = vmatmul.bf16.gmra.mxu0 %v5460
  %v5693 = vpop.f32.mrf.mxu0
  %v5694 = vadd.f32 0.0, %v5693
  %v5695 = vpop.f32.mrf.mxu0
  %5696 = vdwg.mxu0
  %5697 = vmatpush.bf16.msra.mxu0 %v5625
  %5698 = vmatpush.bf16.msra.mxu0 %v5621
  %5699 = vmatpush.bf16.msra.mxu0 %v5617
  %5700 = vmatpush.bf16.msra.mxu0 %v5613
  %5701 = vmatpush.bf16.msra.mxu0 %v5609
  %5702 = vmatpush.bf16.msra.mxu0 %v5605
  %5703 = vmatpush.bf16.msra.mxu0 %v5601
  %5704 = vmatpush.bf16.msra.mxu0 %v5597
  %5705 = vmatmul.bf16.gmra.mxu0 %v5460
  %v5706 = vpop.f32.mrf.mxu0
  %v5707 = vadd.f32 0.0, %v5706
  %v5708 = vpop.f32.mrf.mxu0
  %5709 = vdwg.mxu0
  %v5710 = vadd.f32 %v5462, %v5668
  %v5711 = vadd.f32 %v5463, %v5681
  %v5712 = vadd.f32 %v5464, %v5694
  %v5713 = vadd.f32 %v5465, %v5707
  %v5714 = vxor.u32 %v5710, 2147483648
  %v5715 = vmul.f32 %v5714, 1.442695
  %v5716 = vpow.pop %v5715
  %v5717 = vadd.f32 %v5716, 1.0
  %v5718 = vrcp.pop %v5717
  %v5719 = vmul.f32 %v5717, %v5718
  %v5720 = vsub.f32 1.0, %v5719
  %v5721 = vmul.f32 %v5718, %v5720
  %v5722 = vadd.f32 %v5718, %v5721
  %vm5723 = vweird.f32 %v5717
  %vm5724 = vweird.f32 %v5718
  %vm5725 = vmor %vm5723, %vm5724
  %v5726 = vsel %vm5725, %v5718, %v5722
  %v5727 = vand.u32 2147483647, %v5717
  %vm5728 = vcmp.eq.f32.partialorder %v5727, 8.507059e+37
  %v5729 = vand.u32 %v5717, 2147483648
  %v5730 = vor.u32 1.1754944e-38, %v5729
  %v5731 = vsel %vm5728, %v5730, %v5726
  %v5732 = vmul.f32 1.0, %v5731
  %v5733 = vxor.u32 %v5711, 2147483648
  %v5734 = vmul.f32 %v5733, 1.442695
  %v5735 = vpow.pop %v5734
  %v5736 = vadd.f32 %v5735, 1.0
  %v5737 = vrcp.pop %v5736
  %v5738 = vmul.f32 %v5736, %v5737
  %v5739 = vsub.f32 1.0, %v5738
  %v5740 = vmul.f32 %v5737, %v5739
  %v5741 = vadd.f32 %v5737, %v5740
  %vm5742 = vweird.f32 %v5736
  %vm5743 = vweird.f32 %v5737
  %vm5744 = vmor %vm5742, %vm5743
  %v5745 = vsel %vm5744, %v5737, %v5741
  %v5746 = vand.u32 2147483647, %v5736
  %vm5747 = vcmp.eq.f32.partialorder %v5746, 8.507059e+37
  %v5748 = vand.u32 %v5736, 2147483648
  %v5749 = vor.u32 1.1754944e-38, %v5748
  %v5750 = vsel %vm5747, %v5749, %v5745
  %v5751 = vmul.f32 1.0, %v5750
  %v5752 = vtanh.pop %v5712
  %v5753 = vxor.u32 %v5713, 2147483648
  %v5754 = vmul.f32 %v5753, 1.442695
  %v5755 = vpow.pop %v5754
  %v5756 = vadd.f32 %v5755, 1.0
  %v5757 = vrcp.pop %v5756
  %v5758 = vmul.f32 %v5756, %v5757
  %v5759 = vsub.f32 1.0, %v5758
  %v5760 = vmul.f32 %v5757, %v5759
  %v5761 = vadd.f32 %v5757, %v5760
  %vm5762 = vweird.f32 %v5756
  %vm5763 = vweird.f32 %v5757
  %vm5764 = vmor %vm5762, %vm5763
  %v5765 = vsel %vm5764, %v5757, %v5761
  %v5766 = vand.u32 2147483647, %v5756
  %vm5767 = vcmp.eq.f32.partialorder %v5766, 8.507059e+37
  %v5768 = vand.u32 %v5756, 2147483648
  %v5769 = vor.u32 1.1754944e-38, %v5768
  %v5770 = vsel %vm5767, %v5769, %v5765
  %v5771 = vmul.f32 1.0, %v5770
  %v5772 = vmul.f32 %v5751, %v5457
  %v5773 = vmul.f32 %v5732, %v5752
  %v5774 = vadd.f32 %v5772, %v5773
  %v5775 = vtanh.pop %v5774
  %v5776 = vmul.f32 %v5771, %v5775
  %v5777 = vpack.c.bf16 %v5776, %v5776
  %5778 = vst [vmem:[%s6 + $0x34] sm:$0xf] %v5777
  %v5779 = vld [vmem:[#allocation2 + $0xc0] sm:$0xff]
  %v5780 = vld [vmem:[#allocation2 + $0xc8] sm:$0xff]
  %v5781 = vld [vmem:[#allocation2 + $0xd0] sm:$0xff]
  %v5782 = vld [vmem:[#allocation2 + $0xd8] sm:$0xff]
  %v5783 = vld [vmem:[%s2] sm:$0xff]
  %v5784 = vld [vmem:[%s2 + $0x8] sm:$0xff]
  %v5785 = vld [vmem:[%s2 + $0x10] sm:$0xff]
  %v5786 = vld [vmem:[%s2 + $0x18] sm:$0xff]
  %v5787 = vld [vmem:[%s2 + $0x20] sm:$0xff]
  %v5788 = vld [vmem:[%s2 + $0x28] sm:$0xff]
  %v5789 = vld [vmem:[%s2 + $0x30] sm:$0xff]
  %v5790 = vld [vmem:[%s2 + $0x38] sm:$0xff]
  %v5791 = vld [vmem:[%s2 + $0x40] sm:$0xff]
  %v5792 = vld [vmem:[%s2 + $0x48] sm:$0xff]
  %v5793 = vld [vmem:[%s2 + $0x50] sm:$0xff]
  %v5794 = vld [vmem:[%s2 + $0x58] sm:$0xff]
  %v5795 = vld [vmem:[%s2 + $0x60] sm:$0xff]
  %v5796 = vld [vmem:[%s2 + $0x68] sm:$0xff]
  %v5797 = vld [vmem:[%s2 + $0x70] sm:$0xff]
  %v5798 = vld [vmem:[%s2 + $0x78] sm:$0xff]
  %v5799 = vld [vmem:[%s2 + $0x80] sm:$0xff]
  %v5800 = vld [vmem:[%s2 + $0x88] sm:$0xff]
  %v5801 = vld [vmem:[%s2 + $0x90] sm:$0xff]
  %v5802 = vld [vmem:[%s2 + $0x98] sm:$0xff]
  %v5803 = vld [vmem:[%s2 + $0xa0] sm:$0xff]
  %v5804 = vld [vmem:[%s2 + $0xa8] sm:$0xff]
  %v5805 = vld [vmem:[%s2 + $0xb0] sm:$0xff]
  %v5806 = vld [vmem:[%s2 + $0xb8] sm:$0xff]
  %v5807 = vld [vmem:[%s2 + $0xc0] sm:$0xff]
  %v5808 = vld [vmem:[%s2 + $0xc8] sm:$0xff]
  %v5809 = vld [vmem:[%s2 + $0xd0] sm:$0xff]
  %v5810 = vld [vmem:[%s2 + $0xd8] sm:$0xff]
  %v5811 = vld [vmem:[%s2 + $0xe0] sm:$0xff]
  %v5812 = vld [vmem:[%s2 + $0xe8] sm:$0xff]
  %v5813 = vld [vmem:[%s2 + $0xf0] sm:$0xff]
  %v5814 = vld [vmem:[%s2 + $0xf8] sm:$0xff]
  %v5847 = vunpack.c.l.b16 %v5783
  %v5848 = vunpack.c.h.b16 %v5783
  %v5849 = vunpack.c.l.b16 %v5784
  %v5850 = vunpack.c.h.b16 %v5784
  %v5851 = vunpack.c.l.b16 %v5785
  %v5852 = vunpack.c.h.b16 %v5785
  %v5853 = vunpack.c.l.b16 %v5786
  %v5854 = vunpack.c.h.b16 %v5786
  %v5855 = vunpack.c.l.b16 %v5787
  %v5856 = vunpack.c.h.b16 %v5787
  %v5857 = vunpack.c.l.b16 %v5788
  %v5858 = vunpack.c.h.b16 %v5788
  %v5859 = vunpack.c.l.b16 %v5789
  %v5860 = vunpack.c.h.b16 %v5789
  %v5861 = vunpack.c.l.b16 %v5790
  %v5862 = vunpack.c.h.b16 %v5790
  %v5863 = vunpack.c.l.b16 %v5791
  %v5864 = vunpack.c.h.b16 %v5791
  %v5865 = vunpack.c.l.b16 %v5792
  %v5866 = vunpack.c.h.b16 %v5792
  %v5867 = vunpack.c.l.b16 %v5793
  %v5868 = vunpack.c.h.b16 %v5793
  %v5869 = vunpack.c.l.b16 %v5794
  %v5870 = vunpack.c.h.b16 %v5794
  %v5871 = vunpack.c.l.b16 %v5795
  %v5872 = vunpack.c.h.b16 %v5795
  %v5873 = vunpack.c.l.b16 %v5796
  %v5874 = vunpack.c.h.b16 %v5796
  %v5875 = vunpack.c.l.b16 %v5797
  %v5876 = vunpack.c.h.b16 %v5797
  %v5877 = vunpack.c.l.b16 %v5798
  %v5878 = vunpack.c.h.b16 %v5798
  %v5879 = vunpack.c.l.b16 %v5799
  %v5880 = vunpack.c.h.b16 %v5799
  %v5881 = vunpack.c.l.b16 %v5800
  %v5882 = vunpack.c.h.b16 %v5800
  %v5883 = vunpack.c.l.b16 %v5801
  %v5884 = vunpack.c.h.b16 %v5801
  %v5885 = vunpack.c.l.b16 %v5802
  %v5886 = vunpack.c.h.b16 %v5802
  %v5887 = vunpack.c.l.b16 %v5803
  %v5888 = vunpack.c.h.b16 %v5803
  %v5889 = vunpack.c.l.b16 %v5804
  %v5890 = vunpack.c.h.b16 %v5804
  %v5891 = vunpack.c.l.b16 %v5805
  %v5892 = vunpack.c.h.b16 %v5805
  %v5893 = vunpack.c.l.b16 %v5806
  %v5894 = vunpack.c.h.b16 %v5806
  %v5895 = vunpack.c.l.b16 %v5807
  %v5896 = vunpack.c.h.b16 %v5807
  %v5897 = vunpack.c.l.b16 %v5808
  %v5898 = vunpack.c.h.b16 %v5808
  %v5899 = vunpack.c.l.b16 %v5809
  %v5900 = vunpack.c.h.b16 %v5809
  %v5901 = vunpack.c.l.b16 %v5810
  %v5902 = vunpack.c.h.b16 %v5810
  %v5903 = vunpack.c.l.b16 %v5811
  %v5904 = vunpack.c.h.b16 %v5811
  %v5905 = vunpack.c.l.b16 %v5812
  %v5906 = vunpack.c.h.b16 %v5812
  %v5907 = vunpack.c.l.b16 %v5813
  %v5908 = vunpack.c.h.b16 %v5813
  %v5909 = vunpack.c.l.b16 %v5814
  %v5910 = vunpack.c.h.b16 %v5814
  %v5911 = vpack.c.b16 %v5851, %v5847
  %v5912 = vpack.c.b16 %v5852, %v5848
  %v5913 = vpack.c.b16 %v5853, %v5849
  %v5914 = vpack.c.b16 %v5854, %v5850
  %v5915 = vpack.c.b16 %v5859, %v5855
  %v5916 = vpack.c.b16 %v5860, %v5856
  %v5917 = vpack.c.b16 %v5861, %v5857
  %v5918 = vpack.c.b16 %v5862, %v5858
  %v5919 = vpack.c.b16 %v5867, %v5863
  %v5920 = vpack.c.b16 %v5868, %v5864
  %v5921 = vpack.c.b16 %v5869, %v5865
  %v5922 = vpack.c.b16 %v5870, %v5866
  %v5923 = vpack.c.b16 %v5875, %v5871
  %v5924 = vpack.c.b16 %v5876, %v5872
  %v5925 = vpack.c.b16 %v5877, %v5873
  %v5926 = vpack.c.b16 %v5878, %v5874
  %v5927 = vpack.c.b16 %v5883, %v5879
  %v5928 = vpack.c.b16 %v5884, %v5880
  %v5929 = vpack.c.b16 %v5885, %v5881
  %v5930 = vpack.c.b16 %v5886, %v5882
  %v5931 = vpack.c.b16 %v5891, %v5887
  %v5932 = vpack.c.b16 %v5892, %v5888
  %v5933 = vpack.c.b16 %v5893, %v5889
  %v5934 = vpack.c.b16 %v5894, %v5890
  %v5935 = vpack.c.b16 %v5899, %v5895
  %v5936 = vpack.c.b16 %v5900, %v5896
  %v5937 = vpack.c.b16 %v5901, %v5897
  %v5938 = vpack.c.b16 %v5902, %v5898
  %v5939 = vpack.c.b16 %v5907, %v5903
  %v5940 = vpack.c.b16 %v5908, %v5904
  %v5941 = vpack.c.b16 %v5909, %v5905
  %v5942 = vpack.c.b16 %v5910, %v5906
  %5975 = vmatpush.bf16.msra.mxu0 %v5939
  %5976 = vmatpush.bf16.msra.mxu0 %v5935
  %5977 = vmatpush.bf16.msra.mxu0 %v5931
  %5978 = vmatpush.bf16.msra.mxu0 %v5927
  %5979 = vmatpush.bf16.msra.mxu0 %v5923
  %5980 = vmatpush.bf16.msra.mxu0 %v5919
  %5981 = vmatpush.bf16.msra.mxu0 %v5915
  %5982 = vmatpush.bf16.msra.mxu0 %v5911
  %5983 = vmatmul.bf16.gmra.mxu0 %v5777
  %v5984 = vpop.f32.mrf.mxu0
  %v5985 = vadd.f32 0.0, %v5984
  %v5986 = vpop.f32.mrf.mxu0
  %5987 = vdwg.mxu0
  %5988 = vmatpush.bf16.msra.mxu0 %v5940
  %5989 = vmatpush.bf16.msra.mxu0 %v5936
  %5990 = vmatpush.bf16.msra.mxu0 %v5932
  %5991 = vmatpush.bf16.msra.mxu0 %v5928
  %5992 = vmatpush.bf16.msra.mxu0 %v5924
  %5993 = vmatpush.bf16.msra.mxu0 %v5920
  %5994 = vmatpush.bf16.msra.mxu0 %v5916
  %5995 = vmatpush.bf16.msra.mxu0 %v5912
  %5996 = vmatmul.bf16.gmra.mxu0 %v5777
  %v5997 = vpop.f32.mrf.mxu0
  %v5998 = vadd.f32 0.0, %v5997
  %v5999 = vpop.f32.mrf.mxu0
  %6000 = vdwg.mxu0
  %6001 = vmatpush.bf16.msra.mxu0 %v5941
  %6002 = vmatpush.bf16.msra.mxu0 %v5937
  %6003 = vmatpush.bf16.msra.mxu0 %v5933
  %6004 = vmatpush.bf16.msra.mxu0 %v5929
  %6005 = vmatpush.bf16.msra.mxu0 %v5925
  %6006 = vmatpush.bf16.msra.mxu0 %v5921
  %6007 = vmatpush.bf16.msra.mxu0 %v5917
  %6008 = vmatpush.bf16.msra.mxu0 %v5913
  %6009 = vmatmul.bf16.gmra.mxu0 %v5777
  %v6010 = vpop.f32.mrf.mxu0
  %v6011 = vadd.f32 0.0, %v6010
  %v6012 = vpop.f32.mrf.mxu0
  %6013 = vdwg.mxu0
  %6014 = vmatpush.bf16.msra.mxu0 %v5942
  %6015 = vmatpush.bf16.msra.mxu0 %v5938
  %6016 = vmatpush.bf16.msra.mxu0 %v5934
  %6017 = vmatpush.bf16.msra.mxu0 %v5930
  %6018 = vmatpush.bf16.msra.mxu0 %v5926
  %6019 = vmatpush.bf16.msra.mxu0 %v5922
  %6020 = vmatpush.bf16.msra.mxu0 %v5918
  %6021 = vmatpush.bf16.msra.mxu0 %v5914
  %6022 = vmatmul.bf16.gmra.mxu0 %v5777
  %v6023 = vpop.f32.mrf.mxu0
  %v6024 = vadd.f32 0.0, %v6023
  %v6025 = vpop.f32.mrf.mxu0
  %6026 = vdwg.mxu0
  %v6027 = vadd.f32 %v5779, %v5985
  %v6028 = vadd.f32 %v5780, %v5998
  %v6029 = vadd.f32 %v5781, %v6011
  %v6030 = vadd.f32 %v5782, %v6024
  %v6031 = vxor.u32 %v6027, 2147483648
  %v6032 = vmul.f32 %v6031, 1.442695
  %v6033 = vpow.pop %v6032
  %v6034 = vadd.f32 %v6033, 1.0
  %v6035 = vrcp.pop %v6034
  %v6036 = vmul.f32 %v6034, %v6035
  %v6037 = vsub.f32 1.0, %v6036
  %v6038 = vmul.f32 %v6035, %v6037
  %v6039 = vadd.f32 %v6035, %v6038
  %vm6040 = vweird.f32 %v6034
  %vm6041 = vweird.f32 %v6035
  %vm6042 = vmor %vm6040, %vm6041
  %v6043 = vsel %vm6042, %v6035, %v6039
  %v6044 = vand.u32 2147483647, %v6034
  %vm6045 = vcmp.eq.f32.partialorder %v6044, 8.507059e+37
  %v6046 = vand.u32 %v6034, 2147483648
  %v6047 = vor.u32 1.1754944e-38, %v6046
  %v6048 = vsel %vm6045, %v6047, %v6043
  %v6049 = vmul.f32 1.0, %v6048
  %v6050 = vxor.u32 %v6028, 2147483648
  %v6051 = vmul.f32 %v6050, 1.442695
  %v6052 = vpow.pop %v6051
  %v6053 = vadd.f32 %v6052, 1.0
  %v6054 = vrcp.pop %v6053
  %v6055 = vmul.f32 %v6053, %v6054
  %v6056 = vsub.f32 1.0, %v6055
  %v6057 = vmul.f32 %v6054, %v6056
  %v6058 = vadd.f32 %v6054, %v6057
  %vm6059 = vweird.f32 %v6053
  %vm6060 = vweird.f32 %v6054
  %vm6061 = vmor %vm6059, %vm6060
  %v6062 = vsel %vm6061, %v6054, %v6058
  %v6063 = vand.u32 2147483647, %v6053
  %vm6064 = vcmp.eq.f32.partialorder %v6063, 8.507059e+37
  %v6065 = vand.u32 %v6053, 2147483648
  %v6066 = vor.u32 1.1754944e-38, %v6065
  %v6067 = vsel %vm6064, %v6066, %v6062
  %v6068 = vmul.f32 1.0, %v6067
  %v6069 = vtanh.pop %v6029
  %v6070 = vxor.u32 %v6030, 2147483648
  %v6071 = vmul.f32 %v6070, 1.442695
  %v6072 = vpow.pop %v6071
  %v6073 = vadd.f32 %v6072, 1.0
  %v6074 = vrcp.pop %v6073
  %v6075 = vmul.f32 %v6073, %v6074
  %v6076 = vsub.f32 1.0, %v6075
  %v6077 = vmul.f32 %v6074, %v6076
  %v6078 = vadd.f32 %v6074, %v6077
  %vm6079 = vweird.f32 %v6073
  %vm6080 = vweird.f32 %v6074
  %vm6081 = vmor %vm6079, %vm6080
  %v6082 = vsel %vm6081, %v6074, %v6078
  %v6083 = vand.u32 2147483647, %v6073
  %vm6084 = vcmp.eq.f32.partialorder %v6083, 8.507059e+37
  %v6085 = vand.u32 %v6073, 2147483648
  %v6086 = vor.u32 1.1754944e-38, %v6085
  %v6087 = vsel %vm6084, %v6086, %v6082
  %v6088 = vmul.f32 1.0, %v6087
  %v6089 = vmul.f32 %v6068, %v5774
  %v6090 = vmul.f32 %v6049, %v6069
  %v6091 = vadd.f32 %v6089, %v6090
  %v6092 = vtanh.pop %v6091
  %v6093 = vmul.f32 %v6088, %v6092
  %v6094 = vpack.c.bf16 %v6093, %v6093
  %6095 = vst [vmem:[%s6 + $0x38] sm:$0xf] %v6094
  %v6096 = vld [vmem:[#allocation2 + $0xe0] sm:$0xff]
  %v6097 = vld [vmem:[#allocation2 + $0xe8] sm:$0xff]
  %v6098 = vld [vmem:[#allocation2 + $0xf0] sm:$0xff]
  %v6099 = vld [vmem:[#allocation2 + $0xf8] sm:$0xff]
  %v6100 = vld [vmem:[%s2] sm:$0xff]
  %v6101 = vld [vmem:[%s2 + $0x8] sm:$0xff]
  %v6102 = vld [vmem:[%s2 + $0x10] sm:$0xff]
  %v6103 = vld [vmem:[%s2 + $0x18] sm:$0xff]
  %v6104 = vld [vmem:[%s2 + $0x20] sm:$0xff]
  %v6105 = vld [vmem:[%s2 + $0x28] sm:$0xff]
  %v6106 = vld [vmem:[%s2 + $0x30] sm:$0xff]
  %v6107 = vld [vmem:[%s2 + $0x38] sm:$0xff]
  %v6108 = vld [vmem:[%s2 + $0x40] sm:$0xff]
  %v6109 = vld [vmem:[%s2 + $0x48] sm:$0xff]
  %v6110 = vld [vmem:[%s2 + $0x50] sm:$0xff]
  %v6111 = vld [vmem:[%s2 + $0x58] sm:$0xff]
  %v6112 = vld [vmem:[%s2 + $0x60] sm:$0xff]
  %v6113 = vld [vmem:[%s2 + $0x68] sm:$0xff]
  %v6114 = vld [vmem:[%s2 + $0x70] sm:$0xff]
  %v6115 = vld [vmem:[%s2 + $0x78] sm:$0xff]
  %v6116 = vld [vmem:[%s2 + $0x80] sm:$0xff]
  %v6117 = vld [vmem:[%s2 + $0x88] sm:$0xff]
  %v6118 = vld [vmem:[%s2 + $0x90] sm:$0xff]
  %v6119 = vld [vmem:[%s2 + $0x98] sm:$0xff]
  %v6120 = vld [vmem:[%s2 + $0xa0] sm:$0xff]
  %v6121 = vld [vmem:[%s2 + $0xa8] sm:$0xff]
  %v6122 = vld [vmem:[%s2 + $0xb0] sm:$0xff]
  %v6123 = vld [vmem:[%s2 + $0xb8] sm:$0xff]
  %v6124 = vld [vmem:[%s2 + $0xc0] sm:$0xff]
  %v6125 = vld [vmem:[%s2 + $0xc8] sm:$0xff]
  %v6126 = vld [vmem:[%s2 + $0xd0] sm:$0xff]
  %v6127 = vld [vmem:[%s2 + $0xd8] sm:$0xff]
  %v6128 = vld [vmem:[%s2 + $0xe0] sm:$0xff]
  %v6129 = vld [vmem:[%s2 + $0xe8] sm:$0xff]
  %v6130 = vld [vmem:[%s2 + $0xf0] sm:$0xff]
  %v6131 = vld [vmem:[%s2 + $0xf8] sm:$0xff]
  %v6164 = vunpack.c.l.b16 %v6100
  %v6165 = vunpack.c.h.b16 %v6100
  %v6166 = vunpack.c.l.b16 %v6101
  %v6167 = vunpack.c.h.b16 %v6101
  %v6168 = vunpack.c.l.b16 %v6102
  %v6169 = vunpack.c.h.b16 %v6102
  %v6170 = vunpack.c.l.b16 %v6103
  %v6171 = vunpack.c.h.b16 %v6103
  %v6172 = vunpack.c.l.b16 %v6104
  %v6173 = vunpack.c.h.b16 %v6104
  %v6174 = vunpack.c.l.b16 %v6105
  %v6175 = vunpack.c.h.b16 %v6105
  %v6176 = vunpack.c.l.b16 %v6106
  %v6177 = vunpack.c.h.b16 %v6106
  %v6178 = vunpack.c.l.b16 %v6107
  %v6179 = vunpack.c.h.b16 %v6107
  %v6180 = vunpack.c.l.b16 %v6108
  %v6181 = vunpack.c.h.b16 %v6108
  %v6182 = vunpack.c.l.b16 %v6109
  %v6183 = vunpack.c.h.b16 %v6109
  %v6184 = vunpack.c.l.b16 %v6110
  %v6185 = vunpack.c.h.b16 %v6110
  %v6186 = vunpack.c.l.b16 %v6111
  %v6187 = vunpack.c.h.b16 %v6111
  %v6188 = vunpack.c.l.b16 %v6112
  %v6189 = vunpack.c.h.b16 %v6112
  %v6190 = vunpack.c.l.b16 %v6113
  %v6191 = vunpack.c.h.b16 %v6113
  %v6192 = vunpack.c.l.b16 %v6114
  %v6193 = vunpack.c.h.b16 %v6114
  %v6194 = vunpack.c.l.b16 %v6115
  %v6195 = vunpack.c.h.b16 %v6115
  %v6196 = vunpack.c.l.b16 %v6116
  %v6197 = vunpack.c.h.b16 %v6116
  %v6198 = vunpack.c.l.b16 %v6117
  %v6199 = vunpack.c.h.b16 %v6117
  %v6200 = vunpack.c.l.b16 %v6118
  %v6201 = vunpack.c.h.b16 %v6118
  %v6202 = vunpack.c.l.b16 %v6119
  %v6203 = vunpack.c.h.b16 %v6119
  %v6204 = vunpack.c.l.b16 %v6120
  %v6205 = vunpack.c.h.b16 %v6120
  %v6206 = vunpack.c.l.b16 %v6121
  %v6207 = vunpack.c.h.b16 %v6121
  %v6208 = vunpack.c.l.b16 %v6122
  %v6209 = vunpack.c.h.b16 %v6122
  %v6210 = vunpack.c.l.b16 %v6123
  %v6211 = vunpack.c.h.b16 %v6123
  %v6212 = vunpack.c.l.b16 %v6124
  %v6213 = vunpack.c.h.b16 %v6124
  %v6214 = vunpack.c.l.b16 %v6125
  %v6215 = vunpack.c.h.b16 %v6125
  %v6216 = vunpack.c.l.b16 %v6126
  %v6217 = vunpack.c.h.b16 %v6126
  %v6218 = vunpack.c.l.b16 %v6127
  %v6219 = vunpack.c.h.b16 %v6127
  %v6220 = vunpack.c.l.b16 %v6128
  %v6221 = vunpack.c.h.b16 %v6128
  %v6222 = vunpack.c.l.b16 %v6129
  %v6223 = vunpack.c.h.b16 %v6129
  %v6224 = vunpack.c.l.b16 %v6130
  %v6225 = vunpack.c.h.b16 %v6130
  %v6226 = vunpack.c.l.b16 %v6131
  %v6227 = vunpack.c.h.b16 %v6131
  %v6228 = vpack.c.b16 %v6168, %v6164
  %v6229 = vpack.c.b16 %v6169, %v6165
  %v6230 = vpack.c.b16 %v6170, %v6166
  %v6231 = vpack.c.b16 %v6171, %v6167
  %v6232 = vpack.c.b16 %v6176, %v6172
  %v6233 = vpack.c.b16 %v6177, %v6173
  %v6234 = vpack.c.b16 %v6178, %v6174
  %v6235 = vpack.c.b16 %v6179, %v6175
  %v6236 = vpack.c.b16 %v6184, %v6180
  %v6237 = vpack.c.b16 %v6185, %v6181
  %v6238 = vpack.c.b16 %v6186, %v6182
  %v6239 = vpack.c.b16 %v6187, %v6183
  %v6240 = vpack.c.b16 %v6192, %v6188
  %v6241 = vpack.c.b16 %v6193, %v6189
  %v6242 = vpack.c.b16 %v6194, %v6190
  %v6243 = vpack.c.b16 %v6195, %v6191
  %v6244 = vpack.c.b16 %v6200, %v6196
  %v6245 = vpack.c.b16 %v6201, %v6197
  %v6246 = vpack.c.b16 %v6202, %v6198
  %v6247 = vpack.c.b16 %v6203, %v6199
  %v6248 = vpack.c.b16 %v6208, %v6204
  %v6249 = vpack.c.b16 %v6209, %v6205
  %v6250 = vpack.c.b16 %v6210, %v6206
  %v6251 = vpack.c.b16 %v6211, %v6207
  %v6252 = vpack.c.b16 %v6216, %v6212
  %v6253 = vpack.c.b16 %v6217, %v6213
  %v6254 = vpack.c.b16 %v6218, %v6214
  %v6255 = vpack.c.b16 %v6219, %v6215
  %v6256 = vpack.c.b16 %v6224, %v6220
  %v6257 = vpack.c.b16 %v6225, %v6221
  %v6258 = vpack.c.b16 %v6226, %v6222
  %v6259 = vpack.c.b16 %v6227, %v6223
  %6292 = vmatpush.bf16.msra.mxu0 %v6256
  %6293 = vmatpush.bf16.msra.mxu0 %v6252
  %6294 = vmatpush.bf16.msra.mxu0 %v6248
  %6295 = vmatpush.bf16.msra.mxu0 %v6244
  %6296 = vmatpush.bf16.msra.mxu0 %v6240
  %6297 = vmatpush.bf16.msra.mxu0 %v6236
  %6298 = vmatpush.bf16.msra.mxu0 %v6232
  %6299 = vmatpush.bf16.msra.mxu0 %v6228
  %6300 = vmatmul.bf16.gmra.mxu0 %v6094
  %v6301 = vpop.f32.mrf.mxu0
  %v6302 = vadd.f32 0.0, %v6301
  %v6303 = vpop.f32.mrf.mxu0
  %6304 = vdwg.mxu0
  %6305 = vmatpush.bf16.msra.mxu0 %v6257
  %6306 = vmatpush.bf16.msra.mxu0 %v6253
  %6307 = vmatpush.bf16.msra.mxu0 %v6249
  %6308 = vmatpush.bf16.msra.mxu0 %v6245
  %6309 = vmatpush.bf16.msra.mxu0 %v6241
  %6310 = vmatpush.bf16.msra.mxu0 %v6237
  %6311 = vmatpush.bf16.msra.mxu0 %v6233
  %6312 = vmatpush.bf16.msra.mxu0 %v6229
  %6313 = vmatmul.bf16.gmra.mxu0 %v6094
  %v6314 = vpop.f32.mrf.mxu0
  %v6315 = vadd.f32 0.0, %v6314
  %v6316 = vpop.f32.mrf.mxu0
  %6317 = vdwg.mxu0
  %6318 = vmatpush.bf16.msra.mxu0 %v6258
  %6319 = vmatpush.bf16.msra.mxu0 %v6254
  %6320 = vmatpush.bf16.msra.mxu0 %v6250
  %6321 = vmatpush.bf16.msra.mxu0 %v6246
  %6322 = vmatpush.bf16.msra.mxu0 %v6242
  %6323 = vmatpush.bf16.msra.mxu0 %v6238
  %6324 = vmatpush.bf16.msra.mxu0 %v6234
  %6325 = vmatpush.bf16.msra.mxu0 %v6230
  %6326 = vmatmul.bf16.gmra.mxu0 %v6094
  %v6327 = vpop.f32.mrf.mxu0
  %v6328 = vadd.f32 0.0, %v6327
  %v6329 = vpop.f32.mrf.mxu0
  %6330 = vdwg.mxu0
  %6331 = vmatpush.bf16.msra.mxu0 %v6259
  %6332 = vmatpush.bf16.msra.mxu0 %v6255
  %6333 = vmatpush.bf16.msra.mxu0 %v6251
  %6334 = vmatpush.bf16.msra.mxu0 %v6247
  %6335 = vmatpush.bf16.msra.mxu0 %v6243
  %6336 = vmatpush.bf16.msra.mxu0 %v6239
  %6337 = vmatpush.bf16.msra.mxu0 %v6235
  %6338 = vmatpush.bf16.msra.mxu0 %v6231
  %6339 = vmatmul.bf16.gmra.mxu0 %v6094
  %v6340 = vpop.f32.mrf.mxu0
  %v6341 = vadd.f32 0.0, %v6340
  %v6342 = vpop.f32.mrf.mxu0
  %6343 = vdwg.mxu0
  %v6344 = vadd.f32 %v6096, %v6302
  %v6345 = vadd.f32 %v6097, %v6315
  %v6346 = vadd.f32 %v6098, %v6328
  %v6347 = vadd.f32 %v6099, %v6341
  %v6348 = vxor.u32 %v6344, 2147483648
  %v6349 = vmul.f32 %v6348, 1.442695
  %v6350 = vpow.pop %v6349
  %v6351 = vadd.f32 %v6350, 1.0
  %v6352 = vrcp.pop %v6351
  %v6353 = vmul.f32 %v6351, %v6352
  %v6354 = vsub.f32 1.0, %v6353
  %v6355 = vmul.f32 %v6352, %v6354
  %v6356 = vadd.f32 %v6352, %v6355
  %vm6357 = vweird.f32 %v6351
  %vm6358 = vweird.f32 %v6352
  %vm6359 = vmor %vm6357, %vm6358
  %v6360 = vsel %vm6359, %v6352, %v6356
  %v6361 = vand.u32 2147483647, %v6351
  %vm6362 = vcmp.eq.f32.partialorder %v6361, 8.507059e+37
  %v6363 = vand.u32 %v6351, 2147483648
  %v6364 = vor.u32 1.1754944e-38, %v6363
  %v6365 = vsel %vm6362, %v6364, %v6360
  %v6366 = vmul.f32 1.0, %v6365
  %v6367 = vxor.u32 %v6345, 2147483648
  %v6368 = vmul.f32 %v6367, 1.442695
  %v6369 = vpow.pop %v6368
  %v6370 = vadd.f32 %v6369, 1.0
  %v6371 = vrcp.pop %v6370
  %v6372 = vmul.f32 %v6370, %v6371
  %v6373 = vsub.f32 1.0, %v6372
  %v6374 = vmul.f32 %v6371, %v6373
  %v6375 = vadd.f32 %v6371, %v6374
  %vm6376 = vweird.f32 %v6370
  %vm6377 = vweird.f32 %v6371
  %vm6378 = vmor %vm6376, %vm6377
  %v6379 = vsel %vm6378, %v6371, %v6375
  %v6380 = vand.u32 2147483647, %v6370
  %vm6381 = vcmp.eq.f32.partialorder %v6380, 8.507059e+37
  %v6382 = vand.u32 %v6370, 2147483648
  %v6383 = vor.u32 1.1754944e-38, %v6382
  %v6384 = vsel %vm6381, %v6383, %v6379
  %v6385 = vmul.f32 1.0, %v6384
  %v6386 = vtanh.pop %v6346
  %v6387 = vxor.u32 %v6347, 2147483648
  %v6388 = vmul.f32 %v6387, 1.442695
  %v6389 = vpow.pop %v6388
  %v6390 = vadd.f32 %v6389, 1.0
  %v6391 = vrcp.pop %v6390
  %v6392 = vmul.f32 %v6390, %v6391
  %v6393 = vsub.f32 1.0, %v6392
  %v6394 = vmul.f32 %v6391, %v6393
  %v6395 = vadd.f32 %v6391, %v6394
  %vm6396 = vweird.f32 %v6390
  %vm6397 = vweird.f32 %v6391
  %vm6398 = vmor %vm6396, %vm6397
  %v6399 = vsel %vm6398, %v6391, %v6395
  %v6400 = vand.u32 2147483647, %v6390
  %vm6401 = vcmp.eq.f32.partialorder %v6400, 8.507059e+37
  %v6402 = vand.u32 %v6390, 2147483648
  %v6403 = vor.u32 1.1754944e-38, %v6402
  %v6404 = vsel %vm6401, %v6403, %v6399
  %v6405 = vmul.f32 1.0, %v6404
  %v6406 = vmul.f32 %v6385, %v6091
  %v6407 = vmul.f32 %v6366, %v6386
  %v6408 = vadd.f32 %v6406, %v6407
  %v6409 = vtanh.pop %v6408
  %v6410 = vmul.f32 %v6405, %v6409
  %v6411 = vpack.c.bf16 %v6410, %v6410
  %6412 = vst [vmem:[%s6 + $0x3c] sm:$0xf] %v6411
  %v6413 = vpack.c.bf16 %v6408, %v6408
  %v6414 = vpack.c.bf16 %v3504, %v3504
  %v6415 = vld [vmem:[%s4] sm:$0xff]
  %v6416 = vld [vmem:[%s4 + $0x8] sm:$0xff]
  %v6417 = vld [vmem:[%s4 + $0x10] sm:$0xff]
  %v6418 = vld [vmem:[%s4 + $0x18] sm:$0xff]
  %v6419 = vld [vmem:[%s4 + $0x20] sm:$0xff]
  %v6420 = vld [vmem:[%s4 + $0x28] sm:$0xff]
  %v6421 = vld [vmem:[%s4 + $0x30] sm:$0xff]
  %v6422 = vld [vmem:[%s4 + $0x38] sm:$0xff]
  %v6423 = vld [vmem:[%s4 + $0x40] sm:$0xff]
  %v6424 = vld [vmem:[%s4 + $0x48] sm:$0xff]
  %v6425 = vld [vmem:[%s4 + $0x50] sm:$0xff]
  %v6426 = vld [vmem:[%s4 + $0x58] sm:$0xff]
  %v6427 = vld [vmem:[%s4 + $0x60] sm:$0xff]
  %v6428 = vld [vmem:[%s4 + $0x68] sm:$0xff]
  %v6429 = vld [vmem:[%s4 + $0x70] sm:$0xff]
  %v6430 = vld [vmem:[%s4 + $0x78] sm:$0xff]
  %v6431 = vld [vmem:[%s4 + $0x80] sm:$0xff]
  %v6432 = vld [vmem:[%s4 + $0x88] sm:$0xff]
  %v6433 = vld [vmem:[%s4 + $0x90] sm:$0xff]
  %v6434 = vld [vmem:[%s4 + $0x98] sm:$0xff]
  %v6435 = vld [vmem:[%s4 + $0xa0] sm:$0xff]
  %v6436 = vld [vmem:[%s4 + $0xa8] sm:$0xff]
  %v6437 = vld [vmem:[%s4 + $0xb0] sm:$0xff]
  %v6438 = vld [vmem:[%s4 + $0xb8] sm:$0xff]
  %v6439 = vld [vmem:[%s4 + $0xc0] sm:$0xff]
  %v6440 = vld [vmem:[%s4 + $0xc8] sm:$0xff]
  %v6441 = vld [vmem:[%s4 + $0xd0] sm:$0xff]
  %v6442 = vld [vmem:[%s4 + $0xd8] sm:$0xff]
  %v6443 = vld [vmem:[%s4 + $0xe0] sm:$0xff]
  %v6444 = vld [vmem:[%s4 + $0xe8] sm:$0xff]
  %v6445 = vld [vmem:[%s4 + $0xf0] sm:$0xff]
  %v6446 = vld [vmem:[%s4 + $0xf8] sm:$0xff]
  %v6447 = vld [vmem:[%s4 + $0x100] sm:$0xff]
  %v6448 = vld [vmem:[%s4 + $0x108] sm:$0xff]
  %v6449 = vld [vmem:[%s4 + $0x110] sm:$0xff]
  %v6450 = vld [vmem:[%s4 + $0x118] sm:$0xff]
  %v6451 = vld [vmem:[%s4 + $0x120] sm:$0xff]
  %v6452 = vld [vmem:[%s4 + $0x128] sm:$0xff]
  %v6453 = vld [vmem:[%s4 + $0x130] sm:$0xff]
  %v6454 = vld [vmem:[%s4 + $0x138] sm:$0xff]
  %v6455 = vld [vmem:[%s4 + $0x140] sm:$0xff]
  %v6456 = vld [vmem:[%s4 + $0x148] sm:$0xff]
  %v6457 = vld [vmem:[%s4 + $0x150] sm:$0xff]
  %v6458 = vld [vmem:[%s4 + $0x158] sm:$0xff]
  %v6459 = vld [vmem:[%s4 + $0x160] sm:$0xff]
  %v6460 = vld [vmem:[%s4 + $0x168] sm:$0xff]
  %v6461 = vld [vmem:[%s4 + $0x170] sm:$0xff]
  %v6462 = vld [vmem:[%s4 + $0x178] sm:$0xff]
  %v6463 = vld [vmem:[%s4 + $0x180] sm:$0xff]
  %v6464 = vld [vmem:[%s4 + $0x188] sm:$0xff]
  %v6465 = vld [vmem:[%s4 + $0x190] sm:$0xff]
  %v6466 = vld [vmem:[%s4 + $0x198] sm:$0xff]
  %v6467 = vld [vmem:[%s4 + $0x1a0] sm:$0xff]
  %v6468 = vld [vmem:[%s4 + $0x1a8] sm:$0xff]
  %v6469 = vld [vmem:[%s4 + $0x1b0] sm:$0xff]
  %v6470 = vld [vmem:[%s4 + $0x1b8] sm:$0xff]
  %v6471 = vld [vmem:[%s4 + $0x1c0] sm:$0xff]
  %v6472 = vld [vmem:[%s4 + $0x1c8] sm:$0xff]
  %v6473 = vld [vmem:[%s4 + $0x1d0] sm:$0xff]
  %v6474 = vld [vmem:[%s4 + $0x1d8] sm:$0xff]
  %v6475 = vld [vmem:[%s4 + $0x1e0] sm:$0xff]
  %v6476 = vld [vmem:[%s4 + $0x1e8] sm:$0xff]
  %v6477 = vld [vmem:[%s4 + $0x1f0] sm:$0xff]
  %v6478 = vld [vmem:[%s4 + $0x1f8] sm:$0xff]
  %v6543 = vunpack.c.l.b16 %v6415
  %v6544 = vunpack.c.h.b16 %v6415
  %v6545 = vunpack.c.l.b16 %v6416
  %v6546 = vunpack.c.l.b16 %v6417
  %v6547 = vunpack.c.h.b16 %v6417
  %v6548 = vunpack.c.l.b16 %v6418
  %v6549 = vunpack.c.l.b16 %v6419
  %v6550 = vunpack.c.h.b16 %v6419
  %v6551 = vunpack.c.l.b16 %v6420
  %v6552 = vunpack.c.l.b16 %v6421
  %v6553 = vunpack.c.h.b16 %v6421
  %v6554 = vunpack.c.l.b16 %v6422
  %v6555 = vunpack.c.l.b16 %v6423
  %v6556 = vunpack.c.h.b16 %v6423
  %v6557 = vunpack.c.l.b16 %v6424
  %v6558 = vunpack.c.l.b16 %v6425
  %v6559 = vunpack.c.h.b16 %v6425
  %v6560 = vunpack.c.l.b16 %v6426
  %v6561 = vunpack.c.l.b16 %v6427
  %v6562 = vunpack.c.h.b16 %v6427
  %v6563 = vunpack.c.l.b16 %v6428
  %v6564 = vunpack.c.l.b16 %v6429
  %v6565 = vunpack.c.h.b16 %v6429
  %v6566 = vunpack.c.l.b16 %v6430
  %v6567 = vunpack.c.l.b16 %v6431
  %v6568 = vunpack.c.h.b16 %v6431
  %v6569 = vunpack.c.l.b16 %v6432
  %v6570 = vunpack.c.l.b16 %v6433
  %v6571 = vunpack.c.h.b16 %v6433
  %v6572 = vunpack.c.l.b16 %v6434
  %v6573 = vunpack.c.l.b16 %v6435
  %v6574 = vunpack.c.h.b16 %v6435
  %v6575 = vunpack.c.l.b16 %v6436
  %v6576 = vunpack.c.l.b16 %v6437
  %v6577 = vunpack.c.h.b16 %v6437
  %v6578 = vunpack.c.l.b16 %v6438
  %v6579 = vunpack.c.l.b16 %v6439
  %v6580 = vunpack.c.h.b16 %v6439
  %v6581 = vunpack.c.l.b16 %v6440
  %v6582 = vunpack.c.l.b16 %v6441
  %v6583 = vunpack.c.h.b16 %v6441
  %v6584 = vunpack.c.l.b16 %v6442
  %v6585 = vunpack.c.l.b16 %v6443
  %v6586 = vunpack.c.h.b16 %v6443
  %v6587 = vunpack.c.l.b16 %v6444
  %v6588 = vunpack.c.l.b16 %v6445
  %v6589 = vunpack.c.h.b16 %v6445
  %v6590 = vunpack.c.l.b16 %v6446
  %v6591 = vunpack.c.l.b16 %v6447
  %v6592 = vunpack.c.h.b16 %v6447
  %v6593 = vunpack.c.l.b16 %v6448
  %v6594 = vunpack.c.l.b16 %v6449
  %v6595 = vunpack.c.h.b16 %v6449
  %v6596 = vunpack.c.l.b16 %v6450
  %v6597 = vunpack.c.l.b16 %v6451
  %v6598 = vunpack.c.h.b16 %v6451
  %v6599 = vunpack.c.l.b16 %v6452
  %v6600 = vunpack.c.l.b16 %v6453
  %v6601 = vunpack.c.h.b16 %v6453
  %v6602 = vunpack.c.l.b16 %v6454
  %v6603 = vunpack.c.l.b16 %v6455
  %v6604 = vunpack.c.h.b16 %v6455
  %v6605 = vunpack.c.l.b16 %v6456
  %v6606 = vunpack.c.l.b16 %v6457
  %v6607 = vunpack.c.h.b16 %v6457
  %v6608 = vunpack.c.l.b16 %v6458
  %v6609 = vunpack.c.l.b16 %v6459
  %v6610 = vunpack.c.h.b16 %v6459
  %v6611 = vunpack.c.l.b16 %v6460
  %v6612 = vunpack.c.l.b16 %v6461
  %v6613 = vunpack.c.h.b16 %v6461
  %v6614 = vunpack.c.l.b16 %v6462
  %v6615 = vunpack.c.l.b16 %v6463
  %v6616 = vunpack.c.h.b16 %v6463
  %v6617 = vunpack.c.l.b16 %v6464
  %v6618 = vunpack.c.l.b16 %v6465
  %v6619 = vunpack.c.h.b16 %v6465
  %v6620 = vunpack.c.l.b16 %v6466
  %v6621 = vunpack.c.l.b16 %v6467
  %v6622 = vunpack.c.h.b16 %v6467
  %v6623 = vunpack.c.l.b16 %v6468
  %v6624 = vunpack.c.l.b16 %v6469
  %v6625 = vunpack.c.h.b16 %v6469
  %v6626 = vunpack.c.l.b16 %v6470
  %v6627 = vunpack.c.l.b16 %v6471
  %v6628 = vunpack.c.h.b16 %v6471
  %v6629 = vunpack.c.l.b16 %v6472
  %v6630 = vunpack.c.l.b16 %v6473
  %v6631 = vunpack.c.h.b16 %v6473
  %v6632 = vunpack.c.l.b16 %v6474
  %v6633 = vunpack.c.l.b16 %v6475
  %v6634 = vunpack.c.h.b16 %v6475
  %v6635 = vunpack.c.l.b16 %v6476
  %v6636 = vunpack.c.l.b16 %v6477
  %v6637 = vunpack.c.h.b16 %v6477
  %v6638 = vunpack.c.l.b16 %v6478
  %v6639 = vpack.c.b16 %v6546, %v6543
  %v6640 = vpack.c.b16 %v6547, %v6544
  %v6641 = vpack.c.b16 %v6548, %v6545
  %v6642 = vpack.c.b16 %v6552, %v6549
  %v6643 = vpack.c.b16 %v6553, %v6550
  %v6644 = vpack.c.b16 %v6554, %v6551
  %v6645 = vpack.c.b16 %v6558, %v6555
  %v6646 = vpack.c.b16 %v6559, %v6556
  %v6647 = vpack.c.b16 %v6560, %v6557
  %v6648 = vpack.c.b16 %v6564, %v6561
  %v6649 = vpack.c.b16 %v6565, %v6562
  %v6650 = vpack.c.b16 %v6566, %v6563
  %v6651 = vpack.c.b16 %v6570, %v6567
  %v6652 = vpack.c.b16 %v6571, %v6568
  %v6653 = vpack.c.b16 %v6572, %v6569
  %v6654 = vpack.c.b16 %v6576, %v6573
  %v6655 = vpack.c.b16 %v6577, %v6574
  %v6656 = vpack.c.b16 %v6578, %v6575
  %v6657 = vpack.c.b16 %v6582, %v6579
  %v6658 = vpack.c.b16 %v6583, %v6580
  %v6659 = vpack.c.b16 %v6584, %v6581
  %v6660 = vpack.c.b16 %v6588, %v6585
  %v6661 = vpack.c.b16 %v6589, %v6586
  %v6662 = vpack.c.b16 %v6590, %v6587
  %v6663 = vpack.c.b16 %v6594, %v6591
  %v6664 = vpack.c.b16 %v6595, %v6592
  %v6665 = vpack.c.b16 %v6596, %v6593
  %v6666 = vpack.c.b16 %v6600, %v6597
  %v6667 = vpack.c.b16 %v6601, %v6598
  %v6668 = vpack.c.b16 %v6602, %v6599
  %v6669 = vpack.c.b16 %v6606, %v6603
  %v6670 = vpack.c.b16 %v6607, %v6604
  %v6671 = vpack.c.b16 %v6608, %v6605
  %v6672 = vpack.c.b16 %v6612, %v6609
  %v6673 = vpack.c.b16 %v6613, %v6610
  %v6674 = vpack.c.b16 %v6614, %v6611
  %v6675 = vpack.c.b16 %v6618, %v6615
  %v6676 = vpack.c.b16 %v6619, %v6616
  %v6677 = vpack.c.b16 %v6620, %v6617
  %v6678 = vpack.c.b16 %v6624, %v6621
  %v6679 = vpack.c.b16 %v6625, %v6622
  %v6680 = vpack.c.b16 %v6626, %v6623
  %v6681 = vpack.c.b16 %v6630, %v6627
  %v6682 = vpack.c.b16 %v6631, %v6628
  %v6683 = vpack.c.b16 %v6632, %v6629
  %v6684 = vpack.c.b16 %v6636, %v6633
  %v6685 = vpack.c.b16 %v6637, %v6634
  %v6686 = vpack.c.b16 %v6638, %v6635
  %6735 = vmatpush.bf16.msra.mxu0 %v6660
  %6736 = vmatpush.bf16.msra.mxu0 %v6657
  %6737 = vmatpush.bf16.msra.mxu0 %v6654
  %6738 = vmatpush.bf16.msra.mxu0 %v6651
  %6739 = vmatpush.bf16.msra.mxu0 %v6648
  %6740 = vmatpush.bf16.msra.mxu0 %v6645
  %6741 = vmatpush.bf16.msra.mxu0 %v6642
  %6742 = vmatpush.bf16.msra.mxu0 %v6639
  %6743 = vmatmul.bf16.gmra.mxu0 %v6413
  %v6744 = vpop.f32.mrf.mxu0
  %v6745 = vadd.f32 %v3010, %v6744
  %v6746 = vpop.f32.mrf.mxu0
  %6747 = vdwg.mxu0
  %6748 = vmatpush.bf16.msra.mxu0 %v6684
  %6749 = vmatpush.bf16.msra.mxu0 %v6681
  %6750 = vmatpush.bf16.msra.mxu0 %v6678
  %6751 = vmatpush.bf16.msra.mxu0 %v6675
  %6752 = vmatpush.bf16.msra.mxu0 %v6672
  %6753 = vmatpush.bf16.msra.mxu0 %v6669
  %6754 = vmatpush.bf16.msra.mxu0 %v6666
  %6755 = vmatpush.bf16.msra.mxu0 %v6663
  %6756 = vmatmul.bf16.gmra.mxu0 %v6414
  %v6757 = vpop.f32.mrf.mxu0
  %v6758 = vadd.f32 %v6745, %v6757
  %v6759 = vpop.f32.mrf.mxu0
  %6760 = vdwg.mxu0
  %6761 = vmatpush.bf16.msra.mxu0 %v6661
  %6762 = vmatpush.bf16.msra.mxu0 %v6658
  %6763 = vmatpush.bf16.msra.mxu0 %v6655
  %6764 = vmatpush.bf16.msra.mxu0 %v6652
  %6765 = vmatpush.bf16.msra.mxu0 %v6649
  %6766 = vmatpush.bf16.msra.mxu0 %v6646
  %6767 = vmatpush.bf16.msra.mxu0 %v6643
  %6768 = vmatpush.bf16.msra.mxu0 %v6640
  %6769 = vmatmul.bf16.gmra.mxu0 %v6413
  %v6770 = vpop.f32.mrf.mxu0
  %v6771 = vadd.f32 %v3011, %v6770
  %v6772 = vpop.f32.mrf.mxu0
  %6773 = vdwg.mxu0
  %6774 = vmatpush.bf16.msra.mxu0 %v6685
  %6775 = vmatpush.bf16.msra.mxu0 %v6682
  %6776 = vmatpush.bf16.msra.mxu0 %v6679
  %6777 = vmatpush.bf16.msra.mxu0 %v6676
  %6778 = vmatpush.bf16.msra.mxu0 %v6673
  %6779 = vmatpush.bf16.msra.mxu0 %v6670
  %6780 = vmatpush.bf16.msra.mxu0 %v6667
  %6781 = vmatpush.bf16.msra.mxu0 %v6664
  %6782 = vmatmul.bf16.gmra.mxu0 %v6414
  %v6783 = vpop.f32.mrf.mxu0
  %v6784 = vadd.f32 %v6771, %v6783
  %v6785 = vpop.f32.mrf.mxu0
  %6786 = vdwg.mxu0
  %6787 = vmatpush.bf16.msra.mxu0 %v6662
  %6788 = vmatpush.bf16.msra.mxu0 %v6659
  %6789 = vmatpush.bf16.msra.mxu0 %v6656
  %6790 = vmatpush.bf16.msra.mxu0 %v6653
  %6791 = vmatpush.bf16.msra.mxu0 %v6650
  %6792 = vmatpush.bf16.msra.mxu0 %v6647
  %6793 = vmatpush.bf16.msra.mxu0 %v6644
  %6794 = vmatpush.bf16.msra.mxu0 %v6641
  %6795 = vmatmul.bf16.gmra.mxu0 %v6413
  %v6796 = vpop.f32.mrf.mxu0
  %v6797 = vadd.f32 %v3012, %v6796
  %v6798 = vpop.f32.mrf.mxu0
  %6799 = vdwg.mxu0
  %6800 = vmatpush.bf16.msra.mxu0 %v6686
  %6801 = vmatpush.bf16.msra.mxu0 %v6683
  %6802 = vmatpush.bf16.msra.mxu0 %v6680
  %6803 = vmatpush.bf16.msra.mxu0 %v6677
  %6804 = vmatpush.bf16.msra.mxu0 %v6674
  %6805 = vmatpush.bf16.msra.mxu0 %v6671
  %6806 = vmatpush.bf16.msra.mxu0 %v6668
  %6807 = vmatpush.bf16.msra.mxu0 %v6665
  %6808 = vmatmul.bf16.gmra.mxu0 %v6414
  %v6809 = vpop.f32.mrf.mxu0
  %v6810 = vadd.f32 %v6797, %v6809
  %v6811 = vpop.f32.mrf.mxu0
  %6812 = vdwg.mxu0
  %v6813 = vxor.u32 %v6758, 2147483648
  %v6814 = vmul.f32 %v6813, 1.442695
  %v6815 = vpow.pop %v6814
  %v6816 = vadd.f32 %v6815, 1.0
  %v6817 = vrcp.pop %v6816
  %v6818 = vmul.f32 %v6816, %v6817
  %v6819 = vsub.f32 1.0, %v6818
  %v6820 = vmul.f32 %v6817, %v6819
  %v6821 = vadd.f32 %v6817, %v6820
  %vm6822 = vweird.f32 %v6816
  %vm6823 = vweird.f32 %v6817
  %vm6824 = vmor %vm6822, %vm6823
  %v6825 = vsel %vm6824, %v6817, %v6821
  %v6826 = vand.u32 2147483647, %v6816
  %vm6827 = vcmp.eq.f32.partialorder %v6826, 8.507059e+37
  %v6828 = vand.u32 %v6816, 2147483648
  %v6829 = vor.u32 1.1754944e-38, %v6828
  %v6830 = vsel %vm6827, %v6829, %v6825
  %v6831 = vmul.f32 1.0, %v6830
  %v6832 = vxor.u32 %v6784, 2147483648
  %v6833 = vmul.f32 %v6832, 1.442695
  %v6834 = vpow.pop %v6833
  %v6835 = vadd.f32 %v6834, 1.0
  %v6836 = vrcp.pop %v6835
  %v6837 = vmul.f32 %v6835, %v6836
  %v6838 = vsub.f32 1.0, %v6837
  %v6839 = vmul.f32 %v6836, %v6838
  %v6840 = vadd.f32 %v6836, %v6839
  %vm6841 = vweird.f32 %v6835
  %vm6842 = vweird.f32 %v6836
  %vm6843 = vmor %vm6841, %vm6842
  %v6844 = vsel %vm6843, %v6836, %v6840
  %v6845 = vand.u32 2147483647, %v6835
  %vm6846 = vcmp.eq.f32.partialorder %v6845, 8.507059e+37
  %v6847 = vand.u32 %v6835, 2147483648
  %v6848 = vor.u32 1.1754944e-38, %v6847
  %v6849 = vsel %vm6846, %v6848, %v6844
  %v6850 = vmul.f32 1.0, %v6849
  %v6851 = vtanh.pop %v6810
  %v6852 = vmul.f32 %v6850, %v3502
  %v6853 = vmul.f32 %v6831, %v6851
  %v6854 = vadd.f32 %v6852, %v6853
  %v6855 = vld [vmem:[%s0 + $0x40] sm:$0xf]
  %v6856 = vld [vmem:[%s0 + $0x44] sm:$0xf]
  %v6857 = vld [vmem:[%s0 + $0x48] sm:$0xf]
  %v6858 = vld [vmem:[%s0 + $0x4c] sm:$0xf]
  %v6859 = vld [vmem:[%s0 + $0x50] sm:$0xf]
  %v6860 = vld [vmem:[%s0 + $0x54] sm:$0xf]
  %v6861 = vld [vmem:[%s0 + $0x58] sm:$0xf]
  %v6862 = vld [vmem:[%s0 + $0x5c] sm:$0xf]
  %v6863 = vld [vmem:[%s1] sm:$0xff]
  %v6864 = vld [vmem:[%s1 + $0x8] sm:$0xff]
  %v6865 = vld [vmem:[%s1 + $0x10] sm:$0xff]
  %v6866 = vld [vmem:[%s1 + $0x18] sm:$0xff]
  %v6867 = vld [vmem:[%s1 + $0x20] sm:$0xff]
  %v6868 = vld [vmem:[%s1 + $0x28] sm:$0xff]
  %v6869 = vld [vmem:[%s1 + $0x30] sm:$0xff]
  %v6870 = vld [vmem:[%s1 + $0x38] sm:$0xff]
  %v6871 = vld [vmem:[%s1 + $0x40] sm:$0xff]
  %v6872 = vld [vmem:[%s1 + $0x48] sm:$0xff]
  %v6873 = vld [vmem:[%s1 + $0x50] sm:$0xff]
  %v6874 = vld [vmem:[%s1 + $0x58] sm:$0xff]
  %v6875 = vld [vmem:[%s1 + $0x60] sm:$0xff]
  %v6876 = vld [vmem:[%s1 + $0x68] sm:$0xff]
  %v6877 = vld [vmem:[%s1 + $0x70] sm:$0xff]
  %v6878 = vld [vmem:[%s1 + $0x78] sm:$0xff]
  %v6879 = vld [vmem:[%s1 + $0x80] sm:$0xff]
  %v6880 = vld [vmem:[%s1 + $0x88] sm:$0xff]
  %v6881 = vld [vmem:[%s1 + $0x90] sm:$0xff]
  %v6882 = vld [vmem:[%s1 + $0x98] sm:$0xff]
  %v6883 = vld [vmem:[%s1 + $0xa0] sm:$0xff]
  %v6884 = vld [vmem:[%s1 + $0xa8] sm:$0xff]
  %v6885 = vld [vmem:[%s1 + $0xb0] sm:$0xff]
  %v6886 = vld [vmem:[%s1 + $0xb8] sm:$0xff]
  %v6887 = vld [vmem:[%s1 + $0xc0] sm:$0xff]
  %v6888 = vld [vmem:[%s1 + $0xc8] sm:$0xff]
  %v6889 = vld [vmem:[%s1 + $0xd0] sm:$0xff]
  %v6890 = vld [vmem:[%s1 + $0xd8] sm:$0xff]
  %v6891 = vld [vmem:[%s1 + $0xe0] sm:$0xff]
  %v6892 = vld [vmem:[%s1 + $0xe8] sm:$0xff]
  %v6893 = vld [vmem:[%s1 + $0xf0] sm:$0xff]
  %v6894 = vld [vmem:[%s1 + $0xf8] sm:$0xff]
  %v6903 = vunpack.c.l.b16 %v6855
  %v6904 = vunpack.c.l.b16 %v6856
  %v6905 = vunpack.c.l.b16 %v6857
  %v6906 = vunpack.c.l.b16 %v6858
  %v6907 = vunpack.c.l.b16 %v6859
  %v6908 = vunpack.c.l.b16 %v6860
  %v6909 = vunpack.c.l.b16 %v6861
  %v6910 = vunpack.c.l.b16 %v6862
  %v6911 = vpack.c.b16 %v6904, %v6903
  %v6912 = vpack.c.b16 %v6906, %v6905
  %v6913 = vpack.c.b16 %v6908, %v6907
  %v6914 = vpack.c.b16 %v6910, %v6909
  %v6951 = vunpack.c.l.b16 %v6863
  %v6952 = vunpack.c.h.b16 %v6863
  %v6953 = vunpack.c.l.b16 %v6864
  %v6954 = vunpack.c.h.b16 %v6864
  %v6955 = vunpack.c.l.b16 %v6865
  %v6956 = vunpack.c.h.b16 %v6865
  %v6957 = vunpack.c.l.b16 %v6866
  %v6958 = vunpack.c.h.b16 %v6866
  %v6959 = vunpack.c.l.b16 %v6867
  %v6960 = vunpack.c.h.b16 %v6867
  %v6961 = vunpack.c.l.b16 %v6868
  %v6962 = vunpack.c.h.b16 %v6868
  %v6963 = vunpack.c.l.b16 %v6869
  %v6964 = vunpack.c.h.b16 %v6869
  %v6965 = vunpack.c.l.b16 %v6870
  %v6966 = vunpack.c.h.b16 %v6870
  %v6967 = vunpack.c.l.b16 %v6871
  %v6968 = vunpack.c.h.b16 %v6871
  %v6969 = vunpack.c.l.b16 %v6872
  %v6970 = vunpack.c.h.b16 %v6872
  %v6971 = vunpack.c.l.b16 %v6873
  %v6972 = vunpack.c.h.b16 %v6873
  %v6973 = vunpack.c.l.b16 %v6874
  %v6974 = vunpack.c.h.b16 %v6874
  %v6975 = vunpack.c.l.b16 %v6875
  %v6976 = vunpack.c.h.b16 %v6875
  %v6977 = vunpack.c.l.b16 %v6876
  %v6978 = vunpack.c.h.b16 %v6876
  %v6979 = vunpack.c.l.b16 %v6877
  %v6980 = vunpack.c.h.b16 %v6877
  %v6981 = vunpack.c.l.b16 %v6878
  %v6982 = vunpack.c.h.b16 %v6878
  %v6983 = vunpack.c.l.b16 %v6879
  %v6984 = vunpack.c.h.b16 %v6879
  %v6985 = vunpack.c.l.b16 %v6880
  %v6986 = vunpack.c.h.b16 %v6880
  %v6987 = vunpack.c.l.b16 %v6881
  %v6988 = vunpack.c.h.b16 %v6881
  %v6989 = vunpack.c.l.b16 %v6882
  %v6990 = vunpack.c.h.b16 %v6882
  %v6991 = vunpack.c.l.b16 %v6883
  %v6992 = vunpack.c.h.b16 %v6883
  %v6993 = vunpack.c.l.b16 %v6884
  %v6994 = vunpack.c.h.b16 %v6884
  %v6995 = vunpack.c.l.b16 %v6885
  %v6996 = vunpack.c.h.b16 %v6885
  %v6997 = vunpack.c.l.b16 %v6886
  %v6998 = vunpack.c.h.b16 %v6886
  %v6999 = vunpack.c.l.b16 %v6887
  %v7000 = vunpack.c.h.b16 %v6887
  %v7001 = vunpack.c.l.b16 %v6888
  %v7002 = vunpack.c.h.b16 %v6888
  %v7003 = vunpack.c.l.b16 %v6889
  %v7004 = vunpack.c.h.b16 %v6889
  %v7005 = vunpack.c.l.b16 %v6890
  %v7006 = vunpack.c.h.b16 %v6890
  %v7007 = vunpack.c.l.b16 %v6891
  %v7008 = vunpack.c.h.b16 %v6891
  %v7009 = vunpack.c.l.b16 %v6892
  %v7010 = vunpack.c.h.b16 %v6892
  %v7011 = vunpack.c.l.b16 %v6893
  %v7012 = vunpack.c.h.b16 %v6893
  %v7013 = vunpack.c.l.b16 %v6894
  %v7014 = vunpack.c.h.b16 %v6894
  %v7015 = vpack.c.b16 %v6955, %v6951
  %v7016 = vpack.c.b16 %v6956, %v6952
  %v7017 = vpack.c.b16 %v6957, %v6953
  %v7018 = vpack.c.b16 %v6958, %v6954
  %v7019 = vpack.c.b16 %v6963, %v6959
  %v7020 = vpack.c.b16 %v6964, %v6960
  %v7021 = vpack.c.b16 %v6965, %v6961
  %v7022 = vpack.c.b16 %v6966, %v6962
  %v7023 = vpack.c.b16 %v6971, %v6967
  %v7024 = vpack.c.b16 %v6972, %v6968
  %v7025 = vpack.c.b16 %v6973, %v6969
  %v7026 = vpack.c.b16 %v6974, %v6970
  %v7027 = vpack.c.b16 %v6979, %v6975
  %v7028 = vpack.c.b16 %v6980, %v6976
  %v7029 = vpack.c.b16 %v6981, %v6977
  %v7030 = vpack.c.b16 %v6982, %v6978
  %v7031 = vpack.c.b16 %v6987, %v6983
  %v7032 = vpack.c.b16 %v6988, %v6984
  %v7033 = vpack.c.b16 %v6989, %v6985
  %v7034 = vpack.c.b16 %v6990, %v6986
  %v7035 = vpack.c.b16 %v6995, %v6991
  %v7036 = vpack.c.b16 %v6996, %v6992
  %v7037 = vpack.c.b16 %v6997, %v6993
  %v7038 = vpack.c.b16 %v6998, %v6994
  %v7039 = vpack.c.b16 %v7003, %v6999
  %v7040 = vpack.c.b16 %v7004, %v7000
  %v7041 = vpack.c.b16 %v7005, %v7001
  %v7042 = vpack.c.b16 %v7006, %v7002
  %v7043 = vpack.c.b16 %v7011, %v7007
  %v7044 = vpack.c.b16 %v7012, %v7008
  %v7045 = vpack.c.b16 %v7013, %v7009
  %v7046 = vpack.c.b16 %v7014, %v7010
  %7079 = vmatpush.bf16.msra.mxu0 %v7043
  %7080 = vmatpush.bf16.msra.mxu0 %v7039
  %7081 = vmatpush.bf16.msra.mxu0 %v7035
  %7082 = vmatpush.bf16.msra.mxu0 %v7031
  %7083 = vmatpush.bf16.msra.mxu0 %v7027
  %7084 = vmatpush.bf16.msra.mxu0 %v7023
  %7085 = vmatpush.bf16.msra.mxu0 %v7019
  %7086 = vmatpush.bf16.msra.mxu0 %v7015
  %7087 = vmatmul.bf16.gmra.mxu0 %v6911
  %v7088 = vpop.f32.mrf.mxu0
  %v7089 = vadd.f32 %v67, %v7088
  %v7090 = vpop.f32.mrf.mxu0
  %v7091 = vadd.f32 %v67, %v7090
  %7092 = vmatmul.bf16.gmra.mxu0 %v6912
  %v7093 = vpop.f32.mrf.mxu0
  %v7094 = vadd.f32 %v67, %v7093
  %v7095 = vpop.f32.mrf.mxu0
  %v7096 = vadd.f32 %v67, %v7095
  %7097 = vmatmul.bf16.gmra.mxu0 %v6913
  %v7098 = vpop.f32.mrf.mxu0
  %v7099 = vadd.f32 %v67, %v7098
  %v7100 = vpop.f32.mrf.mxu0
  %v7101 = vadd.f32 %v67, %v7100
  %7102 = vmatmul.bf16.gmra.mxu0 %v6914
  %v7103 = vpop.f32.mrf.mxu0
  %v7104 = vadd.f32 %v67, %v7103
  %v7105 = vpop.f32.mrf.mxu0
  %v7106 = vadd.f32 %v67, %v7105
  %7107 = vdwg.mxu0
  %7108 = vmatpush.bf16.msra.mxu0 %v7044
  %7109 = vmatpush.bf16.msra.mxu0 %v7040
  %7110 = vmatpush.bf16.msra.mxu0 %v7036
  %7111 = vmatpush.bf16.msra.mxu0 %v7032
  %7112 = vmatpush.bf16.msra.mxu0 %v7028
  %7113 = vmatpush.bf16.msra.mxu0 %v7024
  %7114 = vmatpush.bf16.msra.mxu0 %v7020
  %7115 = vmatpush.bf16.msra.mxu0 %v7016
  %7116 = vmatmul.bf16.gmra.mxu0 %v6911
  %v7117 = vpop.f32.mrf.mxu0
  %v7118 = vadd.f32 %v68, %v7117
  %v7119 = vpop.f32.mrf.mxu0
  %v7120 = vadd.f32 %v68, %v7119
  %7121 = vmatmul.bf16.gmra.mxu0 %v6912
  %v7122 = vpop.f32.mrf.mxu0
  %v7123 = vadd.f32 %v68, %v7122
  %v7124 = vpop.f32.mrf.mxu0
  %v7125 = vadd.f32 %v68, %v7124
  %7126 = vmatmul.bf16.gmra.mxu0 %v6913
  %v7127 = vpop.f32.mrf.mxu0
  %v7128 = vadd.f32 %v68, %v7127
  %v7129 = vpop.f32.mrf.mxu0
  %v7130 = vadd.f32 %v68, %v7129
  %7131 = vmatmul.bf16.gmra.mxu0 %v6914
  %v7132 = vpop.f32.mrf.mxu0
  %v7133 = vadd.f32 %v68, %v7132
  %v7134 = vpop.f32.mrf.mxu0
  %v7135 = vadd.f32 %v68, %v7134
  %7136 = vdwg.mxu0
  %7137 = vmatpush.bf16.msra.mxu0 %v7045
  %7138 = vmatpush.bf16.msra.mxu0 %v7041
  %7139 = vmatpush.bf16.msra.mxu0 %v7037
  %7140 = vmatpush.bf16.msra.mxu0 %v7033
  %7141 = vmatpush.bf16.msra.mxu0 %v7029
  %7142 = vmatpush.bf16.msra.mxu0 %v7025
  %7143 = vmatpush.bf16.msra.mxu0 %v7021
  %7144 = vmatpush.bf16.msra.mxu0 %v7017
  %7145 = vmatmul.bf16.gmra.mxu0 %v6911
  %v7146 = vpop.f32.mrf.mxu0
  %v7147 = vadd.f32 %v69, %v7146
  %v7148 = vpop.f32.mrf.mxu0
  %v7149 = vadd.f32 %v69, %v7148
  %7150 = vmatmul.bf16.gmra.mxu0 %v6912
  %v7151 = vpop.f32.mrf.mxu0
  %v7152 = vadd.f32 %v69, %v7151
  %v7153 = vpop.f32.mrf.mxu0
  %v7154 = vadd.f32 %v69, %v7153
  %7155 = vmatmul.bf16.gmra.mxu0 %v6913
  %v7156 = vpop.f32.mrf.mxu0
  %v7157 = vadd.f32 %v69, %v7156
  %v7158 = vpop.f32.mrf.mxu0
  %v7159 = vadd.f32 %v69, %v7158
  %7160 = vmatmul.bf16.gmra.mxu0 %v6914
  %v7161 = vpop.f32.mrf.mxu0
  %v7162 = vadd.f32 %v69, %v7161
  %v7163 = vpop.f32.mrf.mxu0
  %v7164 = vadd.f32 %v69, %v7163
  %7165 = vdwg.mxu0
  %7166 = vmatpush.bf16.msra.mxu0 %v7046
  %7167 = vmatpush.bf16.msra.mxu0 %v7042
  %7168 = vmatpush.bf16.msra.mxu0 %v7038
  %7169 = vmatpush.bf16.msra.mxu0 %v7034
  %7170 = vmatpush.bf16.msra.mxu0 %v7030
  %7171 = vmatpush.bf16.msra.mxu0 %v7026
  %7172 = vmatpush.bf16.msra.mxu0 %v7022
  %7173 = vmatpush.bf16.msra.mxu0 %v7018
  %7174 = vmatmul.bf16.gmra.mxu0 %v6911
  %v7175 = vpop.f32.mrf.mxu0
  %v7176 = vadd.f32 %v70, %v7175
  %v7177 = vpop.f32.mrf.mxu0
  %v7178 = vadd.f32 %v70, %v7177
  %7179 = vmatmul.bf16.gmra.mxu0 %v6912
  %v7180 = vpop.f32.mrf.mxu0
  %v7181 = vadd.f32 %v70, %v7180
  %v7182 = vpop.f32.mrf.mxu0
  %v7183 = vadd.f32 %v70, %v7182
  %7184 = vmatmul.bf16.gmra.mxu0 %v6913
  %v7185 = vpop.f32.mrf.mxu0
  %v7186 = vadd.f32 %v70, %v7185
  %v7187 = vpop.f32.mrf.mxu0
  %v7188 = vadd.f32 %v70, %v7187
  %7189 = vmatmul.bf16.gmra.mxu0 %v6914
  %v7190 = vpop.f32.mrf.mxu0
  %v7191 = vadd.f32 %v70, %v7190
  %v7192 = vpop.f32.mrf.mxu0
  %v7193 = vadd.f32 %v70, %v7192
  %7194 = vdwg.mxu0
  %7195 = vst [vmem:[#allocation2] sm:$0xff] %v7089
  %7196 = vst [vmem:[#allocation2 + $0x8] sm:$0xff] %v7118
  %7197 = vst [vmem:[#allocation2 + $0x10] sm:$0xff] %v7147
  %7198 = vst [vmem:[#allocation2 + $0x18] sm:$0xff] %v7176
  %7199 = vst [vmem:[#allocation2 + $0x20] sm:$0xff] %v7091
  %7200 = vst [vmem:[#allocation2 + $0x28] sm:$0xff] %v7120
  %7201 = vst [vmem:[#allocation2 + $0x30] sm:$0xff] %v7149
  %7202 = vst [vmem:[#allocation2 + $0x38] sm:$0xff] %v7178
  %7203 = vst [vmem:[#allocation2 + $0x40] sm:$0xff] %v7094
  %7204 = vst [vmem:[#allocation2 + $0x48] sm:$0xff] %v7123
  %7205 = vst [vmem:[#allocation2 + $0x50] sm:$0xff] %v7152
  %7206 = vst [vmem:[#allocation2 + $0x58] sm:$0xff] %v7181
  %7207 = vst [vmem:[#allocation2 + $0x60] sm:$0xff] %v7096
  %7208 = vst [vmem:[#allocation2 + $0x68] sm:$0xff] %v7125
  %7209 = vst [vmem:[#allocation2 + $0x70] sm:$0xff] %v7154
  %7210 = vst [vmem:[#allocation2 + $0x78] sm:$0xff] %v7183
  %7211 = vst [vmem:[#allocation2 + $0x80] sm:$0xff] %v7099
  %7212 = vst [vmem:[#allocation2 + $0x88] sm:$0xff] %v7128
  %7213 = vst [vmem:[#allocation2 + $0x90] sm:$0xff] %v7157
  %7214 = vst [vmem:[#allocation2 + $0x98] sm:$0xff] %v7186
  %7215 = vst [vmem:[#allocation2 + $0xa0] sm:$0xff] %v7101
  %7216 = vst [vmem:[#allocation2 + $0xa8] sm:$0xff] %v7130
  %7217 = vst [vmem:[#allocation2 + $0xb0] sm:$0xff] %v7159
  %7218 = vst [vmem:[#allocation2 + $0xb8] sm:$0xff] %v7188
  %7219 = vst [vmem:[#allocation2 + $0xc0] sm:$0xff] %v7104
  %7220 = vst [vmem:[#allocation2 + $0xc8] sm:$0xff] %v7133
  %7221 = vst [vmem:[#allocation2 + $0xd0] sm:$0xff] %v7162
  %7222 = vst [vmem:[#allocation2 + $0xd8] sm:$0xff] %v7191
  %7223 = vst [vmem:[#allocation2 + $0xe0] sm:$0xff] %v7106
  %7224 = vst [vmem:[#allocation2 + $0xe8] sm:$0xff] %v7135
  %7225 = vst [vmem:[#allocation2 + $0xf0] sm:$0xff] %v7164
  %7226 = vst [vmem:[#allocation2 + $0xf8] sm:$0xff] %v7193
  %v7227 = vld [vmem:[#allocation2] sm:$0xff]
  %v7228 = vld [vmem:[#allocation2 + $0x8] sm:$0xff]
  %v7229 = vld [vmem:[#allocation2 + $0x10] sm:$0xff]
  %v7230 = vld [vmem:[#allocation2 + $0x18] sm:$0xff]
  %v7231 = vld [vmem:[%s2] sm:$0xff]
  %v7232 = vld [vmem:[%s2 + $0x8] sm:$0xff]
  %v7233 = vld [vmem:[%s2 + $0x10] sm:$0xff]
  %v7234 = vld [vmem:[%s2 + $0x18] sm:$0xff]
  %v7235 = vld [vmem:[%s2 + $0x20] sm:$0xff]
  %v7236 = vld [vmem:[%s2 + $0x28] sm:$0xff]
  %v7237 = vld [vmem:[%s2 + $0x30] sm:$0xff]
  %v7238 = vld [vmem:[%s2 + $0x38] sm:$0xff]
  %v7239 = vld [vmem:[%s2 + $0x40] sm:$0xff]
  %v7240 = vld [vmem:[%s2 + $0x48] sm:$0xff]
  %v7241 = vld [vmem:[%s2 + $0x50] sm:$0xff]
  %v7242 = vld [vmem:[%s2 + $0x58] sm:$0xff]
  %v7243 = vld [vmem:[%s2 + $0x60] sm:$0xff]
  %v7244 = vld [vmem:[%s2 + $0x68] sm:$0xff]
  %v7245 = vld [vmem:[%s2 + $0x70] sm:$0xff]
  %v7246 = vld [vmem:[%s2 + $0x78] sm:$0xff]
  %v7247 = vld [vmem:[%s2 + $0x80] sm:$0xff]
  %v7248 = vld [vmem:[%s2 + $0x88] sm:$0xff]
  %v7249 = vld [vmem:[%s2 + $0x90] sm:$0xff]
  %v7250 = vld [vmem:[%s2 + $0x98] sm:$0xff]
  %v7251 = vld [vmem:[%s2 + $0xa0] sm:$0xff]
  %v7252 = vld [vmem:[%s2 + $0xa8] sm:$0xff]
  %v7253 = vld [vmem:[%s2 + $0xb0] sm:$0xff]
  %v7254 = vld [vmem:[%s2 + $0xb8] sm:$0xff]
  %v7255 = vld [vmem:[%s2 + $0xc0] sm:$0xff]
  %v7256 = vld [vmem:[%s2 + $0xc8] sm:$0xff]
  %v7257 = vld [vmem:[%s2 + $0xd0] sm:$0xff]
  %v7258 = vld [vmem:[%s2 + $0xd8] sm:$0xff]
  %v7259 = vld [vmem:[%s2 + $0xe0] sm:$0xff]
  %v7260 = vld [vmem:[%s2 + $0xe8] sm:$0xff]
  %v7261 = vld [vmem:[%s2 + $0xf0] sm:$0xff]
  %v7262 = vld [vmem:[%s2 + $0xf8] sm:$0xff]
  %v7295 = vunpack.c.l.b16 %v7231
  %v7296 = vunpack.c.h.b16 %v7231
  %v7297 = vunpack.c.l.b16 %v7232
  %v7298 = vunpack.c.h.b16 %v7232
  %v7299 = vunpack.c.l.b16 %v7233
  %v7300 = vunpack.c.h.b16 %v7233
  %v7301 = vunpack.c.l.b16 %v7234
  %v7302 = vunpack.c.h.b16 %v7234
  %v7303 = vunpack.c.l.b16 %v7235
  %v7304 = vunpack.c.h.b16 %v7235
  %v7305 = vunpack.c.l.b16 %v7236
  %v7306 = vunpack.c.h.b16 %v7236
  %v7307 = vunpack.c.l.b16 %v7237
  %v7308 = vunpack.c.h.b16 %v7237
  %v7309 = vunpack.c.l.b16 %v7238
  %v7310 = vunpack.c.h.b16 %v7238
  %v7311 = vunpack.c.l.b16 %v7239
  %v7312 = vunpack.c.h.b16 %v7239
  %v7313 = vunpack.c.l.b16 %v7240
  %v7314 = vunpack.c.h.b16 %v7240
  %v7315 = vunpack.c.l.b16 %v7241
  %v7316 = vunpack.c.h.b16 %v7241
  %v7317 = vunpack.c.l.b16 %v7242
  %v7318 = vunpack.c.h.b16 %v7242
  %v7319 = vunpack.c.l.b16 %v7243
  %v7320 = vunpack.c.h.b16 %v7243
  %v7321 = vunpack.c.l.b16 %v7244
  %v7322 = vunpack.c.h.b16 %v7244
  %v7323 = vunpack.c.l.b16 %v7245
  %v7324 = vunpack.c.h.b16 %v7245
  %v7325 = vunpack.c.l.b16 %v7246
  %v7326 = vunpack.c.h.b16 %v7246
  %v7327 = vunpack.c.l.b16 %v7247
  %v7328 = vunpack.c.h.b16 %v7247
  %v7329 = vunpack.c.l.b16 %v7248
  %v7330 = vunpack.c.h.b16 %v7248
  %v7331 = vunpack.c.l.b16 %v7249
  %v7332 = vunpack.c.h.b16 %v7249
  %v7333 = vunpack.c.l.b16 %v7250
  %v7334 = vunpack.c.h.b16 %v7250
  %v7335 = vunpack.c.l.b16 %v7251
  %v7336 = vunpack.c.h.b16 %v7251
  %v7337 = vunpack.c.l.b16 %v7252
  %v7338 = vunpack.c.h.b16 %v7252
  %v7339 = vunpack.c.l.b16 %v7253
  %v7340 = vunpack.c.h.b16 %v7253
  %v7341 = vunpack.c.l.b16 %v7254
  %v7342 = vunpack.c.h.b16 %v7254
  %v7343 = vunpack.c.l.b16 %v7255
  %v7344 = vunpack.c.h.b16 %v7255
  %v7345 = vunpack.c.l.b16 %v7256
  %v7346 = vunpack.c.h.b16 %v7256
  %v7347 = vunpack.c.l.b16 %v7257
  %v7348 = vunpack.c.h.b16 %v7257
  %v7349 = vunpack.c.l.b16 %v7258
  %v7350 = vunpack.c.h.b16 %v7258
  %v7351 = vunpack.c.l.b16 %v7259
  %v7352 = vunpack.c.h.b16 %v7259
  %v7353 = vunpack.c.l.b16 %v7260
  %v7354 = vunpack.c.h.b16 %v7260
  %v7355 = vunpack.c.l.b16 %v7261
  %v7356 = vunpack.c.h.b16 %v7261
  %v7357 = vunpack.c.l.b16 %v7262
  %v7358 = vunpack.c.h.b16 %v7262
  %v7359 = vpack.c.b16 %v7299, %v7295
  %v7360 = vpack.c.b16 %v7300, %v7296
  %v7361 = vpack.c.b16 %v7301, %v7297
  %v7362 = vpack.c.b16 %v7302, %v7298
  %v7363 = vpack.c.b16 %v7307, %v7303
  %v7364 = vpack.c.b16 %v7308, %v7304
  %v7365 = vpack.c.b16 %v7309, %v7305
  %v7366 = vpack.c.b16 %v7310, %v7306
  %v7367 = vpack.c.b16 %v7315, %v7311
  %v7368 = vpack.c.b16 %v7316, %v7312
  %v7369 = vpack.c.b16 %v7317, %v7313
  %v7370 = vpack.c.b16 %v7318, %v7314
  %v7371 = vpack.c.b16 %v7323, %v7319
  %v7372 = vpack.c.b16 %v7324, %v7320
  %v7373 = vpack.c.b16 %v7325, %v7321
  %v7374 = vpack.c.b16 %v7326, %v7322
  %v7375 = vpack.c.b16 %v7331, %v7327
  %v7376 = vpack.c.b16 %v7332, %v7328
  %v7377 = vpack.c.b16 %v7333, %v7329
  %v7378 = vpack.c.b16 %v7334, %v7330
  %v7379 = vpack.c.b16 %v7339, %v7335
  %v7380 = vpack.c.b16 %v7340, %v7336
  %v7381 = vpack.c.b16 %v7341, %v7337
  %v7382 = vpack.c.b16 %v7342, %v7338
  %v7383 = vpack.c.b16 %v7347, %v7343
  %v7384 = vpack.c.b16 %v7348, %v7344
  %v7385 = vpack.c.b16 %v7349, %v7345
  %v7386 = vpack.c.b16 %v7350, %v7346
  %v7387 = vpack.c.b16 %v7355, %v7351
  %v7388 = vpack.c.b16 %v7356, %v7352
  %v7389 = vpack.c.b16 %v7357, %v7353
  %v7390 = vpack.c.b16 %v7358, %v7354
  %7423 = vmatpush.bf16.msra.mxu0 %v7387
  %7424 = vmatpush.bf16.msra.mxu0 %v7383
  %7425 = vmatpush.bf16.msra.mxu0 %v7379
  %7426 = vmatpush.bf16.msra.mxu0 %v7375
  %7427 = vmatpush.bf16.msra.mxu0 %v7371
  %7428 = vmatpush.bf16.msra.mxu0 %v7367
  %7429 = vmatpush.bf16.msra.mxu0 %v7363
  %7430 = vmatpush.bf16.msra.mxu0 %v7359
  %7431 = vmatmul.bf16.gmra.mxu0 %v6411
  %v7432 = vpop.f32.mrf.mxu0
  %v7433 = vadd.f32 0.0, %v7432
  %v7434 = vpop.f32.mrf.mxu0
  %7435 = vdwg.mxu0
  %7436 = vmatpush.bf16.msra.mxu0 %v7388
  %7437 = vmatpush.bf16.msra.mxu0 %v7384
  %7438 = vmatpush.bf16.msra.mxu0 %v7380
  %7439 = vmatpush.bf16.msra.mxu0 %v7376
  %7440 = vmatpush.bf16.msra.mxu0 %v7372
  %7441 = vmatpush.bf16.msra.mxu0 %v7368
  %7442 = vmatpush.bf16.msra.mxu0 %v7364
  %7443 = vmatpush.bf16.msra.mxu0 %v7360
  %7444 = vmatmul.bf16.gmra.mxu0 %v6411
  %v7445 = vpop.f32.mrf.mxu0
  %v7446 = vadd.f32 0.0, %v7445
  %v7447 = vpop.f32.mrf.mxu0
  %7448 = vdwg.mxu0
  %7449 = vmatpush.bf16.msra.mxu0 %v7389
  %7450 = vmatpush.bf16.msra.mxu0 %v7385
  %7451 = vmatpush.bf16.msra.mxu0 %v7381
  %7452 = vmatpush.bf16.msra.mxu0 %v7377
  %7453 = vmatpush.bf16.msra.mxu0 %v7373
  %7454 = vmatpush.bf16.msra.mxu0 %v7369
  %7455 = vmatpush.bf16.msra.mxu0 %v7365
  %7456 = vmatpush.bf16.msra.mxu0 %v7361
  %7457 = vmatmul.bf16.gmra.mxu0 %v6411
  %v7458 = vpop.f32.mrf.mxu0
  %v7459 = vadd.f32 0.0, %v7458
  %v7460 = vpop.f32.mrf.mxu0
  %7461 = vdwg.mxu0
  %7462 = vmatpush.bf16.msra.mxu0 %v7390
  %7463 = vmatpush.bf16.msra.mxu0 %v7386
  %7464 = vmatpush.bf16.msra.mxu0 %v7382
  %7465 = vmatpush.bf16.msra.mxu0 %v7378
  %7466 = vmatpush.bf16.msra.mxu0 %v7374
  %7467 = vmatpush.bf16.msra.mxu0 %v7370
  %7468 = vmatpush.bf16.msra.mxu0 %v7366
  %7469 = vmatpush.bf16.msra.mxu0 %v7362
  %7470 = vmatmul.bf16.gmra.mxu0 %v6411
  %v7471 = vpop.f32.mrf.mxu0
  %v7472 = vadd.f32 0.0, %v7471
  %v7473 = vpop.f32.mrf.mxu0
  %7474 = vdwg.mxu0
  %v7475 = vadd.f32 %v7227, %v7433
  %v7476 = vadd.f32 %v7228, %v7446
  %v7477 = vadd.f32 %v7229, %v7459
  %v7478 = vadd.f32 %v7230, %v7472
  %v7479 = vxor.u32 %v7475, 2147483648
  %v7480 = vmul.f32 %v7479, 1.442695
  %v7481 = vpow.pop %v7480
  %v7482 = vadd.f32 %v7481, 1.0
  %v7483 = vrcp.pop %v7482
  %v7484 = vmul.f32 %v7482, %v7483
  %v7485 = vsub.f32 1.0, %v7484
  %v7486 = vmul.f32 %v7483, %v7485
  %v7487 = vadd.f32 %v7483, %v7486
  %vm7488 = vweird.f32 %v7482
  %vm7489 = vweird.f32 %v7483
  %vm7490 = vmor %vm7488, %vm7489
  %v7491 = vsel %vm7490, %v7483, %v7487
  %v7492 = vand.u32 2147483647, %v7482
  %vm7493 = vcmp.eq.f32.partialorder %v7492, 8.507059e+37
  %v7494 = vand.u32 %v7482, 2147483648
  %v7495 = vor.u32 1.1754944e-38, %v7494
  %v7496 = vsel %vm7493, %v7495, %v7491
  %v7497 = vmul.f32 1.0, %v7496
  %v7498 = vxor.u32 %v7476, 2147483648
  %v7499 = vmul.f32 %v7498, 1.442695
  %v7500 = vpow.pop %v7499
  %v7501 = vadd.f32 %v7500, 1.0
  %v7502 = vrcp.pop %v7501
  %v7503 = vmul.f32 %v7501, %v7502
  %v7504 = vsub.f32 1.0, %v7503
  %v7505 = vmul.f32 %v7502, %v7504
  %v7506 = vadd.f32 %v7502, %v7505
  %vm7507 = vweird.f32 %v7501
  %vm7508 = vweird.f32 %v7502
  %vm7509 = vmor %vm7507, %vm7508
  %v7510 = vsel %vm7509, %v7502, %v7506
  %v7511 = vand.u32 2147483647, %v7501
  %vm7512 = vcmp.eq.f32.partialorder %v7511, 8.507059e+37
  %v7513 = vand.u32 %v7501, 2147483648
  %v7514 = vor.u32 1.1754944e-38, %v7513
  %v7515 = vsel %vm7512, %v7514, %v7510
  %v7516 = vmul.f32 1.0, %v7515
  %v7517 = vtanh.pop %v7477
  %v7518 = vxor.u32 %v7478, 2147483648
  %v7519 = vmul.f32 %v7518, 1.442695
  %v7520 = vpow.pop %v7519
  %v7521 = vadd.f32 %v7520, 1.0
  %v7522 = vrcp.pop %v7521
  %v7523 = vmul.f32 %v7521, %v7522
  %v7524 = vsub.f32 1.0, %v7523
  %v7525 = vmul.f32 %v7522, %v7524
  %v7526 = vadd.f32 %v7522, %v7525
  %vm7527 = vweird.f32 %v7521
  %vm7528 = vweird.f32 %v7522
  %vm7529 = vmor %vm7527, %vm7528
  %v7530 = vsel %vm7529, %v7522, %v7526
  %v7531 = vand.u32 2147483647, %v7521
  %vm7532 = vcmp.eq.f32.partialorder %v7531, 8.507059e+37
  %v7533 = vand.u32 %v7521, 2147483648
  %v7534 = vor.u32 1.1754944e-38, %v7533
  %v7535 = vsel %vm7532, %v7534, %v7530
  %v7536 = vmul.f32 1.0, %v7535
  %v7537 = vmul.f32 %v7516, %v6854
  %v7538 = vmul.f32 %v7497, %v7517
  %v7539 = vadd.f32 %v7537, %v7538
  %v7540 = vtanh.pop %v7539
  %v7541 = vmul.f32 %v7536, %v7540
  %v7542 = vpack.c.bf16 %v7541, %v7541
  %7543 = vst [vmem:[%s6 + $0x40] sm:$0xf] %v7542
  %v7544 = vld [vmem:[#allocation2 + $0x20] sm:$0xff]
  %v7545 = vld [vmem:[#allocation2 + $0x28] sm:$0xff]
  %v7546 = vld [vmem:[#allocation2 + $0x30] sm:$0xff]
  %v7547 = vld [vmem:[#allocation2 + $0x38] sm:$0xff]
  %v7548 = vld [vmem:[%s2] sm:$0xff]
  %v7549 = vld [vmem:[%s2 + $0x8] sm:$0xff]
  %v7550 = vld [vmem:[%s2 + $0x10] sm:$0xff]
  %v7551 = vld [vmem:[%s2 + $0x18] sm:$0xff]
  %v7552 = vld [vmem:[%s2 + $0x20] sm:$0xff]
  %v7553 = vld [vmem:[%s2 + $0x28] sm:$0xff]
  %v7554 = vld [vmem:[%s2 + $0x30] sm:$0xff]
  %v7555 = vld [vmem:[%s2 + $0x38] sm:$0xff]
  %v7556 = vld [vmem:[%s2 + $0x40] sm:$0xff]
  %v7557 = vld [vmem:[%s2 + $0x48] sm:$0xff]
  %v7558 = vld [vmem:[%s2 + $0x50] sm:$0xff]
  %v7559 = vld [vmem:[%s2 + $0x58] sm:$0xff]
  %v7560 = vld [vmem:[%s2 + $0x60] sm:$0xff]
  %v7561 = vld [vmem:[%s2 + $0x68] sm:$0xff]
  %v7562 = vld [vmem:[%s2 + $0x70] sm:$0xff]
  %v7563 = vld [vmem:[%s2 + $0x78] sm:$0xff]
  %v7564 = vld [vmem:[%s2 + $0x80] sm:$0xff]
  %v7565 = vld [vmem:[%s2 + $0x88] sm:$0xff]
  %v7566 = vld [vmem:[%s2 + $0x90] sm:$0xff]
  %v7567 = vld [vmem:[%s2 + $0x98] sm:$0xff]
  %v7568 = vld [vmem:[%s2 + $0xa0] sm:$0xff]
  %v7569 = vld [vmem:[%s2 + $0xa8] sm:$0xff]
  %v7570 = vld [vmem:[%s2 + $0xb0] sm:$0xff]
  %v7571 = vld [vmem:[%s2 + $0xb8] sm:$0xff]
  %v7572 = vld [vmem:[%s2 + $0xc0] sm:$0xff]
  %v7573 = vld [vmem:[%s2 + $0xc8] sm:$0xff]
  %v7574 = vld [vmem:[%s2 + $0xd0] sm:$0xff]
  %v7575 = vld [vmem:[%s2 + $0xd8] sm:$0xff]
  %v7576 = vld [vmem:[%s2 + $0xe0] sm:$0xff]
  %v7577 = vld [vmem:[%s2 + $0xe8] sm:$0xff]
  %v7578 = vld [vmem:[%s2 + $0xf0] sm:$0xff]
  %v7579 = vld [vmem:[%s2 + $0xf8] sm:$0xff]
  %v7612 = vunpack.c.l.b16 %v7548
  %v7613 = vunpack.c.h.b16 %v7548
  %v7614 = vunpack.c.l.b16 %v7549
  %v7615 = vunpack.c.h.b16 %v7549
  %v7616 = vunpack.c.l.b16 %v7550
  %v7617 = vunpack.c.h.b16 %v7550
  %v7618 = vunpack.c.l.b16 %v7551
  %v7619 = vunpack.c.h.b16 %v7551
  %v7620 = vunpack.c.l.b16 %v7552
  %v7621 = vunpack.c.h.b16 %v7552
  %v7622 = vunpack.c.l.b16 %v7553
  %v7623 = vunpack.c.h.b16 %v7553
  %v7624 = vunpack.c.l.b16 %v7554
  %v7625 = vunpack.c.h.b16 %v7554
  %v7626 = vunpack.c.l.b16 %v7555
  %v7627 = vunpack.c.h.b16 %v7555
  %v7628 = vunpack.c.l.b16 %v7556
  %v7629 = vunpack.c.h.b16 %v7556
  %v7630 = vunpack.c.l.b16 %v7557
  %v7631 = vunpack.c.h.b16 %v7557
  %v7632 = vunpack.c.l.b16 %v7558
  %v7633 = vunpack.c.h.b16 %v7558
  %v7634 = vunpack.c.l.b16 %v7559
  %v7635 = vunpack.c.h.b16 %v7559
  %v7636 = vunpack.c.l.b16 %v7560
  %v7637 = vunpack.c.h.b16 %v7560
  %v7638 = vunpack.c.l.b16 %v7561
  %v7639 = vunpack.c.h.b16 %v7561
  %v7640 = vunpack.c.l.b16 %v7562
  %v7641 = vunpack.c.h.b16 %v7562
  %v7642 = vunpack.c.l.b16 %v7563
  %v7643 = vunpack.c.h.b16 %v7563
  %v7644 = vunpack.c.l.b16 %v7564
  %v7645 = vunpack.c.h.b16 %v7564
  %v7646 = vunpack.c.l.b16 %v7565
  %v7647 = vunpack.c.h.b16 %v7565
  %v7648 = vunpack.c.l.b16 %v7566
  %v7649 = vunpack.c.h.b16 %v7566
  %v7650 = vunpack.c.l.b16 %v7567
  %v7651 = vunpack.c.h.b16 %v7567
  %v7652 = vunpack.c.l.b16 %v7568
  %v7653 = vunpack.c.h.b16 %v7568
  %v7654 = vunpack.c.l.b16 %v7569
  %v7655 = vunpack.c.h.b16 %v7569
  %v7656 = vunpack.c.l.b16 %v7570
  %v7657 = vunpack.c.h.b16 %v7570
  %v7658 = vunpack.c.l.b16 %v7571
  %v7659 = vunpack.c.h.b16 %v7571
  %v7660 = vunpack.c.l.b16 %v7572
  %v7661 = vunpack.c.h.b16 %v7572
  %v7662 = vunpack.c.l.b16 %v7573
  %v7663 = vunpack.c.h.b16 %v7573
  %v7664 = vunpack.c.l.b16 %v7574
  %v7665 = vunpack.c.h.b16 %v7574
  %v7666 = vunpack.c.l.b16 %v7575
  %v7667 = vunpack.c.h.b16 %v7575
  %v7668 = vunpack.c.l.b16 %v7576
  %v7669 = vunpack.c.h.b16 %v7576
  %v7670 = vunpack.c.l.b16 %v7577
  %v7671 = vunpack.c.h.b16 %v7577
  %v7672 = vunpack.c.l.b16 %v7578
  %v7673 = vunpack.c.h.b16 %v7578
  %v7674 = vunpack.c.l.b16 %v7579
  %v7675 = vunpack.c.h.b16 %v7579
  %v7676 = vpack.c.b16 %v7616, %v7612
  %v7677 = vpack.c.b16 %v7617, %v7613
  %v7678 = vpack.c.b16 %v7618, %v7614
  %v7679 = vpack.c.b16 %v7619, %v7615
  %v7680 = vpack.c.b16 %v7624, %v7620
  %v7681 = vpack.c.b16 %v7625, %v7621
  %v7682 = vpack.c.b16 %v7626, %v7622
  %v7683 = vpack.c.b16 %v7627, %v7623
  %v7684 = vpack.c.b16 %v7632, %v7628
  %v7685 = vpack.c.b16 %v7633, %v7629
  %v7686 = vpack.c.b16 %v7634, %v7630
  %v7687 = vpack.c.b16 %v7635, %v7631
  %v7688 = vpack.c.b16 %v7640, %v7636
  %v7689 = vpack.c.b16 %v7641, %v7637
  %v7690 = vpack.c.b16 %v7642, %v7638
  %v7691 = vpack.c.b16 %v7643, %v7639
  %v7692 = vpack.c.b16 %v7648, %v7644
  %v7693 = vpack.c.b16 %v7649, %v7645
  %v7694 = vpack.c.b16 %v7650, %v7646
  %v7695 = vpack.c.b16 %v7651, %v7647
  %v7696 = vpack.c.b16 %v7656, %v7652
  %v7697 = vpack.c.b16 %v7657, %v7653
  %v7698 = vpack.c.b16 %v7658, %v7654
  %v7699 = vpack.c.b16 %v7659, %v7655
  %v7700 = vpack.c.b16 %v7664, %v7660
  %v7701 = vpack.c.b16 %v7665, %v7661
  %v7702 = vpack.c.b16 %v7666, %v7662
  %v7703 = vpack.c.b16 %v7667, %v7663
  %v7704 = vpack.c.b16 %v7672, %v7668
  %v7705 = vpack.c.b16 %v7673, %v7669
  %v7706 = vpack.c.b16 %v7674, %v7670
  %v7707 = vpack.c.b16 %v7675, %v7671
  %7740 = vmatpush.bf16.msra.mxu0 %v7704
  %7741 = vmatpush.bf16.msra.mxu0 %v7700
  %7742 = vmatpush.bf16.msra.mxu0 %v7696
  %7743 = vmatpush.bf16.msra.mxu0 %v7692
  %7744 = vmatpush.bf16.msra.mxu0 %v7688
  %7745 = vmatpush.bf16.msra.mxu0 %v7684
  %7746 = vmatpush.bf16.msra.mxu0 %v7680
  %7747 = vmatpush.bf16.msra.mxu0 %v7676
  %7748 = vmatmul.bf16.gmra.mxu0 %v7542
  %v7749 = vpop.f32.mrf.mxu0
  %v7750 = vadd.f32 0.0, %v7749
  %v7751 = vpop.f32.mrf.mxu0
  %7752 = vdwg.mxu0
  %7753 = vmatpush.bf16.msra.mxu0 %v7705
  %7754 = vmatpush.bf16.msra.mxu0 %v7701
  %7755 = vmatpush.bf16.msra.mxu0 %v7697
  %7756 = vmatpush.bf16.msra.mxu0 %v7693
  %7757 = vmatpush.bf16.msra.mxu0 %v7689
  %7758 = vmatpush.bf16.msra.mxu0 %v7685
  %7759 = vmatpush.bf16.msra.mxu0 %v7681
  %7760 = vmatpush.bf16.msra.mxu0 %v7677
  %7761 = vmatmul.bf16.gmra.mxu0 %v7542
  %v7762 = vpop.f32.mrf.mxu0
  %v7763 = vadd.f32 0.0, %v7762
  %v7764 = vpop.f32.mrf.mxu0
  %7765 = vdwg.mxu0
  %7766 = vmatpush.bf16.msra.mxu0 %v7706
  %7767 = vmatpush.bf16.msra.mxu0 %v7702
  %7768 = vmatpush.bf16.msra.mxu0 %v7698
  %7769 = vmatpush.bf16.msra.mxu0 %v7694
  %7770 = vmatpush.bf16.msra.mxu0 %v7690
  %7771 = vmatpush.bf16.msra.mxu0 %v7686
  %7772 = vmatpush.bf16.msra.mxu0 %v7682
  %7773 = vmatpush.bf16.msra.mxu0 %v7678
  %7774 = vmatmul.bf16.gmra.mxu0 %v7542
  %v7775 = vpop.f32.mrf.mxu0
  %v7776 = vadd.f32 0.0, %v7775
  %v7777 = vpop.f32.mrf.mxu0
  %7778 = vdwg.mxu0
  %7779 = vmatpush.bf16.msra.mxu0 %v7707
  %7780 = vmatpush.bf16.msra.mxu0 %v7703
  %7781 = vmatpush.bf16.msra.mxu0 %v7699
  %7782 = vmatpush.bf16.msra.mxu0 %v7695
  %7783 = vmatpush.bf16.msra.mxu0 %v7691
  %7784 = vmatpush.bf16.msra.mxu0 %v7687
  %7785 = vmatpush.bf16.msra.mxu0 %v7683
  %7786 = vmatpush.bf16.msra.mxu0 %v7679
  %7787 = vmatmul.bf16.gmra.mxu0 %v7542
  %v7788 = vpop.f32.mrf.mxu0
  %v7789 = vadd.f32 0.0, %v7788
  %v7790 = vpop.f32.mrf.mxu0
  %7791 = vdwg.mxu0
  %v7792 = vadd.f32 %v7544, %v7750
  %v7793 = vadd.f32 %v7545, %v7763
  %v7794 = vadd.f32 %v7546, %v7776
  %v7795 = vadd.f32 %v7547, %v7789
  %v7796 = vxor.u32 %v7792, 2147483648
  %v7797 = vmul.f32 %v7796, 1.442695
  %v7798 = vpow.pop %v7797
  %v7799 = vadd.f32 %v7798, 1.0
  %v7800 = vrcp.pop %v7799
  %v7801 = vmul.f32 %v7799, %v7800
  %v7802 = vsub.f32 1.0, %v7801
  %v7803 = vmul.f32 %v7800, %v7802
  %v7804 = vadd.f32 %v7800, %v7803
  %vm7805 = vweird.f32 %v7799
  %vm7806 = vweird.f32 %v7800
  %vm7807 = vmor %vm7805, %vm7806
  %v7808 = vsel %vm7807, %v7800, %v7804
  %v7809 = vand.u32 2147483647, %v7799
  %vm7810 = vcmp.eq.f32.partialorder %v7809, 8.507059e+37
  %v7811 = vand.u32 %v7799, 2147483648
  %v7812 = vor.u32 1.1754944e-38, %v7811
  %v7813 = vsel %vm7810, %v7812, %v7808
  %v7814 = vmul.f32 1.0, %v7813
  %v7815 = vxor.u32 %v7793, 2147483648
  %v7816 = vmul.f32 %v7815, 1.442695
  %v7817 = vpow.pop %v7816
  %v7818 = vadd.f32 %v7817, 1.0
  %v7819 = vrcp.pop %v7818
  %v7820 = vmul.f32 %v7818, %v7819
  %v7821 = vsub.f32 1.0, %v7820
  %v7822 = vmul.f32 %v7819, %v7821
  %v7823 = vadd.f32 %v7819, %v7822
  %vm7824 = vweird.f32 %v7818
  %vm7825 = vweird.f32 %v7819
  %vm7826 = vmor %vm7824, %vm7825
  %v7827 = vsel %vm7826, %v7819, %v7823
  %v7828 = vand.u32 2147483647, %v7818
  %vm7829 = vcmp.eq.f32.partialorder %v7828, 8.507059e+37
  %v7830 = vand.u32 %v7818, 2147483648
  %v7831 = vor.u32 1.1754944e-38, %v7830
  %v7832 = vsel %vm7829, %v7831, %v7827
  %v7833 = vmul.f32 1.0, %v7832
  %v7834 = vtanh.pop %v7794
  %v7835 = vxor.u32 %v7795, 2147483648
  %v7836 = vmul.f32 %v7835, 1.442695
  %v7837 = vpow.pop %v7836
  %v7838 = vadd.f32 %v7837, 1.0
  %v7839 = vrcp.pop %v7838
  %v7840 = vmul.f32 %v7838, %v7839
  %v7841 = vsub.f32 1.0, %v7840
  %v7842 = vmul.f32 %v7839, %v7841
  %v7843 = vadd.f32 %v7839, %v7842
  %vm7844 = vweird.f32 %v7838
  %vm7845 = vweird.f32 %v7839
  %vm7846 = vmor %vm7844, %vm7845
  %v7847 = vsel %vm7846, %v7839, %v7843
  %v7848 = vand.u32 2147483647, %v7838
  %vm7849 = vcmp.eq.f32.partialorder %v7848, 8.507059e+37
  %v7850 = vand.u32 %v7838, 2147483648
  %v7851 = vor.u32 1.1754944e-38, %v7850
  %v7852 = vsel %vm7849, %v7851, %v7847
  %v7853 = vmul.f32 1.0, %v7852
  %v7854 = vmul.f32 %v7833, %v7539
  %v7855 = vmul.f32 %v7814, %v7834
  %v7856 = vadd.f32 %v7854, %v7855
  %v7857 = vtanh.pop %v7856
  %v7858 = vmul.f32 %v7853, %v7857
  %v7859 = vpack.c.bf16 %v7858, %v7858
  %7860 = vst [vmem:[%s6 + $0x44] sm:$0xf] %v7859
  %v7861 = vld [vmem:[#allocation2 + $0x40] sm:$0xff]
  %v7862 = vld [vmem:[#allocation2 + $0x48] sm:$0xff]
  %v7863 = vld [vmem:[#allocation2 + $0x50] sm:$0xff]
  %v7864 = vld [vmem:[#allocation2 + $0x58] sm:$0xff]
  %v7865 = vld [vmem:[%s2] sm:$0xff]
  %v7866 = vld [vmem:[%s2 + $0x8] sm:$0xff]
  %v7867 = vld [vmem:[%s2 + $0x10] sm:$0xff]
  %v7868 = vld [vmem:[%s2 + $0x18] sm:$0xff]
  %v7869 = vld [vmem:[%s2 + $0x20] sm:$0xff]
  %v7870 = vld [vmem:[%s2 + $0x28] sm:$0xff]
  %v7871 = vld [vmem:[%s2 + $0x30] sm:$0xff]
  %v7872 = vld [vmem:[%s2 + $0x38] sm:$0xff]
  %v7873 = vld [vmem:[%s2 + $0x40] sm:$0xff]
  %v7874 = vld [vmem:[%s2 + $0x48] sm:$0xff]
  %v7875 = vld [vmem:[%s2 + $0x50] sm:$0xff]
  %v7876 = vld [vmem:[%s2 + $0x58] sm:$0xff]
  %v7877 = vld [vmem:[%s2 + $0x60] sm:$0xff]
  %v7878 = vld [vmem:[%s2 + $0x68] sm:$0xff]
  %v7879 = vld [vmem:[%s2 + $0x70] sm:$0xff]
  %v7880 = vld [vmem:[%s2 + $0x78] sm:$0xff]
  %v7881 = vld [vmem:[%s2 + $0x80] sm:$0xff]
  %v7882 = vld [vmem:[%s2 + $0x88] sm:$0xff]
  %v7883 = vld [vmem:[%s2 + $0x90] sm:$0xff]
  %v7884 = vld [vmem:[%s2 + $0x98] sm:$0xff]
  %v7885 = vld [vmem:[%s2 + $0xa0] sm:$0xff]
  %v7886 = vld [vmem:[%s2 + $0xa8] sm:$0xff]
  %v7887 = vld [vmem:[%s2 + $0xb0] sm:$0xff]
  %v7888 = vld [vmem:[%s2 + $0xb8] sm:$0xff]
  %v7889 = vld [vmem:[%s2 + $0xc0] sm:$0xff]
  %v7890 = vld [vmem:[%s2 + $0xc8] sm:$0xff]
  %v7891 = vld [vmem:[%s2 + $0xd0] sm:$0xff]
  %v7892 = vld [vmem:[%s2 + $0xd8] sm:$0xff]
  %v7893 = vld [vmem:[%s2 + $0xe0] sm:$0xff]
  %v7894 = vld [vmem:[%s2 + $0xe8] sm:$0xff]
  %v7895 = vld [vmem:[%s2 + $0xf0] sm:$0xff]
  %v7896 = vld [vmem:[%s2 + $0xf8] sm:$0xff]
  %v7929 = vunpack.c.l.b16 %v7865
  %v7930 = vunpack.c.h.b16 %v7865
  %v7931 = vunpack.c.l.b16 %v7866
  %v7932 = vunpack.c.h.b16 %v7866
  %v7933 = vunpack.c.l.b16 %v7867
  %v7934 = vunpack.c.h.b16 %v7867
  %v7935 = vunpack.c.l.b16 %v7868
  %v7936 = vunpack.c.h.b16 %v7868
  %v7937 = vunpack.c.l.b16 %v7869
  %v7938 = vunpack.c.h.b16 %v7869
  %v7939 = vunpack.c.l.b16 %v7870
  %v7940 = vunpack.c.h.b16 %v7870
  %v7941 = vunpack.c.l.b16 %v7871
  %v7942 = vunpack.c.h.b16 %v7871
  %v7943 = vunpack.c.l.b16 %v7872
  %v7944 = vunpack.c.h.b16 %v7872
  %v7945 = vunpack.c.l.b16 %v7873
  %v7946 = vunpack.c.h.b16 %v7873
  %v7947 = vunpack.c.l.b16 %v7874
  %v7948 = vunpack.c.h.b16 %v7874
  %v7949 = vunpack.c.l.b16 %v7875
  %v7950 = vunpack.c.h.b16 %v7875
  %v7951 = vunpack.c.l.b16 %v7876
  %v7952 = vunpack.c.h.b16 %v7876
  %v7953 = vunpack.c.l.b16 %v7877
  %v7954 = vunpack.c.h.b16 %v7877
  %v7955 = vunpack.c.l.b16 %v7878
  %v7956 = vunpack.c.h.b16 %v7878
  %v7957 = vunpack.c.l.b16 %v7879
  %v7958 = vunpack.c.h.b16 %v7879
  %v7959 = vunpack.c.l.b16 %v7880
  %v7960 = vunpack.c.h.b16 %v7880
  %v7961 = vunpack.c.l.b16 %v7881
  %v7962 = vunpack.c.h.b16 %v7881
  %v7963 = vunpack.c.l.b16 %v7882
  %v7964 = vunpack.c.h.b16 %v7882
  %v7965 = vunpack.c.l.b16 %v7883
  %v7966 = vunpack.c.h.b16 %v7883
  %v7967 = vunpack.c.l.b16 %v7884
  %v7968 = vunpack.c.h.b16 %v7884
  %v7969 = vunpack.c.l.b16 %v7885
  %v7970 = vunpack.c.h.b16 %v7885
  %v7971 = vunpack.c.l.b16 %v7886
  %v7972 = vunpack.c.h.b16 %v7886
  %v7973 = vunpack.c.l.b16 %v7887
  %v7974 = vunpack.c.h.b16 %v7887
  %v7975 = vunpack.c.l.b16 %v7888
  %v7976 = vunpack.c.h.b16 %v7888
  %v7977 = vunpack.c.l.b16 %v7889
  %v7978 = vunpack.c.h.b16 %v7889
  %v7979 = vunpack.c.l.b16 %v7890
  %v7980 = vunpack.c.h.b16 %v7890
  %v7981 = vunpack.c.l.b16 %v7891
  %v7982 = vunpack.c.h.b16 %v7891
  %v7983 = vunpack.c.l.b16 %v7892
  %v7984 = vunpack.c.h.b16 %v7892
  %v7985 = vunpack.c.l.b16 %v7893
  %v7986 = vunpack.c.h.b16 %v7893
  %v7987 = vunpack.c.l.b16 %v7894
  %v7988 = vunpack.c.h.b16 %v7894
  %v7989 = vunpack.c.l.b16 %v7895
  %v7990 = vunpack.c.h.b16 %v7895
  %v7991 = vunpack.c.l.b16 %v7896
  %v7992 = vunpack.c.h.b16 %v7896
  %v7993 = vpack.c.b16 %v7933, %v7929
  %v7994 = vpack.c.b16 %v7934, %v7930
  %v7995 = vpack.c.b16 %v7935, %v7931
  %v7996 = vpack.c.b16 %v7936, %v7932
  %v7997 = vpack.c.b16 %v7941, %v7937
  %v7998 = vpack.c.b16 %v7942, %v7938
  %v7999 = vpack.c.b16 %v7943, %v7939
  %v8000 = vpack.c.b16 %v7944, %v7940
  %v8001 = vpack.c.b16 %v7949, %v7945
  %v8002 = vpack.c.b16 %v7950, %v7946
  %v8003 = vpack.c.b16 %v7951, %v7947
  %v8004 = vpack.c.b16 %v7952, %v7948
  %v8005 = vpack.c.b16 %v7957, %v7953
  %v8006 = vpack.c.b16 %v7958, %v7954
  %v8007 = vpack.c.b16 %v7959, %v7955
  %v8008 = vpack.c.b16 %v7960, %v7956
  %v8009 = vpack.c.b16 %v7965, %v7961
  %v8010 = vpack.c.b16 %v7966, %v7962
  %v8011 = vpack.c.b16 %v7967, %v7963
  %v8012 = vpack.c.b16 %v7968, %v7964
  %v8013 = vpack.c.b16 %v7973, %v7969
  %v8014 = vpack.c.b16 %v7974, %v7970
  %v8015 = vpack.c.b16 %v7975, %v7971
  %v8016 = vpack.c.b16 %v7976, %v7972
  %v8017 = vpack.c.b16 %v7981, %v7977
  %v8018 = vpack.c.b16 %v7982, %v7978
  %v8019 = vpack.c.b16 %v7983, %v7979
  %v8020 = vpack.c.b16 %v7984, %v7980
  %v8021 = vpack.c.b16 %v7989, %v7985
  %v8022 = vpack.c.b16 %v7990, %v7986
  %v8023 = vpack.c.b16 %v7991, %v7987
  %v8024 = vpack.c.b16 %v7992, %v7988
  %8057 = vmatpush.bf16.msra.mxu0 %v8021
  %8058 = vmatpush.bf16.msra.mxu0 %v8017
  %8059 = vmatpush.bf16.msra.mxu0 %v8013
  %8060 = vmatpush.bf16.msra.mxu0 %v8009
  %8061 = vmatpush.bf16.msra.mxu0 %v8005
  %8062 = vmatpush.bf16.msra.mxu0 %v8001
  %8063 = vmatpush.bf16.msra.mxu0 %v7997
  %8064 = vmatpush.bf16.msra.mxu0 %v7993
  %8065 = vmatmul.bf16.gmra.mxu0 %v7859
  %v8066 = vpop.f32.mrf.mxu0
  %v8067 = vadd.f32 0.0, %v8066
  %v8068 = vpop.f32.mrf.mxu0
  %8069 = vdwg.mxu0
  %8070 = vmatpush.bf16.msra.mxu0 %v8022
  %8071 = vmatpush.bf16.msra.mxu0 %v8018
  %8072 = vmatpush.bf16.msra.mxu0 %v8014
  %8073 = vmatpush.bf16.msra.mxu0 %v8010
  %8074 = vmatpush.bf16.msra.mxu0 %v8006
  %8075 = vmatpush.bf16.msra.mxu0 %v8002
  %8076 = vmatpush.bf16.msra.mxu0 %v7998
  %8077 = vmatpush.bf16.msra.mxu0 %v7994
  %8078 = vmatmul.bf16.gmra.mxu0 %v7859
  %v8079 = vpop.f32.mrf.mxu0
  %v8080 = vadd.f32 0.0, %v8079
  %v8081 = vpop.f32.mrf.mxu0
  %8082 = vdwg.mxu0
  %8083 = vmatpush.bf16.msra.mxu0 %v8023
  %8084 = vmatpush.bf16.msra.mxu0 %v8019
  %8085 = vmatpush.bf16.msra.mxu0 %v8015
  %8086 = vmatpush.bf16.msra.mxu0 %v8011
  %8087 = vmatpush.bf16.msra.mxu0 %v8007
  %8088 = vmatpush.bf16.msra.mxu0 %v8003
  %8089 = vmatpush.bf16.msra.mxu0 %v7999
  %8090 = vmatpush.bf16.msra.mxu0 %v7995
  %8091 = vmatmul.bf16.gmra.mxu0 %v7859
  %v8092 = vpop.f32.mrf.mxu0
  %v8093 = vadd.f32 0.0, %v8092
  %v8094 = vpop.f32.mrf.mxu0
  %8095 = vdwg.mxu0
  %8096 = vmatpush.bf16.msra.mxu0 %v8024
  %8097 = vmatpush.bf16.msra.mxu0 %v8020
  %8098 = vmatpush.bf16.msra.mxu0 %v8016
  %8099 = vmatpush.bf16.msra.mxu0 %v8012
  %8100 = vmatpush.bf16.msra.mxu0 %v8008
  %8101 = vmatpush.bf16.msra.mxu0 %v8004
  %8102 = vmatpush.bf16.msra.mxu0 %v8000
  %8103 = vmatpush.bf16.msra.mxu0 %v7996
  %8104 = vmatmul.bf16.gmra.mxu0 %v7859
  %v8105 = vpop.f32.mrf.mxu0
  %v8106 = vadd.f32 0.0, %v8105
  %v8107 = vpop.f32.mrf.mxu0
  %8108 = vdwg.mxu0
  %v8109 = vadd.f32 %v7861, %v8067
  %v8110 = vadd.f32 %v7862, %v8080
  %v8111 = vadd.f32 %v7863, %v8093
  %v8112 = vadd.f32 %v7864, %v8106
  %v8113 = vxor.u32 %v8109, 2147483648
  %v8114 = vmul.f32 %v8113, 1.442695
  %v8115 = vpow.pop %v8114
  %v8116 = vadd.f32 %v8115, 1.0
  %v8117 = vrcp.pop %v8116
  %v8118 = vmul.f32 %v8116, %v8117
  %v8119 = vsub.f32 1.0, %v8118
  %v8120 = vmul.f32 %v8117, %v8119
  %v8121 = vadd.f32 %v8117, %v8120
  %vm8122 = vweird.f32 %v8116
  %vm8123 = vweird.f32 %v8117
  %vm8124 = vmor %vm8122, %vm8123
  %v8125 = vsel %vm8124, %v8117, %v8121
  %v8126 = vand.u32 2147483647, %v8116
  %vm8127 = vcmp.eq.f32.partialorder %v8126, 8.507059e+37
  %v8128 = vand.u32 %v8116, 2147483648
  %v8129 = vor.u32 1.1754944e-38, %v8128
  %v8130 = vsel %vm8127, %v8129, %v8125
  %v8131 = vmul.f32 1.0, %v8130
  %v8132 = vxor.u32 %v8110, 2147483648
  %v8133 = vmul.f32 %v8132, 1.442695
  %v8134 = vpow.pop %v8133
  %v8135 = vadd.f32 %v8134, 1.0
  %v8136 = vrcp.pop %v8135
  %v8137 = vmul.f32 %v8135, %v8136
  %v8138 = vsub.f32 1.0, %v8137
  %v8139 = vmul.f32 %v8136, %v8138
  %v8140 = vadd.f32 %v8136, %v8139
  %vm8141 = vweird.f32 %v8135
  %vm8142 = vweird.f32 %v8136
  %vm8143 = vmor %vm8141, %vm8142
  %v8144 = vsel %vm8143, %v8136, %v8140
  %v8145 = vand.u32 2147483647, %v8135
  %vm8146 = vcmp.eq.f32.partialorder %v8145, 8.507059e+37
  %v8147 = vand.u32 %v8135, 2147483648
  %v8148 = vor.u32 1.1754944e-38, %v8147
  %v8149 = vsel %vm8146, %v8148, %v8144
  %v8150 = vmul.f32 1.0, %v8149
  %v8151 = vtanh.pop %v8111
  %v8152 = vxor.u32 %v8112, 2147483648
  %v8153 = vmul.f32 %v8152, 1.442695
  %v8154 = vpow.pop %v8153
  %v8155 = vadd.f32 %v8154, 1.0
  %v8156 = vrcp.pop %v8155
  %v8157 = vmul.f32 %v8155, %v8156
  %v8158 = vsub.f32 1.0, %v8157
  %v8159 = vmul.f32 %v8156, %v8158
  %v8160 = vadd.f32 %v8156, %v8159
  %vm8161 = vweird.f32 %v8155
  %vm8162 = vweird.f32 %v8156
  %vm8163 = vmor %vm8161, %vm8162
  %v8164 = vsel %vm8163, %v8156, %v8160
  %v8165 = vand.u32 2147483647, %v8155
  %vm8166 = vcmp.eq.f32.partialorder %v8165, 8.507059e+37
  %v8167 = vand.u32 %v8155, 2147483648
  %v8168 = vor.u32 1.1754944e-38, %v8167
  %v8169 = vsel %vm8166, %v8168, %v8164
  %v8170 = vmul.f32 1.0, %v8169
  %v8171 = vmul.f32 %v8150, %v7856
  %v8172 = vmul.f32 %v8131, %v8151
  %v8173 = vadd.f32 %v8171, %v8172
  %v8174 = vtanh.pop %v8173
  %v8175 = vmul.f32 %v8170, %v8174
  %v8176 = vpack.c.bf16 %v8175, %v8175
  %8177 = vst [vmem:[%s6 + $0x48] sm:$0xf] %v8176
  %v8178 = vld [vmem:[#allocation2 + $0x60] sm:$0xff]
  %v8179 = vld [vmem:[#allocation2 + $0x68] sm:$0xff]
  %v8180 = vld [vmem:[#allocation2 + $0x70] sm:$0xff]
  %v8181 = vld [vmem:[#allocation2 + $0x78] sm:$0xff]
  %v8182 = vld [vmem:[%s2] sm:$0xff]
  %v8183 = vld [vmem:[%s2 + $0x8] sm:$0xff]
  %v8184 = vld [vmem:[%s2 + $0x10] sm:$0xff]
  %v8185 = vld [vmem:[%s2 + $0x18] sm:$0xff]
  %v8186 = vld [vmem:[%s2 + $0x20] sm:$0xff]
  %v8187 = vld [vmem:[%s2 + $0x28] sm:$0xff]
  %v8188 = vld [vmem:[%s2 + $0x30] sm:$0xff]
  %v8189 = vld [vmem:[%s2 + $0x38] sm:$0xff]
  %v8190 = vld [vmem:[%s2 + $0x40] sm:$0xff]
  %v8191 = vld [vmem:[%s2 + $0x48] sm:$0xff]
  %v8192 = vld [vmem:[%s2 + $0x50] sm:$0xff]
  %v8193 = vld [vmem:[%s2 + $0x58] sm:$0xff]
  %v8194 = vld [vmem:[%s2 + $0x60] sm:$0xff]
  %v8195 = vld [vmem:[%s2 + $0x68] sm:$0xff]
  %v8196 = vld [vmem:[%s2 + $0x70] sm:$0xff]
  %v8197 = vld [vmem:[%s2 + $0x78] sm:$0xff]
  %v8198 = vld [vmem:[%s2 + $0x80] sm:$0xff]
  %v8199 = vld [vmem:[%s2 + $0x88] sm:$0xff]
  %v8200 = vld [vmem:[%s2 + $0x90] sm:$0xff]
  %v8201 = vld [vmem:[%s2 + $0x98] sm:$0xff]
  %v8202 = vld [vmem:[%s2 + $0xa0] sm:$0xff]
  %v8203 = vld [vmem:[%s2 + $0xa8] sm:$0xff]
  %v8204 = vld [vmem:[%s2 + $0xb0] sm:$0xff]
  %v8205 = vld [vmem:[%s2 + $0xb8] sm:$0xff]
  %v8206 = vld [vmem:[%s2 + $0xc0] sm:$0xff]
  %v8207 = vld [vmem:[%s2 + $0xc8] sm:$0xff]
  %v8208 = vld [vmem:[%s2 + $0xd0] sm:$0xff]
  %v8209 = vld [vmem:[%s2 + $0xd8] sm:$0xff]
  %v8210 = vld [vmem:[%s2 + $0xe0] sm:$0xff]
  %v8211 = vld [vmem:[%s2 + $0xe8] sm:$0xff]
  %v8212 = vld [vmem:[%s2 + $0xf0] sm:$0xff]
  %v8213 = vld [vmem:[%s2 + $0xf8] sm:$0xff]
  %v8246 = vunpack.c.l.b16 %v8182
  %v8247 = vunpack.c.h.b16 %v8182
  %v8248 = vunpack.c.l.b16 %v8183
  %v8249 = vunpack.c.h.b16 %v8183
  %v8250 = vunpack.c.l.b16 %v8184
  %v8251 = vunpack.c.h.b16 %v8184
  %v8252 = vunpack.c.l.b16 %v8185
  %v8253 = vunpack.c.h.b16 %v8185
  %v8254 = vunpack.c.l.b16 %v8186
  %v8255 = vunpack.c.h.b16 %v8186
  %v8256 = vunpack.c.l.b16 %v8187
  %v8257 = vunpack.c.h.b16 %v8187
  %v8258 = vunpack.c.l.b16 %v8188
  %v8259 = vunpack.c.h.b16 %v8188
  %v8260 = vunpack.c.l.b16 %v8189
  %v8261 = vunpack.c.h.b16 %v8189
  %v8262 = vunpack.c.l.b16 %v8190
  %v8263 = vunpack.c.h.b16 %v8190
  %v8264 = vunpack.c.l.b16 %v8191
  %v8265 = vunpack.c.h.b16 %v8191
  %v8266 = vunpack.c.l.b16 %v8192
  %v8267 = vunpack.c.h.b16 %v8192
  %v8268 = vunpack.c.l.b16 %v8193
  %v8269 = vunpack.c.h.b16 %v8193
  %v8270 = vunpack.c.l.b16 %v8194
  %v8271 = vunpack.c.h.b16 %v8194
  %v8272 = vunpack.c.l.b16 %v8195
  %v8273 = vunpack.c.h.b16 %v8195
  %v8274 = vunpack.c.l.b16 %v8196
  %v8275 = vunpack.c.h.b16 %v8196
  %v8276 = vunpack.c.l.b16 %v8197
  %v8277 = vunpack.c.h.b16 %v8197
  %v8278 = vunpack.c.l.b16 %v8198
  %v8279 = vunpack.c.h.b16 %v8198
  %v8280 = vunpack.c.l.b16 %v8199
  %v8281 = vunpack.c.h.b16 %v8199
  %v8282 = vunpack.c.l.b16 %v8200
  %v8283 = vunpack.c.h.b16 %v8200
  %v8284 = vunpack.c.l.b16 %v8201
  %v8285 = vunpack.c.h.b16 %v8201
  %v8286 = vunpack.c.l.b16 %v8202
  %v8287 = vunpack.c.h.b16 %v8202
  %v8288 = vunpack.c.l.b16 %v8203
  %v8289 = vunpack.c.h.b16 %v8203
  %v8290 = vunpack.c.l.b16 %v8204
  %v8291 = vunpack.c.h.b16 %v8204
  %v8292 = vunpack.c.l.b16 %v8205
  %v8293 = vunpack.c.h.b16 %v8205
  %v8294 = vunpack.c.l.b16 %v8206
  %v8295 = vunpack.c.h.b16 %v8206
  %v8296 = vunpack.c.l.b16 %v8207
  %v8297 = vunpack.c.h.b16 %v8207
  %v8298 = vunpack.c.l.b16 %v8208
  %v8299 = vunpack.c.h.b16 %v8208
  %v8300 = vunpack.c.l.b16 %v8209
  %v8301 = vunpack.c.h.b16 %v8209
  %v8302 = vunpack.c.l.b16 %v8210
  %v8303 = vunpack.c.h.b16 %v8210
  %v8304 = vunpack.c.l.b16 %v8211
  %v8305 = vunpack.c.h.b16 %v8211
  %v8306 = vunpack.c.l.b16 %v8212
  %v8307 = vunpack.c.h.b16 %v8212
  %v8308 = vunpack.c.l.b16 %v8213
  %v8309 = vunpack.c.h.b16 %v8213
  %v8310 = vpack.c.b16 %v8250, %v8246
  %v8311 = vpack.c.b16 %v8251, %v8247
  %v8312 = vpack.c.b16 %v8252, %v8248
  %v8313 = vpack.c.b16 %v8253, %v8249
  %v8314 = vpack.c.b16 %v8258, %v8254
  %v8315 = vpack.c.b16 %v8259, %v8255
  %v8316 = vpack.c.b16 %v8260, %v8256
  %v8317 = vpack.c.b16 %v8261, %v8257
  %v8318 = vpack.c.b16 %v8266, %v8262
  %v8319 = vpack.c.b16 %v8267, %v8263
  %v8320 = vpack.c.b16 %v8268, %v8264
  %v8321 = vpack.c.b16 %v8269, %v8265
  %v8322 = vpack.c.b16 %v8274, %v8270
  %v8323 = vpack.c.b16 %v8275, %v8271
  %v8324 = vpack.c.b16 %v8276, %v8272
  %v8325 = vpack.c.b16 %v8277, %v8273
  %v8326 = vpack.c.b16 %v8282, %v8278
  %v8327 = vpack.c.b16 %v8283, %v8279
  %v8328 = vpack.c.b16 %v8284, %v8280
  %v8329 = vpack.c.b16 %v8285, %v8281
  %v8330 = vpack.c.b16 %v8290, %v8286
  %v8331 = vpack.c.b16 %v8291, %v8287
  %v8332 = vpack.c.b16 %v8292, %v8288
  %v8333 = vpack.c.b16 %v8293, %v8289
  %v8334 = vpack.c.b16 %v8298, %v8294
  %v8335 = vpack.c.b16 %v8299, %v8295
  %v8336 = vpack.c.b16 %v8300, %v8296
  %v8337 = vpack.c.b16 %v8301, %v8297
  %v8338 = vpack.c.b16 %v8306, %v8302
  %v8339 = vpack.c.b16 %v8307, %v8303
  %v8340 = vpack.c.b16 %v8308, %v8304
  %v8341 = vpack.c.b16 %v8309, %v8305
  %8374 = vmatpush.bf16.msra.mxu0 %v8338
  %8375 = vmatpush.bf16.msra.mxu0 %v8334
  %8376 = vmatpush.bf16.msra.mxu0 %v8330
  %8377 = vmatpush.bf16.msra.mxu0 %v8326
  %8378 = vmatpush.bf16.msra.mxu0 %v8322
  %8379 = vmatpush.bf16.msra.mxu0 %v8318
  %8380 = vmatpush.bf16.msra.mxu0 %v8314
  %8381 = vmatpush.bf16.msra.mxu0 %v8310
  %8382 = vmatmul.bf16.gmra.mxu0 %v8176
  %v8383 = vpop.f32.mrf.mxu0
  %v8384 = vadd.f32 0.0, %v8383
  %v8385 = vpop.f32.mrf.mxu0
  %8386 = vdwg.mxu0
  %8387 = vmatpush.bf16.msra.mxu0 %v8339
  %8388 = vmatpush.bf16.msra.mxu0 %v8335
  %8389 = vmatpush.bf16.msra.mxu0 %v8331
  %8390 = vmatpush.bf16.msra.mxu0 %v8327
  %8391 = vmatpush.bf16.msra.mxu0 %v8323
  %8392 = vmatpush.bf16.msra.mxu0 %v8319
  %8393 = vmatpush.bf16.msra.mxu0 %v8315
  %8394 = vmatpush.bf16.msra.mxu0 %v8311
  %8395 = vmatmul.bf16.gmra.mxu0 %v8176
  %v8396 = vpop.f32.mrf.mxu0
  %v8397 = vadd.f32 0.0, %v8396
  %v8398 = vpop.f32.mrf.mxu0
  %8399 = vdwg.mxu0
  %8400 = vmatpush.bf16.msra.mxu0 %v8340
  %8401 = vmatpush.bf16.msra.mxu0 %v8336
  %8402 = vmatpush.bf16.msra.mxu0 %v8332
  %8403 = vmatpush.bf16.msra.mxu0 %v8328
  %8404 = vmatpush.bf16.msra.mxu0 %v8324
  %8405 = vmatpush.bf16.msra.mxu0 %v8320
  %8406 = vmatpush.bf16.msra.mxu0 %v8316
  %8407 = vmatpush.bf16.msra.mxu0 %v8312
  %8408 = vmatmul.bf16.gmra.mxu0 %v8176
  %v8409 = vpop.f32.mrf.mxu0
  %v8410 = vadd.f32 0.0, %v8409
  %v8411 = vpop.f32.mrf.mxu0
  %8412 = vdwg.mxu0
  %8413 = vmatpush.bf16.msra.mxu0 %v8341
  %8414 = vmatpush.bf16.msra.mxu0 %v8337
  %8415 = vmatpush.bf16.msra.mxu0 %v8333
  %8416 = vmatpush.bf16.msra.mxu0 %v8329
  %8417 = vmatpush.bf16.msra.mxu0 %v8325
  %8418 = vmatpush.bf16.msra.mxu0 %v8321
  %8419 = vmatpush.bf16.msra.mxu0 %v8317
  %8420 = vmatpush.bf16.msra.mxu0 %v8313
  %8421 = vmatmul.bf16.gmra.mxu0 %v8176
  %v8422 = vpop.f32.mrf.mxu0
  %v8423 = vadd.f32 0.0, %v8422
  %v8424 = vpop.f32.mrf.mxu0
  %8425 = vdwg.mxu0
  %v8426 = vadd.f32 %v8178, %v8384
  %v8427 = vadd.f32 %v8179, %v8397
  %v8428 = vadd.f32 %v8180, %v8410
  %v8429 = vadd.f32 %v8181, %v8423
  %v8430 = vxor.u32 %v8426, 2147483648
  %v8431 = vmul.f32 %v8430, 1.442695
  %v8432 = vpow.pop %v8431
  %v8433 = vadd.f32 %v8432, 1.0
  %v8434 = vrcp.pop %v8433
  %v8435 = vmul.f32 %v8433, %v8434
  %v8436 = vsub.f32 1.0, %v8435
  %v8437 = vmul.f32 %v8434, %v8436
  %v8438 = vadd.f32 %v8434, %v8437
  %vm8439 = vweird.f32 %v8433
  %vm8440 = vweird.f32 %v8434
  %vm8441 = vmor %vm8439, %vm8440
  %v8442 = vsel %vm8441, %v8434, %v8438
  %v8443 = vand.u32 2147483647, %v8433
  %vm8444 = vcmp.eq.f32.partialorder %v8443, 8.507059e+37
  %v8445 = vand.u32 %v8433, 2147483648
  %v8446 = vor.u32 1.1754944e-38, %v8445
  %v8447 = vsel %vm8444, %v8446, %v8442
  %v8448 = vmul.f32 1.0, %v8447
  %v8449 = vxor.u32 %v8427, 2147483648
  %v8450 = vmul.f32 %v8449, 1.442695
  %v8451 = vpow.pop %v8450
  %v8452 = vadd.f32 %v8451, 1.0
  %v8453 = vrcp.pop %v8452
  %v8454 = vmul.f32 %v8452, %v8453
  %v8455 = vsub.f32 1.0, %v8454
  %v8456 = vmul.f32 %v8453, %v8455
  %v8457 = vadd.f32 %v8453, %v8456
  %vm8458 = vweird.f32 %v8452
  %vm8459 = vweird.f32 %v8453
  %vm8460 = vmor %vm8458, %vm8459
  %v8461 = vsel %vm8460, %v8453, %v8457
  %v8462 = vand.u32 2147483647, %v8452
  %vm8463 = vcmp.eq.f32.partialorder %v8462, 8.507059e+37
  %v8464 = vand.u32 %v8452, 2147483648
  %v8465 = vor.u32 1.1754944e-38, %v8464
  %v8466 = vsel %vm8463, %v8465, %v8461
  %v8467 = vmul.f32 1.0, %v8466
  %v8468 = vtanh.pop %v8428
  %v8469 = vxor.u32 %v8429, 2147483648
  %v8470 = vmul.f32 %v8469, 1.442695
  %v8471 = vpow.pop %v8470
  %v8472 = vadd.f32 %v8471, 1.0
  %v8473 = vrcp.pop %v8472
  %v8474 = vmul.f32 %v8472, %v8473
  %v8475 = vsub.f32 1.0, %v8474
  %v8476 = vmul.f32 %v8473, %v8475
  %v8477 = vadd.f32 %v8473, %v8476
  %vm8478 = vweird.f32 %v8472
  %vm8479 = vweird.f32 %v8473
  %vm8480 = vmor %vm8478, %vm8479
  %v8481 = vsel %vm8480, %v8473, %v8477
  %v8482 = vand.u32 2147483647, %v8472
  %vm8483 = vcmp.eq.f32.partialorder %v8482, 8.507059e+37
  %v8484 = vand.u32 %v8472, 2147483648
  %v8485 = vor.u32 1.1754944e-38, %v8484
  %v8486 = vsel %vm8483, %v8485, %v8481
  %v8487 = vmul.f32 1.0, %v8486
  %v8488 = vmul.f32 %v8467, %v8173
  %v8489 = vmul.f32 %v8448, %v8468
  %v8490 = vadd.f32 %v8488, %v8489
  %v8491 = vtanh.pop %v8490
  %v8492 = vmul.f32 %v8487, %v8491
  %v8493 = vpack.c.bf16 %v8492, %v8492
  %8494 = vst [vmem:[%s6 + $0x4c] sm:$0xf] %v8493
  %v8495 = vld [vmem:[#allocation2 + $0x80] sm:$0xff]
  %v8496 = vld [vmem:[#allocation2 + $0x88] sm:$0xff]
  %v8497 = vld [vmem:[#allocation2 + $0x90] sm:$0xff]
  %v8498 = vld [vmem:[#allocation2 + $0x98] sm:$0xff]
  %v8499 = vld [vmem:[%s2] sm:$0xff]
  %v8500 = vld [vmem:[%s2 + $0x8] sm:$0xff]
  %v8501 = vld [vmem:[%s2 + $0x10] sm:$0xff]
  %v8502 = vld [vmem:[%s2 + $0x18] sm:$0xff]
  %v8503 = vld [vmem:[%s2 + $0x20] sm:$0xff]
  %v8504 = vld [vmem:[%s2 + $0x28] sm:$0xff]
  %v8505 = vld [vmem:[%s2 + $0x30] sm:$0xff]
  %v8506 = vld [vmem:[%s2 + $0x38] sm:$0xff]
  %v8507 = vld [vmem:[%s2 + $0x40] sm:$0xff]
  %v8508 = vld [vmem:[%s2 + $0x48] sm:$0xff]
  %v8509 = vld [vmem:[%s2 + $0x50] sm:$0xff]
  %v8510 = vld [vmem:[%s2 + $0x58] sm:$0xff]
  %v8511 = vld [vmem:[%s2 + $0x60] sm:$0xff]
  %v8512 = vld [vmem:[%s2 + $0x68] sm:$0xff]
  %v8513 = vld [vmem:[%s2 + $0x70] sm:$0xff]
  %v8514 = vld [vmem:[%s2 + $0x78] sm:$0xff]
  %v8515 = vld [vmem:[%s2 + $0x80] sm:$0xff]
  %v8516 = vld [vmem:[%s2 + $0x88] sm:$0xff]
  %v8517 = vld [vmem:[%s2 + $0x90] sm:$0xff]
  %v8518 = vld [vmem:[%s2 + $0x98] sm:$0xff]
  %v8519 = vld [vmem:[%s2 + $0xa0] sm:$0xff]
  %v8520 = vld [vmem:[%s2 + $0xa8] sm:$0xff]
  %v8521 = vld [vmem:[%s2 + $0xb0] sm:$0xff]
  %v8522 = vld [vmem:[%s2 + $0xb8] sm:$0xff]
  %v8523 = vld [vmem:[%s2 + $0xc0] sm:$0xff]
  %v8524 = vld [vmem:[%s2 + $0xc8] sm:$0xff]
  %v8525 = vld [vmem:[%s2 + $0xd0] sm:$0xff]
  %v8526 = vld [vmem:[%s2 + $0xd8] sm:$0xff]
  %v8527 = vld [vmem:[%s2 + $0xe0] sm:$0xff]
  %v8528 = vld [vmem:[%s2 + $0xe8] sm:$0xff]
  %v8529 = vld [vmem:[%s2 + $0xf0] sm:$0xff]
  %v8530 = vld [vmem:[%s2 + $0xf8] sm:$0xff]
  %v8563 = vunpack.c.l.b16 %v8499
  %v8564 = vunpack.c.h.b16 %v8499
  %v8565 = vunpack.c.l.b16 %v8500
  %v8566 = vunpack.c.h.b16 %v8500
  %v8567 = vunpack.c.l.b16 %v8501
  %v8568 = vunpack.c.h.b16 %v8501
  %v8569 = vunpack.c.l.b16 %v8502
  %v8570 = vunpack.c.h.b16 %v8502
  %v8571 = vunpack.c.l.b16 %v8503
  %v8572 = vunpack.c.h.b16 %v8503
  %v8573 = vunpack.c.l.b16 %v8504
  %v8574 = vunpack.c.h.b16 %v8504
  %v8575 = vunpack.c.l.b16 %v8505
  %v8576 = vunpack.c.h.b16 %v8505
  %v8577 = vunpack.c.l.b16 %v8506
  %v8578 = vunpack.c.h.b16 %v8506
  %v8579 = vunpack.c.l.b16 %v8507
  %v8580 = vunpack.c.h.b16 %v8507
  %v8581 = vunpack.c.l.b16 %v8508
  %v8582 = vunpack.c.h.b16 %v8508
  %v8583 = vunpack.c.l.b16 %v8509
  %v8584 = vunpack.c.h.b16 %v8509
  %v8585 = vunpack.c.l.b16 %v8510
  %v8586 = vunpack.c.h.b16 %v8510
  %v8587 = vunpack.c.l.b16 %v8511
  %v8588 = vunpack.c.h.b16 %v8511
  %v8589 = vunpack.c.l.b16 %v8512
  %v8590 = vunpack.c.h.b16 %v8512
  %v8591 = vunpack.c.l.b16 %v8513
  %v8592 = vunpack.c.h.b16 %v8513
  %v8593 = vunpack.c.l.b16 %v8514
  %v8594 = vunpack.c.h.b16 %v8514
  %v8595 = vunpack.c.l.b16 %v8515
  %v8596 = vunpack.c.h.b16 %v8515
  %v8597 = vunpack.c.l.b16 %v8516
  %v8598 = vunpack.c.h.b16 %v8516
  %v8599 = vunpack.c.l.b16 %v8517
  %v8600 = vunpack.c.h.b16 %v8517
  %v8601 = vunpack.c.l.b16 %v8518
  %v8602 = vunpack.c.h.b16 %v8518
  %v8603 = vunpack.c.l.b16 %v8519
  %v8604 = vunpack.c.h.b16 %v8519
  %v8605 = vunpack.c.l.b16 %v8520
  %v8606 = vunpack.c.h.b16 %v8520
  %v8607 = vunpack.c.l.b16 %v8521
  %v8608 = vunpack.c.h.b16 %v8521
  %v8609 = vunpack.c.l.b16 %v8522
  %v8610 = vunpack.c.h.b16 %v8522
  %v8611 = vunpack.c.l.b16 %v8523
  %v8612 = vunpack.c.h.b16 %v8523
  %v8613 = vunpack.c.l.b16 %v8524
  %v8614 = vunpack.c.h.b16 %v8524
  %v8615 = vunpack.c.l.b16 %v8525
  %v8616 = vunpack.c.h.b16 %v8525
  %v8617 = vunpack.c.l.b16 %v8526
  %v8618 = vunpack.c.h.b16 %v8526
  %v8619 = vunpack.c.l.b16 %v8527
  %v8620 = vunpack.c.h.b16 %v8527
  %v8621 = vunpack.c.l.b16 %v8528
  %v8622 = vunpack.c.h.b16 %v8528
  %v8623 = vunpack.c.l.b16 %v8529
  %v8624 = vunpack.c.h.b16 %v8529
  %v8625 = vunpack.c.l.b16 %v8530
  %v8626 = vunpack.c.h.b16 %v8530
  %v8627 = vpack.c.b16 %v8567, %v8563
  %v8628 = vpack.c.b16 %v8568, %v8564
  %v8629 = vpack.c.b16 %v8569, %v8565
  %v8630 = vpack.c.b16 %v8570, %v8566
  %v8631 = vpack.c.b16 %v8575, %v8571
  %v8632 = vpack.c.b16 %v8576, %v8572
  %v8633 = vpack.c.b16 %v8577, %v8573
  %v8634 = vpack.c.b16 %v8578, %v8574
  %v8635 = vpack.c.b16 %v8583, %v8579
  %v8636 = vpack.c.b16 %v8584, %v8580
  %v8637 = vpack.c.b16 %v8585, %v8581
  %v8638 = vpack.c.b16 %v8586, %v8582
  %v8639 = vpack.c.b16 %v8591, %v8587
  %v8640 = vpack.c.b16 %v8592, %v8588
  %v8641 = vpack.c.b16 %v8593, %v8589
  %v8642 = vpack.c.b16 %v8594, %v8590
  %v8643 = vpack.c.b16 %v8599, %v8595
  %v8644 = vpack.c.b16 %v8600, %v8596
  %v8645 = vpack.c.b16 %v8601, %v8597
  %v8646 = vpack.c.b16 %v8602, %v8598
  %v8647 = vpack.c.b16 %v8607, %v8603
  %v8648 = vpack.c.b16 %v8608, %v8604
  %v8649 = vpack.c.b16 %v8609, %v8605
  %v8650 = vpack.c.b16 %v8610, %v8606
  %v8651 = vpack.c.b16 %v8615, %v8611
  %v8652 = vpack.c.b16 %v8616, %v8612
  %v8653 = vpack.c.b16 %v8617, %v8613
  %v8654 = vpack.c.b16 %v8618, %v8614
  %v8655 = vpack.c.b16 %v8623, %v8619
  %v8656 = vpack.c.b16 %v8624, %v8620
  %v8657 = vpack.c.b16 %v8625, %v8621
  %v8658 = vpack.c.b16 %v8626, %v8622
  %8691 = vmatpush.bf16.msra.mxu0 %v8655
  %8692 = vmatpush.bf16.msra.mxu0 %v8651
  %8693 = vmatpush.bf16.msra.mxu0 %v8647
  %8694 = vmatpush.bf16.msra.mxu0 %v8643
  %8695 = vmatpush.bf16.msra.mxu0 %v8639
  %8696 = vmatpush.bf16.msra.mxu0 %v8635
  %8697 = vmatpush.bf16.msra.mxu0 %v8631
  %8698 = vmatpush.bf16.msra.mxu0 %v8627
  %8699 = vmatmul.bf16.gmra.mxu0 %v8493
  %v8700 = vpop.f32.mrf.mxu0
  %v8701 = vadd.f32 0.0, %v8700
  %v8702 = vpop.f32.mrf.mxu0
  %8703 = vdwg.mxu0
  %8704 = vmatpush.bf16.msra.mxu0 %v8656
  %8705 = vmatpush.bf16.msra.mxu0 %v8652
  %8706 = vmatpush.bf16.msra.mxu0 %v8648
  %8707 = vmatpush.bf16.msra.mxu0 %v8644
  %8708 = vmatpush.bf16.msra.mxu0 %v8640
  %8709 = vmatpush.bf16.msra.mxu0 %v8636
  %8710 = vmatpush.bf16.msra.mxu0 %v8632
  %8711 = vmatpush.bf16.msra.mxu0 %v8628
  %8712 = vmatmul.bf16.gmra.mxu0 %v8493
  %v8713 = vpop.f32.mrf.mxu0
  %v8714 = vadd.f32 0.0, %v8713
  %v8715 = vpop.f32.mrf.mxu0
  %8716 = vdwg.mxu0
  %8717 = vmatpush.bf16.msra.mxu0 %v8657
  %8718 = vmatpush.bf16.msra.mxu0 %v8653
  %8719 = vmatpush.bf16.msra.mxu0 %v8649
  %8720 = vmatpush.bf16.msra.mxu0 %v8645
  %8721 = vmatpush.bf16.msra.mxu0 %v8641
  %8722 = vmatpush.bf16.msra.mxu0 %v8637
  %8723 = vmatpush.bf16.msra.mxu0 %v8633
  %8724 = vmatpush.bf16.msra.mxu0 %v8629
  %8725 = vmatmul.bf16.gmra.mxu0 %v8493
  %v8726 = vpop.f32.mrf.mxu0
  %v8727 = vadd.f32 0.0, %v8726
  %v8728 = vpop.f32.mrf.mxu0
  %8729 = vdwg.mxu0
  %8730 = vmatpush.bf16.msra.mxu0 %v8658
  %8731 = vmatpush.bf16.msra.mxu0 %v8654
  %8732 = vmatpush.bf16.msra.mxu0 %v8650
  %8733 = vmatpush.bf16.msra.mxu0 %v8646
  %8734 = vmatpush.bf16.msra.mxu0 %v8642
  %8735 = vmatpush.bf16.msra.mxu0 %v8638
  %8736 = vmatpush.bf16.msra.mxu0 %v8634
  %8737 = vmatpush.bf16.msra.mxu0 %v8630
  %8738 = vmatmul.bf16.gmra.mxu0 %v8493
  %v8739 = vpop.f32.mrf.mxu0
  %v8740 = vadd.f32 0.0, %v8739
  %v8741 = vpop.f32.mrf.mxu0
  %8742 = vdwg.mxu0
  %v8743 = vadd.f32 %v8495, %v8701
  %v8744 = vadd.f32 %v8496, %v8714
  %v8745 = vadd.f32 %v8497, %v8727
  %v8746 = vadd.f32 %v8498, %v8740
  %v8747 = vxor.u32 %v8743, 2147483648
  %v8748 = vmul.f32 %v8747, 1.442695
  %v8749 = vpow.pop %v8748
  %v8750 = vadd.f32 %v8749, 1.0
  %v8751 = vrcp.pop %v8750
  %v8752 = vmul.f32 %v8750, %v8751
  %v8753 = vsub.f32 1.0, %v8752
  %v8754 = vmul.f32 %v8751, %v8753
  %v8755 = vadd.f32 %v8751, %v8754
  %vm8756 = vweird.f32 %v8750
  %vm8757 = vweird.f32 %v8751
  %vm8758 = vmor %vm8756, %vm8757
  %v8759 = vsel %vm8758, %v8751, %v8755
  %v8760 = vand.u32 2147483647, %v8750
  %vm8761 = vcmp.eq.f32.partialorder %v8760, 8.507059e+37
  %v8762 = vand.u32 %v8750, 2147483648
  %v8763 = vor.u32 1.1754944e-38, %v8762
  %v8764 = vsel %vm8761, %v8763, %v8759
  %v8765 = vmul.f32 1.0, %v8764
  %v8766 = vxor.u32 %v8744, 2147483648
  %v8767 = vmul.f32 %v8766, 1.442695
  %v8768 = vpow.pop %v8767
  %v8769 = vadd.f32 %v8768, 1.0
  %v8770 = vrcp.pop %v8769
  %v8771 = vmul.f32 %v8769, %v8770
  %v8772 = vsub.f32 1.0, %v8771
  %v8773 = vmul.f32 %v8770, %v8772
  %v8774 = vadd.f32 %v8770, %v8773
  %vm8775 = vweird.f32 %v8769
  %vm8776 = vweird.f32 %v8770
  %vm8777 = vmor %vm8775, %vm8776
  %v8778 = vsel %vm8777, %v8770, %v8774
  %v8779 = vand.u32 2147483647, %v8769
  %vm8780 = vcmp.eq.f32.partialorder %v8779, 8.507059e+37
  %v8781 = vand.u32 %v8769, 2147483648
  %v8782 = vor.u32 1.1754944e-38, %v8781
  %v8783 = vsel %vm8780, %v8782, %v8778
  %v8784 = vmul.f32 1.0, %v8783
  %v8785 = vtanh.pop %v8745
  %v8786 = vxor.u32 %v8746, 2147483648
  %v8787 = vmul.f32 %v8786, 1.442695
  %v8788 = vpow.pop %v8787
  %v8789 = vadd.f32 %v8788, 1.0
  %v8790 = vrcp.pop %v8789
  %v8791 = vmul.f32 %v8789, %v8790
  %v8792 = vsub.f32 1.0, %v8791
  %v8793 = vmul.f32 %v8790, %v8792
  %v8794 = vadd.f32 %v8790, %v8793
  %vm8795 = vweird.f32 %v8789
  %vm8796 = vweird.f32 %v8790
  %vm8797 = vmor %vm8795, %vm8796
  %v8798 = vsel %vm8797, %v8790, %v8794
  %v8799 = vand.u32 2147483647, %v8789
  %vm8800 = vcmp.eq.f32.partialorder %v8799, 8.507059e+37
  %v8801 = vand.u32 %v8789, 2147483648
  %v8802 = vor.u32 1.1754944e-38, %v8801
  %v8803 = vsel %vm8800, %v8802, %v8798
  %v8804 = vmul.f32 1.0, %v8803
  %v8805 = vmul.f32 %v8784, %v8490
  %v8806 = vmul.f32 %v8765, %v8785
  %v8807 = vadd.f32 %v8805, %v8806
  %v8808 = vtanh.pop %v8807
  %v8809 = vmul.f32 %v8804, %v8808
  %v8810 = vpack.c.bf16 %v8809, %v8809
  %8811 = vst [vmem:[%s6 + $0x50] sm:$0xf] %v8810
  %v8812 = vld [vmem:[#allocation2 + $0xa0] sm:$0xff]
  %v8813 = vld [vmem:[#allocation2 + $0xa8] sm:$0xff]
  %v8814 = vld [vmem:[#allocation2 + $0xb0] sm:$0xff]
  %v8815 = vld [vmem:[#allocation2 + $0xb8] sm:$0xff]
  %v8816 = vld [vmem:[%s2] sm:$0xff]
  %v8817 = vld [vmem:[%s2 + $0x8] sm:$0xff]
  %v8818 = vld [vmem:[%s2 + $0x10] sm:$0xff]
  %v8819 = vld [vmem:[%s2 + $0x18] sm:$0xff]
  %v8820 = vld [vmem:[%s2 + $0x20] sm:$0xff]
  %v8821 = vld [vmem:[%s2 + $0x28] sm:$0xff]
  %v8822 = vld [vmem:[%s2 + $0x30] sm:$0xff]
  %v8823 = vld [vmem:[%s2 + $0x38] sm:$0xff]
  %v8824 = vld [vmem:[%s2 + $0x40] sm:$0xff]
  %v8825 = vld [vmem:[%s2 + $0x48] sm:$0xff]
  %v8826 = vld [vmem:[%s2 + $0x50] sm:$0xff]
  %v8827 = vld [vmem:[%s2 + $0x58] sm:$0xff]
  %v8828 = vld [vmem:[%s2 + $0x60] sm:$0xff]
  %v8829 = vld [vmem:[%s2 + $0x68] sm:$0xff]
  %v8830 = vld [vmem:[%s2 + $0x70] sm:$0xff]
  %v8831 = vld [vmem:[%s2 + $0x78] sm:$0xff]
  %v8832 = vld [vmem:[%s2 + $0x80] sm:$0xff]
  %v8833 = vld [vmem:[%s2 + $0x88] sm:$0xff]
  %v8834 = vld [vmem:[%s2 + $0x90] sm:$0xff]
  %v8835 = vld [vmem:[%s2 + $0x98] sm:$0xff]
  %v8836 = vld [vmem:[%s2 + $0xa0] sm:$0xff]
  %v8837 = vld [vmem:[%s2 + $0xa8] sm:$0xff]
  %v8838 = vld [vmem:[%s2 + $0xb0] sm:$0xff]
  %v8839 = vld [vmem:[%s2 + $0xb8] sm:$0xff]
  %v8840 = vld [vmem:[%s2 + $0xc0] sm:$0xff]
  %v8841 = vld [vmem:[%s2 + $0xc8] sm:$0xff]
  %v8842 = vld [vmem:[%s2 + $0xd0] sm:$0xff]
  %v8843 = vld [vmem:[%s2 + $0xd8] sm:$0xff]
  %v8844 = vld [vmem:[%s2 + $0xe0] sm:$0xff]
  %v8845 = vld [vmem:[%s2 + $0xe8] sm:$0xff]
  %v8846 = vld [vmem:[%s2 + $0xf0] sm:$0xff]
  %v8847 = vld [vmem:[%s2 + $0xf8] sm:$0xff]
  %v8880 = vunpack.c.l.b16 %v8816
  %v8881 = vunpack.c.h.b16 %v8816
  %v8882 = vunpack.c.l.b16 %v8817
  %v8883 = vunpack.c.h.b16 %v8817
  %v8884 = vunpack.c.l.b16 %v8818
  %v8885 = vunpack.c.h.b16 %v8818
  %v8886 = vunpack.c.l.b16 %v8819
  %v8887 = vunpack.c.h.b16 %v8819
  %v8888 = vunpack.c.l.b16 %v8820
  %v8889 = vunpack.c.h.b16 %v8820
  %v8890 = vunpack.c.l.b16 %v8821
  %v8891 = vunpack.c.h.b16 %v8821
  %v8892 = vunpack.c.l.b16 %v8822
  %v8893 = vunpack.c.h.b16 %v8822
  %v8894 = vunpack.c.l.b16 %v8823
  %v8895 = vunpack.c.h.b16 %v8823
  %v8896 = vunpack.c.l.b16 %v8824
  %v8897 = vunpack.c.h.b16 %v8824
  %v8898 = vunpack.c.l.b16 %v8825
  %v8899 = vunpack.c.h.b16 %v8825
  %v8900 = vunpack.c.l.b16 %v8826
  %v8901 = vunpack.c.h.b16 %v8826
  %v8902 = vunpack.c.l.b16 %v8827
  %v8903 = vunpack.c.h.b16 %v8827
  %v8904 = vunpack.c.l.b16 %v8828
  %v8905 = vunpack.c.h.b16 %v8828
  %v8906 = vunpack.c.l.b16 %v8829
  %v8907 = vunpack.c.h.b16 %v8829
  %v8908 = vunpack.c.l.b16 %v8830
  %v8909 = vunpack.c.h.b16 %v8830
  %v8910 = vunpack.c.l.b16 %v8831
  %v8911 = vunpack.c.h.b16 %v8831
  %v8912 = vunpack.c.l.b16 %v8832
  %v8913 = vunpack.c.h.b16 %v8832
  %v8914 = vunpack.c.l.b16 %v8833
  %v8915 = vunpack.c.h.b16 %v8833
  %v8916 = vunpack.c.l.b16 %v8834
  %v8917 = vunpack.c.h.b16 %v8834
  %v8918 = vunpack.c.l.b16 %v8835
  %v8919 = vunpack.c.h.b16 %v8835
  %v8920 = vunpack.c.l.b16 %v8836
  %v8921 = vunpack.c.h.b16 %v8836
  %v8922 = vunpack.c.l.b16 %v8837
  %v8923 = vunpack.c.h.b16 %v8837
  %v8924 = vunpack.c.l.b16 %v8838
  %v8925 = vunpack.c.h.b16 %v8838
  %v8926 = vunpack.c.l.b16 %v8839
  %v8927 = vunpack.c.h.b16 %v8839
  %v8928 = vunpack.c.l.b16 %v8840
  %v8929 = vunpack.c.h.b16 %v8840
  %v8930 = vunpack.c.l.b16 %v8841
  %v8931 = vunpack.c.h.b16 %v8841
  %v8932 = vunpack.c.l.b16 %v8842
  %v8933 = vunpack.c.h.b16 %v8842
  %v8934 = vunpack.c.l.b16 %v8843
  %v8935 = vunpack.c.h.b16 %v8843
  %v8936 = vunpack.c.l.b16 %v8844
  %v8937 = vunpack.c.h.b16 %v8844
  %v8938 = vunpack.c.l.b16 %v8845
  %v8939 = vunpack.c.h.b16 %v8845
  %v8940 = vunpack.c.l.b16 %v8846
  %v8941 = vunpack.c.h.b16 %v8846
  %v8942 = vunpack.c.l.b16 %v8847
  %v8943 = vunpack.c.h.b16 %v8847
  %v8944 = vpack.c.b16 %v8884, %v8880
  %v8945 = vpack.c.b16 %v8885, %v8881
  %v8946 = vpack.c.b16 %v8886, %v8882
  %v8947 = vpack.c.b16 %v8887, %v8883
  %v8948 = vpack.c.b16 %v8892, %v8888
  %v8949 = vpack.c.b16 %v8893, %v8889
  %v8950 = vpack.c.b16 %v8894, %v8890
  %v8951 = vpack.c.b16 %v8895, %v8891
  %v8952 = vpack.c.b16 %v8900, %v8896
  %v8953 = vpack.c.b16 %v8901, %v8897
  %v8954 = vpack.c.b16 %v8902, %v8898
  %v8955 = vpack.c.b16 %v8903, %v8899
  %v8956 = vpack.c.b16 %v8908, %v8904
  %v8957 = vpack.c.b16 %v8909, %v8905
  %v8958 = vpack.c.b16 %v8910, %v8906
  %v8959 = vpack.c.b16 %v8911, %v8907
  %v8960 = vpack.c.b16 %v8916, %v8912
  %v8961 = vpack.c.b16 %v8917, %v8913
  %v8962 = vpack.c.b16 %v8918, %v8914
  %v8963 = vpack.c.b16 %v8919, %v8915
  %v8964 = vpack.c.b16 %v8924, %v8920
  %v8965 = vpack.c.b16 %v8925, %v8921
  %v8966 = vpack.c.b16 %v8926, %v8922
  %v8967 = vpack.c.b16 %v8927, %v8923
  %v8968 = vpack.c.b16 %v8932, %v8928
  %v8969 = vpack.c.b16 %v8933, %v8929
  %v8970 = vpack.c.b16 %v8934, %v8930
  %v8971 = vpack.c.b16 %v8935, %v8931
  %v8972 = vpack.c.b16 %v8940, %v8936
  %v8973 = vpack.c.b16 %v8941, %v8937
  %v8974 = vpack.c.b16 %v8942, %v8938
  %v8975 = vpack.c.b16 %v8943, %v8939
  %9008 = vmatpush.bf16.msra.mxu0 %v8972
  %9009 = vmatpush.bf16.msra.mxu0 %v8968
  %9010 = vmatpush.bf16.msra.mxu0 %v8964
  %9011 = vmatpush.bf16.msra.mxu0 %v8960
  %9012 = vmatpush.bf16.msra.mxu0 %v8956
  %9013 = vmatpush.bf16.msra.mxu0 %v8952
  %9014 = vmatpush.bf16.msra.mxu0 %v8948
  %9015 = vmatpush.bf16.msra.mxu0 %v8944
  %9016 = vmatmul.bf16.gmra.mxu0 %v8810
  %v9017 = vpop.f32.mrf.mxu0
  %v9018 = vadd.f32 0.0, %v9017
  %v9019 = vpop.f32.mrf.mxu0
  %9020 = vdwg.mxu0
  %9021 = vmatpush.bf16.msra.mxu0 %v8973
  %9022 = vmatpush.bf16.msra.mxu0 %v8969
  %9023 = vmatpush.bf16.msra.mxu0 %v8965
  %9024 = vmatpush.bf16.msra.mxu0 %v8961
  %9025 = vmatpush.bf16.msra.mxu0 %v8957
  %9026 = vmatpush.bf16.msra.mxu0 %v8953
  %9027 = vmatpush.bf16.msra.mxu0 %v8949
  %9028 = vmatpush.bf16.msra.mxu0 %v8945
  %9029 = vmatmul.bf16.gmra.mxu0 %v8810
  %v9030 = vpop.f32.mrf.mxu0
  %v9031 = vadd.f32 0.0, %v9030
  %v9032 = vpop.f32.mrf.mxu0
  %9033 = vdwg.mxu0
  %9034 = vmatpush.bf16.msra.mxu0 %v8974
  %9035 = vmatpush.bf16.msra.mxu0 %v8970
  %9036 = vmatpush.bf16.msra.mxu0 %v8966
  %9037 = vmatpush.bf16.msra.mxu0 %v8962
  %9038 = vmatpush.bf16.msra.mxu0 %v8958
  %9039 = vmatpush.bf16.msra.mxu0 %v8954
  %9040 = vmatpush.bf16.msra.mxu0 %v8950
  %9041 = vmatpush.bf16.msra.mxu0 %v8946
  %9042 = vmatmul.bf16.gmra.mxu0 %v8810
  %v9043 = vpop.f32.mrf.mxu0
  %v9044 = vadd.f32 0.0, %v9043
  %v9045 = vpop.f32.mrf.mxu0
  %9046 = vdwg.mxu0
  %9047 = vmatpush.bf16.msra.mxu0 %v8975
  %9048 = vmatpush.bf16.msra.mxu0 %v8971
  %9049 = vmatpush.bf16.msra.mxu0 %v8967
  %9050 = vmatpush.bf16.msra.mxu0 %v8963
  %9051 = vmatpush.bf16.msra.mxu0 %v8959
  %9052 = vmatpush.bf16.msra.mxu0 %v8955
  %9053 = vmatpush.bf16.msra.mxu0 %v8951
  %9054 = vmatpush.bf16.msra.mxu0 %v8947
  %9055 = vmatmul.bf16.gmra.mxu0 %v8810
  %v9056 = vpop.f32.mrf.mxu0
  %v9057 = vadd.f32 0.0, %v9056
  %v9058 = vpop.f32.mrf.mxu0
  %9059 = vdwg.mxu0
  %v9060 = vadd.f32 %v8812, %v9018
  %v9061 = vadd.f32 %v8813, %v9031
  %v9062 = vadd.f32 %v8814, %v9044
  %v9063 = vadd.f32 %v8815, %v9057
  %v9064 = vxor.u32 %v9060, 2147483648
  %v9065 = vmul.f32 %v9064, 1.442695
  %v9066 = vpow.pop %v9065
  %v9067 = vadd.f32 %v9066, 1.0
  %v9068 = vrcp.pop %v9067
  %v9069 = vmul.f32 %v9067, %v9068
  %v9070 = vsub.f32 1.0, %v9069
  %v9071 = vmul.f32 %v9068, %v9070
  %v9072 = vadd.f32 %v9068, %v9071
  %vm9073 = vweird.f32 %v9067
  %vm9074 = vweird.f32 %v9068
  %vm9075 = vmor %vm9073, %vm9074
  %v9076 = vsel %vm9075, %v9068, %v9072
  %v9077 = vand.u32 2147483647, %v9067
  %vm9078 = vcmp.eq.f32.partialorder %v9077, 8.507059e+37
  %v9079 = vand.u32 %v9067, 2147483648
  %v9080 = vor.u32 1.1754944e-38, %v9079
  %v9081 = vsel %vm9078, %v9080, %v9076
  %v9082 = vmul.f32 1.0, %v9081
  %v9083 = vxor.u32 %v9061, 2147483648
  %v9084 = vmul.f32 %v9083, 1.442695
  %v9085 = vpow.pop %v9084
  %v9086 = vadd.f32 %v9085, 1.0
  %v9087 = vrcp.pop %v9086
  %v9088 = vmul.f32 %v9086, %v9087
  %v9089 = vsub.f32 1.0, %v9088
  %v9090 = vmul.f32 %v9087, %v9089
  %v9091 = vadd.f32 %v9087, %v9090
  %vm9092 = vweird.f32 %v9086
  %vm9093 = vweird.f32 %v9087
  %vm9094 = vmor %vm9092, %vm9093
  %v9095 = vsel %vm9094, %v9087, %v9091
  %v9096 = vand.u32 2147483647, %v9086
  %vm9097 = vcmp.eq.f32.partialorder %v9096, 8.507059e+37
  %v9098 = vand.u32 %v9086, 2147483648
  %v9099 = vor.u32 1.1754944e-38, %v9098
  %v9100 = vsel %vm9097, %v9099, %v9095
  %v9101 = vmul.f32 1.0, %v9100
  %v9102 = vtanh.pop %v9062
  %v9103 = vxor.u32 %v9063, 2147483648
  %v9104 = vmul.f32 %v9103, 1.442695
  %v9105 = vpow.pop %v9104
  %v9106 = vadd.f32 %v9105, 1.0
  %v9107 = vrcp.pop %v9106
  %v9108 = vmul.f32 %v9106, %v9107
  %v9109 = vsub.f32 1.0, %v9108
  %v9110 = vmul.f32 %v9107, %v9109
  %v9111 = vadd.f32 %v9107, %v9110
  %vm9112 = vweird.f32 %v9106
  %vm9113 = vweird.f32 %v9107
  %vm9114 = vmor %vm9112, %vm9113
  %v9115 = vsel %vm9114, %v9107, %v9111
  %v9116 = vand.u32 2147483647, %v9106
  %vm9117 = vcmp.eq.f32.partialorder %v9116, 8.507059e+37
  %v9118 = vand.u32 %v9106, 2147483648
  %v9119 = vor.u32 1.1754944e-38, %v9118
  %v9120 = vsel %vm9117, %v9119, %v9115
  %v9121 = vmul.f32 1.0, %v9120
  %v9122 = vmul.f32 %v9101, %v8807
  %v9123 = vmul.f32 %v9082, %v9102
  %v9124 = vadd.f32 %v9122, %v9123
  %v9125 = vtanh.pop %v9124
  %v9126 = vmul.f32 %v9121, %v9125
  %v9127 = vpack.c.bf16 %v9126, %v9126
  %9128 = vst [vmem:[%s6 + $0x54] sm:$0xf] %v9127
  %v9129 = vld [vmem:[#allocation2 + $0xc0] sm:$0xff]
  %v9130 = vld [vmem:[#allocation2 + $0xc8] sm:$0xff]
  %v9131 = vld [vmem:[#allocation2 + $0xd0] sm:$0xff]
  %v9132 = vld [vmem:[#allocation2 + $0xd8] sm:$0xff]
  %v9133 = vld [vmem:[%s2] sm:$0xff]
  %v9134 = vld [vmem:[%s2 + $0x8] sm:$0xff]
  %v9135 = vld [vmem:[%s2 + $0x10] sm:$0xff]
  %v9136 = vld [vmem:[%s2 + $0x18] sm:$0xff]
  %v9137 = vld [vmem:[%s2 + $0x20] sm:$0xff]
  %v9138 = vld [vmem:[%s2 + $0x28] sm:$0xff]
  %v9139 = vld [vmem:[%s2 + $0x30] sm:$0xff]
  %v9140 = vld [vmem:[%s2 + $0x38] sm:$0xff]
  %v9141 = vld [vmem:[%s2 + $0x40] sm:$0xff]
  %v9142 = vld [vmem:[%s2 + $0x48] sm:$0xff]
  %v9143 = vld [vmem:[%s2 + $0x50] sm:$0xff]
  %v9144 = vld [vmem:[%s2 + $0x58] sm:$0xff]
  %v9145 = vld [vmem:[%s2 + $0x60] sm:$0xff]
  %v9146 = vld [vmem:[%s2 + $0x68] sm:$0xff]
  %v9147 = vld [vmem:[%s2 + $0x70] sm:$0xff]
  %v9148 = vld [vmem:[%s2 + $0x78] sm:$0xff]
  %v9149 = vld [vmem:[%s2 + $0x80] sm:$0xff]
  %v9150 = vld [vmem:[%s2 + $0x88] sm:$0xff]
  %v9151 = vld [vmem:[%s2 + $0x90] sm:$0xff]
  %v9152 = vld [vmem:[%s2 + $0x98] sm:$0xff]
  %v9153 = vld [vmem:[%s2 + $0xa0] sm:$0xff]
  %v9154 = vld [vmem:[%s2 + $0xa8] sm:$0xff]
  %v9155 = vld [vmem:[%s2 + $0xb0] sm:$0xff]
  %v9156 = vld [vmem:[%s2 + $0xb8] sm:$0xff]
  %v9157 = vld [vmem:[%s2 + $0xc0] sm:$0xff]
  %v9158 = vld [vmem:[%s2 + $0xc8] sm:$0xff]
  %v9159 = vld [vmem:[%s2 + $0xd0] sm:$0xff]
  %v9160 = vld [vmem:[%s2 + $0xd8] sm:$0xff]
  %v9161 = vld [vmem:[%s2 + $0xe0] sm:$0xff]
  %v9162 = vld [vmem:[%s2 + $0xe8] sm:$0xff]
  %v9163 = vld [vmem:[%s2 + $0xf0] sm:$0xff]
  %v9164 = vld [vmem:[%s2 + $0xf8] sm:$0xff]
  %v9197 = vunpack.c.l.b16 %v9133
  %v9198 = vunpack.c.h.b16 %v9133
  %v9199 = vunpack.c.l.b16 %v9134
  %v9200 = vunpack.c.h.b16 %v9134
  %v9201 = vunpack.c.l.b16 %v9135
  %v9202 = vunpack.c.h.b16 %v9135
  %v9203 = vunpack.c.l.b16 %v9136
  %v9204 = vunpack.c.h.b16 %v9136
  %v9205 = vunpack.c.l.b16 %v9137
  %v9206 = vunpack.c.h.b16 %v9137
  %v9207 = vunpack.c.l.b16 %v9138
  %v9208 = vunpack.c.h.b16 %v9138
  %v9209 = vunpack.c.l.b16 %v9139
  %v9210 = vunpack.c.h.b16 %v9139
  %v9211 = vunpack.c.l.b16 %v9140
  %v9212 = vunpack.c.h.b16 %v9140
  %v9213 = vunpack.c.l.b16 %v9141
  %v9214 = vunpack.c.h.b16 %v9141
  %v9215 = vunpack.c.l.b16 %v9142
  %v9216 = vunpack.c.h.b16 %v9142
  %v9217 = vunpack.c.l.b16 %v9143
  %v9218 = vunpack.c.h.b16 %v9143
  %v9219 = vunpack.c.l.b16 %v9144
  %v9220 = vunpack.c.h.b16 %v9144
  %v9221 = vunpack.c.l.b16 %v9145
  %v9222 = vunpack.c.h.b16 %v9145
  %v9223 = vunpack.c.l.b16 %v9146
  %v9224 = vunpack.c.h.b16 %v9146
  %v9225 = vunpack.c.l.b16 %v9147
  %v9226 = vunpack.c.h.b16 %v9147
  %v9227 = vunpack.c.l.b16 %v9148
  %v9228 = vunpack.c.h.b16 %v9148
  %v9229 = vunpack.c.l.b16 %v9149
  %v9230 = vunpack.c.h.b16 %v9149
  %v9231 = vunpack.c.l.b16 %v9150
  %v9232 = vunpack.c.h.b16 %v9150
  %v9233 = vunpack.c.l.b16 %v9151
  %v9234 = vunpack.c.h.b16 %v9151
  %v9235 = vunpack.c.l.b16 %v9152
  %v9236 = vunpack.c.h.b16 %v9152
  %v9237 = vunpack.c.l.b16 %v9153
  %v9238 = vunpack.c.h.b16 %v9153
  %v9239 = vunpack.c.l.b16 %v9154
  %v9240 = vunpack.c.h.b16 %v9154
  %v9241 = vunpack.c.l.b16 %v9155
  %v9242 = vunpack.c.h.b16 %v9155
  %v9243 = vunpack.c.l.b16 %v9156
  %v9244 = vunpack.c.h.b16 %v9156
  %v9245 = vunpack.c.l.b16 %v9157
  %v9246 = vunpack.c.h.b16 %v9157
  %v9247 = vunpack.c.l.b16 %v9158
  %v9248 = vunpack.c.h.b16 %v9158
  %v9249 = vunpack.c.l.b16 %v9159
  %v9250 = vunpack.c.h.b16 %v9159
  %v9251 = vunpack.c.l.b16 %v9160
  %v9252 = vunpack.c.h.b16 %v9160
  %v9253 = vunpack.c.l.b16 %v9161
  %v9254 = vunpack.c.h.b16 %v9161
  %v9255 = vunpack.c.l.b16 %v9162
  %v9256 = vunpack.c.h.b16 %v9162
  %v9257 = vunpack.c.l.b16 %v9163
  %v9258 = vunpack.c.h.b16 %v9163
  %v9259 = vunpack.c.l.b16 %v9164
  %v9260 = vunpack.c.h.b16 %v9164
  %v9261 = vpack.c.b16 %v9201, %v9197
  %v9262 = vpack.c.b16 %v9202, %v9198
  %v9263 = vpack.c.b16 %v9203, %v9199
  %v9264 = vpack.c.b16 %v9204, %v9200
  %v9265 = vpack.c.b16 %v9209, %v9205
  %v9266 = vpack.c.b16 %v9210, %v9206
  %v9267 = vpack.c.b16 %v9211, %v9207
  %v9268 = vpack.c.b16 %v9212, %v9208
  %v9269 = vpack.c.b16 %v9217, %v9213
  %v9270 = vpack.c.b16 %v9218, %v9214
  %v9271 = vpack.c.b16 %v9219, %v9215
  %v9272 = vpack.c.b16 %v9220, %v9216
  %v9273 = vpack.c.b16 %v9225, %v9221
  %v9274 = vpack.c.b16 %v9226, %v9222
  %v9275 = vpack.c.b16 %v9227, %v9223
  %v9276 = vpack.c.b16 %v9228, %v9224
  %v9277 = vpack.c.b16 %v9233, %v9229
  %v9278 = vpack.c.b16 %v9234, %v9230
  %v9279 = vpack.c.b16 %v9235, %v9231
  %v9280 = vpack.c.b16 %v9236, %v9232
  %v9281 = vpack.c.b16 %v9241, %v9237
  %v9282 = vpack.c.b16 %v9242, %v9238
  %v9283 = vpack.c.b16 %v9243, %v9239
  %v9284 = vpack.c.b16 %v9244, %v9240
  %v9285 = vpack.c.b16 %v9249, %v9245
  %v9286 = vpack.c.b16 %v9250, %v9246
  %v9287 = vpack.c.b16 %v9251, %v9247
  %v9288 = vpack.c.b16 %v9252, %v9248
  %v9289 = vpack.c.b16 %v9257, %v9253
  %v9290 = vpack.c.b16 %v9258, %v9254
  %v9291 = vpack.c.b16 %v9259, %v9255
  %v9292 = vpack.c.b16 %v9260, %v9256
  %9325 = vmatpush.bf16.msra.mxu0 %v9289
  %9326 = vmatpush.bf16.msra.mxu0 %v9285
  %9327 = vmatpush.bf16.msra.mxu0 %v9281
  %9328 = vmatpush.bf16.msra.mxu0 %v9277
  %9329 = vmatpush.bf16.msra.mxu0 %v9273
  %9330 = vmatpush.bf16.msra.mxu0 %v9269
  %9331 = vmatpush.bf16.msra.mxu0 %v9265
  %9332 = vmatpush.bf16.msra.mxu0 %v9261
  %9333 = vmatmul.bf16.gmra.mxu0 %v9127
  %v9334 = vpop.f32.mrf.mxu0
  %v9335 = vadd.f32 0.0, %v9334
  %v9336 = vpop.f32.mrf.mxu0
  %9337 = vdwg.mxu0
  %9338 = vmatpush.bf16.msra.mxu0 %v9290
  %9339 = vmatpush.bf16.msra.mxu0 %v9286
  %9340 = vmatpush.bf16.msra.mxu0 %v9282
  %9341 = vmatpush.bf16.msra.mxu0 %v9278
  %9342 = vmatpush.bf16.msra.mxu0 %v9274
  %9343 = vmatpush.bf16.msra.mxu0 %v9270
  %9344 = vmatpush.bf16.msra.mxu0 %v9266
  %9345 = vmatpush.bf16.msra.mxu0 %v9262
  %9346 = vmatmul.bf16.gmra.mxu0 %v9127
  %v9347 = vpop.f32.mrf.mxu0
  %v9348 = vadd.f32 0.0, %v9347
  %v9349 = vpop.f32.mrf.mxu0
  %9350 = vdwg.mxu0
  %9351 = vmatpush.bf16.msra.mxu0 %v9291
  %9352 = vmatpush.bf16.msra.mxu0 %v9287
  %9353 = vmatpush.bf16.msra.mxu0 %v9283
  %9354 = vmatpush.bf16.msra.mxu0 %v9279
  %9355 = vmatpush.bf16.msra.mxu0 %v9275
  %9356 = vmatpush.bf16.msra.mxu0 %v9271
  %9357 = vmatpush.bf16.msra.mxu0 %v9267
  %9358 = vmatpush.bf16.msra.mxu0 %v9263
  %9359 = vmatmul.bf16.gmra.mxu0 %v9127
  %v9360 = vpop.f32.mrf.mxu0
  %v9361 = vadd.f32 0.0, %v9360
  %v9362 = vpop.f32.mrf.mxu0
  %9363 = vdwg.mxu0
  %9364 = vmatpush.bf16.msra.mxu0 %v9292
  %9365 = vmatpush.bf16.msra.mxu0 %v9288
  %9366 = vmatpush.bf16.msra.mxu0 %v9284
  %9367 = vmatpush.bf16.msra.mxu0 %v9280
  %9368 = vmatpush.bf16.msra.mxu0 %v9276
  %9369 = vmatpush.bf16.msra.mxu0 %v9272
  %9370 = vmatpush.bf16.msra.mxu0 %v9268
  %9371 = vmatpush.bf16.msra.mxu0 %v9264
  %9372 = vmatmul.bf16.gmra.mxu0 %v9127
  %v9373 = vpop.f32.mrf.mxu0
  %v9374 = vadd.f32 0.0, %v9373
  %v9375 = vpop.f32.mrf.mxu0
  %9376 = vdwg.mxu0
  %v9377 = vadd.f32 %v9129, %v9335
  %v9378 = vadd.f32 %v9130, %v9348
  %v9379 = vadd.f32 %v9131, %v9361
  %v9380 = vadd.f32 %v9132, %v9374
  %v9381 = vxor.u32 %v9377, 2147483648
  %v9382 = vmul.f32 %v9381, 1.442695
  %v9383 = vpow.pop %v9382
  %v9384 = vadd.f32 %v9383, 1.0
  %v9385 = vrcp.pop %v9384
  %v9386 = vmul.f32 %v9384, %v9385
  %v9387 = vsub.f32 1.0, %v9386
  %v9388 = vmul.f32 %v9385, %v9387
  %v9389 = vadd.f32 %v9385, %v9388
  %vm9390 = vweird.f32 %v9384
  %vm9391 = vweird.f32 %v9385
  %vm9392 = vmor %vm9390, %vm9391
  %v9393 = vsel %vm9392, %v9385, %v9389
  %v9394 = vand.u32 2147483647, %v9384
  %vm9395 = vcmp.eq.f32.partialorder %v9394, 8.507059e+37
  %v9396 = vand.u32 %v9384, 2147483648
  %v9397 = vor.u32 1.1754944e-38, %v9396
  %v9398 = vsel %vm9395, %v9397, %v9393
  %v9399 = vmul.f32 1.0, %v9398
  %v9400 = vxor.u32 %v9378, 2147483648
  %v9401 = vmul.f32 %v9400, 1.442695
  %v9402 = vpow.pop %v9401
  %v9403 = vadd.f32 %v9402, 1.0
  %v9404 = vrcp.pop %v9403
  %v9405 = vmul.f32 %v9403, %v9404
  %v9406 = vsub.f32 1.0, %v9405
  %v9407 = vmul.f32 %v9404, %v9406
  %v9408 = vadd.f32 %v9404, %v9407
  %vm9409 = vweird.f32 %v9403
  %vm9410 = vweird.f32 %v9404
  %vm9411 = vmor %vm9409, %vm9410
  %v9412 = vsel %vm9411, %v9404, %v9408
  %v9413 = vand.u32 2147483647, %v9403
  %vm9414 = vcmp.eq.f32.partialorder %v9413, 8.507059e+37
  %v9415 = vand.u32 %v9403, 2147483648
  %v9416 = vor.u32 1.1754944e-38, %v9415
  %v9417 = vsel %vm9414, %v9416, %v9412
  %v9418 = vmul.f32 1.0, %v9417
  %v9419 = vtanh.pop %v9379
  %v9420 = vxor.u32 %v9380, 2147483648
  %v9421 = vmul.f32 %v9420, 1.442695
  %v9422 = vpow.pop %v9421
  %v9423 = vadd.f32 %v9422, 1.0
  %v9424 = vrcp.pop %v9423
  %v9425 = vmul.f32 %v9423, %v9424
  %v9426 = vsub.f32 1.0, %v9425
  %v9427 = vmul.f32 %v9424, %v9426
  %v9428 = vadd.f32 %v9424, %v9427
  %vm9429 = vweird.f32 %v9423
  %vm9430 = vweird.f32 %v9424
  %vm9431 = vmor %vm9429, %vm9430
  %v9432 = vsel %vm9431, %v9424, %v9428
  %v9433 = vand.u32 2147483647, %v9423
  %vm9434 = vcmp.eq.f32.partialorder %v9433, 8.507059e+37
  %v9435 = vand.u32 %v9423, 2147483648
  %v9436 = vor.u32 1.1754944e-38, %v9435
  %v9437 = vsel %vm9434, %v9436, %v9432
  %v9438 = vmul.f32 1.0, %v9437
  %v9439 = vmul.f32 %v9418, %v9124
  %v9440 = vmul.f32 %v9399, %v9419
  %v9441 = vadd.f32 %v9439, %v9440
  %v9442 = vtanh.pop %v9441
  %v9443 = vmul.f32 %v9438, %v9442
  %v9444 = vpack.c.bf16 %v9443, %v9443
  %9445 = vst [vmem:[%s6 + $0x58] sm:$0xf] %v9444
  %v9446 = vld [vmem:[#allocation2 + $0xe0] sm:$0xff]
  %v9447 = vld [vmem:[#allocation2 + $0xe8] sm:$0xff]
  %v9448 = vld [vmem:[#allocation2 + $0xf0] sm:$0xff]
  %v9449 = vld [vmem:[#allocation2 + $0xf8] sm:$0xff]
  %v9450 = vld [vmem:[%s2] sm:$0xff]
  %v9451 = vld [vmem:[%s2 + $0x8] sm:$0xff]
  %v9452 = vld [vmem:[%s2 + $0x10] sm:$0xff]
  %v9453 = vld [vmem:[%s2 + $0x18] sm:$0xff]
  %v9454 = vld [vmem:[%s2 + $0x20] sm:$0xff]
  %v9455 = vld [vmem:[%s2 + $0x28] sm:$0xff]
  %v9456 = vld [vmem:[%s2 + $0x30] sm:$0xff]
  %v9457 = vld [vmem:[%s2 + $0x38] sm:$0xff]
  %v9458 = vld [vmem:[%s2 + $0x40] sm:$0xff]
  %v9459 = vld [vmem:[%s2 + $0x48] sm:$0xff]
  %v9460 = vld [vmem:[%s2 + $0x50] sm:$0xff]
  %v9461 = vld [vmem:[%s2 + $0x58] sm:$0xff]
  %v9462 = vld [vmem:[%s2 + $0x60] sm:$0xff]
  %v9463 = vld [vmem:[%s2 + $0x68] sm:$0xff]
  %v9464 = vld [vmem:[%s2 + $0x70] sm:$0xff]
  %v9465 = vld [vmem:[%s2 + $0x78] sm:$0xff]
  %v9466 = vld [vmem:[%s2 + $0x80] sm:$0xff]
  %v9467 = vld [vmem:[%s2 + $0x88] sm:$0xff]
  %v9468 = vld [vmem:[%s2 + $0x90] sm:$0xff]
  %v9469 = vld [vmem:[%s2 + $0x98] sm:$0xff]
  %v9470 = vld [vmem:[%s2 + $0xa0] sm:$0xff]
  %v9471 = vld [vmem:[%s2 + $0xa8] sm:$0xff]
  %v9472 = vld [vmem:[%s2 + $0xb0] sm:$0xff]
  %v9473 = vld [vmem:[%s2 + $0xb8] sm:$0xff]
  %v9474 = vld [vmem:[%s2 + $0xc0] sm:$0xff]
  %v9475 = vld [vmem:[%s2 + $0xc8] sm:$0xff]
  %v9476 = vld [vmem:[%s2 + $0xd0] sm:$0xff]
  %v9477 = vld [vmem:[%s2 + $0xd8] sm:$0xff]
  %v9478 = vld [vmem:[%s2 + $0xe0] sm:$0xff]
  %v9479 = vld [vmem:[%s2 + $0xe8] sm:$0xff]
  %v9480 = vld [vmem:[%s2 + $0xf0] sm:$0xff]
  %v9481 = vld [vmem:[%s2 + $0xf8] sm:$0xff]
  %v9514 = vunpack.c.l.b16 %v9450
  %v9515 = vunpack.c.h.b16 %v9450
  %v9516 = vunpack.c.l.b16 %v9451
  %v9517 = vunpack.c.h.b16 %v9451
  %v9518 = vunpack.c.l.b16 %v9452
  %v9519 = vunpack.c.h.b16 %v9452
  %v9520 = vunpack.c.l.b16 %v9453
  %v9521 = vunpack.c.h.b16 %v9453
  %v9522 = vunpack.c.l.b16 %v9454
  %v9523 = vunpack.c.h.b16 %v9454
  %v9524 = vunpack.c.l.b16 %v9455
  %v9525 = vunpack.c.h.b16 %v9455
  %v9526 = vunpack.c.l.b16 %v9456
  %v9527 = vunpack.c.h.b16 %v9456
  %v9528 = vunpack.c.l.b16 %v9457
  %v9529 = vunpack.c.h.b16 %v9457
  %v9530 = vunpack.c.l.b16 %v9458
  %v9531 = vunpack.c.h.b16 %v9458
  %v9532 = vunpack.c.l.b16 %v9459
  %v9533 = vunpack.c.h.b16 %v9459
  %v9534 = vunpack.c.l.b16 %v9460
  %v9535 = vunpack.c.h.b16 %v9460
  %v9536 = vunpack.c.l.b16 %v9461
  %v9537 = vunpack.c.h.b16 %v9461
  %v9538 = vunpack.c.l.b16 %v9462
  %v9539 = vunpack.c.h.b16 %v9462
  %v9540 = vunpack.c.l.b16 %v9463
  %v9541 = vunpack.c.h.b16 %v9463
  %v9542 = vunpack.c.l.b16 %v9464
  %v9543 = vunpack.c.h.b16 %v9464
  %v9544 = vunpack.c.l.b16 %v9465
  %v9545 = vunpack.c.h.b16 %v9465
  %v9546 = vunpack.c.l.b16 %v9466
  %v9547 = vunpack.c.h.b16 %v9466
  %v9548 = vunpack.c.l.b16 %v9467
  %v9549 = vunpack.c.h.b16 %v9467
  %v9550 = vunpack.c.l.b16 %v9468
  %v9551 = vunpack.c.h.b16 %v9468
  %v9552 = vunpack.c.l.b16 %v9469
  %v9553 = vunpack.c.h.b16 %v9469
  %v9554 = vunpack.c.l.b16 %v9470
  %v9555 = vunpack.c.h.b16 %v9470
  %v9556 = vunpack.c.l.b16 %v9471
  %v9557 = vunpack.c.h.b16 %v9471
  %v9558 = vunpack.c.l.b16 %v9472
  %v9559 = vunpack.c.h.b16 %v9472
  %v9560 = vunpack.c.l.b16 %v9473
  %v9561 = vunpack.c.h.b16 %v9473
  %v9562 = vunpack.c.l.b16 %v9474
  %v9563 = vunpack.c.h.b16 %v9474
  %v9564 = vunpack.c.l.b16 %v9475
  %v9565 = vunpack.c.h.b16 %v9475
  %v9566 = vunpack.c.l.b16 %v9476
  %v9567 = vunpack.c.h.b16 %v9476
  %v9568 = vunpack.c.l.b16 %v9477
  %v9569 = vunpack.c.h.b16 %v9477
  %v9570 = vunpack.c.l.b16 %v9478
  %v9571 = vunpack.c.h.b16 %v9478
  %v9572 = vunpack.c.l.b16 %v9479
  %v9573 = vunpack.c.h.b16 %v9479
  %v9574 = vunpack.c.l.b16 %v9480
  %v9575 = vunpack.c.h.b16 %v9480
  %v9576 = vunpack.c.l.b16 %v9481
  %v9577 = vunpack.c.h.b16 %v9481
  %v9578 = vpack.c.b16 %v9518, %v9514
  %v9579 = vpack.c.b16 %v9519, %v9515
  %v9580 = vpack.c.b16 %v9520, %v9516
  %v9581 = vpack.c.b16 %v9521, %v9517
  %v9582 = vpack.c.b16 %v9526, %v9522
  %v9583 = vpack.c.b16 %v9527, %v9523
  %v9584 = vpack.c.b16 %v9528, %v9524
  %v9585 = vpack.c.b16 %v9529, %v9525
  %v9586 = vpack.c.b16 %v9534, %v9530
  %v9587 = vpack.c.b16 %v9535, %v9531
  %v9588 = vpack.c.b16 %v9536, %v9532
  %v9589 = vpack.c.b16 %v9537, %v9533
  %v9590 = vpack.c.b16 %v9542, %v9538
  %v9591 = vpack.c.b16 %v9543, %v9539
  %v9592 = vpack.c.b16 %v9544, %v9540
  %v9593 = vpack.c.b16 %v9545, %v9541
  %v9594 = vpack.c.b16 %v9550, %v9546
  %v9595 = vpack.c.b16 %v9551, %v9547
  %v9596 = vpack.c.b16 %v9552, %v9548
  %v9597 = vpack.c.b16 %v9553, %v9549
  %v9598 = vpack.c.b16 %v9558, %v9554
  %v9599 = vpack.c.b16 %v9559, %v9555
  %v9600 = vpack.c.b16 %v9560, %v9556
  %v9601 = vpack.c.b16 %v9561, %v9557
  %v9602 = vpack.c.b16 %v9566, %v9562
  %v9603 = vpack.c.b16 %v9567, %v9563
  %v9604 = vpack.c.b16 %v9568, %v9564
  %v9605 = vpack.c.b16 %v9569, %v9565
  %v9606 = vpack.c.b16 %v9574, %v9570
  %v9607 = vpack.c.b16 %v9575, %v9571
  %v9608 = vpack.c.b16 %v9576, %v9572
  %v9609 = vpack.c.b16 %v9577, %v9573
  %9642 = vmatpush.bf16.msra.mxu0 %v9606
  %9643 = vmatpush.bf16.msra.mxu0 %v9602
  %9644 = vmatpush.bf16.msra.mxu0 %v9598
  %9645 = vmatpush.bf16.msra.mxu0 %v9594
  %9646 = vmatpush.bf16.msra.mxu0 %v9590
  %9647 = vmatpush.bf16.msra.mxu0 %v9586
  %9648 = vmatpush.bf16.msra.mxu0 %v9582
  %9649 = vmatpush.bf16.msra.mxu0 %v9578
  %9650 = vmatmul.bf16.gmra.mxu0 %v9444
  %v9651 = vpop.f32.mrf.mxu0
  %v9652 = vadd.f32 0.0, %v9651
  %v9653 = vpop.f32.mrf.mxu0
  %9654 = vdwg.mxu0
  %9655 = vmatpush.bf16.msra.mxu0 %v9607
  %9656 = vmatpush.bf16.msra.mxu0 %v9603
  %9657 = vmatpush.bf16.msra.mxu0 %v9599
  %9658 = vmatpush.bf16.msra.mxu0 %v9595
  %9659 = vmatpush.bf16.msra.mxu0 %v9591
  %9660 = vmatpush.bf16.msra.mxu0 %v9587
  %9661 = vmatpush.bf16.msra.mxu0 %v9583
  %9662 = vmatpush.bf16.msra.mxu0 %v9579
  %9663 = vmatmul.bf16.gmra.mxu0 %v9444
  %v9664 = vpop.f32.mrf.mxu0
  %v9665 = vadd.f32 0.0, %v9664
  %v9666 = vpop.f32.mrf.mxu0
  %9667 = vdwg.mxu0
  %9668 = vmatpush.bf16.msra.mxu0 %v9608
  %9669 = vmatpush.bf16.msra.mxu0 %v9604
  %9670 = vmatpush.bf16.msra.mxu0 %v9600
  %9671 = vmatpush.bf16.msra.mxu0 %v9596
  %9672 = vmatpush.bf16.msra.mxu0 %v9592
  %9673 = vmatpush.bf16.msra.mxu0 %v9588
  %9674 = vmatpush.bf16.msra.mxu0 %v9584
  %9675 = vmatpush.bf16.msra.mxu0 %v9580
  %9676 = vmatmul.bf16.gmra.mxu0 %v9444
  %v9677 = vpop.f32.mrf.mxu0
  %v9678 = vadd.f32 0.0, %v9677
  %v9679 = vpop.f32.mrf.mxu0
  %9680 = vdwg.mxu0
  %9681 = vmatpush.bf16.msra.mxu0 %v9609
  %9682 = vmatpush.bf16.msra.mxu0 %v9605
  %9683 = vmatpush.bf16.msra.mxu0 %v9601
  %9684 = vmatpush.bf16.msra.mxu0 %v9597
  %9685 = vmatpush.bf16.msra.mxu0 %v9593
  %9686 = vmatpush.bf16.msra.mxu0 %v9589
  %9687 = vmatpush.bf16.msra.mxu0 %v9585
  %9688 = vmatpush.bf16.msra.mxu0 %v9581
  %9689 = vmatmul.bf16.gmra.mxu0 %v9444
  %v9690 = vpop.f32.mrf.mxu0
  %v9691 = vadd.f32 0.0, %v9690
  %v9692 = vpop.f32.mrf.mxu0
  %9693 = vdwg.mxu0
  %v9694 = vadd.f32 %v9446, %v9652
  %v9695 = vadd.f32 %v9447, %v9665
  %v9696 = vadd.f32 %v9448, %v9678
  %v9697 = vadd.f32 %v9449, %v9691
  %v9698 = vxor.u32 %v9694, 2147483648
  %v9699 = vmul.f32 %v9698, 1.442695
  %v9700 = vpow.pop %v9699
  %v9701 = vadd.f32 %v9700, 1.0
  %v9702 = vrcp.pop %v9701
  %v9703 = vmul.f32 %v9701, %v9702
  %v9704 = vsub.f32 1.0, %v9703
  %v9705 = vmul.f32 %v9702, %v9704
  %v9706 = vadd.f32 %v9702, %v9705
  %vm9707 = vweird.f32 %v9701
  %vm9708 = vweird.f32 %v9702
  %vm9709 = vmor %vm9707, %vm9708
  %v9710 = vsel %vm9709, %v9702, %v9706
  %v9711 = vand.u32 2147483647, %v9701
  %vm9712 = vcmp.eq.f32.partialorder %v9711, 8.507059e+37
  %v9713 = vand.u32 %v9701, 2147483648
  %v9714 = vor.u32 1.1754944e-38, %v9713
  %v9715 = vsel %vm9712, %v9714, %v9710
  %v9716 = vmul.f32 1.0, %v9715
  %v9717 = vxor.u32 %v9695, 2147483648
  %v9718 = vmul.f32 %v9717, 1.442695
  %v9719 = vpow.pop %v9718
  %v9720 = vadd.f32 %v9719, 1.0
  %v9721 = vrcp.pop %v9720
  %v9722 = vmul.f32 %v9720, %v9721
  %v9723 = vsub.f32 1.0, %v9722
  %v9724 = vmul.f32 %v9721, %v9723
  %v9725 = vadd.f32 %v9721, %v9724
  %vm9726 = vweird.f32 %v9720
  %vm9727 = vweird.f32 %v9721
  %vm9728 = vmor %vm9726, %vm9727
  %v9729 = vsel %vm9728, %v9721, %v9725
  %v9730 = vand.u32 2147483647, %v9720
  %vm9731 = vcmp.eq.f32.partialorder %v9730, 8.507059e+37
  %v9732 = vand.u32 %v9720, 2147483648
  %v9733 = vor.u32 1.1754944e-38, %v9732
  %v9734 = vsel %vm9731, %v9733, %v9729
  %v9735 = vmul.f32 1.0, %v9734
  %v9736 = vtanh.pop %v9696
  %v9737 = vxor.u32 %v9697, 2147483648
  %v9738 = vmul.f32 %v9737, 1.442695
  %v9739 = vpow.pop %v9738
  %v9740 = vadd.f32 %v9739, 1.0
  %v9741 = vrcp.pop %v9740
  %v9742 = vmul.f32 %v9740, %v9741
  %v9743 = vsub.f32 1.0, %v9742
  %v9744 = vmul.f32 %v9741, %v9743
  %v9745 = vadd.f32 %v9741, %v9744
  %vm9746 = vweird.f32 %v9740
  %vm9747 = vweird.f32 %v9741
  %vm9748 = vmor %vm9746, %vm9747
  %v9749 = vsel %vm9748, %v9741, %v9745
  %v9750 = vand.u32 2147483647, %v9740
  %vm9751 = vcmp.eq.f32.partialorder %v9750, 8.507059e+37
  %v9752 = vand.u32 %v9740, 2147483648
  %v9753 = vor.u32 1.1754944e-38, %v9752
  %v9754 = vsel %vm9751, %v9753, %v9749
  %v9755 = vmul.f32 1.0, %v9754
  %v9756 = vmul.f32 %v9735, %v9441
  %v9757 = vmul.f32 %v9716, %v9736
  %v9758 = vadd.f32 %v9756, %v9757
  %v9759 = vtanh.pop %v9758
  %v9760 = vmul.f32 %v9755, %v9759
  %v9761 = vpack.c.bf16 %v9760, %v9760
  %9762 = vst [vmem:[%s6 + $0x5c] sm:$0xf] %v9761
  // Predicated region
  $region26: #{design_forward.2} parent=0 // pred_check
    _
  $region27: #{design_forward.2} parent=0 // pred_check_branch
    %9764 = sbr.rel (0) target = $region29
  $region28: #{design_forward.2} parent=0 // pred_region
    _
  $region29: #{design_forward.2} parent=0 // pred_fallthru
    _
  // Predicated region
  $region30: #{design_forward.2} parent=0 // pred_check
    _
  $region31: #{design_forward.2} parent=0 // pred_check_branch
    %9766 = sbr.rel (0) target = $region33
  $region32: #{design_forward.2} parent=0 // pred_region
    _
  $region33: #{design_forward.2} parent=0 // pred_fallthru
    _

</llo_original>
